<compile_context>
chip_gen: v5e
topology: v5e:2x2
jax: 0.10.0
libtpu: 0.0.40
codegen_flags: <defaults>
</compile_context>

<pallas_src>
import functools
import math

import jax
import jax.numpy as jnp
from jax.experimental import pallas as pl
from jax.experimental.pallas import tpu as pltpu

N_FEATURES = 3
IN_EPS = 1e-5
_VMEM_BUDGET = 20 * 1024 * 1024        # conservative per-step buffer budget
_VMEM_LIMIT = 32 * 1024 * 1024         # scoped VMEM limit handed to Mosaic


# ----------------------------------------------------------------------------
# kernel helpers
# ----------------------------------------------------------------------------
def _edge_masks(m, l):
    """(m, 1) f32 masks for batch-stacked rows with per-sample length l.

    prev_ok zeroes the x[t-1] tap at segment starts (t == 0),
    next_ok zeroes the x[t+1] tap at segment ends (t == l-1).
    """
    r = jax.lax.broadcasted_iota(jnp.int32, (m, 1), 0) % l
    prev_ok = (r != 0).astype(jnp.float32)
    next_ok = (r != (l - 1)).astype(jnp.float32)
    return prev_ok, next_ok


def _conv_t_k4s2p1(x, w_ref, b_ref, prev_ok, next_ok):
    """ConvTranspose1d(k=4, s=2, p=1) on batch-stacked rows.

    x:      (M, Cin) bf16, rows ordered (batch, t).
    w_ref:  (4, Cin, Cout) bf16 (kernel-tap major).
    b_ref:  (1, Cout) f32.
    prev_ok/next_ok: (M, 1) f32 segment-edge masks.

        y[2t]   = W3 @ x[t-1] + W1 @ x[t]   + b
        y[2t+1] = W2 @ x[t]   + W0 @ x[t+1] + b

    The shifted taps are realized as matmul-then-roll: all four matmuls run on
    the unshifted x, then the W3/W0 products are rotated one row through the
    XLU (f32 operands, static shift) and the edge masks zero the rows that
    wrapped across batch-segment boundaries.
    """
    m = x.shape[0]
    a0 = jnp.dot(x, w_ref[0], preferred_element_type=jnp.float32)
    a1 = jnp.dot(x, w_ref[1], preferred_element_type=jnp.float32)
    a2 = jnp.dot(x, w_ref[2], preferred_element_type=jnp.float32)
    a3 = jnp.dot(x, w_ref[3], preferred_element_type=jnp.float32)
    b = b_ref[...]
    y_even = pltpu.roll(a3, 1, 0) * prev_ok + a1 + b        # a3 shifted down 1 row
    y_odd = a2 + pltpu.roll(a0, m - 1, 0) * next_ok + b     # a0 shifted up 1 row
    return y_even, y_odd


def _interleave(y_even, y_odd):
    """(M, C), (M, C) -> (2M, C) with rows [e0, o0, e1, o1, ...]."""
    m, c = y_even.shape
    return jnp.stack([y_even, y_odd], axis=1).reshape(2 * m, c)


def _inorm_relu_bf16(y, bt):
    """InstanceNorm1d (affine=False, biased var, eps=1e-5) per batch segment + ReLU.

    y: (bt*l, C) f32, rows ordered (batch, t); stats per channel over l.
    Returns bf16 for the next MXU matmul.
    """
    m, c = y.shape
    l = m // bt
    if bt == 1:
        mean = jnp.mean(y, axis=0, keepdims=True)
        var = jnp.maximum(jnp.mean(y * y, axis=0, keepdims=True) - mean * mean, 0.0)
        yn = (y - mean) * jax.lax.rsqrt(var + IN_EPS)
    elif l % 8 == 0:
        # sublane-aligned segments: one batched reduction, no per-segment unroll
        ys = y.reshape(bt, l, c)
        mean = jnp.mean(ys, axis=1, keepdims=True)
        var = jnp.maximum(jnp.mean(ys * ys, axis=1, keepdims=True) - mean * mean, 0.0)
        yn = ((ys - mean) * jax.lax.rsqrt(var + IN_EPS)).reshape(m, c)
    else:
        # fallback for tiny seq_len where segments are not sublane aligned
        segs = []
        for bi in range(bt):
            s = y[bi * l:(bi + 1) * l, :]
            mean = jnp.mean(s, axis=0, keepdims=True)
            var = jnp.maximum(jnp.mean(s * s, axis=0, keepdims=True) - mean * mean, 0.0)
            segs.append((s - mean) * jax.lax.rsqrt(var + IN_EPS))
        yn = jnp.concatenate(segs, axis=0)
    return jnp.maximum(yn, 0.0).astype(jnp.bfloat16)


# ----------------------------------------------------------------------------
# kernel
# ----------------------------------------------------------------------------
def gen_kernel(x0_ref, wu1_ref, bu1_ref, wu2_ref, bu2_ref, wu3_ref, bu3_ref,
               wpw_ref, bpw_ref, out_even_ref, out_odd_ref, *, bt, l0):
    # lin0 output (matmul already done in XLA) -> ReLU         (bt*l0, 512)
    x = jnp.maximum(x0_ref[...], 0.0)

    # convu1 -> InstanceNorm(384) -> ReLU                      (bt*2l0, 384)
    pm, nm = _edge_masks(bt * l0, l0)
    ye, yo = _conv_t_k4s2p1(x, wu1_ref, bu1_ref, pm, nm)
    x = _inorm_relu_bf16(_interleave(ye, yo), bt)

    # convu2 -> InstanceNorm(256) -> ReLU                      (bt*4l0, 256)
    pm, nm = _edge_masks(bt * 2 * l0, 2 * l0)
    ye, yo = _conv_t_k4s2p1(x, wu2_ref, bu2_ref, pm, nm)
    x = _inorm_relu_bf16(_interleave(ye, yo), bt)

    # convu3 -> Identity -> ReLU; keep even/odd halves separate (bt*4l0, 128)
    pm, nm = _edge_masks(bt * 4 * l0, 4 * l0)
    ye, yo = _conv_t_k4s2p1(x, wu3_ref, bu3_ref, pm, nm)
    xe = jnp.maximum(ye, 0.0).astype(jnp.bfloat16)
    xo = jnp.maximum(yo, 0.0).astype(jnp.bfloat16)

    # fused 1x1 heads (convp ++ convw zero-padded to 128 lanes) + tanh, bf16 out
    wpw = wpw_ref[...]
    bpw = bpw_ref[...]
    out_even_ref[...] = jnp.tanh(
        jnp.dot(xe, wpw, preferred_element_type=jnp.float32) + bpw
    ).astype(out_even_ref.dtype)
    out_odd_ref[...] = jnp.tanh(
        jnp.dot(xo, wpw, preferred_element_type=jnp.float32) + bpw
    ).astype(out_odd_ref.dtype)


# ----------------------------------------------------------------------------
# parameters (PyTorch-style uniform init, stored directly in kernel layouts)
# ----------------------------------------------------------------------------
def init_params(key, latent_dims, seq_len, encoded_dim):
    assert seq_len % 8 == 0, "seq_len must be a multiple of 8"
    assert N_FEATURES + encoded_dim <= 128, "fused head must fit in 128 lanes"
    l0 = seq_len // 8
    ks = jax.random.split(key, 11)

    def unif(k, shape, fan_in):
        bound = 1.0 / math.sqrt(fan_in)
        return jax.random.uniform(k, shape, jnp.float32, -bound, bound)

    # lin0 (bias=False): stored transposed AND column-permuted to (latent, l0*512)
    # with column index t*512 + c, so the lin0 output reshapes straight to the
    # kernel layout with no runtime transpose.  (A PyTorch checkpoint import
    # must apply the matching permutation.)
    w0 = unif(ks[0], (latent_dims, 512, l0), latent_dims)
    wlin = (jnp.transpose(w0, (0, 2, 1)).reshape(latent_dims, l0 * 512)
            .astype(jnp.bfloat16))

    def convT(kw, kb, cin, cout):
        w_t = unif(kw, (cin, cout, 4), cout * 4)      # torch layout (Cin, Cout, K)
        bias = unif(kb, (1, cout), cout * 4)
        # kernel layout: (K, Cin, Cout), bf16 for the MXU path
        return jnp.transpose(w_t, (2, 0, 1)).astype(jnp.bfloat16), bias

    wu1, bu1 = convT(ks[1], ks[2], 512, 384)
    wu2, bu2 = convT(ks[3], ks[4], 384, 256)
    wu3, bu3 = convT(ks[5], ks[6], 256, 128)

    # 1x1 heads: convp (128 -> 3) and convw (128 -> enc), fused and zero-padded
    # to 128 output lanes so the final matmul/store is lane-dense.
    wp = unif(ks[7], (128, N_FEATURES), N_FEATURES)
    bp = unif(ks[8], (1, N_FEATURES), N_FEATURES)
    ww = unif(ks[9], (128, encoded_dim), encoded_dim)
    bw = unif(ks[10], (1, encoded_dim), encoded_dim)
    wpw = (jnp.zeros((128, 128), jnp.float32)
           .at[:, :N_FEATURES].set(wp)
           .at[:, N_FEATURES:N_FEATURES + encoded_dim].set(ww)
           .astype(jnp.bfloat16))
    bpw = (jnp.zeros((1, 128), jnp.float32)
           .at[:, :N_FEATURES].set(bp)
           .at[:, N_FEATURES:N_FEATURES + encoded_dim].set(bw))

    return (wlin, wu1, bu1, wu2, bu2, wu3, bu3, wpw, bpw)


# ----------------------------------------------------------------------------
# batch-tile selection (VMEM / MXU budget)
# ----------------------------------------------------------------------------
def _vmem_estimate(bt, l0):
    """Rough per-grid-step VMEM bytes: pipeline buffers + live intermediates."""
    rows = bt * l0
    x0 = rows * 512 * 2 * 2                           # input block, bf16, 2 buffers
    outs = 2 * (rows * 4) * 128 * 2 * 2               # two bf16 outputs, 2 buffers
    weights = ((4 * 512 * 384 + 4 * 384 * 256 + 4 * 256 * 128 + 128 * 128) * 2
               + (384 + 256 + 128 + 128) * 4)         # single-buffered constants
    inter = rows * 22 * 1024                          # conservative live-value slab
    return x0 + outs + weights + inter


def _pick_bt(batch, l0):
    """Fill the MXU M dim, stay inside the VMEM budget, keep >=2 grid steps."""
    cands = [bt for bt in range(1, batch + 1)
             if batch % bt == 0 and ((bt * l0) % 8 == 0 or bt == batch)]
    fits = lambda bt: _vmem_estimate(bt, l0) <= _VMEM_BUDGET
    multi = lambda bt: batch == 1 or (batch // bt) >= 2   # megacore / v7x dual-TC
    for bt in cands:                       # smallest tile that fills a 256-row pass
        if bt * l0 >= 256 and fits(bt) and multi(bt):
            return bt
    for bt in reversed(cands):             # else: largest tile that fits + >=2 steps
        if fits(bt) and multi(bt):
            return bt
    for bt in reversed(cands):             # else: largest tile that fits
        if fits(bt):
            return bt
    return cands[-1]                       # degenerate: whole batch in one step


# ----------------------------------------------------------------------------
# forward wrapper
# ----------------------------------------------------------------------------
def gen_forward(z, params, *, seq_len, encoded_dim):
    B = z.shape[0]
    l0 = seq_len // 8
    half = seq_len // 2
    n_used = N_FEATURES + encoded_dim
    wlin, wu1, bu1, wu2, bu2, wu3, bu3, wpw, bpw = params

    # ---- lin0 (bias=False) hoisted to one XLA matmul over the whole batch ----
    h = jnp.dot(z.astype(jnp.bfloat16), wlin, preferred_element_type=jnp.float32)
    x0 = h.reshape(B * l0, 512).astype(jnp.bfloat16)     # rows=(batch, t), lanes=chan

    bt = _pick_bt(B, l0)
    grid = (B // bt,)

    row_blk = lambda g: (g, 0)
    const2 = lambda g: (0, 0)
    const3 = lambda g: (0, 0, 0)
    # constant blocks across the grid: single-buffer them to halve weight VMEM
    cw2 = lambda shape: pl.BlockSpec(shape, const2, pipeline_mode=pl.Buffered(1))
    cw3 = lambda shape: pl.BlockSpec(shape, const3, pipeline_mode=pl.Buffered(1))

    in_specs = [
        pl.BlockSpec((bt * l0, 512), row_blk),            # x0 batch-tile rows
        cw3((4, 512, 384)), cw2((1, 384)),                # convu1
        cw3((4, 384, 256)), cw2((1, 256)),                # convu2
        cw3((4, 256, 128)), cw2((1, 128)),                # convu3
        cw2((128, 128)), cw2((1, 128)),                   # fused 1x1 heads
    ]
    out_specs = [pl.BlockSpec((bt * half, 128), row_blk),
                 pl.BlockSpec((bt * half, 128), row_blk)]
    out_shape = [jax.ShapeDtypeStruct((B * half, 128), jnp.bfloat16),
                 jax.ShapeDtypeStruct((B * half, 128), jnp.bfloat16)]

    out_even, out_odd = pl.pallas_call(
        functools.partial(gen_kernel, bt=bt, l0=l0),
        grid=grid,
        in_specs=in_specs,
        out_specs=out_specs,
        out_shape=out_shape,
        compiler_params=pltpu.CompilerParams(
            dimension_semantics=("parallel",),
            vmem_limit_bytes=_VMEM_LIMIT),
    )(x0, wu1, bu1, wu2, bu2, wu3, bu3, wpw, bpw)

    # ---- epilogue in XLA: slice to the used lanes FIRST, then interleave ----
    e = out_even.reshape(B, half, 128)[..., :n_used]
    o = out_odd.reshape(B, half, 128)[..., :n_used]
    y = jnp.stack([e, o], axis=2).reshape(B, seq_len, n_used).astype(jnp.float32)
    p = jnp.transpose(y[..., :N_FEATURES], (0, 2, 1))            # (B, 3, L)
    w = jnp.transpose(y[..., N_FEATURES:n_used], (0, 2, 1))      # (B, enc, L)
    return p, w


# ----------------------------------------------------------------------------
# pure-JAX f32 reference of the PyTorch forward (validation only)
# ----------------------------------------------------------------------------
def ref_forward(z, params, *, seq_len, encoded_dim):
    wlin, wu1, bu1, wu2, bu2, wu3, bu3, wpw, bpw = params
    B = z.shape[0]
    l0 = seq_len // 8
    f32 = jnp.float32

    def conv_t(x, w, b):                      # x (B, L, Cin); w (4, Cin, Cout)
        w = w.astype(f32)
        zeros = jnp.zeros_like(x[:, :1, :])
        x_prev = jnp.concatenate([zeros, x[:, :-1, :]], axis=1)
        x_next = jnp.concatenate([x[:, 1:, :], zeros], axis=1)
        ye = x_prev @ w[3] + x @ w[1] + b
        yo = x @ w[2] + x_next @ w[0] + b
        bsz, length, cout = ye.shape
        return jnp.stack([ye, yo], axis=2).reshape(bsz, 2 * length, cout)

    def inorm(y):                             # biased variance, eps inside sqrt
        mean = jnp.mean(y, axis=1, keepdims=True)
        var = jnp.mean((y - mean) ** 2, axis=1, keepdims=True)
        return (y - mean) / jnp.sqrt(var + IN_EPS)

    relu = lambda v: jnp.maximum(v, 0.0)
    x = relu((z @ wlin.astype(f32)).reshape(B, l0, 512))
    x = relu(inorm(conv_t(x, wu1, bu1)))
    x = relu(inorm(conv_t(x, wu2, bu2)))
    x = relu(conv_t(x, wu3, bu3))
    y = jnp.tanh(x @ wpw.astype(f32) + bpw)
    p = jnp.transpose(y[..., :N_FEATURES], (0, 2, 1))
    w = jnp.transpose(y[..., N_FEATURES:N_FEATURES + encoded_dim], (0, 2, 1))
    return p, w


if __name__ == "__main__":
    # small shapes consistent with the module; seq_len=64 exercises the
    # sublane-aligned reshape-norm path and a multi-step parallel grid.
    B = 4
    latent_dims = 32
    seq_len = 64          # l0 = seq_len // 8 = 8
    encoded_dim = 8
    # ngf is unused by the reference forward pass.

    key = jax.random.PRNGKey(0)
    k_param, k_z = jax.random.split(key)
    params = init_params(k_param, latent_dims, seq_len, encoded_dim)
    z = jax.random.normal(k_z, (B, latent_dims), jnp.float32)

    fwd = jax.jit(functools.partial(gen_forward, seq_len=seq_len,
                                    encoded_dim=encoded_dim))
    p, w = jax.block_until_ready(fwd(z, params))

    assert p.shape == (B, N_FEATURES, seq_len), p.shape
    assert w.shape == (B, encoded_dim, seq_len), w.shape
    assert bool(jnp.all(jnp.isfinite(p))) and bool(jnp.all(jnp.isfinite(w)))

    # validate against the pure-JAX f32 reference (bf16 MXU path -> loose tol)
    p_ref, w_ref = ref_forward(z, params, seq_len=seq_len, encoded_dim=encoded_dim)
    err = max(float(jnp.max(jnp.abs(p - p_ref))),
              float(jnp.max(jnp.abs(w - w_ref))))
    assert err < 0.15, f"max abs diff vs reference = {err}"
    print("KERNEL_OK")
</pallas_src>

<mosaic_0001>
module attributes {stable_mosaic.version = 11 : i64} {
  func.func @gen_kernel(%arg0: i32, %arg1: memref<16x512xbf16, #tpu.memory_space<vmem>>, %arg2: memref<4x512x384xbf16, #tpu.memory_space<vmem>>, %arg3: memref<1x384xf32, #tpu.memory_space<vmem>>, %arg4: memref<4x384x256xbf16, #tpu.memory_space<vmem>>, %arg5: memref<1x256xf32, #tpu.memory_space<vmem>>, %arg6: memref<4x256x128xbf16, #tpu.memory_space<vmem>>, %arg7: memref<1x128xf32, #tpu.memory_space<vmem>>, %arg8: memref<128x128xbf16, #tpu.memory_space<vmem>>, %arg9: memref<1x128xf32, #tpu.memory_space<vmem>>, %arg10: memref<64x128xbf16, #tpu.memory_space<vmem>>, %arg11: memref<64x128xbf16, #tpu.memory_space<vmem>>) attributes {dimension_semantics = [#tpu.dimension_semantics<parallel>], iteration_bounds = array<i64: 2>, scalar_prefetch = 0 : i64, scratch_operands = 0 : i64, tpu.core_type = #tpu.core_type<tc>, window_params = [{transform_indices = @transform_0, window_bounds = array<i64: 16, 512>}, {pipeline_mode = #tpu.pipeline_mode<synchronous>, transform_indices = @transform_1, window_bounds = array<i64: 4, 512, 384>}, {pipeline_mode = #tpu.pipeline_mode<synchronous>, transform_indices = @transform_2, window_bounds = array<i64: 1, 384>}, {pipeline_mode = #tpu.pipeline_mode<synchronous>, transform_indices = @transform_3, window_bounds = array<i64: 4, 384, 256>}, {pipeline_mode = #tpu.pipeline_mode<synchronous>, transform_indices = @transform_4, window_bounds = array<i64: 1, 256>}, {pipeline_mode = #tpu.pipeline_mode<synchronous>, transform_indices = @transform_5, window_bounds = array<i64: 4, 256, 128>}, {pipeline_mode = #tpu.pipeline_mode<synchronous>, transform_indices = @transform_6, window_bounds = array<i64: 1, 128>}, {pipeline_mode = #tpu.pipeline_mode<synchronous>, transform_indices = @transform_7, window_bounds = array<i64: 128, 128>}, {pipeline_mode = #tpu.pipeline_mode<synchronous>, transform_indices = @transform_8, window_bounds = array<i64: 1, 128>}, {transform_indices = @transform_9, window_bounds = array<i64: 64, 128>}, {transform_indices = @transform_10, window_bounds = array<i64: 64, 128>}]} {
    %c0 = arith.constant 0 : index
    %c0_0 = arith.constant 0 : index
    %0 = vector.load %arg1[%c0, %c0_0] : memref<16x512xbf16, #tpu.memory_space<vmem>>, vector<16x512xbf16>
    %cst = arith.constant 0.000000e+00 : bf16
    %1 = vector.broadcast %cst : bf16 to vector<16x512xbf16>
    %2 = arith.maximumf %0, %1 : vector<16x512xbf16>
    %3 = tpu.iota {dimensions = array<i32: 0>} : vector<16x1xi32>
    %c8_i32 = arith.constant 8 : i32
    %c0_i32 = arith.constant 0 : i32
    %4 = arith.cmpi eq, %c8_i32, %c0_i32 : i32
    %c1_i32 = arith.constant 1 : i32
    %5 = arith.select %4, %c1_i32, %c8_i32 : i32
    %6 = vector.broadcast %5 : i32 to vector<16x1xi32>
    %7 = arith.remsi %3, %6 : vector<16x1xi32>
    %c0_i32_1 = arith.constant 0 : i32
    %8 = vector.broadcast %c0_i32_1 : i32 to vector<16x1xi32>
    %9 = arith.cmpi ne, %7, %8 : vector<16x1xi32>
    %c0_i32_2 = arith.constant 0 : i32
    %10 = vector.broadcast %c0_i32_2 : i32 to vector<16x1xi32>
    %11 = arith.cmpi slt, %7, %10 : vector<16x1xi32>
    %c0_i32_3 = arith.constant 0 : i32
    %12 = arith.cmpi slt, %5, %c0_i32_3 : i32
    %13 = vector.broadcast %12 : i1 to vector<16x1xi1>
    %14 = vector.broadcast %13 : vector<16x1xi1> to vector<16x1xi1>
    %15 = arith.xori %11, %14 : vector<16x1xi1>
    %16 = arith.andi %15, %9 : vector<16x1xi1>
    %17 = vector.broadcast %5 : i32 to vector<16x1xi32>
    %18 = arith.addi %7, %17 : vector<16x1xi32>
    %19 = arith.select %16, %18, %7 : vector<16x1xi1>, vector<16x1xi32>
    %c0_i32_4 = arith.constant 0 : i32
    %20 = vector.broadcast %c0_i32_4 : i32 to vector<16x1xi32>
    %21 = arith.cmpi ne, %19, %20 : vector<16x1xi32>
    %22 = arith.extui %21 : vector<16x1xi1> to vector<16x1xi32>
    %23 = arith.sitofp %22 : vector<16x1xi32> to vector<16x1xf32>
    %c7_i32 = arith.constant 7 : i32
    %24 = vector.broadcast %c7_i32 : i32 to vector<16x1xi32>
    %25 = arith.cmpi ne, %19, %24 : vector<16x1xi32>
    %26 = arith.extui %25 : vector<16x1xi1> to vector<16x1xi32>
    %27 = arith.sitofp %26 : vector<16x1xi32> to vector<16x1xf32>
    %c0_5 = arith.constant 0 : index
    %c0_6 = arith.constant 0 : index
    %c0_7 = arith.constant 0 : index
    %28 = vector.load %arg2[%c0_5, %c0_6, %c0_7] : memref<4x512x384xbf16, #tpu.memory_space<vmem>>, vector<1x512x384xbf16>
    %29 = vector.shape_cast %28 : vector<1x512x384xbf16> to vector<512x384xbf16>
    %cst_8 = arith.constant dense<0.000000e+00> : vector<16x384xf32>
    %30 = tpu.matmul %2, %29, %cst_8 {dimension_numbers = #tpu.dot_dimension_numbers<[1], [0], [0], [1], [0, 0, 1, 1], [], []>} : vector<16x512xbf16>, vector<512x384xbf16>, vector<16x384xf32> -> vector<16x384xf32>
    %c1 = arith.constant 1 : index
    %c0_9 = arith.constant 0 : index
    %c0_10 = arith.constant 0 : index
    %31 = vector.load %arg2[%c1, %c0_9, %c0_10] : memref<4x512x384xbf16, #tpu.memory_space<vmem>>, vector<1x512x384xbf16>
    %32 = vector.shape_cast %31 : vector<1x512x384xbf16> to vector<512x384xbf16>
    %cst_11 = arith.constant dense<0.000000e+00> : vector<16x384xf32>
    %33 = tpu.matmul %2, %32, %cst_11 {dimension_numbers = #tpu.dot_dimension_numbers<[1], [0], [0], [1], [0, 0, 1, 1], [], []>} : vector<16x512xbf16>, vector<512x384xbf16>, vector<16x384xf32> -> vector<16x384xf32>
    %c2 = arith.constant 2 : index
    %c0_12 = arith.constant 0 : index
    %c0_13 = arith.constant 0 : index
    %34 = vector.load %arg2[%c2, %c0_12, %c0_13] : memref<4x512x384xbf16, #tpu.memory_space<vmem>>, vector<1x512x384xbf16>
    %35 = vector.shape_cast %34 : vector<1x512x384xbf16> to vector<512x384xbf16>
    %cst_14 = arith.constant dense<0.000000e+00> : vector<16x384xf32>
    %36 = tpu.matmul %2, %35, %cst_14 {dimension_numbers = #tpu.dot_dimension_numbers<[1], [0], [0], [1], [0, 0, 1, 1], [], []>} : vector<16x512xbf16>, vector<512x384xbf16>, vector<16x384xf32> -> vector<16x384xf32>
    %c3 = arith.constant 3 : index
    %c0_15 = arith.constant 0 : index
    %c0_16 = arith.constant 0 : index
    %37 = vector.load %arg2[%c3, %c0_15, %c0_16] : memref<4x512x384xbf16, #tpu.memory_space<vmem>>, vector<1x512x384xbf16>
    %38 = vector.shape_cast %37 : vector<1x512x384xbf16> to vector<512x384xbf16>
    %cst_17 = arith.constant dense<0.000000e+00> : vector<16x384xf32>
    %39 = tpu.matmul %2, %38, %cst_17 {dimension_numbers = #tpu.dot_dimension_numbers<[1], [0], [0], [1], [0, 0, 1, 1], [], []>} : vector<16x512xbf16>, vector<512x384xbf16>, vector<16x384xf32> -> vector<16x384xf32>
    %c0_18 = arith.constant 0 : index
    %c0_19 = arith.constant 0 : index
    %40 = vector.load %arg3[%c0_18, %c0_19] : memref<1x384xf32, #tpu.memory_space<vmem>>, vector<1x384xf32>
    %c1_i32_20 = arith.constant 1 : i32
    %41 = tpu.dynamic_rotate %39 by %c1_i32_20 dim 0 : vector<16x384xf32>, i32 -> vector<16x384xf32>
    %42 = vector.broadcast %23 : vector<16x1xf32> to vector<16x384xf32>
    %43 = arith.mulf %41, %42 : vector<16x384xf32>
    %44 = arith.addf %43, %33 : vector<16x384xf32>
    %45 = vector.broadcast %40 : vector<1x384xf32> to vector<16x384xf32>
    %46 = arith.addf %44, %45 : vector<16x384xf32>
    %c15_i32 = arith.constant 15 : i32
    %47 = tpu.dynamic_rotate %30 by %c15_i32 dim 0 : vector<16x384xf32>, i32 -> vector<16x384xf32>
    %48 = vector.broadcast %27 : vector<16x1xf32> to vector<16x384xf32>
    %49 = arith.mulf %47, %48 : vector<16x384xf32>
    %50 = arith.addf %36, %49 : vector<16x384xf32>
    %51 = vector.broadcast %40 : vector<1x384xf32> to vector<16x384xf32>
    %52 = arith.addf %50, %51 : vector<16x384xf32>
    %53 = vector.shape_cast %46 : vector<16x384xf32> to vector<16x1x384xf32>
    %54 = vector.shape_cast %52 : vector<16x384xf32> to vector<16x1x384xf32>
    %55 = tpu.concatenate %53, %54 in 1 : vector<16x1x384xf32>, vector<16x1x384xf32> -> vector<16x2x384xf32>
    %56 = vector.shape_cast %55 : vector<16x2x384xf32> to vector<32x384xf32>
    %57 = vector.shape_cast %56 : vector<32x384xf32> to vector<2x16x384xf32>
    %cst_21 = arith.constant dense<0.000000e+00> : vector<2x384xf32>
    %58 = vector.multi_reduction <add>, %57, %cst_21 [1] : vector<2x16x384xf32> to vector<2x384xf32>
    %59 = vector.shape_cast %58 : vector<2x384xf32> to vector<2x1x384xf32>
    %cst_22 = arith.constant 1.600000e+01 : f32
    %60 = vector.broadcast %cst_22 : f32 to vector<2x1x384xf32>
    %61 = arith.divf %59, %60 : vector<2x1x384xf32>
    %62 = arith.mulf %57, %57 : vector<2x16x384xf32>
    %cst_23 = arith.constant dense<0.000000e+00> : vector<2x384xf32>
    %63 = vector.multi_reduction <add>, %62, %cst_23 [1] : vector<2x16x384xf32> to vector<2x384xf32>
    %64 = vector.shape_cast %63 : vector<2x384xf32> to vector<2x1x384xf32>
    %cst_24 = arith.constant 1.600000e+01 : f32
    %65 = vector.broadcast %cst_24 : f32 to vector<2x1x384xf32>
    %66 = arith.divf %64, %65 : vector<2x1x384xf32>
    %67 = arith.mulf %61, %61 : vector<2x1x384xf32>
    %68 = arith.subf %66, %67 : vector<2x1x384xf32>
    %cst_25 = arith.constant 0.000000e+00 : f32
    %69 = vector.broadcast %cst_25 : f32 to vector<2x1x384xf32>
    %70 = arith.maximumf %68, %69 : vector<2x1x384xf32>
    %71 = vector.broadcast %61 : vector<2x1x384xf32> to vector<2x16x384xf32>
    %72 = arith.subf %57, %71 : vector<2x16x384xf32>
    %cst_26 = arith.constant 9.99999974E-6 : f32
    %73 = vector.broadcast %cst_26 : f32 to vector<2x1x384xf32>
    %74 = arith.addf %70, %73 : vector<2x1x384xf32>
    %75 = math.rsqrt %74 : vector<2x1x384xf32>
    %76 = vector.broadcast %75 : vector<2x1x384xf32> to vector<2x16x384xf32>
    %77 = arith.mulf %72, %76 : vector<2x16x384xf32>
    %78 = vector.shape_cast %77 : vector<2x16x384xf32> to vector<32x384xf32>
    %cst_27 = arith.constant 0.000000e+00 : f32
    %79 = vector.broadcast %cst_27 : f32 to vector<32x384xf32>
    %80 = arith.maximumf %78, %79 : vector<32x384xf32>
    %81 = arith.truncf %80 : vector<32x384xf32> to vector<32x384xbf16>
    %82 = tpu.iota {dimensions = array<i32: 0>} : vector<32x1xi32>
    %c16_i32 = arith.constant 16 : i32
    %c0_i32_28 = arith.constant 0 : i32
    %83 = arith.cmpi eq, %c16_i32, %c0_i32_28 : i32
    %c1_i32_29 = arith.constant 1 : i32
    %84 = arith.select %83, %c1_i32_29, %c16_i32 : i32
    %85 = vector.broadcast %84 : i32 to vector<32x1xi32>
    %86 = arith.remsi %82, %85 : vector<32x1xi32>
    %c0_i32_30 = arith.constant 0 : i32
    %87 = vector.broadcast %c0_i32_30 : i32 to vector<32x1xi32>
    %88 = arith.cmpi ne, %86, %87 : vector<32x1xi32>
    %c0_i32_31 = arith.constant 0 : i32
    %89 = vector.broadcast %c0_i32_31 : i32 to vector<32x1xi32>
    %90 = arith.cmpi slt, %86, %89 : vector<32x1xi32>
    %c0_i32_32 = arith.constant 0 : i32
    %91 = arith.cmpi slt, %84, %c0_i32_32 : i32
    %92 = vector.broadcast %91 : i1 to vector<32x1xi1>
    %93 = vector.broadcast %92 : vector<32x1xi1> to vector<32x1xi1>
    %94 = arith.xori %90, %93 : vector<32x1xi1>
    %95 = arith.andi %94, %88 : vector<32x1xi1>
    %96 = vector.broadcast %84 : i32 to vector<32x1xi32>
    %97 = arith.addi %86, %96 : vector<32x1xi32>
    %98 = arith.select %95, %97, %86 : vector<32x1xi1>, vector<32x1xi32>
    %c0_i32_33 = arith.constant 0 : i32
    %99 = vector.broadcast %c0_i32_33 : i32 to vector<32x1xi32>
    %100 = arith.cmpi ne, %98, %99 : vector<32x1xi32>
    %101 = arith.extui %100 : vector<32x1xi1> to vector<32x1xi32>
    %102 = arith.sitofp %101 : vector<32x1xi32> to vector<32x1xf32>
    %c15_i32_34 = arith.constant 15 : i32
    %103 = vector.broadcast %c15_i32_34 : i32 to vector<32x1xi32>
    %104 = arith.cmpi ne, %98, %103 : vector<32x1xi32>
    %105 = arith.extui %104 : vector<32x1xi1> to vector<32x1xi32>
    %106 = arith.sitofp %105 : vector<32x1xi32> to vector<32x1xf32>
    %c0_35 = arith.constant 0 : index
    %c0_36 = arith.constant 0 : index
    %c0_37 = arith.constant 0 : index
    %107 = vector.load %arg4[%c0_35, %c0_36, %c0_37] : memref<4x384x256xbf16, #tpu.memory_space<vmem>>, vector<1x384x256xbf16>
    %108 = vector.shape_cast %107 : vector<1x384x256xbf16> to vector<384x256xbf16>
    %cst_38 = arith.constant dense<0.000000e+00> : vector<32x256xf32>
    %109 = tpu.matmul %81, %108, %cst_38 {dimension_numbers = #tpu.dot_dimension_numbers<[1], [0], [0], [1], [0, 0, 1, 1], [], []>} : vector<32x384xbf16>, vector<384x256xbf16>, vector<32x256xf32> -> vector<32x256xf32>
    %c1_39 = arith.constant 1 : index
    %c0_40 = arith.constant 0 : index
    %c0_41 = arith.constant 0 : index
    %110 = vector.load %arg4[%c1_39, %c0_40, %c0_41] : memref<4x384x256xbf16, #tpu.memory_space<vmem>>, vector<1x384x256xbf16>
    %111 = vector.shape_cast %110 : vector<1x384x256xbf16> to vector<384x256xbf16>
    %cst_42 = arith.constant dense<0.000000e+00> : vector<32x256xf32>
    %112 = tpu.matmul %81, %111, %cst_42 {dimension_numbers = #tpu.dot_dimension_numbers<[1], [0], [0], [1], [0, 0, 1, 1], [], []>} : vector<32x384xbf16>, vector<384x256xbf16>, vector<32x256xf32> -> vector<32x256xf32>
    %c2_43 = arith.constant 2 : index
    %c0_44 = arith.constant 0 : index
    %c0_45 = arith.constant 0 : index
    %113 = vector.load %arg4[%c2_43, %c0_44, %c0_45] : memref<4x384x256xbf16, #tpu.memory_space<vmem>>, vector<1x384x256xbf16>
    %114 = vector.shape_cast %113 : vector<1x384x256xbf16> to vector<384x256xbf16>
    %cst_46 = arith.constant dense<0.000000e+00> : vector<32x256xf32>
    %115 = tpu.matmul %81, %114, %cst_46 {dimension_numbers = #tpu.dot_dimension_numbers<[1], [0], [0], [1], [0, 0, 1, 1], [], []>} : vector<32x384xbf16>, vector<384x256xbf16>, vector<32x256xf32> -> vector<32x256xf32>
    %c3_47 = arith.constant 3 : index
    %c0_48 = arith.constant 0 : index
    %c0_49 = arith.constant 0 : index
    %116 = vector.load %arg4[%c3_47, %c0_48, %c0_49] : memref<4x384x256xbf16, #tpu.memory_space<vmem>>, vector<1x384x256xbf16>
    %117 = vector.shape_cast %116 : vector<1x384x256xbf16> to vector<384x256xbf16>
    %cst_50 = arith.constant dense<0.000000e+00> : vector<32x256xf32>
    %118 = tpu.matmul %81, %117, %cst_50 {dimension_numbers = #tpu.dot_dimension_numbers<[1], [0], [0], [1], [0, 0, 1, 1], [], []>} : vector<32x384xbf16>, vector<384x256xbf16>, vector<32x256xf32> -> vector<32x256xf32>
    %c0_51 = arith.constant 0 : index
    %c0_52 = arith.constant 0 : index
    %119 = vector.load %arg5[%c0_51, %c0_52] : memref<1x256xf32, #tpu.memory_space<vmem>>, vector<1x256xf32>
    %c1_i32_53 = arith.constant 1 : i32
    %120 = tpu.dynamic_rotate %118 by %c1_i32_53 dim 0 : vector<32x256xf32>, i32 -> vector<32x256xf32>
    %121 = vector.broadcast %102 : vector<32x1xf32> to vector<32x256xf32>
    %122 = arith.mulf %120, %121 : vector<32x256xf32>
    %123 = arith.addf %122, %112 : vector<32x256xf32>
    %124 = vector.broadcast %119 : vector<1x256xf32> to vector<32x256xf32>
    %125 = arith.addf %123, %124 : vector<32x256xf32>
    %c31_i32 = arith.constant 31 : i32
    %126 = tpu.dynamic_rotate %109 by %c31_i32 dim 0 : vector<32x256xf32>, i32 -> vector<32x256xf32>
    %127 = vector.broadcast %106 : vector<32x1xf32> to vector<32x256xf32>
    %128 = arith.mulf %126, %127 : vector<32x256xf32>
    %129 = arith.addf %115, %128 : vector<32x256xf32>
    %130 = vector.broadcast %119 : vector<1x256xf32> to vector<32x256xf32>
    %131 = arith.addf %129, %130 : vector<32x256xf32>
    %132 = vector.shape_cast %125 : vector<32x256xf32> to vector<32x1x256xf32>
    %133 = vector.shape_cast %131 : vector<32x256xf32> to vector<32x1x256xf32>
    %134 = tpu.concatenate %132, %133 in 1 : vector<32x1x256xf32>, vector<32x1x256xf32> -> vector<32x2x256xf32>
    %135 = vector.shape_cast %134 : vector<32x2x256xf32> to vector<64x256xf32>
    %136 = vector.shape_cast %135 : vector<64x256xf32> to vector<2x32x256xf32>
    %cst_54 = arith.constant dense<0.000000e+00> : vector<2x256xf32>
    %137 = vector.multi_reduction <add>, %136, %cst_54 [1] : vector<2x32x256xf32> to vector<2x256xf32>
    %138 = vector.shape_cast %137 : vector<2x256xf32> to vector<2x1x256xf32>
    %cst_55 = arith.constant 3.200000e+01 : f32
    %139 = vector.broadcast %cst_55 : f32 to vector<2x1x256xf32>
    %140 = arith.divf %138, %139 : vector<2x1x256xf32>
    %141 = arith.mulf %136, %136 : vector<2x32x256xf32>
    %cst_56 = arith.constant dense<0.000000e+00> : vector<2x256xf32>
    %142 = vector.multi_reduction <add>, %141, %cst_56 [1] : vector<2x32x256xf32> to vector<2x256xf32>
    %143 = vector.shape_cast %142 : vector<2x256xf32> to vector<2x1x256xf32>
    %cst_57 = arith.constant 3.200000e+01 : f32
    %144 = vector.broadcast %cst_57 : f32 to vector<2x1x256xf32>
    %145 = arith.divf %143, %144 : vector<2x1x256xf32>
    %146 = arith.mulf %140, %140 : vector<2x1x256xf32>
    %147 = arith.subf %145, %146 : vector<2x1x256xf32>
    %cst_58 = arith.constant 0.000000e+00 : f32
    %148 = vector.broadcast %cst_58 : f32 to vector<2x1x256xf32>
    %149 = arith.maximumf %147, %148 : vector<2x1x256xf32>
    %150 = vector.broadcast %140 : vector<2x1x256xf32> to vector<2x32x256xf32>
    %151 = arith.subf %136, %150 : vector<2x32x256xf32>
    %cst_59 = arith.constant 9.99999974E-6 : f32
    %152 = vector.broadcast %cst_59 : f32 to vector<2x1x256xf32>
    %153 = arith.addf %149, %152 : vector<2x1x256xf32>
    %154 = math.rsqrt %153 : vector<2x1x256xf32>
    %155 = vector.broadcast %154 : vector<2x1x256xf32> to vector<2x32x256xf32>
    %156 = arith.mulf %151, %155 : vector<2x32x256xf32>
    %157 = vector.shape_cast %156 : vector<2x32x256xf32> to vector<64x256xf32>
    %cst_60 = arith.constant 0.000000e+00 : f32
    %158 = vector.broadcast %cst_60 : f32 to vector<64x256xf32>
    %159 = arith.maximumf %157, %158 : vector<64x256xf32>
    %160 = arith.truncf %159 : vector<64x256xf32> to vector<64x256xbf16>
    %161 = tpu.iota {dimensions = array<i32: 0>} : vector<64x1xi32>
    %c32_i32 = arith.constant 32 : i32
    %c0_i32_61 = arith.constant 0 : i32
    %162 = arith.cmpi eq, %c32_i32, %c0_i32_61 : i32
    %c1_i32_62 = arith.constant 1 : i32
    %163 = arith.select %162, %c1_i32_62, %c32_i32 : i32
    %164 = vector.broadcast %163 : i32 to vector<64x1xi32>
    %165 = arith.remsi %161, %164 : vector<64x1xi32>
    %c0_i32_63 = arith.constant 0 : i32
    %166 = vector.broadcast %c0_i32_63 : i32 to vector<64x1xi32>
    %167 = arith.cmpi ne, %165, %166 : vector<64x1xi32>
    %c0_i32_64 = arith.constant 0 : i32
    %168 = vector.broadcast %c0_i32_64 : i32 to vector<64x1xi32>
    %169 = arith.cmpi slt, %165, %168 : vector<64x1xi32>
    %c0_i32_65 = arith.constant 0 : i32
    %170 = arith.cmpi slt, %163, %c0_i32_65 : i32
    %171 = vector.broadcast %170 : i1 to vector<64x1xi1>
    %172 = vector.broadcast %171 : vector<64x1xi1> to vector<64x1xi1>
    %173 = arith.xori %169, %172 : vector<64x1xi1>
    %174 = arith.andi %173, %167 : vector<64x1xi1>
    %175 = vector.broadcast %163 : i32 to vector<64x1xi32>
    %176 = arith.addi %165, %175 : vector<64x1xi32>
    %177 = arith.select %174, %176, %165 : vector<64x1xi1>, vector<64x1xi32>
    %c0_i32_66 = arith.constant 0 : i32
    %178 = vector.broadcast %c0_i32_66 : i32 to vector<64x1xi32>
    %179 = arith.cmpi ne, %177, %178 : vector<64x1xi32>
    %180 = arith.extui %179 : vector<64x1xi1> to vector<64x1xi32>
    %181 = arith.sitofp %180 : vector<64x1xi32> to vector<64x1xf32>
    %c31_i32_67 = arith.constant 31 : i32
    %182 = vector.broadcast %c31_i32_67 : i32 to vector<64x1xi32>
    %183 = arith.cmpi ne, %177, %182 : vector<64x1xi32>
    %184 = arith.extui %183 : vector<64x1xi1> to vector<64x1xi32>
    %185 = arith.sitofp %184 : vector<64x1xi32> to vector<64x1xf32>
    %c0_68 = arith.constant 0 : index
    %c0_69 = arith.constant 0 : index
    %c0_70 = arith.constant 0 : index
    %186 = vector.load %arg6[%c0_68, %c0_69, %c0_70] : memref<4x256x128xbf16, #tpu.memory_space<vmem>>, vector<1x256x128xbf16>
    %187 = vector.shape_cast %186 : vector<1x256x128xbf16> to vector<256x128xbf16>
    %cst_71 = arith.constant dense<0.000000e+00> : vector<64x128xf32>
    %188 = tpu.matmul %160, %187, %cst_71 {dimension_numbers = #tpu.dot_dimension_numbers<[1], [0], [0], [1], [0, 0, 1, 1], [], []>} : vector<64x256xbf16>, vector<256x128xbf16>, vector<64x128xf32> -> vector<64x128xf32>
    %c1_72 = arith.constant 1 : index
    %c0_73 = arith.constant 0 : index
    %c0_74 = arith.constant 0 : index
    %189 = vector.load %arg6[%c1_72, %c0_73, %c0_74] : memref<4x256x128xbf16, #tpu.memory_space<vmem>>, vector<1x256x128xbf16>
    %190 = vector.shape_cast %189 : vector<1x256x128xbf16> to vector<256x128xbf16>
    %cst_75 = arith.constant dense<0.000000e+00> : vector<64x128xf32>
    %191 = tpu.matmul %160, %190, %cst_75 {dimension_numbers = #tpu.dot_dimension_numbers<[1], [0], [0], [1], [0, 0, 1, 1], [], []>} : vector<64x256xbf16>, vector<256x128xbf16>, vector<64x128xf32> -> vector<64x128xf32>
    %c2_76 = arith.constant 2 : index
    %c0_77 = arith.constant 0 : index
    %c0_78 = arith.constant 0 : index
    %192 = vector.load %arg6[%c2_76, %c0_77, %c0_78] : memref<4x256x128xbf16, #tpu.memory_space<vmem>>, vector<1x256x128xbf16>
    %193 = vector.shape_cast %192 : vector<1x256x128xbf16> to vector<256x128xbf16>
    %cst_79 = arith.constant dense<0.000000e+00> : vector<64x128xf32>
    %194 = tpu.matmul %160, %193, %cst_79 {dimension_numbers = #tpu.dot_dimension_numbers<[1], [0], [0], [1], [0, 0, 1, 1], [], []>} : vector<64x256xbf16>, vector<256x128xbf16>, vector<64x128xf32> -> vector<64x128xf32>
    %c3_80 = arith.constant 3 : index
    %c0_81 = arith.constant 0 : index
    %c0_82 = arith.constant 0 : index
    %195 = vector.load %arg6[%c3_80, %c0_81, %c0_82] : memref<4x256x128xbf16, #tpu.memory_space<vmem>>, vector<1x256x128xbf16>
    %196 = vector.shape_cast %195 : vector<1x256x128xbf16> to vector<256x128xbf16>
    %cst_83 = arith.constant dense<0.000000e+00> : vector<64x128xf32>
    %197 = tpu.matmul %160, %196, %cst_83 {dimension_numbers = #tpu.dot_dimension_numbers<[1], [0], [0], [1], [0, 0, 1, 1], [], []>} : vector<64x256xbf16>, vector<256x128xbf16>, vector<64x128xf32> -> vector<64x128xf32>
    %c0_84 = arith.constant 0 : index
    %c0_85 = arith.constant 0 : index
    %198 = vector.load %arg7[%c0_84, %c0_85] : memref<1x128xf32, #tpu.memory_space<vmem>>, vector<1x128xf32>
    %c1_i32_86 = arith.constant 1 : i32
    %199 = tpu.dynamic_rotate %197 by %c1_i32_86 dim 0 : vector<64x128xf32>, i32 -> vector<64x128xf32>
    %200 = vector.broadcast %181 : vector<64x1xf32> to vector<64x128xf32>
    %201 = arith.mulf %199, %200 : vector<64x128xf32>
    %202 = arith.addf %201, %191 : vector<64x128xf32>
    %203 = vector.broadcast %198 : vector<1x128xf32> to vector<64x128xf32>
    %204 = arith.addf %202, %203 : vector<64x128xf32>
    %c63_i32 = arith.constant 63 : i32
    %205 = tpu.dynamic_rotate %188 by %c63_i32 dim 0 : vector<64x128xf32>, i32 -> vector<64x128xf32>
    %206 = vector.broadcast %185 : vector<64x1xf32> to vector<64x128xf32>
    %207 = arith.mulf %205, %206 : vector<64x128xf32>
    %208 = arith.addf %194, %207 : vector<64x128xf32>
    %209 = vector.broadcast %198 : vector<1x128xf32> to vector<64x128xf32>
    %210 = arith.addf %208, %209 : vector<64x128xf32>
    %cst_87 = arith.constant 0.000000e+00 : f32
    %211 = vector.broadcast %cst_87 : f32 to vector<64x128xf32>
    %212 = arith.maximumf %204, %211 : vector<64x128xf32>
    %213 = arith.truncf %212 : vector<64x128xf32> to vector<64x128xbf16>
    %cst_88 = arith.constant 0.000000e+00 : f32
    %214 = vector.broadcast %cst_88 : f32 to vector<64x128xf32>
    %215 = arith.maximumf %210, %214 : vector<64x128xf32>
    %216 = arith.truncf %215 : vector<64x128xf32> to vector<64x128xbf16>
    %c0_89 = arith.constant 0 : index
    %c0_90 = arith.constant 0 : index
    %217 = vector.load %arg8[%c0_89, %c0_90] : memref<128x128xbf16, #tpu.memory_space<vmem>>, vector<128x128xbf16>
    %c0_91 = arith.constant 0 : index
    %c0_92 = arith.constant 0 : index
    %218 = vector.load %arg9[%c0_91, %c0_92] : memref<1x128xf32, #tpu.memory_space<vmem>>, vector<1x128xf32>
    %cst_93 = arith.constant dense<0.000000e+00> : vector<64x128xf32>
    %219 = tpu.matmul %213, %217, %cst_93 {dimension_numbers = #tpu.dot_dimension_numbers<[1], [0], [0], [1], [0, 0, 1, 1], [], []>} : vector<64x128xbf16>, vector<128x128xbf16>, vector<64x128xf32> -> vector<64x128xf32>
    %220 = vector.broadcast %218 : vector<1x128xf32> to vector<64x128xf32>
    %221 = arith.addf %219, %220 : vector<64x128xf32>
    %222 = math.tanh %221 : vector<64x128xf32>
    %223 = arith.truncf %222 : vector<64x128xf32> to vector<64x128xbf16>
    %c0_94 = arith.constant 0 : index
    %c0_95 = arith.constant 0 : index
    %224 = vector.load %arg10[%c0_94, %c0_95] : memref<64x128xbf16, #tpu.memory_space<vmem>>, vector<64x128xbf16>
    tpu.vector_store %arg10[%c0_94, %c0_95], %223 {strides = array<i32>} : memref<64x128xbf16, #tpu.memory_space<vmem>>, vector<64x128xbf16>,
    %cst_96 = arith.constant dense<0.000000e+00> : vector<64x128xf32>
    %225 = tpu.matmul %216, %217, %cst_96 {dimension_numbers = #tpu.dot_dimension_numbers<[1], [0], [0], [1], [0, 0, 1, 1], [], []>} : vector<64x128xbf16>, vector<128x128xbf16>, vector<64x128xf32> -> vector<64x128xf32>
    %226 = vector.broadcast %218 : vector<1x128xf32> to vector<64x128xf32>
    %227 = arith.addf %225, %226 : vector<64x128xf32>
    %228 = math.tanh %227 : vector<64x128xf32>
    %229 = arith.truncf %228 : vector<64x128xf32> to vector<64x128xbf16>
    %c0_97 = arith.constant 0 : index
    %c0_98 = arith.constant 0 : index
    %230 = vector.load %arg11[%c0_97, %c0_98] : memref<64x128xbf16, #tpu.memory_space<vmem>>, vector<64x128xbf16>
    tpu.vector_store %arg11[%c0_97, %c0_98], %229 {strides = array<i32>} : memref<64x128xbf16, #tpu.memory_space<vmem>>, vector<64x128xbf16>,
    return
  }
  func.func @transform_0(%arg0: i32) -> (i32, i32) {
    %c0_i32 = arith.constant 0 : i32
    %c0_i32_0 = arith.constant 0 : i32
    return %arg0, %c0_i32 : i32, i32
  }
  func.func @transform_1(%arg0: i32) -> (i32, i32, i32) {
    %c0_i32 = arith.constant 0 : i32
    %c0_i32_0 = arith.constant 0 : i32
    %c0_i32_1 = arith.constant 0 : i32
    %c0_i32_2 = arith.constant 0 : i32
    return %c0_i32, %c0_i32_0, %c0_i32_1 : i32, i32, i32
  }
  func.func @transform_2(%arg0: i32) -> (i32, i32) {
    %c0_i32 = arith.constant 0 : i32
    %c0_i32_0 = arith.constant 0 : i32
    %c0_i32_1 = arith.constant 0 : i32
    return %c0_i32, %c0_i32_0 : i32, i32
  }
  func.func @transform_3(%arg0: i32) -> (i32, i32, i32) {
    %c0_i32 = arith.constant 0 : i32
    %c0_i32_0 = arith.constant 0 : i32
    %c0_i32_1 = arith.constant 0 : i32
    %c0_i32_2 = arith.constant 0 : i32
    return %c0_i32, %c0_i32_0, %c0_i32_1 : i32, i32, i32
  }
  func.func @transform_4(%arg0: i32) -> (i32, i32) {
    %c0_i32 = arith.constant 0 : i32
    %c0_i32_0 = arith.constant 0 : i32
    %c0_i32_1 = arith.constant 0 : i32
    return %c0_i32, %c0_i32_0 : i32, i32
  }
  func.func @transform_5(%arg0: i32) -> (i32, i32, i32) {
    %c0_i32 = arith.constant 0 : i32
    %c0_i32_0 = arith.constant 0 : i32
    %c0_i32_1 = arith.constant 0 : i32
    %c0_i32_2 = arith.constant 0 : i32
    return %c0_i32, %c0_i32_0, %c0_i32_1 : i32, i32, i32
  }
  func.func @transform_6(%arg0: i32) -> (i32, i32) {
    %c0_i32 = arith.constant 0 : i32
    %c0_i32_0 = arith.constant 0 : i32
    %c0_i32_1 = arith.constant 0 : i32
    return %c0_i32, %c0_i32_0 : i32, i32
  }
  func.func @transform_7(%arg0: i32) -> (i32, i32) {
    %c0_i32 = arith.constant 0 : i32
    %c0_i32_0 = arith.constant 0 : i32
    %c0_i32_1 = arith.constant 0 : i32
    return %c0_i32, %c0_i32_0 : i32, i32
  }
  func.func @transform_8(%arg0: i32) -> (i32, i32) {
    %c0_i32 = arith.constant 0 : i32
    %c0_i32_0 = arith.constant 0 : i32
    %c0_i32_1 = arith.constant 0 : i32
    return %c0_i32, %c0_i32_0 : i32, i32
  }
  func.func @transform_9(%arg0: i32) -> (i32, i32) {
    %c0_i32 = arith.constant 0 : i32
    %c0_i32_0 = arith.constant 0 : i32
    return %arg0, %c0_i32 : i32, i32
  }
  func.func @transform_10(%arg0: i32) -> (i32, i32) {
    %c0_i32 = arith.constant 0 : i32
    %c0_i32_0 = arith.constant 0 : i32
    return %arg0, %c0_i32 : i32, i32
  }
}

</mosaic_0001>

<llo_original>
// kernel: gen_forward.1
$region0: #{gen_forward.1}
  #allocation0 [shape = 'u32[]', space=smem, size = 0x4, offset = 0x4, fixed_abs, tag = 'smem constant byte address 0x4 - core index']
  #allocation1 [shape = 'u32[72,128]{1,0:T(1,128)}', space=vmem, size = 0x9000, scoped, tag = 'internal scratch']
  %s0 = inlined_call_operand.vmem [shape: bf16[32,512], index: 0, kind: input, shape index: {}]
  %s1 = inlined_call_operand.hbm [shape: bf16[4,512,384], index: 1, kind: input, shape index: {}]
  %s2 = inlined_call_operand.hbm [shape: f32[1,384], index: 2, kind: input, shape index: {}]
  %s3 = inlined_call_operand.hbm [shape: bf16[4,384,256], index: 3, kind: input, shape index: {}]
  %s4 = inlined_call_operand.hbm [shape: f32[1,256], index: 4, kind: input, shape index: {}]
  %s5 = inlined_call_operand.hbm [shape: bf16[4,256,128], index: 5, kind: input, shape index: {}]
  %s6 = inlined_call_operand.hbm [shape: f32[1,128], index: 6, kind: input, shape index: {}]
  %s7 = inlined_call_operand.hbm [shape: bf16[128,128], index: 7, kind: input, shape index: {}]
  %s8 = inlined_call_operand.hbm [shape: f32[1,128], index: 8, kind: input, shape index: {}]
  %s9 = inlined_call_operand.vmem [shape: bf16[128,128], index: 9, kind: output, shape index: {0}]
  %s10 = inlined_call_operand.vmem [shape: bf16[128,128], index: 10, kind: output, shape index: {1}]
  %11 = xla_tuple %s9, %s10
  %s12 = sld [smem:[#allocation0]]
  $region109: #{gen_forward.1} parent=0
    _
  %s14 = ssub.s32 1, %s12
  %s15 = scalar_select 0, %s14, %s12
  $region1: #{gen_forward.1} parent=0
    #allocation2 [shape = 'u8[1572864]{0}', space=vmem, size = 0x180000, scoped, tag = 'input window, operand 1, single buffered']
    #allocation3 [shape = 's32[2]{0}', space=sflag, size = 0x8, scoped, tag = 'scoped memory for gen_forward.1']
    #allocation4 [shape = 'u8[1536]{0}', space=vmem, size = 0x800, scoped, tag = 'input window, operand 2, single buffered']
    #allocation5 [shape = 's32[1]{0}', space=sflag, size = 0x4, scoped, tag = 'scoped memory for gen_forward.1']
    #allocation6 [shape = 'u8[786432]{0}', space=vmem, size = 0xc0000, scoped, tag = 'input window, operand 3, single buffered']
    #allocation7 [shape = 'u8[1024]{0}', space=vmem, size = 0x400, scoped, tag = 'input window, operand 4, single buffered']
    #allocation8 [shape = 's32[1]{0}', space=sflag, size = 0x4, scoped, tag = 'scoped memory for gen_forward.1']
    #allocation9 [shape = 'u8[262144]{0}', space=vmem, size = 0x40000, scoped, tag = 'input window, operand 5, single buffered']
    #allocation10 [shape = 'u8[512]{0}', space=vmem, size = 0x400, scoped, tag = 'input window, operand 6, single buffered']
    #allocation11 [shape = 's32[1]{0}', space=sflag, size = 0x4, scoped, tag = 'scoped memory for gen_forward.1']
    #allocation12 [shape = 'u8[32768]{0}', space=vmem, size = 0x8000, scoped, tag = 'input window, operand 7, single buffered']
    #allocation13 [shape = 'u8[512]{0}', space=vmem, size = 0x400, scoped, tag = 'input window, operand 8, single buffered']
    #allocation14 [shape = 's32[1]{0}', space=sflag, size = 0x4, scoped, tag = 'scoped memory for gen_forward.1']
    %16 = vsyncpa [#allocation3], 0
    %17 = vsyncpa [#allocation5], 0
    %18 = vsyncpa [#allocation8], 0
    %19 = vsyncpa [#allocation11], 0
    %20 = vsyncpa [#allocation14], 0
    loop: start=0, step=1, limit=4
    $region2: #{gen_forward.1} parent=1 // loop_pre_header
      _
    $region3: #{gen_forward.1} parent=1 // loop_header
      %s22 = sphi 0, %s26
      %p23 = scmp.ge.s32.totalorder %s22, 4
      %s32 = sphi 0, %s34
      %s35 = sphi 0, %s32
      %s36 = sphi 0, %s35
      %s52 = sphi 0, %s36
      %s56 = sphi 0, %s56
      %s58 = sphi 0, %s56
      %s59 = sphi 0, %s58
      %s73 = sphi 0, %s59
      %s77 = sphi 0, %s77
      %s79 = sphi 0, %s77
      %s80 = sphi 0, %s79
      %s94 = sphi 0, %s80
      %s98 = sphi 0, %s98
      %s100 = sphi 0, %s98
      %s101 = sphi 0, %s100
      %s115 = sphi 0, %s101
      %s119 = sphi 0, %s119
      %s121 = sphi 0, %s119
      %s122 = sphi 0, %s121
      %s136 = sphi 0, %s122
      %s140 = sphi 0, %s140
      %s142 = sphi 0, %s140
      %s143 = sphi 0, %s142
      %s157 = sphi 0, %s143
      %s161 = sphi 0, %s161
      %s163 = sphi 0, %s161
      %s164 = sphi 0, %s163
      %s178 = sphi 0, %s164
      %s182 = sphi 0, %s182
      %s184 = sphi 0, %s182
      %s185 = sphi 0, %s184
      %s199 = sphi 0, %s185
      %s203 = sphi 0, %s203
      %s205 = sphi 0, %s203
      %s206 = sphi 0, %s205
      %s220 = sphi 0, %s206
      %s226 = sphi 0, %s228
      %s229 = sphi 0, %s226
      %s230 = sphi 0, %s229
      %s246 = sphi 0, %s230
      %s252 = sphi 0, %s254
      %s255 = sphi 0, %s252
      %s256 = sphi 0, %s255
      %s272 = sphi 0, %s256
    $region4: #{gen_forward.1} parent=1 // loop_header_branch
      %25 = sbr.rel (%p23) target = $region8
    $region5: #{gen_forward.1} parent=1 // loop_body
      %s27 = ssub.s32 %s22, 1
      %s28 = ssub.s32 %s22, 2
      %s29 = sadd.s32 %s22, 1
      %s30 = ssub.s32 %s22, %s29
      %p31 = scmp.eq.s32.totalorder %s30, 0
      %s33 = sadd.s32 %s32, 1
      %s34 = scalar_select %p31, %s32, %s33
      %p37 = pneg %p31
      %p38 = scmp.eq.s32.totalorder %s22, 1
      %p39 = por %p37, %p38
      %p40 = scmp.ne.s32.totalorder %s32, %s35
      %p41 = scmp.eq.s32.totalorder %s22, 0
      %p42 = por %p40, %p41
      %p43 = scmp.ne.s32.totalorder %s32, %s35
      %p44 = scmp.eq.s32.totalorder %s27, 1
      %p45 = por %p43, %p44
      %p46 = scmp.ne.s32.totalorder %s35, %s36
      %p47 = scmp.eq.s32.totalorder %s27, 0
      %p48 = por %p46, %p47
      %p49 = scmp.ne.s32.totalorder %s35, %s36
      %p50 = scmp.eq.s32.totalorder %s28, 1
      %p51 = por %p49, %p50
      %p53 = scmp.ne.s32.totalorder %s36, %s52
      %p54 = scmp.eq.s32.totalorder %s28, 0
      %p55 = por %p53, %p54
      %s57 = sadd.s32 %s56, 1
      %p60 = scmp.eq.s32.totalorder %s22, 1
      %p61 = scmp.ne.s32.totalorder %s56, %s58
      %p62 = scmp.eq.s32.totalorder %s22, 0
      %p63 = por %p61, %p62
      %p64 = scmp.ne.s32.totalorder %s56, %s58
      %p65 = scmp.eq.s32.totalorder %s27, 1
      %p66 = por %p64, %p65
      %p67 = scmp.ne.s32.totalorder %s58, %s59
      %p68 = scmp.eq.s32.totalorder %s27, 0
      %p69 = por %p67, %p68
      %p70 = scmp.ne.s32.totalorder %s58, %s59
      %p71 = scmp.eq.s32.totalorder %s28, 1
      %p72 = por %p70, %p71
      %p74 = scmp.ne.s32.totalorder %s59, %s73
      %p75 = scmp.eq.s32.totalorder %s28, 0
      %p76 = por %p74, %p75
      %s78 = sadd.s32 %s77, 1
      %p81 = scmp.eq.s32.totalorder %s22, 1
      %p82 = scmp.ne.s32.totalorder %s77, %s79
      %p83 = scmp.eq.s32.totalorder %s22, 0
      %p84 = por %p82, %p83
      %p85 = scmp.ne.s32.totalorder %s77, %s79
      %p86 = scmp.eq.s32.totalorder %s27, 1
      %p87 = por %p85, %p86
      %p88 = scmp.ne.s32.totalorder %s79, %s80
      %p89 = scmp.eq.s32.totalorder %s27, 0
      %p90 = por %p88, %p89
      %p91 = scmp.ne.s32.totalorder %s79, %s80
      %p92 = scmp.eq.s32.totalorder %s28, 1
      %p93 = por %p91, %p92
      %p95 = scmp.ne.s32.totalorder %s80, %s94
      %p96 = scmp.eq.s32.totalorder %s28, 0
      %p97 = por %p95, %p96
      %s99 = sadd.s32 %s98, 1
      %p102 = scmp.eq.s32.totalorder %s22, 1
      %p103 = scmp.ne.s32.totalorder %s98, %s100
      %p104 = scmp.eq.s32.totalorder %s22, 0
      %p105 = por %p103, %p104
      %p106 = scmp.ne.s32.totalorder %s98, %s100
      %p107 = scmp.eq.s32.totalorder %s27, 1
      %p108 = por %p106, %p107
      %p109 = scmp.ne.s32.totalorder %s100, %s101
      %p110 = scmp.eq.s32.totalorder %s27, 0
      %p111 = por %p109, %p110
      %p112 = scmp.ne.s32.totalorder %s100, %s101
      %p113 = scmp.eq.s32.totalorder %s28, 1
      %p114 = por %p112, %p113
      %p116 = scmp.ne.s32.totalorder %s101, %s115
      %p117 = scmp.eq.s32.totalorder %s28, 0
      %p118 = por %p116, %p117
      %s120 = sadd.s32 %s119, 1
      %p123 = scmp.eq.s32.totalorder %s22, 1
      %p124 = scmp.ne.s32.totalorder %s119, %s121
      %p125 = scmp.eq.s32.totalorder %s22, 0
      %p126 = por %p124, %p125
      %p127 = scmp.ne.s32.totalorder %s119, %s121
      %p128 = scmp.eq.s32.totalorder %s27, 1
      %p129 = por %p127, %p128
      %p130 = scmp.ne.s32.totalorder %s121, %s122
      %p131 = scmp.eq.s32.totalorder %s27, 0
      %p132 = por %p130, %p131
      %p133 = scmp.ne.s32.totalorder %s121, %s122
      %p134 = scmp.eq.s32.totalorder %s28, 1
      %p135 = por %p133, %p134
      %p137 = scmp.ne.s32.totalorder %s122, %s136
      %p138 = scmp.eq.s32.totalorder %s28, 0
      %p139 = por %p137, %p138
      %s141 = sadd.s32 %s140, 1
      %p144 = scmp.eq.s32.totalorder %s22, 1
      %p145 = scmp.ne.s32.totalorder %s140, %s142
      %p146 = scmp.eq.s32.totalorder %s22, 0
      %p147 = por %p145, %p146
      %p148 = scmp.ne.s32.totalorder %s140, %s142
      %p149 = scmp.eq.s32.totalorder %s27, 1
      %p150 = por %p148, %p149
      %p151 = scmp.ne.s32.totalorder %s142, %s143
      %p152 = scmp.eq.s32.totalorder %s27, 0
      %p153 = por %p151, %p152
      %p154 = scmp.ne.s32.totalorder %s142, %s143
      %p155 = scmp.eq.s32.totalorder %s28, 1
      %p156 = por %p154, %p155
      %p158 = scmp.ne.s32.totalorder %s143, %s157
      %p159 = scmp.eq.s32.totalorder %s28, 0
      %p160 = por %p158, %p159
      %s162 = sadd.s32 %s161, 1
      %p165 = scmp.eq.s32.totalorder %s22, 1
      %p166 = scmp.ne.s32.totalorder %s161, %s163
      %p167 = scmp.eq.s32.totalorder %s22, 0
      %p168 = por %p166, %p167
      %p169 = scmp.ne.s32.totalorder %s161, %s163
      %p170 = scmp.eq.s32.totalorder %s27, 1
      %p171 = por %p169, %p170
      %p172 = scmp.ne.s32.totalorder %s163, %s164
      %p173 = scmp.eq.s32.totalorder %s27, 0
      %p174 = por %p172, %p173
      %p175 = scmp.ne.s32.totalorder %s163, %s164
      %p176 = scmp.eq.s32.totalorder %s28, 1
      %p177 = por %p175, %p176
      %p179 = scmp.ne.s32.totalorder %s164, %s178
      %p180 = scmp.eq.s32.totalorder %s28, 0
      %p181 = por %p179, %p180
      %s183 = sadd.s32 %s182, 1
      %p186 = scmp.eq.s32.totalorder %s22, 1
      %p187 = scmp.ne.s32.totalorder %s182, %s184
      %p188 = scmp.eq.s32.totalorder %s22, 0
      %p189 = por %p187, %p188
      %p190 = scmp.ne.s32.totalorder %s182, %s184
      %p191 = scmp.eq.s32.totalorder %s27, 1
      %p192 = por %p190, %p191
      %p193 = scmp.ne.s32.totalorder %s184, %s185
      %p194 = scmp.eq.s32.totalorder %s27, 0
      %p195 = por %p193, %p194
      %p196 = scmp.ne.s32.totalorder %s184, %s185
      %p197 = scmp.eq.s32.totalorder %s28, 1
      %p198 = por %p196, %p197
      %p200 = scmp.ne.s32.totalorder %s185, %s199
      %p201 = scmp.eq.s32.totalorder %s28, 0
      %p202 = por %p200, %p201
      %s204 = sadd.s32 %s203, 1
      %p207 = scmp.eq.s32.totalorder %s22, 1
      %p208 = scmp.ne.s32.totalorder %s203, %s205
      %p209 = scmp.eq.s32.totalorder %s22, 0
      %p210 = por %p208, %p209
      %p211 = scmp.ne.s32.totalorder %s203, %s205
      %p212 = scmp.eq.s32.totalorder %s27, 1
      %p213 = por %p211, %p212
      %p214 = scmp.ne.s32.totalorder %s205, %s206
      %p215 = scmp.eq.s32.totalorder %s27, 0
      %p216 = por %p214, %p215
      %p217 = scmp.ne.s32.totalorder %s205, %s206
      %p218 = scmp.eq.s32.totalorder %s28, 1
      %p219 = por %p217, %p218
      %p221 = scmp.ne.s32.totalorder %s206, %s220
      %p222 = scmp.eq.s32.totalorder %s28, 0
      %p223 = por %p221, %p222
      %s224 = ssub.s32 %s22, %s29
      %p225 = scmp.eq.s32.totalorder %s224, 0
      %s227 = sadd.s32 %s226, 1
      %s228 = scalar_select %p225, %s226, %s227
      %p231 = pneg %p225
      %p232 = scmp.eq.s32.totalorder %s22, 1
      %p233 = por %p231, %p232
      %p234 = scmp.ne.s32.totalorder %s226, %s229
      %p235 = scmp.eq.s32.totalorder %s22, 0
      %p236 = por %p234, %p235
      %p237 = scmp.ne.s32.totalorder %s226, %s229
      %p238 = scmp.eq.s32.totalorder %s27, 1
      %p239 = por %p237, %p238
      %p240 = scmp.ne.s32.totalorder %s229, %s230
      %p241 = scmp.eq.s32.totalorder %s27, 0
      %p242 = por %p240, %p241
      %p243 = scmp.ne.s32.totalorder %s229, %s230
      %p244 = scmp.eq.s32.totalorder %s28, 1
      %p245 = por %p243, %p244
      %p247 = scmp.ne.s32.totalorder %s230, %s246
      %p248 = scmp.eq.s32.totalorder %s28, 0
      %p249 = por %p247, %p248
      %s250 = ssub.s32 %s22, %s29
      %p251 = scmp.eq.s32.totalorder %s250, 0
      %s253 = sadd.s32 %s252, 1
      %s254 = scalar_select %p251, %s252, %s253
      %p257 = pneg %p251
      %p258 = scmp.eq.s32.totalorder %s22, 1
      %p259 = por %p257, %p258
      %p260 = scmp.ne.s32.totalorder %s252, %s255
      %p261 = scmp.eq.s32.totalorder %s22, 0
      %p262 = por %p260, %p261
      %p263 = scmp.ne.s32.totalorder %s252, %s255
      %p264 = scmp.eq.s32.totalorder %s27, 1
      %p265 = por %p263, %p264
      %p266 = scmp.ne.s32.totalorder %s255, %s256
      %p267 = scmp.eq.s32.totalorder %s27, 0
      %p268 = por %p266, %p267
      %p269 = scmp.ne.s32.totalorder %s255, %s256
      %p270 = scmp.eq.s32.totalorder %s28, 1
      %p271 = por %p269, %p270
      %p273 = scmp.ne.s32.totalorder %s256, %s272
      %p274 = scmp.eq.s32.totalorder %s28, 0
      %p275 = por %p273, %p274
      %p276 = scmp.le.s32.totalorder 1, %s22
      %p277 = scmp.lt.s32.totalorder %s22, 3
      %p278 = pnand %p276, %p277
      %p279 = pneg %p278
      // Predicated region
      $region9: #{gen_forward.1} parent=5 // pred_check
        _
      $region10: #{gen_forward.1} parent=5 // pred_check_branch
        %281 = sbr.rel (%p278) target = $region12
      $region11: #{gen_forward.1} parent=5 // pred_region
        %s282 = ssub.s32 %s22, 1
        // Predicated region
        $region13: #{gen_forward.1} parent=11 // pred_check
          %p283 = pneg %p69
        $region14: #{gen_forward.1} parent=11 // pred_check_branch
          %285 = sbr.rel (%p283) target = $region16
        $region15: #{gen_forward.1} parent=11 // pred_region
          %287 = vsyncadd [#allocation3], 0
          %s288 = sshll.u32 %s1, 4
          %s289 = int_to_ptr.hbm [resolvable:$true] %s288
          %s290 = sshll.u32 [#allocation2], 4
          %s291 = int_to_ptr.vmem [resolvable:$true] %s290
          %296 = dma.hbm_to_vmem [thread:$0]  %s289, 49152, %s291, [#allocation3], 192, 192, 12
        $region16: #{gen_forward.1} parent=11 // pred_fallthru
          _
        // Predicated region
        $region17: #{gen_forward.1} parent=11 // pred_check
          %p297 = pneg %p90
        $region18: #{gen_forward.1} parent=11 // pred_check_branch
          %299 = sbr.rel (%p297) target = $region20
        $region19: #{gen_forward.1} parent=11 // pred_region
          %301 = vsyncadd [#allocation5], 0
          %s303 = sshll.u32 %s2, 4
          %s304 = int_to_ptr.hbm [resolvable:$true] %s303
          %s305 = sshll.u32 [#allocation4], 4
          %s306 = int_to_ptr.vmem [resolvable:$true] %s305
          %308 = dma.hbm_to_vmem [thread:$0]  %s304, 48, %s306, [#allocation5]
        $region20: #{gen_forward.1} parent=11 // pred_fallthru
          _
        // Predicated region
        $region21: #{gen_forward.1} parent=11 // pred_check
          %p309 = pneg %p111
        $region22: #{gen_forward.1} parent=11 // pred_check_branch
          %311 = sbr.rel (%p309) target = $region24
        $region23: #{gen_forward.1} parent=11 // pred_region
          %313 = vsyncadd [#allocation5], 0
          %s314 = sshll.u32 %s3, 4
          %s315 = int_to_ptr.hbm [resolvable:$true] %s314
          %s316 = sshll.u32 [#allocation6], 4
          %s317 = int_to_ptr.vmem [resolvable:$true] %s316
          %322 = dma.hbm_to_vmem [thread:$0]  %s315, 24576, %s317, [#allocation5], 128, 128, 8
        $region24: #{gen_forward.1} parent=11 // pred_fallthru
          _
        // Predicated region
        $region25: #{gen_forward.1} parent=11 // pred_check
          %p323 = pneg %p132
        $region26: #{gen_forward.1} parent=11 // pred_check_branch
          %325 = sbr.rel (%p323) target = $region28
        $region27: #{gen_forward.1} parent=11 // pred_region
          %327 = vsyncadd [#allocation8], 0
          %s329 = sshll.u32 %s4, 4
          %s330 = int_to_ptr.hbm [resolvable:$true] %s329
          %s331 = sshll.u32 [#allocation7], 4
          %s332 = int_to_ptr.vmem [resolvable:$true] %s331
          %334 = dma.hbm_to_vmem [thread:$0]  %s330, 32, %s332, [#allocation8]
        $region28: #{gen_forward.1} parent=11 // pred_fallthru
          _
        // Predicated region
        $region29: #{gen_forward.1} parent=11 // pred_check
          %p335 = pneg %p153
        $region30: #{gen_forward.1} parent=11 // pred_check_branch
          %337 = sbr.rel (%p335) target = $region32
        $region31: #{gen_forward.1} parent=11 // pred_region
          %339 = vsyncadd [#allocation8], 0
          %s340 = sshll.u32 %s5, 4
          %s341 = int_to_ptr.hbm [resolvable:$true] %s340
          %s342 = sshll.u32 [#allocation9], 4
          %s343 = int_to_ptr.vmem [resolvable:$true] %s342
          %348 = dma.hbm_to_vmem [thread:$0]  %s341, 8192, %s343, [#allocation8], 64, 64, 4
        $region32: #{gen_forward.1} parent=11 // pred_fallthru
          _
        // Predicated region
        $region33: #{gen_forward.1} parent=11 // pred_check
          %p349 = pneg %p174
        $region34: #{gen_forward.1} parent=11 // pred_check_branch
          %351 = sbr.rel (%p349) target = $region36
        $region35: #{gen_forward.1} parent=11 // pred_region
          %353 = vsyncadd [#allocation11], 0
          %s355 = sshll.u32 %s6, 4
          %s356 = int_to_ptr.hbm [resolvable:$true] %s355
          %s357 = sshll.u32 [#allocation10], 4
          %s358 = int_to_ptr.vmem [resolvable:$true] %s357
          %360 = dma.hbm_to_vmem [thread:$0]  %s356, 16, %s358, [#allocation11]
        $region36: #{gen_forward.1} parent=11 // pred_fallthru
          _
        // Predicated region
        $region37: #{gen_forward.1} parent=11 // pred_check
          %p361 = pneg %p195
        $region38: #{gen_forward.1} parent=11 // pred_check_branch
          %363 = sbr.rel (%p361) target = $region40
        $region39: #{gen_forward.1} parent=11 // pred_region
          %365 = vsyncadd [#allocation11], 0
          %s366 = sshll.u32 %s7, 4
          %s367 = int_to_ptr.hbm [resolvable:$true] %s366
          %s368 = sshll.u32 [#allocation12], 4
          %s369 = int_to_ptr.vmem [resolvable:$true] %s368
          %374 = dma.hbm_to_vmem [thread:$0]  %s367, 1024, %s369, [#allocation11], 64, 64, 4
        $region40: #{gen_forward.1} parent=11 // pred_fallthru
          _
        // Predicated region
        $region41: #{gen_forward.1} parent=11 // pred_check
          %p375 = pneg %p216
        $region42: #{gen_forward.1} parent=11 // pred_check_branch
          %377 = sbr.rel (%p375) target = $region44
        $region43: #{gen_forward.1} parent=11 // pred_region
          %379 = vsyncadd [#allocation14], 0
          %s381 = sshll.u32 %s8, 4
          %s382 = int_to_ptr.hbm [resolvable:$true] %s381
          %s383 = sshll.u32 [#allocation13], 4
          %s384 = int_to_ptr.vmem [resolvable:$true] %s383
          %386 = dma.hbm_to_vmem [thread:$0]  %s382, 16, %s384, [#allocation14]
        $region44: #{gen_forward.1} parent=11 // pred_fallthru
          _
      $region12: #{gen_forward.1} parent=5 // pred_fallthru
        _
      %p387 = scmp.lt.s32.totalorder %s22, 2
      // Predicated region
      $region45: #{gen_forward.1} parent=5 // pred_check
        %p388 = pneg %p387
      $region46: #{gen_forward.1} parent=5 // pred_check_branch
        %390 = sbr.rel (%p388) target = $region48
      $region47: #{gen_forward.1} parent=5 // pred_region
        // Predicated region
        $region49: #{gen_forward.1} parent=47 // pred_check
          %p391 = pneg %p42
        $region50: #{gen_forward.1} parent=47 // pred_check_branch
          %393 = sbr.rel (%p391) target = $region52
        $region51: #{gen_forward.1} parent=47 // pred_region
          %s394 = smul.u32 2, %s22
          %p395 = scmp.lt.s32.totalorder %s394, 3
          %s396 = scalar_select %p395, %s394, 3
          %s397 = smul.addr %s396, 4
          %s398 = smul.addr %s397, 4
          %s399 = scalar_lea.vmem %s0, %s398
          %s400 = smul.u32 2, %s22
        $region52: #{gen_forward.1} parent=47 // pred_fallthru
          _
      $region48: #{gen_forward.1} parent=5 // pred_fallthru
        _
      %p401 = scmp.le.s32.totalorder 1, %s22
      %p402 = scmp.lt.s32.totalorder %s22, 3
      %p403 = pnand %p401, %p402
      %p404 = pneg %p403
      // Predicated region
      $region53: #{gen_forward.1} parent=5 // pred_check
        _
      $region54: #{gen_forward.1} parent=5 // pred_check_branch
        %406 = sbr.rel (%p403) target = $region56
      $region55: #{gen_forward.1} parent=5 // pred_region
        %s407 = ssub.s32 %s22, 1
        // Predicated region
        $region57: #{gen_forward.1} parent=55 // pred_check
          %p408 = pneg %p69
        $region58: #{gen_forward.1} parent=55 // pred_check_branch
          %410 = sbr.rel (%p408) target = $region60
        $region59: #{gen_forward.1} parent=55 // pred_region
          %412 = dma.done [#allocation3], 49152
        $region60: #{gen_forward.1} parent=55 // pred_fallthru
          _
        // Predicated region
        $region61: #{gen_forward.1} parent=55 // pred_check
          %p413 = pneg %p90
        $region62: #{gen_forward.1} parent=55 // pred_check_branch
          %415 = sbr.rel (%p413) target = $region64
        $region63: #{gen_forward.1} parent=55 // pred_region
          %417 = dma.done [#allocation5], 48
        $region64: #{gen_forward.1} parent=55 // pred_fallthru
          _
        // Predicated region
        $region65: #{gen_forward.1} parent=55 // pred_check
          %p418 = pneg %p111
        $region66: #{gen_forward.1} parent=55 // pred_check_branch
          %420 = sbr.rel (%p418) target = $region68
        $region67: #{gen_forward.1} parent=55 // pred_region
          %422 = dma.done [#allocation5], 24576
        $region68: #{gen_forward.1} parent=55 // pred_fallthru
          _
        // Predicated region
        $region69: #{gen_forward.1} parent=55 // pred_check
          %p423 = pneg %p132
        $region70: #{gen_forward.1} parent=55 // pred_check_branch
          %425 = sbr.rel (%p423) target = $region72
        $region71: #{gen_forward.1} parent=55 // pred_region
          %427 = dma.done [#allocation8], 32
        $region72: #{gen_forward.1} parent=55 // pred_fallthru
          _
        // Predicated region
        $region73: #{gen_forward.1} parent=55 // pred_check
          %p428 = pneg %p153
        $region74: #{gen_forward.1} parent=55 // pred_check_branch
          %430 = sbr.rel (%p428) target = $region76
        $region75: #{gen_forward.1} parent=55 // pred_region
          %432 = dma.done [#allocation8], 8192
        $region76: #{gen_forward.1} parent=55 // pred_fallthru
          _
        // Predicated region
        $region77: #{gen_forward.1} parent=55 // pred_check
          %p433 = pneg %p174
        $region78: #{gen_forward.1} parent=55 // pred_check_branch
          %435 = sbr.rel (%p433) target = $region80
        $region79: #{gen_forward.1} parent=55 // pred_region
          %437 = dma.done [#allocation11], 16
        $region80: #{gen_forward.1} parent=55 // pred_fallthru
          _
        // Predicated region
        $region81: #{gen_forward.1} parent=55 // pred_check
          %p438 = pneg %p195
        $region82: #{gen_forward.1} parent=55 // pred_check_branch
          %440 = sbr.rel (%p438) target = $region84
        $region83: #{gen_forward.1} parent=55 // pred_region
          %442 = dma.done [#allocation11], 1024
        $region84: #{gen_forward.1} parent=55 // pred_fallthru
          _
        // Predicated region
        $region85: #{gen_forward.1} parent=55 // pred_check
          %p443 = pneg %p216
        $region86: #{gen_forward.1} parent=55 // pred_check_branch
          %445 = sbr.rel (%p443) target = $region88
        $region87: #{gen_forward.1} parent=55 // pred_region
          %447 = dma.done [#allocation14], 16
        $region88: #{gen_forward.1} parent=55 // pred_fallthru
          _
        %s448 = smul.u32 2, %s27
        %p449 = scmp.lt.s32.totalorder %s448, 3
        %s450 = scalar_select %p449, %s448, 3
        %s451 = smul.addr %s450, 4
        %s452 = smul.addr %s451, 4
        %s453 = scalar_lea.vmem %s0, %s452
        %p454 = pneg %p48
        %p455 = pneg %p45
        %p456 = pneg %p69
        %p457 = pneg %p66
        %p458 = pneg %p90
        %p459 = pneg %p87
        %p460 = pneg %p111
        %p461 = pneg %p108
        %p462 = pneg %p132
        %p463 = pneg %p129
        %p464 = pneg %p153
        %p465 = pneg %p150
        %p466 = pneg %p174
        %p467 = pneg %p171
        %p468 = pneg %p195
        %p469 = pneg %p192
        %p470 = pneg %p216
        %p471 = pneg %p213
        %p472 = pneg %p242
        %p473 = pneg %p239
        %s474 = smul.u32 8, %s27
        %p475 = scmp.lt.s32.totalorder %s474, 15
        %s476 = scalar_select %p475, %s474, 15
        %s477 = smul.addr %s476, 4
        %s478 = scalar_lea.vmem %s9, %s477
        %p479 = pneg %p268
        %p480 = pneg %p265
        %s481 = smul.u32 8, %s27
        %p482 = scmp.lt.s32.totalorder %s481, 15
        %s483 = scalar_select %p482, %s481, 15
        %s484 = smul.addr %s483, 4
        %s485 = scalar_lea.vmem %s10, %s484
        %s486 = smul.u32 2, %s27
        %p487 = scmp.lt.s32.totalorder %s486, 3
        %s488 = scalar_select %p487, %s486, 3
        %s489 = smul.addr %s488, 4
        %s490 = smul.addr %s489, 4
        %s491 = scalar_lea.vmem %s0, %s490
        %s492 = smul.u32 2, %s27
        %s493 = smul.u32 8, %s27
        %p494 = scmp.lt.s32.totalorder %s493, 15
        %s495 = scalar_select %p494, %s493, 15
        %s496 = smul.addr %s495, 4
        %s497 = scalar_lea.vmem %s9, %s496
        %s498 = smul.u32 8, %s27
        %s499 = smul.u32 8, %s27
        %p500 = scmp.lt.s32.totalorder %s499, 15
        %s501 = scalar_select %p500, %s499, 15
        %s502 = smul.addr %s501, 4
        %s503 = scalar_lea.vmem %s10, %s502
        %s504 = smul.u32 8, %s27
        %v505 = vld [vmem:[%s491] sm:$0xff]
        %v506 = vld [vmem:[%s491 + $0x8] sm:$0xff]
        %v507 = vld [vmem:[%s491 + $0x10] sm:$0xff]
        %v508 = vld [vmem:[%s491 + $0x18] sm:$0xff]
        %v509 = vunpack.c.l.bf16 %v505
        %v510 = vunpack.c.h.bf16 %v505
        %v511 = vunpack.c.l.bf16 %v506
        %v512 = vunpack.c.h.bf16 %v506
        %v513 = vunpack.c.l.bf16 %v507
        %v514 = vunpack.c.h.bf16 %v507
        %v515 = vunpack.c.l.bf16 %v508
        %v516 = vunpack.c.h.bf16 %v508
        %v517 = vmax.f32 %v509, 0.0
        %v518 = vmax.f32 %v510, 0.0
        %v519 = vmax.f32 %v511, 0.0
        %v520 = vmax.f32 %v512, 0.0
        %v521 = vmax.f32 %v513, 0.0
        %v522 = vmax.f32 %v514, 0.0
        %v523 = vmax.f32 %v515, 0.0
        %v524 = vmax.f32 %v516, 0.0
        %v525 = vpack.c.bf16 %v521, %v517
        %v526 = vpack.c.bf16 %v522, %v518
        %v527 = vpack.c.bf16 %v523, %v519
        %v528 = vpack.c.bf16 %v524, %v520
        %v529 = vlaneseq
        %v530 = vshrl.u32 %v529, 7
        %v531 = vadd.s32 %v530, 8
        %vm532 = vcmp.lt.s32.totalorder %v530, 0
        %v533 = vsub.s32 0, %v530
        %v534 = vsel %vm532, %v533, %v530
        %v535 = vshrl.u32 %v534, 3
        %v536 = vand.u32 %v534, 7
        %v537 = vsub.s32 0, %v536
        %v538 = vsel %vm532, %v537, %v536
        %vm539 = vcmp.lt.s32.totalorder %v531, 0
        %v540 = vsub.s32 0, %v531
        %v541 = vsel %vm539, %v540, %v531
        %v542 = vshrl.u32 %v541, 3
        %v543 = vand.u32 %v541, 7
        %v544 = vsub.s32 0, %v543
        %v545 = vsel %vm539, %v544, %v543
        %vm546 = vcmp.ne.s32.totalorder %v538, 0
        %vm547 = vcmp.ne.s32.totalorder %v545, 0
        %vm548 = vcmp.lt.s32.totalorder %v538, 0
        %vm549 = vcmp.lt.s32.totalorder %v545, 0
        %vm550 = vmand %vm548, %vm546
        %vm551 = vmand %vm549, %vm547
        %v552 = vadd.s32 %v538, 8
        %v553 = vadd.s32 %v545, 8
        %v554 = vsel %vm550, %v552, %v538
        %v555 = vsel %vm551, %v553, %v545
        %vm556 = vcmp.ne.s32.totalorder %v554, 0
        %vm557 = vcmp.ne.s32.totalorder %v555, 0
        %v558 = vsel %vm556, 1, 0
        %v559 = vsel %vm557, 1, 0
        %v560 = vcvt.s32.f32 %v558
        %v561 = vcvt.s32.f32 %v559
        %vm562 = vcmp.ne.s32.totalorder %v554, 7
        %vm563 = vcmp.ne.s32.totalorder %v555, 7
        %v564 = vsel %vm562, 1, 0
        %v565 = vsel %vm563, 1, 0
        %v566 = vcvt.s32.f32 %v564
        %v567 = vcvt.s32.f32 %v565
        %v568 = vld [vmem:[#allocation2] sm:$0xff]
        %v569 = vld [vmem:[#allocation2 + $0x8] sm:$0xf]
        %v570 = vld [vmem:[#allocation2 + $0xc] sm:$0xff]
        %v571 = vld [vmem:[#allocation2 + $0x14] sm:$0xf]
        %v572 = vld [vmem:[#allocation2 + $0x18] sm:$0xff]
        %v573 = vld [vmem:[#allocation2 + $0x20] sm:$0xf]
        %v574 = vld [vmem:[#allocation2 + $0x24] sm:$0xff]
        %v575 = vld [vmem:[#allocation2 + $0x2c] sm:$0xf]
        %v576 = vld [vmem:[#allocation2 + $0x30] sm:$0xff]
        %v577 = vld [vmem:[#allocation2 + $0x38] sm:$0xf]
        %v578 = vld [vmem:[#allocation2 + $0x3c] sm:$0xff]
        %v579 = vld [vmem:[#allocation2 + $0x44] sm:$0xf]
        %v580 = vld [vmem:[#allocation2 + $0x48] sm:$0xff]
        %v581 = vld [vmem:[#allocation2 + $0x50] sm:$0xf]
        %v582 = vld [vmem:[#allocation2 + $0x54] sm:$0xff]
        %v583 = vld [vmem:[#allocation2 + $0x5c] sm:$0xf]
        %v584 = vld [vmem:[#allocation2 + $0x60] sm:$0xff]
        %v585 = vld [vmem:[#allocation2 + $0x68] sm:$0xf]
        %v586 = vld [vmem:[#allocation2 + $0x6c] sm:$0xff]
        %v587 = vld [vmem:[#allocation2 + $0x74] sm:$0xf]
        %v588 = vld [vmem:[#allocation2 + $0x78] sm:$0xff]
        %v589 = vld [vmem:[#allocation2 + $0x80] sm:$0xf]
        %v590 = vld [vmem:[#allocation2 + $0x84] sm:$0xff]
        %v591 = vld [vmem:[#allocation2 + $0x8c] sm:$0xf]
        %v592 = vld [vmem:[#allocation2 + $0x90] sm:$0xff]
        %v593 = vld [vmem:[#allocation2 + $0x98] sm:$0xf]
        %v594 = vld [vmem:[#allocation2 + $0x9c] sm:$0xff]
        %v595 = vld [vmem:[#allocation2 + $0xa4] sm:$0xf]
        %v596 = vld [vmem:[#allocation2 + $0xa8] sm:$0xff]
        %v597 = vld [vmem:[#allocation2 + $0xb0] sm:$0xf]
        %v598 = vld [vmem:[#allocation2 + $0xb4] sm:$0xff]
        %v599 = vld [vmem:[#allocation2 + $0xbc] sm:$0xf]
        %v600 = vld [vmem:[#allocation2 + $0xc0] sm:$0xff]
        %v601 = vld [vmem:[#allocation2 + $0xc8] sm:$0xf]
        %v602 = vld [vmem:[#allocation2 + $0xcc] sm:$0xff]
        %v603 = vld [vmem:[#allocation2 + $0xd4] sm:$0xf]
        %v604 = vld [vmem:[#allocation2 + $0xd8] sm:$0xff]
        %v605 = vld [vmem:[#allocation2 + $0xe0] sm:$0xf]
        %v606 = vld [vmem:[#allocation2 + $0xe4] sm:$0xff]
        %v607 = vld [vmem:[#allocation2 + $0xec] sm:$0xf]
        %v608 = vld [vmem:[#allocation2 + $0xf0] sm:$0xff]
        %v609 = vld [vmem:[#allocation2 + $0xf8] sm:$0xf]
        %v610 = vld [vmem:[#allocation2 + $0xfc] sm:$0xff]
        %v611 = vld [vmem:[#allocation2 + $0x104] sm:$0xf]
        %v612 = vld [vmem:[#allocation2 + $0x108] sm:$0xff]
        %v613 = vld [vmem:[#allocation2 + $0x110] sm:$0xf]
        %v614 = vld [vmem:[#allocation2 + $0x114] sm:$0xff]
        %v615 = vld [vmem:[#allocation2 + $0x11c] sm:$0xf]
        %v616 = vld [vmem:[#allocation2 + $0x120] sm:$0xff]
        %v617 = vld [vmem:[#allocation2 + $0x128] sm:$0xf]
        %v618 = vld [vmem:[#allocation2 + $0x12c] sm:$0xff]
        %v619 = vld [vmem:[#allocation2 + $0x134] sm:$0xf]
        %v620 = vld [vmem:[#allocation2 + $0x138] sm:$0xff]
        %v621 = vld [vmem:[#allocation2 + $0x140] sm:$0xf]
        %v622 = vld [vmem:[#allocation2 + $0x144] sm:$0xff]
        %v623 = vld [vmem:[#allocation2 + $0x14c] sm:$0xf]
        %v624 = vld [vmem:[#allocation2 + $0x150] sm:$0xff]
        %v625 = vld [vmem:[#allocation2 + $0x158] sm:$0xf]
        %v626 = vld [vmem:[#allocation2 + $0x15c] sm:$0xff]
        %v627 = vld [vmem:[#allocation2 + $0x164] sm:$0xf]
        %v628 = vld [vmem:[#allocation2 + $0x168] sm:$0xff]
        %v629 = vld [vmem:[#allocation2 + $0x170] sm:$0xf]
        %v630 = vld [vmem:[#allocation2 + $0x174] sm:$0xff]
        %v631 = vld [vmem:[#allocation2 + $0x17c] sm:$0xf]
        %v632 = vld [vmem:[#allocation2 + $0x180] sm:$0xff]
        %v633 = vld [vmem:[#allocation2 + $0x188] sm:$0xf]
        %v634 = vld [vmem:[#allocation2 + $0x18c] sm:$0xff]
        %v635 = vld [vmem:[#allocation2 + $0x194] sm:$0xf]
        %v636 = vld [vmem:[#allocation2 + $0x198] sm:$0xff]
        %v637 = vld [vmem:[#allocation2 + $0x1a0] sm:$0xf]
        %v638 = vld [vmem:[#allocation2 + $0x1a4] sm:$0xff]
        %v639 = vld [vmem:[#allocation2 + $0x1ac] sm:$0xf]
        %v640 = vld [vmem:[#allocation2 + $0x1b0] sm:$0xff]
        %v641 = vld [vmem:[#allocation2 + $0x1b8] sm:$0xf]
        %v642 = vld [vmem:[#allocation2 + $0x1bc] sm:$0xff]
        %v643 = vld [vmem:[#allocation2 + $0x1c4] sm:$0xf]
        %v644 = vld [vmem:[#allocation2 + $0x1c8] sm:$0xff]
        %v645 = vld [vmem:[#allocation2 + $0x1d0] sm:$0xf]
        %v646 = vld [vmem:[#allocation2 + $0x1d4] sm:$0xff]
        %v647 = vld [vmem:[#allocation2 + $0x1dc] sm:$0xf]
        %v648 = vld [vmem:[#allocation2 + $0x1e0] sm:$0xff]
        %v649 = vld [vmem:[#allocation2 + $0x1e8] sm:$0xf]
        %v650 = vld [vmem:[#allocation2 + $0x1ec] sm:$0xff]
        %v651 = vld [vmem:[#allocation2 + $0x1f4] sm:$0xf]
        %v652 = vld [vmem:[#allocation2 + $0x1f8] sm:$0xff]
        %v653 = vld [vmem:[#allocation2 + $0x200] sm:$0xf]
        %v654 = vld [vmem:[#allocation2 + $0x204] sm:$0xff]
        %v655 = vld [vmem:[#allocation2 + $0x20c] sm:$0xf]
        %v656 = vld [vmem:[#allocation2 + $0x210] sm:$0xff]
        %v657 = vld [vmem:[#allocation2 + $0x218] sm:$0xf]
        %v658 = vld [vmem:[#allocation2 + $0x21c] sm:$0xff]
        %v659 = vld [vmem:[#allocation2 + $0x224] sm:$0xf]
        %v660 = vld [vmem:[#allocation2 + $0x228] sm:$0xff]
        %v661 = vld [vmem:[#allocation2 + $0x230] sm:$0xf]
        %v662 = vld [vmem:[#allocation2 + $0x234] sm:$0xff]
        %v663 = vld [vmem:[#allocation2 + $0x23c] sm:$0xf]
        %v664 = vld [vmem:[#allocation2 + $0x240] sm:$0xff]
        %v665 = vld [vmem:[#allocation2 + $0x248] sm:$0xf]
        %v666 = vld [vmem:[#allocation2 + $0x24c] sm:$0xff]
        %v667 = vld [vmem:[#allocation2 + $0x254] sm:$0xf]
        %v668 = vld [vmem:[#allocation2 + $0x258] sm:$0xff]
        %v669 = vld [vmem:[#allocation2 + $0x260] sm:$0xf]
        %v670 = vld [vmem:[#allocation2 + $0x264] sm:$0xff]
        %v671 = vld [vmem:[#allocation2 + $0x26c] sm:$0xf]
        %v672 = vld [vmem:[#allocation2 + $0x270] sm:$0xff]
        %v673 = vld [vmem:[#allocation2 + $0x278] sm:$0xf]
        %v674 = vld [vmem:[#allocation2 + $0x27c] sm:$0xff]
        %v675 = vld [vmem:[#allocation2 + $0x284] sm:$0xf]
        %v676 = vld [vmem:[#allocation2 + $0x288] sm:$0xff]
        %v677 = vld [vmem:[#allocation2 + $0x290] sm:$0xf]
        %v678 = vld [vmem:[#allocation2 + $0x294] sm:$0xff]
        %v679 = vld [vmem:[#allocation2 + $0x29c] sm:$0xf]
        %v680 = vld [vmem:[#allocation2 + $0x2a0] sm:$0xff]
        %v681 = vld [vmem:[#allocation2 + $0x2a8] sm:$0xf]
        %v682 = vld [vmem:[#allocation2 + $0x2ac] sm:$0xff]
        %v683 = vld [vmem:[#allocation2 + $0x2b4] sm:$0xf]
        %v684 = vld [vmem:[#allocation2 + $0x2b8] sm:$0xff]
        %v685 = vld [vmem:[#allocation2 + $0x2c0] sm:$0xf]
        %v686 = vld [vmem:[#allocation2 + $0x2c4] sm:$0xff]
        %v687 = vld [vmem:[#allocation2 + $0x2cc] sm:$0xf]
        %v688 = vld [vmem:[#allocation2 + $0x2d0] sm:$0xff]
        %v689 = vld [vmem:[#allocation2 + $0x2d8] sm:$0xf]
        %v690 = vld [vmem:[#allocation2 + $0x2dc] sm:$0xff]
        %v691 = vld [vmem:[#allocation2 + $0x2e4] sm:$0xf]
        %v692 = vld [vmem:[#allocation2 + $0x2e8] sm:$0xff]
        %v693 = vld [vmem:[#allocation2 + $0x2f0] sm:$0xf]
        %v694 = vld [vmem:[#allocation2 + $0x2f4] sm:$0xff]
        %v695 = vld [vmem:[#allocation2 + $0x2fc] sm:$0xf]
        %v824 = vunpack.c.l.b16 %v568
        %v825 = vunpack.c.h.b16 %v568
        %v826 = vunpack.c.l.b16 %v569
        %v827 = vunpack.c.l.b16 %v570
        %v828 = vunpack.c.h.b16 %v570
        %v829 = vunpack.c.l.b16 %v571
        %v830 = vunpack.c.l.b16 %v572
        %v831 = vunpack.c.h.b16 %v572
        %v832 = vunpack.c.l.b16 %v573
        %v833 = vunpack.c.l.b16 %v574
        %v834 = vunpack.c.h.b16 %v574
        %v835 = vunpack.c.l.b16 %v575
        %v836 = vunpack.c.l.b16 %v576
        %v837 = vunpack.c.h.b16 %v576
        %v838 = vunpack.c.l.b16 %v577
        %v839 = vunpack.c.l.b16 %v578
        %v840 = vunpack.c.h.b16 %v578
        %v841 = vunpack.c.l.b16 %v579
        %v842 = vunpack.c.l.b16 %v580
        %v843 = vunpack.c.h.b16 %v580
        %v844 = vunpack.c.l.b16 %v581
        %v845 = vunpack.c.l.b16 %v582
        %v846 = vunpack.c.h.b16 %v582
        %v847 = vunpack.c.l.b16 %v583
        %v848 = vunpack.c.l.b16 %v584
        %v849 = vunpack.c.h.b16 %v584
        %v850 = vunpack.c.l.b16 %v585
        %v851 = vunpack.c.l.b16 %v586
        %v852 = vunpack.c.h.b16 %v586
        %v853 = vunpack.c.l.b16 %v587
        %v854 = vunpack.c.l.b16 %v588
        %v855 = vunpack.c.h.b16 %v588
        %v856 = vunpack.c.l.b16 %v589
        %v857 = vunpack.c.l.b16 %v590
        %v858 = vunpack.c.h.b16 %v590
        %v859 = vunpack.c.l.b16 %v591
        %v860 = vunpack.c.l.b16 %v592
        %v861 = vunpack.c.h.b16 %v592
        %v862 = vunpack.c.l.b16 %v593
        %v863 = vunpack.c.l.b16 %v594
        %v864 = vunpack.c.h.b16 %v594
        %v865 = vunpack.c.l.b16 %v595
        %v866 = vunpack.c.l.b16 %v596
        %v867 = vunpack.c.h.b16 %v596
        %v868 = vunpack.c.l.b16 %v597
        %v869 = vunpack.c.l.b16 %v598
        %v870 = vunpack.c.h.b16 %v598
        %v871 = vunpack.c.l.b16 %v599
        %v872 = vunpack.c.l.b16 %v600
        %v873 = vunpack.c.h.b16 %v600
        %v874 = vunpack.c.l.b16 %v601
        %v875 = vunpack.c.l.b16 %v602
        %v876 = vunpack.c.h.b16 %v602
        %v877 = vunpack.c.l.b16 %v603
        %v878 = vunpack.c.l.b16 %v604
        %v879 = vunpack.c.h.b16 %v604
        %v880 = vunpack.c.l.b16 %v605
        %v881 = vunpack.c.l.b16 %v606
        %v882 = vunpack.c.h.b16 %v606
        %v883 = vunpack.c.l.b16 %v607
        %v884 = vunpack.c.l.b16 %v608
        %v885 = vunpack.c.h.b16 %v608
        %v886 = vunpack.c.l.b16 %v609
        %v887 = vunpack.c.l.b16 %v610
        %v888 = vunpack.c.h.b16 %v610
        %v889 = vunpack.c.l.b16 %v611
        %v890 = vunpack.c.l.b16 %v612
        %v891 = vunpack.c.h.b16 %v612
        %v892 = vunpack.c.l.b16 %v613
        %v893 = vunpack.c.l.b16 %v614
        %v894 = vunpack.c.h.b16 %v614
        %v895 = vunpack.c.l.b16 %v615
        %v896 = vunpack.c.l.b16 %v616
        %v897 = vunpack.c.h.b16 %v616
        %v898 = vunpack.c.l.b16 %v617
        %v899 = vunpack.c.l.b16 %v618
        %v900 = vunpack.c.h.b16 %v618
        %v901 = vunpack.c.l.b16 %v619
        %v902 = vunpack.c.l.b16 %v620
        %v903 = vunpack.c.h.b16 %v620
        %v904 = vunpack.c.l.b16 %v621
        %v905 = vunpack.c.l.b16 %v622
        %v906 = vunpack.c.h.b16 %v622
        %v907 = vunpack.c.l.b16 %v623
        %v908 = vunpack.c.l.b16 %v624
        %v909 = vunpack.c.h.b16 %v624
        %v910 = vunpack.c.l.b16 %v625
        %v911 = vunpack.c.l.b16 %v626
        %v912 = vunpack.c.h.b16 %v626
        %v913 = vunpack.c.l.b16 %v627
        %v914 = vunpack.c.l.b16 %v628
        %v915 = vunpack.c.h.b16 %v628
        %v916 = vunpack.c.l.b16 %v629
        %v917 = vunpack.c.l.b16 %v630
        %v918 = vunpack.c.h.b16 %v630
        %v919 = vunpack.c.l.b16 %v631
        %v920 = vunpack.c.l.b16 %v632
        %v921 = vunpack.c.h.b16 %v632
        %v922 = vunpack.c.l.b16 %v633
        %v923 = vunpack.c.l.b16 %v634
        %v924 = vunpack.c.h.b16 %v634
        %v925 = vunpack.c.l.b16 %v635
        %v926 = vunpack.c.l.b16 %v636
        %v927 = vunpack.c.h.b16 %v636
        %v928 = vunpack.c.l.b16 %v637
        %v929 = vunpack.c.l.b16 %v638
        %v930 = vunpack.c.h.b16 %v638
        %v931 = vunpack.c.l.b16 %v639
        %v932 = vunpack.c.l.b16 %v640
        %v933 = vunpack.c.h.b16 %v640
        %v934 = vunpack.c.l.b16 %v641
        %v935 = vunpack.c.l.b16 %v642
        %v936 = vunpack.c.h.b16 %v642
        %v937 = vunpack.c.l.b16 %v643
        %v938 = vunpack.c.l.b16 %v644
        %v939 = vunpack.c.h.b16 %v644
        %v940 = vunpack.c.l.b16 %v645
        %v941 = vunpack.c.l.b16 %v646
        %v942 = vunpack.c.h.b16 %v646
        %v943 = vunpack.c.l.b16 %v647
        %v944 = vunpack.c.l.b16 %v648
        %v945 = vunpack.c.h.b16 %v648
        %v946 = vunpack.c.l.b16 %v649
        %v947 = vunpack.c.l.b16 %v650
        %v948 = vunpack.c.h.b16 %v650
        %v949 = vunpack.c.l.b16 %v651
        %v950 = vunpack.c.l.b16 %v652
        %v951 = vunpack.c.h.b16 %v652
        %v952 = vunpack.c.l.b16 %v653
        %v953 = vunpack.c.l.b16 %v654
        %v954 = vunpack.c.h.b16 %v654
        %v955 = vunpack.c.l.b16 %v655
        %v956 = vunpack.c.l.b16 %v656
        %v957 = vunpack.c.h.b16 %v656
        %v958 = vunpack.c.l.b16 %v657
        %v959 = vunpack.c.l.b16 %v658
        %v960 = vunpack.c.h.b16 %v658
        %v961 = vunpack.c.l.b16 %v659
        %v962 = vunpack.c.l.b16 %v660
        %v963 = vunpack.c.h.b16 %v660
        %v964 = vunpack.c.l.b16 %v661
        %v965 = vunpack.c.l.b16 %v662
        %v966 = vunpack.c.h.b16 %v662
        %v967 = vunpack.c.l.b16 %v663
        %v968 = vunpack.c.l.b16 %v664
        %v969 = vunpack.c.h.b16 %v664
        %v970 = vunpack.c.l.b16 %v665
        %v971 = vunpack.c.l.b16 %v666
        %v972 = vunpack.c.h.b16 %v666
        %v973 = vunpack.c.l.b16 %v667
        %v974 = vunpack.c.l.b16 %v668
        %v975 = vunpack.c.h.b16 %v668
        %v976 = vunpack.c.l.b16 %v669
        %v977 = vunpack.c.l.b16 %v670
        %v978 = vunpack.c.h.b16 %v670
        %v979 = vunpack.c.l.b16 %v671
        %v980 = vunpack.c.l.b16 %v672
        %v981 = vunpack.c.h.b16 %v672
        %v982 = vunpack.c.l.b16 %v673
        %v983 = vunpack.c.l.b16 %v674
        %v984 = vunpack.c.h.b16 %v674
        %v985 = vunpack.c.l.b16 %v675
        %v986 = vunpack.c.l.b16 %v676
        %v987 = vunpack.c.h.b16 %v676
        %v988 = vunpack.c.l.b16 %v677
        %v989 = vunpack.c.l.b16 %v678
        %v990 = vunpack.c.h.b16 %v678
        %v991 = vunpack.c.l.b16 %v679
        %v992 = vunpack.c.l.b16 %v680
        %v993 = vunpack.c.h.b16 %v680
        %v994 = vunpack.c.l.b16 %v681
        %v995 = vunpack.c.l.b16 %v682
        %v996 = vunpack.c.h.b16 %v682
        %v997 = vunpack.c.l.b16 %v683
        %v998 = vunpack.c.l.b16 %v684
        %v999 = vunpack.c.h.b16 %v684
        %v1000 = vunpack.c.l.b16 %v685
        %v1001 = vunpack.c.l.b16 %v686
        %v1002 = vunpack.c.h.b16 %v686
        %v1003 = vunpack.c.l.b16 %v687
        %v1004 = vunpack.c.l.b16 %v688
        %v1005 = vunpack.c.h.b16 %v688
        %v1006 = vunpack.c.l.b16 %v689
        %v1007 = vunpack.c.l.b16 %v690
        %v1008 = vunpack.c.h.b16 %v690
        %v1009 = vunpack.c.l.b16 %v691
        %v1010 = vunpack.c.l.b16 %v692
        %v1011 = vunpack.c.h.b16 %v692
        %v1012 = vunpack.c.l.b16 %v693
        %v1013 = vunpack.c.l.b16 %v694
        %v1014 = vunpack.c.h.b16 %v694
        %v1015 = vunpack.c.l.b16 %v695
        %v1016 = vpack.c.b16 %v827, %v824
        %v1017 = vpack.c.b16 %v828, %v825
        %v1018 = vpack.c.b16 %v829, %v826
        %v1019 = vpack.c.b16 %v833, %v830
        %v1020 = vpack.c.b16 %v834, %v831
        %v1021 = vpack.c.b16 %v835, %v832
        %v1022 = vpack.c.b16 %v839, %v836
        %v1023 = vpack.c.b16 %v840, %v837
        %v1024 = vpack.c.b16 %v841, %v838
        %v1025 = vpack.c.b16 %v845, %v842
        %v1026 = vpack.c.b16 %v846, %v843
        %v1027 = vpack.c.b16 %v847, %v844
        %v1028 = vpack.c.b16 %v851, %v848
        %v1029 = vpack.c.b16 %v852, %v849
        %v1030 = vpack.c.b16 %v853, %v850
        %v1031 = vpack.c.b16 %v857, %v854
        %v1032 = vpack.c.b16 %v858, %v855
        %v1033 = vpack.c.b16 %v859, %v856
        %v1034 = vpack.c.b16 %v863, %v860
        %v1035 = vpack.c.b16 %v864, %v861
        %v1036 = vpack.c.b16 %v865, %v862
        %v1037 = vpack.c.b16 %v869, %v866
        %v1038 = vpack.c.b16 %v870, %v867
        %v1039 = vpack.c.b16 %v871, %v868
        %v1040 = vpack.c.b16 %v875, %v872
        %v1041 = vpack.c.b16 %v876, %v873
        %v1042 = vpack.c.b16 %v877, %v874
        %v1043 = vpack.c.b16 %v881, %v878
        %v1044 = vpack.c.b16 %v882, %v879
        %v1045 = vpack.c.b16 %v883, %v880
        %v1046 = vpack.c.b16 %v887, %v884
        %v1047 = vpack.c.b16 %v888, %v885
        %v1048 = vpack.c.b16 %v889, %v886
        %v1049 = vpack.c.b16 %v893, %v890
        %v1050 = vpack.c.b16 %v894, %v891
        %v1051 = vpack.c.b16 %v895, %v892
        %v1052 = vpack.c.b16 %v899, %v896
        %v1053 = vpack.c.b16 %v900, %v897
        %v1054 = vpack.c.b16 %v901, %v898
        %v1055 = vpack.c.b16 %v905, %v902
        %v1056 = vpack.c.b16 %v906, %v903
        %v1057 = vpack.c.b16 %v907, %v904
        %v1058 = vpack.c.b16 %v911, %v908
        %v1059 = vpack.c.b16 %v912, %v909
        %v1060 = vpack.c.b16 %v913, %v910
        %v1061 = vpack.c.b16 %v917, %v914
        %v1062 = vpack.c.b16 %v918, %v915
        %v1063 = vpack.c.b16 %v919, %v916
        %v1064 = vpack.c.b16 %v923, %v920
        %v1065 = vpack.c.b16 %v924, %v921
        %v1066 = vpack.c.b16 %v925, %v922
        %v1067 = vpack.c.b16 %v929, %v926
        %v1068 = vpack.c.b16 %v930, %v927
        %v1069 = vpack.c.b16 %v931, %v928
        %v1070 = vpack.c.b16 %v935, %v932
        %v1071 = vpack.c.b16 %v936, %v933
        %v1072 = vpack.c.b16 %v937, %v934
        %v1073 = vpack.c.b16 %v941, %v938
        %v1074 = vpack.c.b16 %v942, %v939
        %v1075 = vpack.c.b16 %v943, %v940
        %v1076 = vpack.c.b16 %v947, %v944
        %v1077 = vpack.c.b16 %v948, %v945
        %v1078 = vpack.c.b16 %v949, %v946
        %v1079 = vpack.c.b16 %v953, %v950
        %v1080 = vpack.c.b16 %v954, %v951
        %v1081 = vpack.c.b16 %v955, %v952
        %v1082 = vpack.c.b16 %v959, %v956
        %v1083 = vpack.c.b16 %v960, %v957
        %v1084 = vpack.c.b16 %v961, %v958
        %v1085 = vpack.c.b16 %v965, %v962
        %v1086 = vpack.c.b16 %v966, %v963
        %v1087 = vpack.c.b16 %v967, %v964
        %v1088 = vpack.c.b16 %v971, %v968
        %v1089 = vpack.c.b16 %v972, %v969
        %v1090 = vpack.c.b16 %v973, %v970
        %v1091 = vpack.c.b16 %v977, %v974
        %v1092 = vpack.c.b16 %v978, %v975
        %v1093 = vpack.c.b16 %v979, %v976
        %v1094 = vpack.c.b16 %v983, %v980
        %v1095 = vpack.c.b16 %v984, %v981
        %v1096 = vpack.c.b16 %v985, %v982
        %v1097 = vpack.c.b16 %v989, %v986
        %v1098 = vpack.c.b16 %v990, %v987
        %v1099 = vpack.c.b16 %v991, %v988
        %v1100 = vpack.c.b16 %v995, %v992
        %v1101 = vpack.c.b16 %v996, %v993
        %v1102 = vpack.c.b16 %v997, %v994
        %v1103 = vpack.c.b16 %v1001, %v998
        %v1104 = vpack.c.b16 %v1002, %v999
        %v1105 = vpack.c.b16 %v1003, %v1000
        %v1106 = vpack.c.b16 %v1007, %v1004
        %v1107 = vpack.c.b16 %v1008, %v1005
        %v1108 = vpack.c.b16 %v1009, %v1006
        %v1109 = vpack.c.b16 %v1013, %v1010
        %v1110 = vpack.c.b16 %v1014, %v1011
        %v1111 = vpack.c.b16 %v1015, %v1012
        %1208 = vmatpush.bf16.msra.mxu0 %v1037
        %1209 = vmatpush.bf16.msra.mxu0 %v1034
        %1210 = vmatpush.bf16.msra.mxu0 %v1031
        %1211 = vmatpush.bf16.msra.mxu0 %v1028
        %1212 = vmatpush.bf16.msra.mxu0 %v1025
        %1213 = vmatpush.bf16.msra.mxu0 %v1022
        %1214 = vmatpush.bf16.msra.mxu0 %v1019
        %1215 = vmatpush.bf16.msra.mxu0 %v1016
        %1216 = vmatmul.bf16.gmra.mxu0 %v525
        %v1217 = vpop.f32.mrf.mxu0
        %v1218 = vadd.f32 0.0, %v1217
        %v1219 = vpop.f32.mrf.mxu0
        %v1220 = vadd.f32 0.0, %v1219
        %1221 = vdwg.mxu0
        %1222 = vmatpush.bf16.msra.mxu0 %v1061
        %1223 = vmatpush.bf16.msra.mxu0 %v1058
        %1224 = vmatpush.bf16.msra.mxu0 %v1055
        %1225 = vmatpush.bf16.msra.mxu0 %v1052
        %1226 = vmatpush.bf16.msra.mxu0 %v1049
        %1227 = vmatpush.bf16.msra.mxu0 %v1046
        %1228 = vmatpush.bf16.msra.mxu0 %v1043
        %1229 = vmatpush.bf16.msra.mxu0 %v1040
        %1230 = vmatmul.bf16.gmra.mxu0 %v526
        %v1231 = vpop.f32.mrf.mxu0
        %v1232 = vadd.f32 %v1218, %v1231
        %v1233 = vpop.f32.mrf.mxu0
        %v1234 = vadd.f32 %v1220, %v1233
        %1235 = vdwg.mxu0
        %1236 = vmatpush.bf16.msra.mxu0 %v1085
        %1237 = vmatpush.bf16.msra.mxu0 %v1082
        %1238 = vmatpush.bf16.msra.mxu0 %v1079
        %1239 = vmatpush.bf16.msra.mxu0 %v1076
        %1240 = vmatpush.bf16.msra.mxu0 %v1073
        %1241 = vmatpush.bf16.msra.mxu0 %v1070
        %1242 = vmatpush.bf16.msra.mxu0 %v1067
        %1243 = vmatpush.bf16.msra.mxu0 %v1064
        %1244 = vmatmul.bf16.gmra.mxu0 %v527
        %v1245 = vpop.f32.mrf.mxu0
        %v1246 = vadd.f32 %v1232, %v1245
        %v1247 = vpop.f32.mrf.mxu0
        %v1248 = vadd.f32 %v1234, %v1247
        %1249 = vdwg.mxu0
        %1250 = vmatpush.bf16.msra.mxu0 %v1109
        %1251 = vmatpush.bf16.msra.mxu0 %v1106
        %1252 = vmatpush.bf16.msra.mxu0 %v1103
        %1253 = vmatpush.bf16.msra.mxu0 %v1100
        %1254 = vmatpush.bf16.msra.mxu0 %v1097
        %1255 = vmatpush.bf16.msra.mxu0 %v1094
        %1256 = vmatpush.bf16.msra.mxu0 %v1091
        %1257 = vmatpush.bf16.msra.mxu0 %v1088
        %1258 = vmatmul.bf16.gmra.mxu0 %v528
        %v1259 = vpop.f32.mrf.mxu0
        %v1260 = vadd.f32 %v1246, %v1259
        %v1261 = vpop.f32.mrf.mxu0
        %v1262 = vadd.f32 %v1248, %v1261
        %1263 = vdwg.mxu0
        %1264 = vmatpush.bf16.msra.mxu0 %v1038
        %1265 = vmatpush.bf16.msra.mxu0 %v1035
        %1266 = vmatpush.bf16.msra.mxu0 %v1032
        %1267 = vmatpush.bf16.msra.mxu0 %v1029
        %1268 = vmatpush.bf16.msra.mxu0 %v1026
        %1269 = vmatpush.bf16.msra.mxu0 %v1023
        %1270 = vmatpush.bf16.msra.mxu0 %v1020
        %1271 = vmatpush.bf16.msra.mxu0 %v1017
        %1272 = vmatmul.bf16.gmra.mxu0 %v525
        %v1273 = vpop.f32.mrf.mxu0
        %v1274 = vadd.f32 0.0, %v1273
        %v1275 = vpop.f32.mrf.mxu0
        %v1276 = vadd.f32 0.0, %v1275
        %1277 = vdwg.mxu0
        %1278 = vmatpush.bf16.msra.mxu0 %v1062
        %1279 = vmatpush.bf16.msra.mxu0 %v1059
        %1280 = vmatpush.bf16.msra.mxu0 %v1056
        %1281 = vmatpush.bf16.msra.mxu0 %v1053
        %1282 = vmatpush.bf16.msra.mxu0 %v1050
        %1283 = vmatpush.bf16.msra.mxu0 %v1047
        %1284 = vmatpush.bf16.msra.mxu0 %v1044
        %1285 = vmatpush.bf16.msra.mxu0 %v1041
        %1286 = vmatmul.bf16.gmra.mxu0 %v526
        %v1287 = vpop.f32.mrf.mxu0
        %v1288 = vadd.f32 %v1274, %v1287
        %v1289 = vpop.f32.mrf.mxu0
        %v1290 = vadd.f32 %v1276, %v1289
        %1291 = vdwg.mxu0
        %1292 = vmatpush.bf16.msra.mxu0 %v1086
        %1293 = vmatpush.bf16.msra.mxu0 %v1083
        %1294 = vmatpush.bf16.msra.mxu0 %v1080
        %1295 = vmatpush.bf16.msra.mxu0 %v1077
        %1296 = vmatpush.bf16.msra.mxu0 %v1074
        %1297 = vmatpush.bf16.msra.mxu0 %v1071
        %1298 = vmatpush.bf16.msra.mxu0 %v1068
        %1299 = vmatpush.bf16.msra.mxu0 %v1065
        %1300 = vmatmul.bf16.gmra.mxu0 %v527
        %v1301 = vpop.f32.mrf.mxu0
        %v1302 = vadd.f32 %v1288, %v1301
        %v1303 = vpop.f32.mrf.mxu0
        %v1304 = vadd.f32 %v1290, %v1303
        %1305 = vdwg.mxu0
        %1306 = vmatpush.bf16.msra.mxu0 %v1110
        %1307 = vmatpush.bf16.msra.mxu0 %v1107
        %1308 = vmatpush.bf16.msra.mxu0 %v1104
        %1309 = vmatpush.bf16.msra.mxu0 %v1101
        %1310 = vmatpush.bf16.msra.mxu0 %v1098
        %1311 = vmatpush.bf16.msra.mxu0 %v1095
        %1312 = vmatpush.bf16.msra.mxu0 %v1092
        %1313 = vmatpush.bf16.msra.mxu0 %v1089
        %1314 = vmatmul.bf16.gmra.mxu0 %v528
        %v1315 = vpop.f32.mrf.mxu0
        %v1316 = vadd.f32 %v1302, %v1315
        %v1317 = vpop.f32.mrf.mxu0
        %v1318 = vadd.f32 %v1304, %v1317
        %1319 = vdwg.mxu0
        %1320 = vmatpush.bf16.msra.mxu0 %v1039
        %1321 = vmatpush.bf16.msra.mxu0 %v1036
        %1322 = vmatpush.bf16.msra.mxu0 %v1033
        %1323 = vmatpush.bf16.msra.mxu0 %v1030
        %1324 = vmatpush.bf16.msra.mxu0 %v1027
        %1325 = vmatpush.bf16.msra.mxu0 %v1024
        %1326 = vmatpush.bf16.msra.mxu0 %v1021
        %1327 = vmatpush.bf16.msra.mxu0 %v1018
        %1328 = vmatmul.bf16.gmra.mxu0 %v525
        %v1329 = vpop.f32.mrf.mxu0
        %v1330 = vadd.f32 0.0, %v1329
        %v1331 = vpop.f32.mrf.mxu0
        %v1332 = vadd.f32 0.0, %v1331
        %1333 = vdwg.mxu0
        %1334 = vmatpush.bf16.msra.mxu0 %v1063
        %1335 = vmatpush.bf16.msra.mxu0 %v1060
        %1336 = vmatpush.bf16.msra.mxu0 %v1057
        %1337 = vmatpush.bf16.msra.mxu0 %v1054
        %1338 = vmatpush.bf16.msra.mxu0 %v1051
        %1339 = vmatpush.bf16.msra.mxu0 %v1048
        %1340 = vmatpush.bf16.msra.mxu0 %v1045
        %1341 = vmatpush.bf16.msra.mxu0 %v1042
        %1342 = vmatmul.bf16.gmra.mxu0 %v526
        %v1343 = vpop.f32.mrf.mxu0
        %v1344 = vadd.f32 %v1330, %v1343
        %v1345 = vpop.f32.mrf.mxu0
        %v1346 = vadd.f32 %v1332, %v1345
        %1347 = vdwg.mxu0
        %1348 = vmatpush.bf16.msra.mxu0 %v1087
        %1349 = vmatpush.bf16.msra.mxu0 %v1084
        %1350 = vmatpush.bf16.msra.mxu0 %v1081
        %1351 = vmatpush.bf16.msra.mxu0 %v1078
        %1352 = vmatpush.bf16.msra.mxu0 %v1075
        %1353 = vmatpush.bf16.msra.mxu0 %v1072
        %1354 = vmatpush.bf16.msra.mxu0 %v1069
        %1355 = vmatpush.bf16.msra.mxu0 %v1066
        %1356 = vmatmul.bf16.gmra.mxu0 %v527
        %v1357 = vpop.f32.mrf.mxu0
        %v1358 = vadd.f32 %v1344, %v1357
        %v1359 = vpop.f32.mrf.mxu0
        %v1360 = vadd.f32 %v1346, %v1359
        %1361 = vdwg.mxu0
        %1362 = vmatpush.bf16.msra.mxu0 %v1111
        %1363 = vmatpush.bf16.msra.mxu0 %v1108
        %1364 = vmatpush.bf16.msra.mxu0 %v1105
        %1365 = vmatpush.bf16.msra.mxu0 %v1102
        %1366 = vmatpush.bf16.msra.mxu0 %v1099
        %1367 = vmatpush.bf16.msra.mxu0 %v1096
        %1368 = vmatpush.bf16.msra.mxu0 %v1093
        %1369 = vmatpush.bf16.msra.mxu0 %v1090
        %1370 = vmatmul.bf16.gmra.mxu0 %v528
        %v1371 = vpop.f32.mrf.mxu0
        %v1372 = vadd.f32 %v1358, %v1371
        %v1373 = vpop.f32.mrf.mxu0
        %v1374 = vadd.f32 %v1360, %v1373
        %1375 = vdwg.mxu0
        %s1376 = scalar_lea.vmem [#allocation2], 768
        %v1377 = vld [vmem:[%s1376] sm:$0xff]
        %v1378 = vld [vmem:[%s1376 + $0x8] sm:$0xf]
        %v1379 = vld [vmem:[%s1376 + $0xc] sm:$0xff]
        %v1380 = vld [vmem:[%s1376 + $0x14] sm:$0xf]
        %v1381 = vld [vmem:[%s1376 + $0x18] sm:$0xff]
        %v1382 = vld [vmem:[%s1376 + $0x20] sm:$0xf]
        %v1383 = vld [vmem:[%s1376 + $0x24] sm:$0xff]
        %v1384 = vld [vmem:[%s1376 + $0x2c] sm:$0xf]
        %v1385 = vld [vmem:[%s1376 + $0x30] sm:$0xff]
        %v1386 = vld [vmem:[%s1376 + $0x38] sm:$0xf]
        %v1387 = vld [vmem:[%s1376 + $0x3c] sm:$0xff]
        %v1388 = vld [vmem:[%s1376 + $0x44] sm:$0xf]
        %v1389 = vld [vmem:[%s1376 + $0x48] sm:$0xff]
        %v1390 = vld [vmem:[%s1376 + $0x50] sm:$0xf]
        %v1391 = vld [vmem:[%s1376 + $0x54] sm:$0xff]
        %v1392 = vld [vmem:[%s1376 + $0x5c] sm:$0xf]
        %v1393 = vld [vmem:[%s1376 + $0x60] sm:$0xff]
        %v1394 = vld [vmem:[%s1376 + $0x68] sm:$0xf]
        %v1395 = vld [vmem:[%s1376 + $0x6c] sm:$0xff]
        %v1396 = vld [vmem:[%s1376 + $0x74] sm:$0xf]
        %v1397 = vld [vmem:[%s1376 + $0x78] sm:$0xff]
        %v1398 = vld [vmem:[%s1376 + $0x80] sm:$0xf]
        %v1399 = vld [vmem:[%s1376 + $0x84] sm:$0xff]
        %v1400 = vld [vmem:[%s1376 + $0x8c] sm:$0xf]
        %v1401 = vld [vmem:[%s1376 + $0x90] sm:$0xff]
        %v1402 = vld [vmem:[%s1376 + $0x98] sm:$0xf]
        %v1403 = vld [vmem:[%s1376 + $0x9c] sm:$0xff]
        %v1404 = vld [vmem:[%s1376 + $0xa4] sm:$0xf]
        %v1405 = vld [vmem:[%s1376 + $0xa8] sm:$0xff]
        %v1406 = vld [vmem:[%s1376 + $0xb0] sm:$0xf]
        %v1407 = vld [vmem:[%s1376 + $0xb4] sm:$0xff]
        %v1408 = vld [vmem:[%s1376 + $0xbc] sm:$0xf]
        %v1409 = vld [vmem:[%s1376 + $0xc0] sm:$0xff]
        %v1410 = vld [vmem:[%s1376 + $0xc8] sm:$0xf]
        %v1411 = vld [vmem:[%s1376 + $0xcc] sm:$0xff]
        %v1412 = vld [vmem:[%s1376 + $0xd4] sm:$0xf]
        %v1413 = vld [vmem:[%s1376 + $0xd8] sm:$0xff]
        %v1414 = vld [vmem:[%s1376 + $0xe0] sm:$0xf]
        %v1415 = vld [vmem:[%s1376 + $0xe4] sm:$0xff]
        %v1416 = vld [vmem:[%s1376 + $0xec] sm:$0xf]
        %v1417 = vld [vmem:[%s1376 + $0xf0] sm:$0xff]
        %v1418 = vld [vmem:[%s1376 + $0xf8] sm:$0xf]
        %v1419 = vld [vmem:[%s1376 + $0xfc] sm:$0xff]
        %v1420 = vld [vmem:[%s1376 + $0x104] sm:$0xf]
        %v1421 = vld [vmem:[%s1376 + $0x108] sm:$0xff]
        %v1422 = vld [vmem:[%s1376 + $0x110] sm:$0xf]
        %v1423 = vld [vmem:[%s1376 + $0x114] sm:$0xff]
        %v1424 = vld [vmem:[%s1376 + $0x11c] sm:$0xf]
        %v1425 = vld [vmem:[%s1376 + $0x120] sm:$0xff]
        %v1426 = vld [vmem:[%s1376 + $0x128] sm:$0xf]
        %v1427 = vld [vmem:[%s1376 + $0x12c] sm:$0xff]
        %v1428 = vld [vmem:[%s1376 + $0x134] sm:$0xf]
        %v1429 = vld [vmem:[%s1376 + $0x138] sm:$0xff]
        %v1430 = vld [vmem:[%s1376 + $0x140] sm:$0xf]
        %v1431 = vld [vmem:[%s1376 + $0x144] sm:$0xff]
        %v1432 = vld [vmem:[%s1376 + $0x14c] sm:$0xf]
        %v1433 = vld [vmem:[%s1376 + $0x150] sm:$0xff]
        %v1434 = vld [vmem:[%s1376 + $0x158] sm:$0xf]
        %v1435 = vld [vmem:[%s1376 + $0x15c] sm:$0xff]
        %v1436 = vld [vmem:[%s1376 + $0x164] sm:$0xf]
        %v1437 = vld [vmem:[%s1376 + $0x168] sm:$0xff]
        %v1438 = vld [vmem:[%s1376 + $0x170] sm:$0xf]
        %v1439 = vld [vmem:[%s1376 + $0x174] sm:$0xff]
        %v1440 = vld [vmem:[%s1376 + $0x17c] sm:$0xf]
        %v1441 = vld [vmem:[%s1376 + $0x180] sm:$0xff]
        %v1442 = vld [vmem:[%s1376 + $0x188] sm:$0xf]
        %v1443 = vld [vmem:[%s1376 + $0x18c] sm:$0xff]
        %v1444 = vld [vmem:[%s1376 + $0x194] sm:$0xf]
        %v1445 = vld [vmem:[%s1376 + $0x198] sm:$0xff]
        %v1446 = vld [vmem:[%s1376 + $0x1a0] sm:$0xf]
        %v1447 = vld [vmem:[%s1376 + $0x1a4] sm:$0xff]
        %v1448 = vld [vmem:[%s1376 + $0x1ac] sm:$0xf]
        %v1449 = vld [vmem:[%s1376 + $0x1b0] sm:$0xff]
        %v1450 = vld [vmem:[%s1376 + $0x1b8] sm:$0xf]
        %v1451 = vld [vmem:[%s1376 + $0x1bc] sm:$0xff]
        %v1452 = vld [vmem:[%s1376 + $0x1c4] sm:$0xf]
        %v1453 = vld [vmem:[%s1376 + $0x1c8] sm:$0xff]
        %v1454 = vld [vmem:[%s1376 + $0x1d0] sm:$0xf]
        %v1455 = vld [vmem:[%s1376 + $0x1d4] sm:$0xff]
        %v1456 = vld [vmem:[%s1376 + $0x1dc] sm:$0xf]
        %v1457 = vld [vmem:[%s1376 + $0x1e0] sm:$0xff]
        %v1458 = vld [vmem:[%s1376 + $0x1e8] sm:$0xf]
        %v1459 = vld [vmem:[%s1376 + $0x1ec] sm:$0xff]
        %v1460 = vld [vmem:[%s1376 + $0x1f4] sm:$0xf]
        %v1461 = vld [vmem:[%s1376 + $0x1f8] sm:$0xff]
        %v1462 = vld [vmem:[%s1376 + $0x200] sm:$0xf]
        %v1463 = vld [vmem:[%s1376 + $0x204] sm:$0xff]
        %v1464 = vld [vmem:[%s1376 + $0x20c] sm:$0xf]
        %v1465 = vld [vmem:[%s1376 + $0x210] sm:$0xff]
        %v1466 = vld [vmem:[%s1376 + $0x218] sm:$0xf]
        %v1467 = vld [vmem:[%s1376 + $0x21c] sm:$0xff]
        %v1468 = vld [vmem:[%s1376 + $0x224] sm:$0xf]
        %v1469 = vld [vmem:[%s1376 + $0x228] sm:$0xff]
        %v1470 = vld [vmem:[%s1376 + $0x230] sm:$0xf]
        %v1471 = vld [vmem:[%s1376 + $0x234] sm:$0xff]
        %v1472 = vld [vmem:[%s1376 + $0x23c] sm:$0xf]
        %v1473 = vld [vmem:[%s1376 + $0x240] sm:$0xff]
        %v1474 = vld [vmem:[%s1376 + $0x248] sm:$0xf]
        %v1475 = vld [vmem:[%s1376 + $0x24c] sm:$0xff]
        %v1476 = vld [vmem:[%s1376 + $0x254] sm:$0xf]
        %v1477 = vld [vmem:[%s1376 + $0x258] sm:$0xff]
        %v1478 = vld [vmem:[%s1376 + $0x260] sm:$0xf]
        %v1479 = vld [vmem:[%s1376 + $0x264] sm:$0xff]
        %v1480 = vld [vmem:[%s1376 + $0x26c] sm:$0xf]
        %v1481 = vld [vmem:[%s1376 + $0x270] sm:$0xff]
        %v1482 = vld [vmem:[%s1376 + $0x278] sm:$0xf]
        %v1483 = vld [vmem:[%s1376 + $0x27c] sm:$0xff]
        %v1484 = vld [vmem:[%s1376 + $0x284] sm:$0xf]
        %v1485 = vld [vmem:[%s1376 + $0x288] sm:$0xff]
        %v1486 = vld [vmem:[%s1376 + $0x290] sm:$0xf]
        %v1487 = vld [vmem:[%s1376 + $0x294] sm:$0xff]
        %v1488 = vld [vmem:[%s1376 + $0x29c] sm:$0xf]
        %v1489 = vld [vmem:[%s1376 + $0x2a0] sm:$0xff]
        %v1490 = vld [vmem:[%s1376 + $0x2a8] sm:$0xf]
        %v1491 = vld [vmem:[%s1376 + $0x2ac] sm:$0xff]
        %v1492 = vld [vmem:[%s1376 + $0x2b4] sm:$0xf]
        %v1493 = vld [vmem:[%s1376 + $0x2b8] sm:$0xff]
        %v1494 = vld [vmem:[%s1376 + $0x2c0] sm:$0xf]
        %v1495 = vld [vmem:[%s1376 + $0x2c4] sm:$0xff]
        %v1496 = vld [vmem:[%s1376 + $0x2cc] sm:$0xf]
        %v1497 = vld [vmem:[%s1376 + $0x2d0] sm:$0xff]
        %v1498 = vld [vmem:[%s1376 + $0x2d8] sm:$0xf]
        %v1499 = vld [vmem:[%s1376 + $0x2dc] sm:$0xff]
        %v1500 = vld [vmem:[%s1376 + $0x2e4] sm:$0xf]
        %v1501 = vld [vmem:[%s1376 + $0x2e8] sm:$0xff]
        %v1502 = vld [vmem:[%s1376 + $0x2f0] sm:$0xf]
        %v1503 = vld [vmem:[%s1376 + $0x2f4] sm:$0xff]
        %v1504 = vld [vmem:[%s1376 + $0x2fc] sm:$0xf]
        %v1633 = vunpack.c.l.b16 %v1377
        %v1634 = vunpack.c.h.b16 %v1377
        %v1635 = vunpack.c.l.b16 %v1378
        %v1636 = vunpack.c.l.b16 %v1379
        %v1637 = vunpack.c.h.b16 %v1379
        %v1638 = vunpack.c.l.b16 %v1380
        %v1639 = vunpack.c.l.b16 %v1381
        %v1640 = vunpack.c.h.b16 %v1381
        %v1641 = vunpack.c.l.b16 %v1382
        %v1642 = vunpack.c.l.b16 %v1383
        %v1643 = vunpack.c.h.b16 %v1383
        %v1644 = vunpack.c.l.b16 %v1384
        %v1645 = vunpack.c.l.b16 %v1385
        %v1646 = vunpack.c.h.b16 %v1385
        %v1647 = vunpack.c.l.b16 %v1386
        %v1648 = vunpack.c.l.b16 %v1387
        %v1649 = vunpack.c.h.b16 %v1387
        %v1650 = vunpack.c.l.b16 %v1388
        %v1651 = vunpack.c.l.b16 %v1389
        %v1652 = vunpack.c.h.b16 %v1389
        %v1653 = vunpack.c.l.b16 %v1390
        %v1654 = vunpack.c.l.b16 %v1391
        %v1655 = vunpack.c.h.b16 %v1391
        %v1656 = vunpack.c.l.b16 %v1392
        %v1657 = vunpack.c.l.b16 %v1393
        %v1658 = vunpack.c.h.b16 %v1393
        %v1659 = vunpack.c.l.b16 %v1394
        %v1660 = vunpack.c.l.b16 %v1395
        %v1661 = vunpack.c.h.b16 %v1395
        %v1662 = vunpack.c.l.b16 %v1396
        %v1663 = vunpack.c.l.b16 %v1397
        %v1664 = vunpack.c.h.b16 %v1397
        %v1665 = vunpack.c.l.b16 %v1398
        %v1666 = vunpack.c.l.b16 %v1399
        %v1667 = vunpack.c.h.b16 %v1399
        %v1668 = vunpack.c.l.b16 %v1400
        %v1669 = vunpack.c.l.b16 %v1401
        %v1670 = vunpack.c.h.b16 %v1401
        %v1671 = vunpack.c.l.b16 %v1402
        %v1672 = vunpack.c.l.b16 %v1403
        %v1673 = vunpack.c.h.b16 %v1403
        %v1674 = vunpack.c.l.b16 %v1404
        %v1675 = vunpack.c.l.b16 %v1405
        %v1676 = vunpack.c.h.b16 %v1405
        %v1677 = vunpack.c.l.b16 %v1406
        %v1678 = vunpack.c.l.b16 %v1407
        %v1679 = vunpack.c.h.b16 %v1407
        %v1680 = vunpack.c.l.b16 %v1408
        %v1681 = vunpack.c.l.b16 %v1409
        %v1682 = vunpack.c.h.b16 %v1409
        %v1683 = vunpack.c.l.b16 %v1410
        %v1684 = vunpack.c.l.b16 %v1411
        %v1685 = vunpack.c.h.b16 %v1411
        %v1686 = vunpack.c.l.b16 %v1412
        %v1687 = vunpack.c.l.b16 %v1413
        %v1688 = vunpack.c.h.b16 %v1413
        %v1689 = vunpack.c.l.b16 %v1414
        %v1690 = vunpack.c.l.b16 %v1415
        %v1691 = vunpack.c.h.b16 %v1415
        %v1692 = vunpack.c.l.b16 %v1416
        %v1693 = vunpack.c.l.b16 %v1417
        %v1694 = vunpack.c.h.b16 %v1417
        %v1695 = vunpack.c.l.b16 %v1418
        %v1696 = vunpack.c.l.b16 %v1419
        %v1697 = vunpack.c.h.b16 %v1419
        %v1698 = vunpack.c.l.b16 %v1420
        %v1699 = vunpack.c.l.b16 %v1421
        %v1700 = vunpack.c.h.b16 %v1421
        %v1701 = vunpack.c.l.b16 %v1422
        %v1702 = vunpack.c.l.b16 %v1423
        %v1703 = vunpack.c.h.b16 %v1423
        %v1704 = vunpack.c.l.b16 %v1424
        %v1705 = vunpack.c.l.b16 %v1425
        %v1706 = vunpack.c.h.b16 %v1425
        %v1707 = vunpack.c.l.b16 %v1426
        %v1708 = vunpack.c.l.b16 %v1427
        %v1709 = vunpack.c.h.b16 %v1427
        %v1710 = vunpack.c.l.b16 %v1428
        %v1711 = vunpack.c.l.b16 %v1429
        %v1712 = vunpack.c.h.b16 %v1429
        %v1713 = vunpack.c.l.b16 %v1430
        %v1714 = vunpack.c.l.b16 %v1431
        %v1715 = vunpack.c.h.b16 %v1431
        %v1716 = vunpack.c.l.b16 %v1432
        %v1717 = vunpack.c.l.b16 %v1433
        %v1718 = vunpack.c.h.b16 %v1433
        %v1719 = vunpack.c.l.b16 %v1434
        %v1720 = vunpack.c.l.b16 %v1435
        %v1721 = vunpack.c.h.b16 %v1435
        %v1722 = vunpack.c.l.b16 %v1436
        %v1723 = vunpack.c.l.b16 %v1437
        %v1724 = vunpack.c.h.b16 %v1437
        %v1725 = vunpack.c.l.b16 %v1438
        %v1726 = vunpack.c.l.b16 %v1439
        %v1727 = vunpack.c.h.b16 %v1439
        %v1728 = vunpack.c.l.b16 %v1440
        %v1729 = vunpack.c.l.b16 %v1441
        %v1730 = vunpack.c.h.b16 %v1441
        %v1731 = vunpack.c.l.b16 %v1442
        %v1732 = vunpack.c.l.b16 %v1443
        %v1733 = vunpack.c.h.b16 %v1443
        %v1734 = vunpack.c.l.b16 %v1444
        %v1735 = vunpack.c.l.b16 %v1445
        %v1736 = vunpack.c.h.b16 %v1445
        %v1737 = vunpack.c.l.b16 %v1446
        %v1738 = vunpack.c.l.b16 %v1447
        %v1739 = vunpack.c.h.b16 %v1447
        %v1740 = vunpack.c.l.b16 %v1448
        %v1741 = vunpack.c.l.b16 %v1449
        %v1742 = vunpack.c.h.b16 %v1449
        %v1743 = vunpack.c.l.b16 %v1450
        %v1744 = vunpack.c.l.b16 %v1451
        %v1745 = vunpack.c.h.b16 %v1451
        %v1746 = vunpack.c.l.b16 %v1452
        %v1747 = vunpack.c.l.b16 %v1453
        %v1748 = vunpack.c.h.b16 %v1453
        %v1749 = vunpack.c.l.b16 %v1454
        %v1750 = vunpack.c.l.b16 %v1455
        %v1751 = vunpack.c.h.b16 %v1455
        %v1752 = vunpack.c.l.b16 %v1456
        %v1753 = vunpack.c.l.b16 %v1457
        %v1754 = vunpack.c.h.b16 %v1457
        %v1755 = vunpack.c.l.b16 %v1458
        %v1756 = vunpack.c.l.b16 %v1459
        %v1757 = vunpack.c.h.b16 %v1459
        %v1758 = vunpack.c.l.b16 %v1460
        %v1759 = vunpack.c.l.b16 %v1461
        %v1760 = vunpack.c.h.b16 %v1461
        %v1761 = vunpack.c.l.b16 %v1462
        %v1762 = vunpack.c.l.b16 %v1463
        %v1763 = vunpack.c.h.b16 %v1463
        %v1764 = vunpack.c.l.b16 %v1464
        %v1765 = vunpack.c.l.b16 %v1465
        %v1766 = vunpack.c.h.b16 %v1465
        %v1767 = vunpack.c.l.b16 %v1466
        %v1768 = vunpack.c.l.b16 %v1467
        %v1769 = vunpack.c.h.b16 %v1467
        %v1770 = vunpack.c.l.b16 %v1468
        %v1771 = vunpack.c.l.b16 %v1469
        %v1772 = vunpack.c.h.b16 %v1469
        %v1773 = vunpack.c.l.b16 %v1470
        %v1774 = vunpack.c.l.b16 %v1471
        %v1775 = vunpack.c.h.b16 %v1471
        %v1776 = vunpack.c.l.b16 %v1472
        %v1777 = vunpack.c.l.b16 %v1473
        %v1778 = vunpack.c.h.b16 %v1473
        %v1779 = vunpack.c.l.b16 %v1474
        %v1780 = vunpack.c.l.b16 %v1475
        %v1781 = vunpack.c.h.b16 %v1475
        %v1782 = vunpack.c.l.b16 %v1476
        %v1783 = vunpack.c.l.b16 %v1477
        %v1784 = vunpack.c.h.b16 %v1477
        %v1785 = vunpack.c.l.b16 %v1478
        %v1786 = vunpack.c.l.b16 %v1479
        %v1787 = vunpack.c.h.b16 %v1479
        %v1788 = vunpack.c.l.b16 %v1480
        %v1789 = vunpack.c.l.b16 %v1481
        %v1790 = vunpack.c.h.b16 %v1481
        %v1791 = vunpack.c.l.b16 %v1482
        %v1792 = vunpack.c.l.b16 %v1483
        %v1793 = vunpack.c.h.b16 %v1483
        %v1794 = vunpack.c.l.b16 %v1484
        %v1795 = vunpack.c.l.b16 %v1485
        %v1796 = vunpack.c.h.b16 %v1485
        %v1797 = vunpack.c.l.b16 %v1486
        %v1798 = vunpack.c.l.b16 %v1487
        %v1799 = vunpack.c.h.b16 %v1487
        %v1800 = vunpack.c.l.b16 %v1488
        %v1801 = vunpack.c.l.b16 %v1489
        %v1802 = vunpack.c.h.b16 %v1489
        %v1803 = vunpack.c.l.b16 %v1490
        %v1804 = vunpack.c.l.b16 %v1491
        %v1805 = vunpack.c.h.b16 %v1491
        %v1806 = vunpack.c.l.b16 %v1492
        %v1807 = vunpack.c.l.b16 %v1493
        %v1808 = vunpack.c.h.b16 %v1493
        %v1809 = vunpack.c.l.b16 %v1494
        %v1810 = vunpack.c.l.b16 %v1495
        %v1811 = vunpack.c.h.b16 %v1495
        %v1812 = vunpack.c.l.b16 %v1496
        %v1813 = vunpack.c.l.b16 %v1497
        %v1814 = vunpack.c.h.b16 %v1497
        %v1815 = vunpack.c.l.b16 %v1498
        %v1816 = vunpack.c.l.b16 %v1499
        %v1817 = vunpack.c.h.b16 %v1499
        %v1818 = vunpack.c.l.b16 %v1500
        %v1819 = vunpack.c.l.b16 %v1501
        %v1820 = vunpack.c.h.b16 %v1501
        %v1821 = vunpack.c.l.b16 %v1502
        %v1822 = vunpack.c.l.b16 %v1503
        %v1823 = vunpack.c.h.b16 %v1503
        %v1824 = vunpack.c.l.b16 %v1504
        %v1825 = vpack.c.b16 %v1636, %v1633
        %v1826 = vpack.c.b16 %v1637, %v1634
        %v1827 = vpack.c.b16 %v1638, %v1635
        %v1828 = vpack.c.b16 %v1642, %v1639
        %v1829 = vpack.c.b16 %v1643, %v1640
        %v1830 = vpack.c.b16 %v1644, %v1641
        %v1831 = vpack.c.b16 %v1648, %v1645
        %v1832 = vpack.c.b16 %v1649, %v1646
        %v1833 = vpack.c.b16 %v1650, %v1647
        %v1834 = vpack.c.b16 %v1654, %v1651
        %v1835 = vpack.c.b16 %v1655, %v1652
        %v1836 = vpack.c.b16 %v1656, %v1653
        %v1837 = vpack.c.b16 %v1660, %v1657
        %v1838 = vpack.c.b16 %v1661, %v1658
        %v1839 = vpack.c.b16 %v1662, %v1659
        %v1840 = vpack.c.b16 %v1666, %v1663
        %v1841 = vpack.c.b16 %v1667, %v1664
        %v1842 = vpack.c.b16 %v1668, %v1665
        %v1843 = vpack.c.b16 %v1672, %v1669
        %v1844 = vpack.c.b16 %v1673, %v1670
        %v1845 = vpack.c.b16 %v1674, %v1671
        %v1846 = vpack.c.b16 %v1678, %v1675
        %v1847 = vpack.c.b16 %v1679, %v1676
        %v1848 = vpack.c.b16 %v1680, %v1677
        %v1849 = vpack.c.b16 %v1684, %v1681
        %v1850 = vpack.c.b16 %v1685, %v1682
        %v1851 = vpack.c.b16 %v1686, %v1683
        %v1852 = vpack.c.b16 %v1690, %v1687
        %v1853 = vpack.c.b16 %v1691, %v1688
        %v1854 = vpack.c.b16 %v1692, %v1689
        %v1855 = vpack.c.b16 %v1696, %v1693
        %v1856 = vpack.c.b16 %v1697, %v1694
        %v1857 = vpack.c.b16 %v1698, %v1695
        %v1858 = vpack.c.b16 %v1702, %v1699
        %v1859 = vpack.c.b16 %v1703, %v1700
        %v1860 = vpack.c.b16 %v1704, %v1701
        %v1861 = vpack.c.b16 %v1708, %v1705
        %v1862 = vpack.c.b16 %v1709, %v1706
        %v1863 = vpack.c.b16 %v1710, %v1707
        %v1864 = vpack.c.b16 %v1714, %v1711
        %v1865 = vpack.c.b16 %v1715, %v1712
        %v1866 = vpack.c.b16 %v1716, %v1713
        %v1867 = vpack.c.b16 %v1720, %v1717
        %v1868 = vpack.c.b16 %v1721, %v1718
        %v1869 = vpack.c.b16 %v1722, %v1719
        %v1870 = vpack.c.b16 %v1726, %v1723
        %v1871 = vpack.c.b16 %v1727, %v1724
        %v1872 = vpack.c.b16 %v1728, %v1725
        %v1873 = vpack.c.b16 %v1732, %v1729
        %v1874 = vpack.c.b16 %v1733, %v1730
        %v1875 = vpack.c.b16 %v1734, %v1731
        %v1876 = vpack.c.b16 %v1738, %v1735
        %v1877 = vpack.c.b16 %v1739, %v1736
        %v1878 = vpack.c.b16 %v1740, %v1737
        %v1879 = vpack.c.b16 %v1744, %v1741
        %v1880 = vpack.c.b16 %v1745, %v1742
        %v1881 = vpack.c.b16 %v1746, %v1743
        %v1882 = vpack.c.b16 %v1750, %v1747
        %v1883 = vpack.c.b16 %v1751, %v1748
        %v1884 = vpack.c.b16 %v1752, %v1749
        %v1885 = vpack.c.b16 %v1756, %v1753
        %v1886 = vpack.c.b16 %v1757, %v1754
        %v1887 = vpack.c.b16 %v1758, %v1755
        %v1888 = vpack.c.b16 %v1762, %v1759
        %v1889 = vpack.c.b16 %v1763, %v1760
        %v1890 = vpack.c.b16 %v1764, %v1761
        %v1891 = vpack.c.b16 %v1768, %v1765
        %v1892 = vpack.c.b16 %v1769, %v1766
        %v1893 = vpack.c.b16 %v1770, %v1767
        %v1894 = vpack.c.b16 %v1774, %v1771
        %v1895 = vpack.c.b16 %v1775, %v1772
        %v1896 = vpack.c.b16 %v1776, %v1773
        %v1897 = vpack.c.b16 %v1780, %v1777
        %v1898 = vpack.c.b16 %v1781, %v1778
        %v1899 = vpack.c.b16 %v1782, %v1779
        %v1900 = vpack.c.b16 %v1786, %v1783
        %v1901 = vpack.c.b16 %v1787, %v1784
        %v1902 = vpack.c.b16 %v1788, %v1785
        %v1903 = vpack.c.b16 %v1792, %v1789
        %v1904 = vpack.c.b16 %v1793, %v1790
        %v1905 = vpack.c.b16 %v1794, %v1791
        %v1906 = vpack.c.b16 %v1798, %v1795
        %v1907 = vpack.c.b16 %v1799, %v1796
        %v1908 = vpack.c.b16 %v1800, %v1797
        %v1909 = vpack.c.b16 %v1804, %v1801
        %v1910 = vpack.c.b16 %v1805, %v1802
        %v1911 = vpack.c.b16 %v1806, %v1803
        %v1912 = vpack.c.b16 %v1810, %v1807
        %v1913 = vpack.c.b16 %v1811, %v1808
        %v1914 = vpack.c.b16 %v1812, %v1809
        %v1915 = vpack.c.b16 %v1816, %v1813
        %v1916 = vpack.c.b16 %v1817, %v1814
        %v1917 = vpack.c.b16 %v1818, %v1815
        %v1918 = vpack.c.b16 %v1822, %v1819
        %v1919 = vpack.c.b16 %v1823, %v1820
        %v1920 = vpack.c.b16 %v1824, %v1821
        %2017 = vmatpush.bf16.msra.mxu0 %v1846
        %2018 = vmatpush.bf16.msra.mxu0 %v1843
        %2019 = vmatpush.bf16.msra.mxu0 %v1840
        %2020 = vmatpush.bf16.msra.mxu0 %v1837
        %2021 = vmatpush.bf16.msra.mxu0 %v1834
        %2022 = vmatpush.bf16.msra.mxu0 %v1831
        %2023 = vmatpush.bf16.msra.mxu0 %v1828
        %2024 = vmatpush.bf16.msra.mxu0 %v1825
        %2025 = vmatmul.bf16.gmra.mxu0 %v525
        %v2026 = vpop.f32.mrf.mxu0
        %v2027 = vadd.f32 0.0, %v2026
        %v2028 = vpop.f32.mrf.mxu0
        %v2029 = vadd.f32 0.0, %v2028
        %2030 = vdwg.mxu0
        %2031 = vmatpush.bf16.msra.mxu0 %v1870
        %2032 = vmatpush.bf16.msra.mxu0 %v1867
        %2033 = vmatpush.bf16.msra.mxu0 %v1864
        %2034 = vmatpush.bf16.msra.mxu0 %v1861
        %2035 = vmatpush.bf16.msra.mxu0 %v1858
        %2036 = vmatpush.bf16.msra.mxu0 %v1855
        %2037 = vmatpush.bf16.msra.mxu0 %v1852
        %2038 = vmatpush.bf16.msra.mxu0 %v1849
        %2039 = vmatmul.bf16.gmra.mxu0 %v526
        %v2040 = vpop.f32.mrf.mxu0
        %v2041 = vadd.f32 %v2027, %v2040
        %v2042 = vpop.f32.mrf.mxu0
        %v2043 = vadd.f32 %v2029, %v2042
        %2044 = vdwg.mxu0
        %2045 = vmatpush.bf16.msra.mxu0 %v1894
        %2046 = vmatpush.bf16.msra.mxu0 %v1891
        %2047 = vmatpush.bf16.msra.mxu0 %v1888
        %2048 = vmatpush.bf16.msra.mxu0 %v1885
        %2049 = vmatpush.bf16.msra.mxu0 %v1882
        %2050 = vmatpush.bf16.msra.mxu0 %v1879
        %2051 = vmatpush.bf16.msra.mxu0 %v1876
        %2052 = vmatpush.bf16.msra.mxu0 %v1873
        %2053 = vmatmul.bf16.gmra.mxu0 %v527
        %v2054 = vpop.f32.mrf.mxu0
        %v2055 = vadd.f32 %v2041, %v2054
        %v2056 = vpop.f32.mrf.mxu0
        %v2057 = vadd.f32 %v2043, %v2056
        %2058 = vdwg.mxu0
        %2059 = vmatpush.bf16.msra.mxu0 %v1918
        %2060 = vmatpush.bf16.msra.mxu0 %v1915
        %2061 = vmatpush.bf16.msra.mxu0 %v1912
        %2062 = vmatpush.bf16.msra.mxu0 %v1909
        %2063 = vmatpush.bf16.msra.mxu0 %v1906
        %2064 = vmatpush.bf16.msra.mxu0 %v1903
        %2065 = vmatpush.bf16.msra.mxu0 %v1900
        %2066 = vmatpush.bf16.msra.mxu0 %v1897
        %2067 = vmatmul.bf16.gmra.mxu0 %v528
        %v2068 = vpop.f32.mrf.mxu0
        %v2069 = vadd.f32 %v2055, %v2068
        %v2070 = vpop.f32.mrf.mxu0
        %v2071 = vadd.f32 %v2057, %v2070
        %2072 = vdwg.mxu0
        %2073 = vmatpush.bf16.msra.mxu0 %v1847
        %2074 = vmatpush.bf16.msra.mxu0 %v1844
        %2075 = vmatpush.bf16.msra.mxu0 %v1841
        %2076 = vmatpush.bf16.msra.mxu0 %v1838
        %2077 = vmatpush.bf16.msra.mxu0 %v1835
        %2078 = vmatpush.bf16.msra.mxu0 %v1832
        %2079 = vmatpush.bf16.msra.mxu0 %v1829
        %2080 = vmatpush.bf16.msra.mxu0 %v1826
        %2081 = vmatmul.bf16.gmra.mxu0 %v525
        %v2082 = vpop.f32.mrf.mxu0
        %v2083 = vadd.f32 0.0, %v2082
        %v2084 = vpop.f32.mrf.mxu0
        %v2085 = vadd.f32 0.0, %v2084
        %2086 = vdwg.mxu0
        %2087 = vmatpush.bf16.msra.mxu0 %v1871
        %2088 = vmatpush.bf16.msra.mxu0 %v1868
        %2089 = vmatpush.bf16.msra.mxu0 %v1865
        %2090 = vmatpush.bf16.msra.mxu0 %v1862
        %2091 = vmatpush.bf16.msra.mxu0 %v1859
        %2092 = vmatpush.bf16.msra.mxu0 %v1856
        %2093 = vmatpush.bf16.msra.mxu0 %v1853
        %2094 = vmatpush.bf16.msra.mxu0 %v1850
        %2095 = vmatmul.bf16.gmra.mxu0 %v526
        %v2096 = vpop.f32.mrf.mxu0
        %v2097 = vadd.f32 %v2083, %v2096
        %v2098 = vpop.f32.mrf.mxu0
        %v2099 = vadd.f32 %v2085, %v2098
        %2100 = vdwg.mxu0
        %2101 = vmatpush.bf16.msra.mxu0 %v1895
        %2102 = vmatpush.bf16.msra.mxu0 %v1892
        %2103 = vmatpush.bf16.msra.mxu0 %v1889
        %2104 = vmatpush.bf16.msra.mxu0 %v1886
        %2105 = vmatpush.bf16.msra.mxu0 %v1883
        %2106 = vmatpush.bf16.msra.mxu0 %v1880
        %2107 = vmatpush.bf16.msra.mxu0 %v1877
        %2108 = vmatpush.bf16.msra.mxu0 %v1874
        %2109 = vmatmul.bf16.gmra.mxu0 %v527
        %v2110 = vpop.f32.mrf.mxu0
        %v2111 = vadd.f32 %v2097, %v2110
        %v2112 = vpop.f32.mrf.mxu0
        %v2113 = vadd.f32 %v2099, %v2112
        %2114 = vdwg.mxu0
        %2115 = vmatpush.bf16.msra.mxu0 %v1919
        %2116 = vmatpush.bf16.msra.mxu0 %v1916
        %2117 = vmatpush.bf16.msra.mxu0 %v1913
        %2118 = vmatpush.bf16.msra.mxu0 %v1910
        %2119 = vmatpush.bf16.msra.mxu0 %v1907
        %2120 = vmatpush.bf16.msra.mxu0 %v1904
        %2121 = vmatpush.bf16.msra.mxu0 %v1901
        %2122 = vmatpush.bf16.msra.mxu0 %v1898
        %2123 = vmatmul.bf16.gmra.mxu0 %v528
        %v2124 = vpop.f32.mrf.mxu0
        %v2125 = vadd.f32 %v2111, %v2124
        %v2126 = vpop.f32.mrf.mxu0
        %v2127 = vadd.f32 %v2113, %v2126
        %2128 = vdwg.mxu0
        %2129 = vmatpush.bf16.msra.mxu0 %v1848
        %2130 = vmatpush.bf16.msra.mxu0 %v1845
        %2131 = vmatpush.bf16.msra.mxu0 %v1842
        %2132 = vmatpush.bf16.msra.mxu0 %v1839
        %2133 = vmatpush.bf16.msra.mxu0 %v1836
        %2134 = vmatpush.bf16.msra.mxu0 %v1833
        %2135 = vmatpush.bf16.msra.mxu0 %v1830
        %2136 = vmatpush.bf16.msra.mxu0 %v1827
        %2137 = vmatmul.bf16.gmra.mxu0 %v525
        %v2138 = vpop.f32.mrf.mxu0
        %v2139 = vadd.f32 0.0, %v2138
        %v2140 = vpop.f32.mrf.mxu0
        %v2141 = vadd.f32 0.0, %v2140
        %2142 = vdwg.mxu0
        %2143 = vmatpush.bf16.msra.mxu0 %v1872
        %2144 = vmatpush.bf16.msra.mxu0 %v1869
        %2145 = vmatpush.bf16.msra.mxu0 %v1866
        %2146 = vmatpush.bf16.msra.mxu0 %v1863
        %2147 = vmatpush.bf16.msra.mxu0 %v1860
        %2148 = vmatpush.bf16.msra.mxu0 %v1857
        %2149 = vmatpush.bf16.msra.mxu0 %v1854
        %2150 = vmatpush.bf16.msra.mxu0 %v1851
        %2151 = vmatmul.bf16.gmra.mxu0 %v526
        %v2152 = vpop.f32.mrf.mxu0
        %v2153 = vadd.f32 %v2139, %v2152
        %v2154 = vpop.f32.mrf.mxu0
        %v2155 = vadd.f32 %v2141, %v2154
        %2156 = vdwg.mxu0
        %2157 = vmatpush.bf16.msra.mxu0 %v1896
        %2158 = vmatpush.bf16.msra.mxu0 %v1893
        %2159 = vmatpush.bf16.msra.mxu0 %v1890
        %2160 = vmatpush.bf16.msra.mxu0 %v1887
        %2161 = vmatpush.bf16.msra.mxu0 %v1884
        %2162 = vmatpush.bf16.msra.mxu0 %v1881
        %2163 = vmatpush.bf16.msra.mxu0 %v1878
        %2164 = vmatpush.bf16.msra.mxu0 %v1875
        %2165 = vmatmul.bf16.gmra.mxu0 %v527
        %v2166 = vpop.f32.mrf.mxu0
        %v2167 = vadd.f32 %v2153, %v2166
        %v2168 = vpop.f32.mrf.mxu0
        %v2169 = vadd.f32 %v2155, %v2168
        %2170 = vdwg.mxu0
        %2171 = vmatpush.bf16.msra.mxu0 %v1920
        %2172 = vmatpush.bf16.msra.mxu0 %v1917
        %2173 = vmatpush.bf16.msra.mxu0 %v1914
        %2174 = vmatpush.bf16.msra.mxu0 %v1911
        %2175 = vmatpush.bf16.msra.mxu0 %v1908
        %2176 = vmatpush.bf16.msra.mxu0 %v1905
        %2177 = vmatpush.bf16.msra.mxu0 %v1902
        %2178 = vmatpush.bf16.msra.mxu0 %v1899
        %2179 = vmatmul.bf16.gmra.mxu0 %v528
        %v2180 = vpop.f32.mrf.mxu0
        %v2181 = vadd.f32 %v2167, %v2180
        %v2182 = vpop.f32.mrf.mxu0
        %v2183 = vadd.f32 %v2169, %v2182
        %2184 = vdwg.mxu0
        %s2185 = scalar_lea.vmem [#allocation2], 1536
        %v2186 = vld [vmem:[%s2185] sm:$0xff]
        %v2187 = vld [vmem:[%s2185 + $0x8] sm:$0xf]
        %v2188 = vld [vmem:[%s2185 + $0xc] sm:$0xff]
        %v2189 = vld [vmem:[%s2185 + $0x14] sm:$0xf]
        %v2190 = vld [vmem:[%s2185 + $0x18] sm:$0xff]
        %v2191 = vld [vmem:[%s2185 + $0x20] sm:$0xf]
        %v2192 = vld [vmem:[%s2185 + $0x24] sm:$0xff]
        %v2193 = vld [vmem:[%s2185 + $0x2c] sm:$0xf]
        %v2194 = vld [vmem:[%s2185 + $0x30] sm:$0xff]
        %v2195 = vld [vmem:[%s2185 + $0x38] sm:$0xf]
        %v2196 = vld [vmem:[%s2185 + $0x3c] sm:$0xff]
        %v2197 = vld [vmem:[%s2185 + $0x44] sm:$0xf]
        %v2198 = vld [vmem:[%s2185 + $0x48] sm:$0xff]
        %v2199 = vld [vmem:[%s2185 + $0x50] sm:$0xf]
        %v2200 = vld [vmem:[%s2185 + $0x54] sm:$0xff]
        %v2201 = vld [vmem:[%s2185 + $0x5c] sm:$0xf]
        %v2202 = vld [vmem:[%s2185 + $0x60] sm:$0xff]
        %v2203 = vld [vmem:[%s2185 + $0x68] sm:$0xf]
        %v2204 = vld [vmem:[%s2185 + $0x6c] sm:$0xff]
        %v2205 = vld [vmem:[%s2185 + $0x74] sm:$0xf]
        %v2206 = vld [vmem:[%s2185 + $0x78] sm:$0xff]
        %v2207 = vld [vmem:[%s2185 + $0x80] sm:$0xf]
        %v2208 = vld [vmem:[%s2185 + $0x84] sm:$0xff]
        %v2209 = vld [vmem:[%s2185 + $0x8c] sm:$0xf]
        %v2210 = vld [vmem:[%s2185 + $0x90] sm:$0xff]
        %v2211 = vld [vmem:[%s2185 + $0x98] sm:$0xf]
        %v2212 = vld [vmem:[%s2185 + $0x9c] sm:$0xff]
        %v2213 = vld [vmem:[%s2185 + $0xa4] sm:$0xf]
        %v2214 = vld [vmem:[%s2185 + $0xa8] sm:$0xff]
        %v2215 = vld [vmem:[%s2185 + $0xb0] sm:$0xf]
        %v2216 = vld [vmem:[%s2185 + $0xb4] sm:$0xff]
        %v2217 = vld [vmem:[%s2185 + $0xbc] sm:$0xf]
        %v2218 = vld [vmem:[%s2185 + $0xc0] sm:$0xff]
        %v2219 = vld [vmem:[%s2185 + $0xc8] sm:$0xf]
        %v2220 = vld [vmem:[%s2185 + $0xcc] sm:$0xff]
        %v2221 = vld [vmem:[%s2185 + $0xd4] sm:$0xf]
        %v2222 = vld [vmem:[%s2185 + $0xd8] sm:$0xff]
        %v2223 = vld [vmem:[%s2185 + $0xe0] sm:$0xf]
        %v2224 = vld [vmem:[%s2185 + $0xe4] sm:$0xff]
        %v2225 = vld [vmem:[%s2185 + $0xec] sm:$0xf]
        %v2226 = vld [vmem:[%s2185 + $0xf0] sm:$0xff]
        %v2227 = vld [vmem:[%s2185 + $0xf8] sm:$0xf]
        %v2228 = vld [vmem:[%s2185 + $0xfc] sm:$0xff]
        %v2229 = vld [vmem:[%s2185 + $0x104] sm:$0xf]
        %v2230 = vld [vmem:[%s2185 + $0x108] sm:$0xff]
        %v2231 = vld [vmem:[%s2185 + $0x110] sm:$0xf]
        %v2232 = vld [vmem:[%s2185 + $0x114] sm:$0xff]
        %v2233 = vld [vmem:[%s2185 + $0x11c] sm:$0xf]
        %v2234 = vld [vmem:[%s2185 + $0x120] sm:$0xff]
        %v2235 = vld [vmem:[%s2185 + $0x128] sm:$0xf]
        %v2236 = vld [vmem:[%s2185 + $0x12c] sm:$0xff]
        %v2237 = vld [vmem:[%s2185 + $0x134] sm:$0xf]
        %v2238 = vld [vmem:[%s2185 + $0x138] sm:$0xff]
        %v2239 = vld [vmem:[%s2185 + $0x140] sm:$0xf]
        %v2240 = vld [vmem:[%s2185 + $0x144] sm:$0xff]
        %v2241 = vld [vmem:[%s2185 + $0x14c] sm:$0xf]
        %v2242 = vld [vmem:[%s2185 + $0x150] sm:$0xff]
        %v2243 = vld [vmem:[%s2185 + $0x158] sm:$0xf]
        %v2244 = vld [vmem:[%s2185 + $0x15c] sm:$0xff]
        %v2245 = vld [vmem:[%s2185 + $0x164] sm:$0xf]
        %v2246 = vld [vmem:[%s2185 + $0x168] sm:$0xff]
        %v2247 = vld [vmem:[%s2185 + $0x170] sm:$0xf]
        %v2248 = vld [vmem:[%s2185 + $0x174] sm:$0xff]
        %v2249 = vld [vmem:[%s2185 + $0x17c] sm:$0xf]
        %v2250 = vld [vmem:[%s2185 + $0x180] sm:$0xff]
        %v2251 = vld [vmem:[%s2185 + $0x188] sm:$0xf]
        %v2252 = vld [vmem:[%s2185 + $0x18c] sm:$0xff]
        %v2253 = vld [vmem:[%s2185 + $0x194] sm:$0xf]
        %v2254 = vld [vmem:[%s2185 + $0x198] sm:$0xff]
        %v2255 = vld [vmem:[%s2185 + $0x1a0] sm:$0xf]
        %v2256 = vld [vmem:[%s2185 + $0x1a4] sm:$0xff]
        %v2257 = vld [vmem:[%s2185 + $0x1ac] sm:$0xf]
        %v2258 = vld [vmem:[%s2185 + $0x1b0] sm:$0xff]
        %v2259 = vld [vmem:[%s2185 + $0x1b8] sm:$0xf]
        %v2260 = vld [vmem:[%s2185 + $0x1bc] sm:$0xff]
        %v2261 = vld [vmem:[%s2185 + $0x1c4] sm:$0xf]
        %v2262 = vld [vmem:[%s2185 + $0x1c8] sm:$0xff]
        %v2263 = vld [vmem:[%s2185 + $0x1d0] sm:$0xf]
        %v2264 = vld [vmem:[%s2185 + $0x1d4] sm:$0xff]
        %v2265 = vld [vmem:[%s2185 + $0x1dc] sm:$0xf]
        %v2266 = vld [vmem:[%s2185 + $0x1e0] sm:$0xff]
        %v2267 = vld [vmem:[%s2185 + $0x1e8] sm:$0xf]
        %v2268 = vld [vmem:[%s2185 + $0x1ec] sm:$0xff]
        %v2269 = vld [vmem:[%s2185 + $0x1f4] sm:$0xf]
        %v2270 = vld [vmem:[%s2185 + $0x1f8] sm:$0xff]
        %v2271 = vld [vmem:[%s2185 + $0x200] sm:$0xf]
        %v2272 = vld [vmem:[%s2185 + $0x204] sm:$0xff]
        %v2273 = vld [vmem:[%s2185 + $0x20c] sm:$0xf]
        %v2274 = vld [vmem:[%s2185 + $0x210] sm:$0xff]
        %v2275 = vld [vmem:[%s2185 + $0x218] sm:$0xf]
        %v2276 = vld [vmem:[%s2185 + $0x21c] sm:$0xff]
        %v2277 = vld [vmem:[%s2185 + $0x224] sm:$0xf]
        %v2278 = vld [vmem:[%s2185 + $0x228] sm:$0xff]
        %v2279 = vld [vmem:[%s2185 + $0x230] sm:$0xf]
        %v2280 = vld [vmem:[%s2185 + $0x234] sm:$0xff]
        %v2281 = vld [vmem:[%s2185 + $0x23c] sm:$0xf]
        %v2282 = vld [vmem:[%s2185 + $0x240] sm:$0xff]
        %v2283 = vld [vmem:[%s2185 + $0x248] sm:$0xf]
        %v2284 = vld [vmem:[%s2185 + $0x24c] sm:$0xff]
        %v2285 = vld [vmem:[%s2185 + $0x254] sm:$0xf]
        %v2286 = vld [vmem:[%s2185 + $0x258] sm:$0xff]
        %v2287 = vld [vmem:[%s2185 + $0x260] sm:$0xf]
        %v2288 = vld [vmem:[%s2185 + $0x264] sm:$0xff]
        %v2289 = vld [vmem:[%s2185 + $0x26c] sm:$0xf]
        %v2290 = vld [vmem:[%s2185 + $0x270] sm:$0xff]
        %v2291 = vld [vmem:[%s2185 + $0x278] sm:$0xf]
        %v2292 = vld [vmem:[%s2185 + $0x27c] sm:$0xff]
        %v2293 = vld [vmem:[%s2185 + $0x284] sm:$0xf]
        %v2294 = vld [vmem:[%s2185 + $0x288] sm:$0xff]
        %v2295 = vld [vmem:[%s2185 + $0x290] sm:$0xf]
        %v2296 = vld [vmem:[%s2185 + $0x294] sm:$0xff]
        %v2297 = vld [vmem:[%s2185 + $0x29c] sm:$0xf]
        %v2298 = vld [vmem:[%s2185 + $0x2a0] sm:$0xff]
        %v2299 = vld [vmem:[%s2185 + $0x2a8] sm:$0xf]
        %v2300 = vld [vmem:[%s2185 + $0x2ac] sm:$0xff]
        %v2301 = vld [vmem:[%s2185 + $0x2b4] sm:$0xf]
        %v2302 = vld [vmem:[%s2185 + $0x2b8] sm:$0xff]
        %v2303 = vld [vmem:[%s2185 + $0x2c0] sm:$0xf]
        %v2304 = vld [vmem:[%s2185 + $0x2c4] sm:$0xff]
        %v2305 = vld [vmem:[%s2185 + $0x2cc] sm:$0xf]
        %v2306 = vld [vmem:[%s2185 + $0x2d0] sm:$0xff]
        %v2307 = vld [vmem:[%s2185 + $0x2d8] sm:$0xf]
        %v2308 = vld [vmem:[%s2185 + $0x2dc] sm:$0xff]
        %v2309 = vld [vmem:[%s2185 + $0x2e4] sm:$0xf]
        %v2310 = vld [vmem:[%s2185 + $0x2e8] sm:$0xff]
        %v2311 = vld [vmem:[%s2185 + $0x2f0] sm:$0xf]
        %v2312 = vld [vmem:[%s2185 + $0x2f4] sm:$0xff]
        %v2313 = vld [vmem:[%s2185 + $0x2fc] sm:$0xf]
        %s2314 = scalar_lea.vmem [#allocation2], 2304
        %v2315 = vld [vmem:[%s2314] sm:$0xff]
        %v2316 = vld [vmem:[%s2314 + $0x8] sm:$0xf]
        %v2317 = vld [vmem:[%s2314 + $0xc] sm:$0xff]
        %v2318 = vld [vmem:[%s2314 + $0x14] sm:$0xf]
        %v2319 = vld [vmem:[%s2314 + $0x18] sm:$0xff]
        %v2320 = vld [vmem:[%s2314 + $0x20] sm:$0xf]
        %v2321 = vld [vmem:[%s2314 + $0x24] sm:$0xff]
        %v2322 = vld [vmem:[%s2314 + $0x2c] sm:$0xf]
        %v2323 = vld [vmem:[%s2314 + $0x30] sm:$0xff]
        %v2324 = vld [vmem:[%s2314 + $0x38] sm:$0xf]
        %v2325 = vld [vmem:[%s2314 + $0x3c] sm:$0xff]
        %v2326 = vld [vmem:[%s2314 + $0x44] sm:$0xf]
        %v2327 = vld [vmem:[%s2314 + $0x48] sm:$0xff]
        %v2328 = vld [vmem:[%s2314 + $0x50] sm:$0xf]
        %v2329 = vld [vmem:[%s2314 + $0x54] sm:$0xff]
        %v2330 = vld [vmem:[%s2314 + $0x5c] sm:$0xf]
        %v2331 = vld [vmem:[%s2314 + $0x60] sm:$0xff]
        %v2332 = vld [vmem:[%s2314 + $0x68] sm:$0xf]
        %v2333 = vld [vmem:[%s2314 + $0x6c] sm:$0xff]
        %v2334 = vld [vmem:[%s2314 + $0x74] sm:$0xf]
        %v2335 = vld [vmem:[%s2314 + $0x78] sm:$0xff]
        %v2336 = vld [vmem:[%s2314 + $0x80] sm:$0xf]
        %v2337 = vld [vmem:[%s2314 + $0x84] sm:$0xff]
        %v2338 = vld [vmem:[%s2314 + $0x8c] sm:$0xf]
        %v2339 = vld [vmem:[%s2314 + $0x90] sm:$0xff]
        %v2340 = vld [vmem:[%s2314 + $0x98] sm:$0xf]
        %v2341 = vld [vmem:[%s2314 + $0x9c] sm:$0xff]
        %v2342 = vld [vmem:[%s2314 + $0xa4] sm:$0xf]
        %v2343 = vld [vmem:[%s2314 + $0xa8] sm:$0xff]
        %v2344 = vld [vmem:[%s2314 + $0xb0] sm:$0xf]
        %v2345 = vld [vmem:[%s2314 + $0xb4] sm:$0xff]
        %v2346 = vld [vmem:[%s2314 + $0xbc] sm:$0xf]
        %v2347 = vld [vmem:[%s2314 + $0xc0] sm:$0xff]
        %v2348 = vld [vmem:[%s2314 + $0xc8] sm:$0xf]
        %v2349 = vld [vmem:[%s2314 + $0xcc] sm:$0xff]
        %v2350 = vld [vmem:[%s2314 + $0xd4] sm:$0xf]
        %v2351 = vld [vmem:[%s2314 + $0xd8] sm:$0xff]
        %v2352 = vld [vmem:[%s2314 + $0xe0] sm:$0xf]
        %v2353 = vld [vmem:[%s2314 + $0xe4] sm:$0xff]
        %v2354 = vld [vmem:[%s2314 + $0xec] sm:$0xf]
        %v2355 = vld [vmem:[%s2314 + $0xf0] sm:$0xff]
        %v2356 = vld [vmem:[%s2314 + $0xf8] sm:$0xf]
        %v2357 = vld [vmem:[%s2314 + $0xfc] sm:$0xff]
        %v2358 = vld [vmem:[%s2314 + $0x104] sm:$0xf]
        %v2359 = vld [vmem:[%s2314 + $0x108] sm:$0xff]
        %v2360 = vld [vmem:[%s2314 + $0x110] sm:$0xf]
        %v2361 = vld [vmem:[%s2314 + $0x114] sm:$0xff]
        %v2362 = vld [vmem:[%s2314 + $0x11c] sm:$0xf]
        %v2363 = vld [vmem:[%s2314 + $0x120] sm:$0xff]
        %v2364 = vld [vmem:[%s2314 + $0x128] sm:$0xf]
        %v2365 = vld [vmem:[%s2314 + $0x12c] sm:$0xff]
        %v2366 = vld [vmem:[%s2314 + $0x134] sm:$0xf]
        %v2367 = vld [vmem:[%s2314 + $0x138] sm:$0xff]
        %v2368 = vld [vmem:[%s2314 + $0x140] sm:$0xf]
        %v2369 = vld [vmem:[%s2314 + $0x144] sm:$0xff]
        %v2370 = vld [vmem:[%s2314 + $0x14c] sm:$0xf]
        %v2371 = vld [vmem:[%s2314 + $0x150] sm:$0xff]
        %v2372 = vld [vmem:[%s2314 + $0x158] sm:$0xf]
        %v2373 = vld [vmem:[%s2314 + $0x15c] sm:$0xff]
        %v2374 = vld [vmem:[%s2314 + $0x164] sm:$0xf]
        %v2375 = vld [vmem:[%s2314 + $0x168] sm:$0xff]
        %v2376 = vld [vmem:[%s2314 + $0x170] sm:$0xf]
        %v2377 = vld [vmem:[%s2314 + $0x174] sm:$0xff]
        %v2378 = vld [vmem:[%s2314 + $0x17c] sm:$0xf]
        %v2379 = vld [vmem:[%s2314 + $0x180] sm:$0xff]
        %v2380 = vld [vmem:[%s2314 + $0x188] sm:$0xf]
        %v2381 = vld [vmem:[%s2314 + $0x18c] sm:$0xff]
        %v2382 = vld [vmem:[%s2314 + $0x194] sm:$0xf]
        %v2383 = vld [vmem:[%s2314 + $0x198] sm:$0xff]
        %v2384 = vld [vmem:[%s2314 + $0x1a0] sm:$0xf]
        %v2385 = vld [vmem:[%s2314 + $0x1a4] sm:$0xff]
        %v2386 = vld [vmem:[%s2314 + $0x1ac] sm:$0xf]
        %v2387 = vld [vmem:[%s2314 + $0x1b0] sm:$0xff]
        %v2388 = vld [vmem:[%s2314 + $0x1b8] sm:$0xf]
        %v2389 = vld [vmem:[%s2314 + $0x1bc] sm:$0xff]
        %v2390 = vld [vmem:[%s2314 + $0x1c4] sm:$0xf]
        %v2391 = vld [vmem:[%s2314 + $0x1c8] sm:$0xff]
        %v2392 = vld [vmem:[%s2314 + $0x1d0] sm:$0xf]
        %v2393 = vld [vmem:[%s2314 + $0x1d4] sm:$0xff]
        %v2394 = vld [vmem:[%s2314 + $0x1dc] sm:$0xf]
        %v2395 = vld [vmem:[%s2314 + $0x1e0] sm:$0xff]
        %v2396 = vld [vmem:[%s2314 + $0x1e8] sm:$0xf]
        %v2397 = vld [vmem:[%s2314 + $0x1ec] sm:$0xff]
        %v2398 = vld [vmem:[%s2314 + $0x1f4] sm:$0xf]
        %v2399 = vld [vmem:[%s2314 + $0x1f8] sm:$0xff]
        %v2400 = vld [vmem:[%s2314 + $0x200] sm:$0xf]
        %v2401 = vld [vmem:[%s2314 + $0x204] sm:$0xff]
        %v2402 = vld [vmem:[%s2314 + $0x20c] sm:$0xf]
        %v2403 = vld [vmem:[%s2314 + $0x210] sm:$0xff]
        %v2404 = vld [vmem:[%s2314 + $0x218] sm:$0xf]
        %v2405 = vld [vmem:[%s2314 + $0x21c] sm:$0xff]
        %v2406 = vld [vmem:[%s2314 + $0x224] sm:$0xf]
        %v2407 = vld [vmem:[%s2314 + $0x228] sm:$0xff]
        %v2408 = vld [vmem:[%s2314 + $0x230] sm:$0xf]
        %v2409 = vld [vmem:[%s2314 + $0x234] sm:$0xff]
        %v2410 = vld [vmem:[%s2314 + $0x23c] sm:$0xf]
        %v2411 = vld [vmem:[%s2314 + $0x240] sm:$0xff]
        %v2412 = vld [vmem:[%s2314 + $0x248] sm:$0xf]
        %v2413 = vld [vmem:[%s2314 + $0x24c] sm:$0xff]
        %v2414 = vld [vmem:[%s2314 + $0x254] sm:$0xf]
        %v2415 = vld [vmem:[%s2314 + $0x258] sm:$0xff]
        %v2416 = vld [vmem:[%s2314 + $0x260] sm:$0xf]
        %v2417 = vld [vmem:[%s2314 + $0x264] sm:$0xff]
        %v2418 = vld [vmem:[%s2314 + $0x26c] sm:$0xf]
        %v2419 = vld [vmem:[%s2314 + $0x270] sm:$0xff]
        %v2420 = vld [vmem:[%s2314 + $0x278] sm:$0xf]
        %v2421 = vld [vmem:[%s2314 + $0x27c] sm:$0xff]
        %v2422 = vld [vmem:[%s2314 + $0x284] sm:$0xf]
        %v2423 = vld [vmem:[%s2314 + $0x288] sm:$0xff]
        %v2424 = vld [vmem:[%s2314 + $0x290] sm:$0xf]
        %v2425 = vld [vmem:[%s2314 + $0x294] sm:$0xff]
        %v2426 = vld [vmem:[%s2314 + $0x29c] sm:$0xf]
        %v2427 = vld [vmem:[%s2314 + $0x2a0] sm:$0xff]
        %v2428 = vld [vmem:[%s2314 + $0x2a8] sm:$0xf]
        %v2429 = vld [vmem:[%s2314 + $0x2ac] sm:$0xff]
        %v2430 = vld [vmem:[%s2314 + $0x2b4] sm:$0xf]
        %v2431 = vld [vmem:[%s2314 + $0x2b8] sm:$0xff]
        %v2432 = vld [vmem:[%s2314 + $0x2c0] sm:$0xf]
        %v2433 = vld [vmem:[%s2314 + $0x2c4] sm:$0xff]
        %v2434 = vld [vmem:[%s2314 + $0x2cc] sm:$0xf]
        %v2435 = vld [vmem:[%s2314 + $0x2d0] sm:$0xff]
        %v2436 = vld [vmem:[%s2314 + $0x2d8] sm:$0xf]
        %v2437 = vld [vmem:[%s2314 + $0x2dc] sm:$0xff]
        %v2438 = vld [vmem:[%s2314 + $0x2e4] sm:$0xf]
        %v2439 = vld [vmem:[%s2314 + $0x2e8] sm:$0xff]
        %v2440 = vld [vmem:[%s2314 + $0x2f0] sm:$0xf]
        %v2441 = vld [vmem:[%s2314 + $0x2f4] sm:$0xff]
        %v2442 = vld [vmem:[%s2314 + $0x2fc] sm:$0xf]
        %v2571 = vunpack.c.l.b16 %v2315
        %v2572 = vunpack.c.h.b16 %v2315
        %v2573 = vunpack.c.l.b16 %v2316
        %v2574 = vunpack.c.l.b16 %v2317
        %v2575 = vunpack.c.h.b16 %v2317
        %v2576 = vunpack.c.l.b16 %v2318
        %v2577 = vunpack.c.l.b16 %v2319
        %v2578 = vunpack.c.h.b16 %v2319
        %v2579 = vunpack.c.l.b16 %v2320
        %v2580 = vunpack.c.l.b16 %v2321
        %v2581 = vunpack.c.h.b16 %v2321
        %v2582 = vunpack.c.l.b16 %v2322
        %v2583 = vunpack.c.l.b16 %v2323
        %v2584 = vunpack.c.h.b16 %v2323
        %v2585 = vunpack.c.l.b16 %v2324
        %v2586 = vunpack.c.l.b16 %v2325
        %v2587 = vunpack.c.h.b16 %v2325
        %v2588 = vunpack.c.l.b16 %v2326
        %v2589 = vunpack.c.l.b16 %v2327
        %v2590 = vunpack.c.h.b16 %v2327
        %v2591 = vunpack.c.l.b16 %v2328
        %v2592 = vunpack.c.l.b16 %v2329
        %v2593 = vunpack.c.h.b16 %v2329
        %v2594 = vunpack.c.l.b16 %v2330
        %v2595 = vunpack.c.l.b16 %v2331
        %v2596 = vunpack.c.h.b16 %v2331
        %v2597 = vunpack.c.l.b16 %v2332
        %v2598 = vunpack.c.l.b16 %v2333
        %v2599 = vunpack.c.h.b16 %v2333
        %v2600 = vunpack.c.l.b16 %v2334
        %v2601 = vunpack.c.l.b16 %v2335
        %v2602 = vunpack.c.h.b16 %v2335
        %v2603 = vunpack.c.l.b16 %v2336
        %v2604 = vunpack.c.l.b16 %v2337
        %v2605 = vunpack.c.h.b16 %v2337
        %v2606 = vunpack.c.l.b16 %v2338
        %v2607 = vunpack.c.l.b16 %v2339
        %v2608 = vunpack.c.h.b16 %v2339
        %v2609 = vunpack.c.l.b16 %v2340
        %v2610 = vunpack.c.l.b16 %v2341
        %v2611 = vunpack.c.h.b16 %v2341
        %v2612 = vunpack.c.l.b16 %v2342
        %v2613 = vunpack.c.l.b16 %v2343
        %v2614 = vunpack.c.h.b16 %v2343
        %v2615 = vunpack.c.l.b16 %v2344
        %v2616 = vunpack.c.l.b16 %v2345
        %v2617 = vunpack.c.h.b16 %v2345
        %v2618 = vunpack.c.l.b16 %v2346
        %v2619 = vunpack.c.l.b16 %v2347
        %v2620 = vunpack.c.h.b16 %v2347
        %v2621 = vunpack.c.l.b16 %v2348
        %v2622 = vunpack.c.l.b16 %v2349
        %v2623 = vunpack.c.h.b16 %v2349
        %v2624 = vunpack.c.l.b16 %v2350
        %v2625 = vunpack.c.l.b16 %v2351
        %v2626 = vunpack.c.h.b16 %v2351
        %v2627 = vunpack.c.l.b16 %v2352
        %v2628 = vunpack.c.l.b16 %v2353
        %v2629 = vunpack.c.h.b16 %v2353
        %v2630 = vunpack.c.l.b16 %v2354
        %v2631 = vunpack.c.l.b16 %v2355
        %v2632 = vunpack.c.h.b16 %v2355
        %v2633 = vunpack.c.l.b16 %v2356
        %v2634 = vunpack.c.l.b16 %v2357
        %v2635 = vunpack.c.h.b16 %v2357
        %v2636 = vunpack.c.l.b16 %v2358
        %v2637 = vunpack.c.l.b16 %v2359
        %v2638 = vunpack.c.h.b16 %v2359
        %v2639 = vunpack.c.l.b16 %v2360
        %v2640 = vunpack.c.l.b16 %v2361
        %v2641 = vunpack.c.h.b16 %v2361
        %v2642 = vunpack.c.l.b16 %v2362
        %v2643 = vunpack.c.l.b16 %v2363
        %v2644 = vunpack.c.h.b16 %v2363
        %v2645 = vunpack.c.l.b16 %v2364
        %v2646 = vunpack.c.l.b16 %v2365
        %v2647 = vunpack.c.h.b16 %v2365
        %v2648 = vunpack.c.l.b16 %v2366
        %v2649 = vunpack.c.l.b16 %v2367
        %v2650 = vunpack.c.h.b16 %v2367
        %v2651 = vunpack.c.l.b16 %v2368
        %v2652 = vunpack.c.l.b16 %v2369
        %v2653 = vunpack.c.h.b16 %v2369
        %v2654 = vunpack.c.l.b16 %v2370
        %v2655 = vunpack.c.l.b16 %v2371
        %v2656 = vunpack.c.h.b16 %v2371
        %v2657 = vunpack.c.l.b16 %v2372
        %v2658 = vunpack.c.l.b16 %v2373
        %v2659 = vunpack.c.h.b16 %v2373
        %v2660 = vunpack.c.l.b16 %v2374
        %v2661 = vunpack.c.l.b16 %v2375
        %v2662 = vunpack.c.h.b16 %v2375
        %v2663 = vunpack.c.l.b16 %v2376
        %v2664 = vunpack.c.l.b16 %v2377
        %v2665 = vunpack.c.h.b16 %v2377
        %v2666 = vunpack.c.l.b16 %v2378
        %v2667 = vunpack.c.l.b16 %v2379
        %v2668 = vunpack.c.h.b16 %v2379
        %v2669 = vunpack.c.l.b16 %v2380
        %v2670 = vunpack.c.l.b16 %v2381
        %v2671 = vunpack.c.h.b16 %v2381
        %v2672 = vunpack.c.l.b16 %v2382
        %v2673 = vunpack.c.l.b16 %v2383
        %v2674 = vunpack.c.h.b16 %v2383
        %v2675 = vunpack.c.l.b16 %v2384
        %v2676 = vunpack.c.l.b16 %v2385
        %v2677 = vunpack.c.h.b16 %v2385
        %v2678 = vunpack.c.l.b16 %v2386
        %v2679 = vunpack.c.l.b16 %v2387
        %v2680 = vunpack.c.h.b16 %v2387
        %v2681 = vunpack.c.l.b16 %v2388
        %v2682 = vunpack.c.l.b16 %v2389
        %v2683 = vunpack.c.h.b16 %v2389
        %v2684 = vunpack.c.l.b16 %v2390
        %v2685 = vunpack.c.l.b16 %v2391
        %v2686 = vunpack.c.h.b16 %v2391
        %v2687 = vunpack.c.l.b16 %v2392
        %v2688 = vunpack.c.l.b16 %v2393
        %v2689 = vunpack.c.h.b16 %v2393
        %v2690 = vunpack.c.l.b16 %v2394
        %v2691 = vunpack.c.l.b16 %v2395
        %v2692 = vunpack.c.h.b16 %v2395
        %v2693 = vunpack.c.l.b16 %v2396
        %v2694 = vunpack.c.l.b16 %v2397
        %v2695 = vunpack.c.h.b16 %v2397
        %v2696 = vunpack.c.l.b16 %v2398
        %v2697 = vunpack.c.l.b16 %v2399
        %v2698 = vunpack.c.h.b16 %v2399
        %v2699 = vunpack.c.l.b16 %v2400
        %v2700 = vunpack.c.l.b16 %v2401
        %v2701 = vunpack.c.h.b16 %v2401
        %v2702 = vunpack.c.l.b16 %v2402
        %v2703 = vunpack.c.l.b16 %v2403
        %v2704 = vunpack.c.h.b16 %v2403
        %v2705 = vunpack.c.l.b16 %v2404
        %v2706 = vunpack.c.l.b16 %v2405
        %v2707 = vunpack.c.h.b16 %v2405
        %v2708 = vunpack.c.l.b16 %v2406
        %v2709 = vunpack.c.l.b16 %v2407
        %v2710 = vunpack.c.h.b16 %v2407
        %v2711 = vunpack.c.l.b16 %v2408
        %v2712 = vunpack.c.l.b16 %v2409
        %v2713 = vunpack.c.h.b16 %v2409
        %v2714 = vunpack.c.l.b16 %v2410
        %v2715 = vunpack.c.l.b16 %v2411
        %v2716 = vunpack.c.h.b16 %v2411
        %v2717 = vunpack.c.l.b16 %v2412
        %v2718 = vunpack.c.l.b16 %v2413
        %v2719 = vunpack.c.h.b16 %v2413
        %v2720 = vunpack.c.l.b16 %v2414
        %v2721 = vunpack.c.l.b16 %v2415
        %v2722 = vunpack.c.h.b16 %v2415
        %v2723 = vunpack.c.l.b16 %v2416
        %v2724 = vunpack.c.l.b16 %v2417
        %v2725 = vunpack.c.h.b16 %v2417
        %v2726 = vunpack.c.l.b16 %v2418
        %v2727 = vunpack.c.l.b16 %v2419
        %v2728 = vunpack.c.h.b16 %v2419
        %v2729 = vunpack.c.l.b16 %v2420
        %v2730 = vunpack.c.l.b16 %v2421
        %v2731 = vunpack.c.h.b16 %v2421
        %v2732 = vunpack.c.l.b16 %v2422
        %v2733 = vunpack.c.l.b16 %v2423
        %v2734 = vunpack.c.h.b16 %v2423
        %v2735 = vunpack.c.l.b16 %v2424
        %v2736 = vunpack.c.l.b16 %v2425
        %v2737 = vunpack.c.h.b16 %v2425
        %v2738 = vunpack.c.l.b16 %v2426
        %v2739 = vunpack.c.l.b16 %v2427
        %v2740 = vunpack.c.h.b16 %v2427
        %v2741 = vunpack.c.l.b16 %v2428
        %v2742 = vunpack.c.l.b16 %v2429
        %v2743 = vunpack.c.h.b16 %v2429
        %v2744 = vunpack.c.l.b16 %v2430
        %v2745 = vunpack.c.l.b16 %v2431
        %v2746 = vunpack.c.h.b16 %v2431
        %v2747 = vunpack.c.l.b16 %v2432
        %v2748 = vunpack.c.l.b16 %v2433
        %v2749 = vunpack.c.h.b16 %v2433
        %v2750 = vunpack.c.l.b16 %v2434
        %v2751 = vunpack.c.l.b16 %v2435
        %v2752 = vunpack.c.h.b16 %v2435
        %v2753 = vunpack.c.l.b16 %v2436
        %v2754 = vunpack.c.l.b16 %v2437
        %v2755 = vunpack.c.h.b16 %v2437
        %v2756 = vunpack.c.l.b16 %v2438
        %v2757 = vunpack.c.l.b16 %v2439
        %v2758 = vunpack.c.h.b16 %v2439
        %v2759 = vunpack.c.l.b16 %v2440
        %v2760 = vunpack.c.l.b16 %v2441
        %v2761 = vunpack.c.h.b16 %v2441
        %v2762 = vunpack.c.l.b16 %v2442
        %v2763 = vpack.c.b16 %v2574, %v2571
        %v2764 = vpack.c.b16 %v2575, %v2572
        %v2765 = vpack.c.b16 %v2576, %v2573
        %v2766 = vpack.c.b16 %v2580, %v2577
        %v2767 = vpack.c.b16 %v2581, %v2578
        %v2768 = vpack.c.b16 %v2582, %v2579
        %v2769 = vpack.c.b16 %v2586, %v2583
        %v2770 = vpack.c.b16 %v2587, %v2584
        %v2771 = vpack.c.b16 %v2588, %v2585
        %v2772 = vpack.c.b16 %v2592, %v2589
        %v2773 = vpack.c.b16 %v2593, %v2590
        %v2774 = vpack.c.b16 %v2594, %v2591
        %v2775 = vpack.c.b16 %v2598, %v2595
        %v2776 = vpack.c.b16 %v2599, %v2596
        %v2777 = vpack.c.b16 %v2600, %v2597
        %v2778 = vpack.c.b16 %v2604, %v2601
        %v2779 = vpack.c.b16 %v2605, %v2602
        %v2780 = vpack.c.b16 %v2606, %v2603
        %v2781 = vpack.c.b16 %v2610, %v2607
        %v2782 = vpack.c.b16 %v2611, %v2608
        %v2783 = vpack.c.b16 %v2612, %v2609
        %v2784 = vpack.c.b16 %v2616, %v2613
        %v2785 = vpack.c.b16 %v2617, %v2614
        %v2786 = vpack.c.b16 %v2618, %v2615
        %v2787 = vpack.c.b16 %v2622, %v2619
        %v2788 = vpack.c.b16 %v2623, %v2620
        %v2789 = vpack.c.b16 %v2624, %v2621
        %v2790 = vpack.c.b16 %v2628, %v2625
        %v2791 = vpack.c.b16 %v2629, %v2626
        %v2792 = vpack.c.b16 %v2630, %v2627
        %v2793 = vpack.c.b16 %v2634, %v2631
        %v2794 = vpack.c.b16 %v2635, %v2632
        %v2795 = vpack.c.b16 %v2636, %v2633
        %v2796 = vpack.c.b16 %v2640, %v2637
        %v2797 = vpack.c.b16 %v2641, %v2638
        %v2798 = vpack.c.b16 %v2642, %v2639
        %v2799 = vpack.c.b16 %v2646, %v2643
        %v2800 = vpack.c.b16 %v2647, %v2644
        %v2801 = vpack.c.b16 %v2648, %v2645
        %v2802 = vpack.c.b16 %v2652, %v2649
        %v2803 = vpack.c.b16 %v2653, %v2650
        %v2804 = vpack.c.b16 %v2654, %v2651
        %v2805 = vpack.c.b16 %v2658, %v2655
        %v2806 = vpack.c.b16 %v2659, %v2656
        %v2807 = vpack.c.b16 %v2660, %v2657
        %v2808 = vpack.c.b16 %v2664, %v2661
        %v2809 = vpack.c.b16 %v2665, %v2662
        %v2810 = vpack.c.b16 %v2666, %v2663
        %v2811 = vpack.c.b16 %v2670, %v2667
        %v2812 = vpack.c.b16 %v2671, %v2668
        %v2813 = vpack.c.b16 %v2672, %v2669
        %v2814 = vpack.c.b16 %v2676, %v2673
        %v2815 = vpack.c.b16 %v2677, %v2674
        %v2816 = vpack.c.b16 %v2678, %v2675
        %v2817 = vpack.c.b16 %v2682, %v2679
        %v2818 = vpack.c.b16 %v2683, %v2680
        %v2819 = vpack.c.b16 %v2684, %v2681
        %v2820 = vpack.c.b16 %v2688, %v2685
        %v2821 = vpack.c.b16 %v2689, %v2686
        %v2822 = vpack.c.b16 %v2690, %v2687
        %v2823 = vpack.c.b16 %v2694, %v2691
        %v2824 = vpack.c.b16 %v2695, %v2692
        %v2825 = vpack.c.b16 %v2696, %v2693
        %v2826 = vpack.c.b16 %v2700, %v2697
        %v2827 = vpack.c.b16 %v2701, %v2698
        %v2828 = vpack.c.b16 %v2702, %v2699
        %v2829 = vpack.c.b16 %v2706, %v2703
        %v2830 = vpack.c.b16 %v2707, %v2704
        %v2831 = vpack.c.b16 %v2708, %v2705
        %v2832 = vpack.c.b16 %v2712, %v2709
        %v2833 = vpack.c.b16 %v2713, %v2710
        %v2834 = vpack.c.b16 %v2714, %v2711
        %v2835 = vpack.c.b16 %v2718, %v2715
        %v2836 = vpack.c.b16 %v2719, %v2716
        %v2837 = vpack.c.b16 %v2720, %v2717
        %v2838 = vpack.c.b16 %v2724, %v2721
        %v2839 = vpack.c.b16 %v2725, %v2722
        %v2840 = vpack.c.b16 %v2726, %v2723
        %v2841 = vpack.c.b16 %v2730, %v2727
        %v2842 = vpack.c.b16 %v2731, %v2728
        %v2843 = vpack.c.b16 %v2732, %v2729
        %v2844 = vpack.c.b16 %v2736, %v2733
        %v2845 = vpack.c.b16 %v2737, %v2734
        %v2846 = vpack.c.b16 %v2738, %v2735
        %v2847 = vpack.c.b16 %v2742, %v2739
        %v2848 = vpack.c.b16 %v2743, %v2740
        %v2849 = vpack.c.b16 %v2744, %v2741
        %v2850 = vpack.c.b16 %v2748, %v2745
        %v2851 = vpack.c.b16 %v2749, %v2746
        %v2852 = vpack.c.b16 %v2750, %v2747
        %v2853 = vpack.c.b16 %v2754, %v2751
        %v2854 = vpack.c.b16 %v2755, %v2752
        %v2855 = vpack.c.b16 %v2756, %v2753
        %v2856 = vpack.c.b16 %v2760, %v2757
        %v2857 = vpack.c.b16 %v2761, %v2758
        %v2858 = vpack.c.b16 %v2762, %v2759
        %2955 = vmatpush.bf16.msra.mxu0 %v2784
        %2956 = vmatpush.bf16.msra.mxu0 %v2781
        %2957 = vmatpush.bf16.msra.mxu0 %v2778
        %2958 = vmatpush.bf16.msra.mxu0 %v2775
        %2959 = vmatpush.bf16.msra.mxu0 %v2772
        %2960 = vmatpush.bf16.msra.mxu0 %v2769
        %2961 = vmatpush.bf16.msra.mxu0 %v2766
        %2962 = vmatpush.bf16.msra.mxu0 %v2763
        %2963 = vmatmul.bf16.gmra.mxu0 %v525
        %v2964 = vpop.f32.mrf.mxu0
        %v2965 = vadd.f32 0.0, %v2964
        %v2966 = vpop.f32.mrf.mxu0
        %v2967 = vadd.f32 0.0, %v2966
        %2968 = vdwg.mxu0
        %2969 = vmatpush.bf16.msra.mxu0 %v2808
        %2970 = vmatpush.bf16.msra.mxu0 %v2805
        %2971 = vmatpush.bf16.msra.mxu0 %v2802
        %2972 = vmatpush.bf16.msra.mxu0 %v2799
        %2973 = vmatpush.bf16.msra.mxu0 %v2796
        %2974 = vmatpush.bf16.msra.mxu0 %v2793
        %2975 = vmatpush.bf16.msra.mxu0 %v2790
        %2976 = vmatpush.bf16.msra.mxu0 %v2787
        %2977 = vmatmul.bf16.gmra.mxu0 %v526
        %v2978 = vpop.f32.mrf.mxu0
        %v2979 = vadd.f32 %v2965, %v2978
        %v2980 = vpop.f32.mrf.mxu0
        %v2981 = vadd.f32 %v2967, %v2980
        %2982 = vdwg.mxu0
        %2983 = vmatpush.bf16.msra.mxu0 %v2832
        %2984 = vmatpush.bf16.msra.mxu0 %v2829
        %2985 = vmatpush.bf16.msra.mxu0 %v2826
        %2986 = vmatpush.bf16.msra.mxu0 %v2823
        %2987 = vmatpush.bf16.msra.mxu0 %v2820
        %2988 = vmatpush.bf16.msra.mxu0 %v2817
        %2989 = vmatpush.bf16.msra.mxu0 %v2814
        %2990 = vmatpush.bf16.msra.mxu0 %v2811
        %2991 = vmatmul.bf16.gmra.mxu0 %v527
        %v2992 = vpop.f32.mrf.mxu0
        %v2993 = vadd.f32 %v2979, %v2992
        %v2994 = vpop.f32.mrf.mxu0
        %v2995 = vadd.f32 %v2981, %v2994
        %2996 = vdwg.mxu0
        %2997 = vmatpush.bf16.msra.mxu0 %v2856
        %2998 = vmatpush.bf16.msra.mxu0 %v2853
        %2999 = vmatpush.bf16.msra.mxu0 %v2850
        %3000 = vmatpush.bf16.msra.mxu0 %v2847
        %3001 = vmatpush.bf16.msra.mxu0 %v2844
        %3002 = vmatpush.bf16.msra.mxu0 %v2841
        %3003 = vmatpush.bf16.msra.mxu0 %v2838
        %3004 = vmatpush.bf16.msra.mxu0 %v2835
        %3005 = vmatmul.bf16.gmra.mxu0 %v528
        %v3006 = vpop.f32.mrf.mxu0
        %v3007 = vadd.f32 %v2993, %v3006
        %v3008 = vpop.f32.mrf.mxu0
        %v3009 = vadd.f32 %v2995, %v3008
        %3010 = vdwg.mxu0
        %3011 = vmatpush.bf16.msra.mxu0 %v2785
        %3012 = vmatpush.bf16.msra.mxu0 %v2782
        %3013 = vmatpush.bf16.msra.mxu0 %v2779
        %3014 = vmatpush.bf16.msra.mxu0 %v2776
        %3015 = vmatpush.bf16.msra.mxu0 %v2773
        %3016 = vmatpush.bf16.msra.mxu0 %v2770
        %3017 = vmatpush.bf16.msra.mxu0 %v2767
        %3018 = vmatpush.bf16.msra.mxu0 %v2764
        %3019 = vmatmul.bf16.gmra.mxu0 %v525
        %v3020 = vpop.f32.mrf.mxu0
        %v3021 = vadd.f32 0.0, %v3020
        %v3022 = vpop.f32.mrf.mxu0
        %v3023 = vadd.f32 0.0, %v3022
        %3024 = vdwg.mxu0
        %3025 = vmatpush.bf16.msra.mxu0 %v2809
        %3026 = vmatpush.bf16.msra.mxu0 %v2806
        %3027 = vmatpush.bf16.msra.mxu0 %v2803
        %3028 = vmatpush.bf16.msra.mxu0 %v2800
        %3029 = vmatpush.bf16.msra.mxu0 %v2797
        %3030 = vmatpush.bf16.msra.mxu0 %v2794
        %3031 = vmatpush.bf16.msra.mxu0 %v2791
        %3032 = vmatpush.bf16.msra.mxu0 %v2788
        %3033 = vmatmul.bf16.gmra.mxu0 %v526
        %v3034 = vpop.f32.mrf.mxu0
        %v3035 = vadd.f32 %v3021, %v3034
        %v3036 = vpop.f32.mrf.mxu0
        %v3037 = vadd.f32 %v3023, %v3036
        %3038 = vdwg.mxu0
        %3039 = vmatpush.bf16.msra.mxu0 %v2833
        %3040 = vmatpush.bf16.msra.mxu0 %v2830
        %3041 = vmatpush.bf16.msra.mxu0 %v2827
        %3042 = vmatpush.bf16.msra.mxu0 %v2824
        %3043 = vmatpush.bf16.msra.mxu0 %v2821
        %3044 = vmatpush.bf16.msra.mxu0 %v2818
        %3045 = vmatpush.bf16.msra.mxu0 %v2815
        %3046 = vmatpush.bf16.msra.mxu0 %v2812
        %3047 = vmatmul.bf16.gmra.mxu0 %v527
        %v3048 = vpop.f32.mrf.mxu0
        %v3049 = vadd.f32 %v3035, %v3048
        %v3050 = vpop.f32.mrf.mxu0
        %v3051 = vadd.f32 %v3037, %v3050
        %3052 = vdwg.mxu0
        %3053 = vmatpush.bf16.msra.mxu0 %v2857
        %3054 = vmatpush.bf16.msra.mxu0 %v2854
        %3055 = vmatpush.bf16.msra.mxu0 %v2851
        %3056 = vmatpush.bf16.msra.mxu0 %v2848
        %3057 = vmatpush.bf16.msra.mxu0 %v2845
        %3058 = vmatpush.bf16.msra.mxu0 %v2842
        %3059 = vmatpush.bf16.msra.mxu0 %v2839
        %3060 = vmatpush.bf16.msra.mxu0 %v2836
        %3061 = vmatmul.bf16.gmra.mxu0 %v528
        %v3062 = vpop.f32.mrf.mxu0
        %v3063 = vadd.f32 %v3049, %v3062
        %v3064 = vpop.f32.mrf.mxu0
        %v3065 = vadd.f32 %v3051, %v3064
        %3066 = vdwg.mxu0
        %3067 = vmatpush.bf16.msra.mxu0 %v2786
        %3068 = vmatpush.bf16.msra.mxu0 %v2783
        %3069 = vmatpush.bf16.msra.mxu0 %v2780
        %3070 = vmatpush.bf16.msra.mxu0 %v2777
        %3071 = vmatpush.bf16.msra.mxu0 %v2774
        %3072 = vmatpush.bf16.msra.mxu0 %v2771
        %3073 = vmatpush.bf16.msra.mxu0 %v2768
        %3074 = vmatpush.bf16.msra.mxu0 %v2765
        %3075 = vmatmul.bf16.gmra.mxu0 %v525
        %v3076 = vpop.f32.mrf.mxu0
        %v3077 = vadd.f32 0.0, %v3076
        %v3078 = vpop.f32.mrf.mxu0
        %v3079 = vadd.f32 0.0, %v3078
        %3080 = vdwg.mxu0
        %3081 = vmatpush.bf16.msra.mxu0 %v2810
        %3082 = vmatpush.bf16.msra.mxu0 %v2807
        %3083 = vmatpush.bf16.msra.mxu0 %v2804
        %3084 = vmatpush.bf16.msra.mxu0 %v2801
        %3085 = vmatpush.bf16.msra.mxu0 %v2798
        %3086 = vmatpush.bf16.msra.mxu0 %v2795
        %3087 = vmatpush.bf16.msra.mxu0 %v2792
        %3088 = vmatpush.bf16.msra.mxu0 %v2789
        %3089 = vmatmul.bf16.gmra.mxu0 %v526
        %v3090 = vpop.f32.mrf.mxu0
        %v3091 = vadd.f32 %v3077, %v3090
        %v3092 = vpop.f32.mrf.mxu0
        %v3093 = vadd.f32 %v3079, %v3092
        %3094 = vdwg.mxu0
        %3095 = vmatpush.bf16.msra.mxu0 %v2834
        %3096 = vmatpush.bf16.msra.mxu0 %v2831
        %3097 = vmatpush.bf16.msra.mxu0 %v2828
        %3098 = vmatpush.bf16.msra.mxu0 %v2825
        %3099 = vmatpush.bf16.msra.mxu0 %v2822
        %3100 = vmatpush.bf16.msra.mxu0 %v2819
        %3101 = vmatpush.bf16.msra.mxu0 %v2816
        %3102 = vmatpush.bf16.msra.mxu0 %v2813
        %3103 = vmatmul.bf16.gmra.mxu0 %v527
        %v3104 = vpop.f32.mrf.mxu0
        %v3105 = vadd.f32 %v3091, %v3104
        %v3106 = vpop.f32.mrf.mxu0
        %v3107 = vadd.f32 %v3093, %v3106
        %3108 = vdwg.mxu0
        %3109 = vmatpush.bf16.msra.mxu0 %v2858
        %3110 = vmatpush.bf16.msra.mxu0 %v2855
        %3111 = vmatpush.bf16.msra.mxu0 %v2852
        %3112 = vmatpush.bf16.msra.mxu0 %v2849
        %3113 = vmatpush.bf16.msra.mxu0 %v2846
        %3114 = vmatpush.bf16.msra.mxu0 %v2843
        %3115 = vmatpush.bf16.msra.mxu0 %v2840
        %3116 = vmatpush.bf16.msra.mxu0 %v2837
        %3117 = vmatmul.bf16.gmra.mxu0 %v528
        %v3118 = vpop.f32.mrf.mxu0
        %v3119 = vadd.f32 %v3105, %v3118
        %v3120 = vpop.f32.mrf.mxu0
        %v3121 = vadd.f32 %v3107, %v3120
        %3122 = vdwg.mxu0
        %v3123 = vld [vmem:[#allocation4] sm:$0x7]
        %v3124 = vrot.slane %v3007, 7
        %v3125 = vrot.slane %v3063, 7
        %v3126 = vrot.slane %v3119, 7
        %v3127 = vrot.slane %v3009, 7
        %v3128 = vrot.slane %v3065, 7
        %v3129 = vrot.slane %v3121, 7
        %vm3130 = vcmp.lt.s32.totalorder %v530, 1
        %v3131 = vsel %vm3130, %v3124, %v3127
        %v3132 = vsel %vm3130, %v3125, %v3128
        %v3133 = vsel %vm3130, %v3126, %v3129
        %v3134 = vsel %vm3130, %v3127, %v3124
        %v3135 = vsel %vm3130, %v3128, %v3125
        %v3136 = vsel %vm3130, %v3129, %v3126
        %v3137 = vmul.f32 %v3134, %v560
        %v3138 = vmul.f32 %v3135, %v560
        %v3139 = vmul.f32 %v3136, %v560
        %v3140 = vmul.f32 %v3131, %v561
        %v3141 = vmul.f32 %v3132, %v561
        %v3142 = vmul.f32 %v3133, %v561
        %v3143 = vadd.f32 %v3137, %v2069
        %v3144 = vadd.f32 %v3138, %v2125
        %v3145 = vadd.f32 %v3139, %v2181
        %v3146 = vadd.f32 %v3140, %v2071
        %v3147 = vadd.f32 %v3141, %v2127
        %v3148 = vadd.f32 %v3142, %v2183
        %v3150 = vperm.slane %v3123, 0
        %v3151 = vperm.slane %v3123, 1
        %v3152 = vperm.slane %v3123, 2
        %v3156 = vadd.f32 %v3143, %v3150
        %v3157 = vadd.f32 %v3144, %v3151
        %v3158 = vadd.f32 %v3145, %v3152
        %v3159 = vadd.f32 %v3146, %v3150
        %v3160 = vadd.f32 %v3147, %v3151
        %v3161 = vadd.f32 %v3148, %v3152
        %v3162 = vrot.slane %v1260, 1
        %v3163 = vrot.slane %v1316, 1
        %v3164 = vrot.slane %v1372, 1
        %v3165 = vrot.slane %v1262, 1
        %v3166 = vrot.slane %v1318, 1
        %v3167 = vrot.slane %v1374, 1
        %vm3168 = vcmp.lt.s32.totalorder %v530, 7
        %v3169 = vsel %vm3168, %v3162, %v3165
        %v3170 = vsel %vm3168, %v3163, %v3166
        %v3171 = vsel %vm3168, %v3164, %v3167
        %v3172 = vsel %vm3168, %v3165, %v3162
        %v3173 = vsel %vm3168, %v3166, %v3163
        %v3174 = vsel %vm3168, %v3167, %v3164
        %v3175 = vmul.f32 %v3169, %v566
        %v3176 = vmul.f32 %v3170, %v566
        %v3177 = vmul.f32 %v3171, %v566
        %v3178 = vmul.f32 %v3172, %v567
        %v3179 = vmul.f32 %v3173, %v567
        %v3180 = vmul.f32 %v3174, %v567
        %v3309 = vunpack.c.l.b16 %v2186
        %v3310 = vunpack.c.h.b16 %v2186
        %v3311 = vunpack.c.l.b16 %v2187
        %v3312 = vunpack.c.l.b16 %v2188
        %v3313 = vunpack.c.h.b16 %v2188
        %v3314 = vunpack.c.l.b16 %v2189
        %v3315 = vunpack.c.l.b16 %v2190
        %v3316 = vunpack.c.h.b16 %v2190
        %v3317 = vunpack.c.l.b16 %v2191
        %v3318 = vunpack.c.l.b16 %v2192
        %v3319 = vunpack.c.h.b16 %v2192
        %v3320 = vunpack.c.l.b16 %v2193
        %v3321 = vunpack.c.l.b16 %v2194
        %v3322 = vunpack.c.h.b16 %v2194
        %v3323 = vunpack.c.l.b16 %v2195
        %v3324 = vunpack.c.l.b16 %v2196
        %v3325 = vunpack.c.h.b16 %v2196
        %v3326 = vunpack.c.l.b16 %v2197
        %v3327 = vunpack.c.l.b16 %v2198
        %v3328 = vunpack.c.h.b16 %v2198
        %v3329 = vunpack.c.l.b16 %v2199
        %v3330 = vunpack.c.l.b16 %v2200
        %v3331 = vunpack.c.h.b16 %v2200
        %v3332 = vunpack.c.l.b16 %v2201
        %v3333 = vunpack.c.l.b16 %v2202
        %v3334 = vunpack.c.h.b16 %v2202
        %v3335 = vunpack.c.l.b16 %v2203
        %v3336 = vunpack.c.l.b16 %v2204
        %v3337 = vunpack.c.h.b16 %v2204
        %v3338 = vunpack.c.l.b16 %v2205
        %v3339 = vunpack.c.l.b16 %v2206
        %v3340 = vunpack.c.h.b16 %v2206
        %v3341 = vunpack.c.l.b16 %v2207
        %v3342 = vunpack.c.l.b16 %v2208
        %v3343 = vunpack.c.h.b16 %v2208
        %v3344 = vunpack.c.l.b16 %v2209
        %v3345 = vunpack.c.l.b16 %v2210
        %v3346 = vunpack.c.h.b16 %v2210
        %v3347 = vunpack.c.l.b16 %v2211
        %v3348 = vunpack.c.l.b16 %v2212
        %v3349 = vunpack.c.h.b16 %v2212
        %v3350 = vunpack.c.l.b16 %v2213
        %v3351 = vunpack.c.l.b16 %v2214
        %v3352 = vunpack.c.h.b16 %v2214
        %v3353 = vunpack.c.l.b16 %v2215
        %v3354 = vunpack.c.l.b16 %v2216
        %v3355 = vunpack.c.h.b16 %v2216
        %v3356 = vunpack.c.l.b16 %v2217
        %v3357 = vunpack.c.l.b16 %v2218
        %v3358 = vunpack.c.h.b16 %v2218
        %v3359 = vunpack.c.l.b16 %v2219
        %v3360 = vunpack.c.l.b16 %v2220
        %v3361 = vunpack.c.h.b16 %v2220
        %v3362 = vunpack.c.l.b16 %v2221
        %v3363 = vunpack.c.l.b16 %v2222
        %v3364 = vunpack.c.h.b16 %v2222
        %v3365 = vunpack.c.l.b16 %v2223
        %v3366 = vunpack.c.l.b16 %v2224
        %v3367 = vunpack.c.h.b16 %v2224
        %v3368 = vunpack.c.l.b16 %v2225
        %v3369 = vunpack.c.l.b16 %v2226
        %v3370 = vunpack.c.h.b16 %v2226
        %v3371 = vunpack.c.l.b16 %v2227
        %v3372 = vunpack.c.l.b16 %v2228
        %v3373 = vunpack.c.h.b16 %v2228
        %v3374 = vunpack.c.l.b16 %v2229
        %v3375 = vunpack.c.l.b16 %v2230
        %v3376 = vunpack.c.h.b16 %v2230
        %v3377 = vunpack.c.l.b16 %v2231
        %v3378 = vunpack.c.l.b16 %v2232
        %v3379 = vunpack.c.h.b16 %v2232
        %v3380 = vunpack.c.l.b16 %v2233
        %v3381 = vunpack.c.l.b16 %v2234
        %v3382 = vunpack.c.h.b16 %v2234
        %v3383 = vunpack.c.l.b16 %v2235
        %v3384 = vunpack.c.l.b16 %v2236
        %v3385 = vunpack.c.h.b16 %v2236
        %v3386 = vunpack.c.l.b16 %v2237
        %v3387 = vunpack.c.l.b16 %v2238
        %v3388 = vunpack.c.h.b16 %v2238
        %v3389 = vunpack.c.l.b16 %v2239
        %v3390 = vunpack.c.l.b16 %v2240
        %v3391 = vunpack.c.h.b16 %v2240
        %v3392 = vunpack.c.l.b16 %v2241
        %v3393 = vunpack.c.l.b16 %v2242
        %v3394 = vunpack.c.h.b16 %v2242
        %v3395 = vunpack.c.l.b16 %v2243
        %v3396 = vunpack.c.l.b16 %v2244
        %v3397 = vunpack.c.h.b16 %v2244
        %v3398 = vunpack.c.l.b16 %v2245
        %v3399 = vunpack.c.l.b16 %v2246
        %v3400 = vunpack.c.h.b16 %v2246
        %v3401 = vunpack.c.l.b16 %v2247
        %v3402 = vunpack.c.l.b16 %v2248
        %v3403 = vunpack.c.h.b16 %v2248
        %v3404 = vunpack.c.l.b16 %v2249
        %v3405 = vunpack.c.l.b16 %v2250
        %v3406 = vunpack.c.h.b16 %v2250
        %v3407 = vunpack.c.l.b16 %v2251
        %v3408 = vunpack.c.l.b16 %v2252
        %v3409 = vunpack.c.h.b16 %v2252
        %v3410 = vunpack.c.l.b16 %v2253
        %v3411 = vunpack.c.l.b16 %v2254
        %v3412 = vunpack.c.h.b16 %v2254
        %v3413 = vunpack.c.l.b16 %v2255
        %v3414 = vunpack.c.l.b16 %v2256
        %v3415 = vunpack.c.h.b16 %v2256
        %v3416 = vunpack.c.l.b16 %v2257
        %v3417 = vunpack.c.l.b16 %v2258
        %v3418 = vunpack.c.h.b16 %v2258
        %v3419 = vunpack.c.l.b16 %v2259
        %v3420 = vunpack.c.l.b16 %v2260
        %v3421 = vunpack.c.h.b16 %v2260
        %v3422 = vunpack.c.l.b16 %v2261
        %v3423 = vunpack.c.l.b16 %v2262
        %v3424 = vunpack.c.h.b16 %v2262
        %v3425 = vunpack.c.l.b16 %v2263
        %v3426 = vunpack.c.l.b16 %v2264
        %v3427 = vunpack.c.h.b16 %v2264
        %v3428 = vunpack.c.l.b16 %v2265
        %v3429 = vunpack.c.l.b16 %v2266
        %v3430 = vunpack.c.h.b16 %v2266
        %v3431 = vunpack.c.l.b16 %v2267
        %v3432 = vunpack.c.l.b16 %v2268
        %v3433 = vunpack.c.h.b16 %v2268
        %v3434 = vunpack.c.l.b16 %v2269
        %v3435 = vunpack.c.l.b16 %v2270
        %v3436 = vunpack.c.h.b16 %v2270
        %v3437 = vunpack.c.l.b16 %v2271
        %v3438 = vunpack.c.l.b16 %v2272
        %v3439 = vunpack.c.h.b16 %v2272
        %v3440 = vunpack.c.l.b16 %v2273
        %v3441 = vunpack.c.l.b16 %v2274
        %v3442 = vunpack.c.h.b16 %v2274
        %v3443 = vunpack.c.l.b16 %v2275
        %v3444 = vunpack.c.l.b16 %v2276
        %v3445 = vunpack.c.h.b16 %v2276
        %v3446 = vunpack.c.l.b16 %v2277
        %v3447 = vunpack.c.l.b16 %v2278
        %v3448 = vunpack.c.h.b16 %v2278
        %v3449 = vunpack.c.l.b16 %v2279
        %v3450 = vunpack.c.l.b16 %v2280
        %v3451 = vunpack.c.h.b16 %v2280
        %v3452 = vunpack.c.l.b16 %v2281
        %v3453 = vunpack.c.l.b16 %v2282
        %v3454 = vunpack.c.h.b16 %v2282
        %v3455 = vunpack.c.l.b16 %v2283
        %v3456 = vunpack.c.l.b16 %v2284
        %v3457 = vunpack.c.h.b16 %v2284
        %v3458 = vunpack.c.l.b16 %v2285
        %v3459 = vunpack.c.l.b16 %v2286
        %v3460 = vunpack.c.h.b16 %v2286
        %v3461 = vunpack.c.l.b16 %v2287
        %v3462 = vunpack.c.l.b16 %v2288
        %v3463 = vunpack.c.h.b16 %v2288
        %v3464 = vunpack.c.l.b16 %v2289
        %v3465 = vunpack.c.l.b16 %v2290
        %v3466 = vunpack.c.h.b16 %v2290
        %v3467 = vunpack.c.l.b16 %v2291
        %v3468 = vunpack.c.l.b16 %v2292
        %v3469 = vunpack.c.h.b16 %v2292
        %v3470 = vunpack.c.l.b16 %v2293
        %v3471 = vunpack.c.l.b16 %v2294
        %v3472 = vunpack.c.h.b16 %v2294
        %v3473 = vunpack.c.l.b16 %v2295
        %v3474 = vunpack.c.l.b16 %v2296
        %v3475 = vunpack.c.h.b16 %v2296
        %v3476 = vunpack.c.l.b16 %v2297
        %v3477 = vunpack.c.l.b16 %v2298
        %v3478 = vunpack.c.h.b16 %v2298
        %v3479 = vunpack.c.l.b16 %v2299
        %v3480 = vunpack.c.l.b16 %v2300
        %v3481 = vunpack.c.h.b16 %v2300
        %v3482 = vunpack.c.l.b16 %v2301
        %v3483 = vunpack.c.l.b16 %v2302
        %v3484 = vunpack.c.h.b16 %v2302
        %v3485 = vunpack.c.l.b16 %v2303
        %v3486 = vunpack.c.l.b16 %v2304
        %v3487 = vunpack.c.h.b16 %v2304
        %v3488 = vunpack.c.l.b16 %v2305
        %v3489 = vunpack.c.l.b16 %v2306
        %v3490 = vunpack.c.h.b16 %v2306
        %v3491 = vunpack.c.l.b16 %v2307
        %v3492 = vunpack.c.l.b16 %v2308
        %v3493 = vunpack.c.h.b16 %v2308
        %v3494 = vunpack.c.l.b16 %v2309
        %v3495 = vunpack.c.l.b16 %v2310
        %v3496 = vunpack.c.h.b16 %v2310
        %v3497 = vunpack.c.l.b16 %v2311
        %v3498 = vunpack.c.l.b16 %v2312
        %v3499 = vunpack.c.h.b16 %v2312
        %v3500 = vunpack.c.l.b16 %v2313
        %v3501 = vpack.c.b16 %v3312, %v3309
        %v3502 = vpack.c.b16 %v3313, %v3310
        %v3503 = vpack.c.b16 %v3314, %v3311
        %v3504 = vpack.c.b16 %v3318, %v3315
        %v3505 = vpack.c.b16 %v3319, %v3316
        %v3506 = vpack.c.b16 %v3320, %v3317
        %v3507 = vpack.c.b16 %v3324, %v3321
        %v3508 = vpack.c.b16 %v3325, %v3322
        %v3509 = vpack.c.b16 %v3326, %v3323
        %v3510 = vpack.c.b16 %v3330, %v3327
        %v3511 = vpack.c.b16 %v3331, %v3328
        %v3512 = vpack.c.b16 %v3332, %v3329
        %v3513 = vpack.c.b16 %v3336, %v3333
        %v3514 = vpack.c.b16 %v3337, %v3334
        %v3515 = vpack.c.b16 %v3338, %v3335
        %v3516 = vpack.c.b16 %v3342, %v3339
        %v3517 = vpack.c.b16 %v3343, %v3340
        %v3518 = vpack.c.b16 %v3344, %v3341
        %v3519 = vpack.c.b16 %v3348, %v3345
        %v3520 = vpack.c.b16 %v3349, %v3346
        %v3521 = vpack.c.b16 %v3350, %v3347
        %v3522 = vpack.c.b16 %v3354, %v3351
        %v3523 = vpack.c.b16 %v3355, %v3352
        %v3524 = vpack.c.b16 %v3356, %v3353
        %v3525 = vpack.c.b16 %v3360, %v3357
        %v3526 = vpack.c.b16 %v3361, %v3358
        %v3527 = vpack.c.b16 %v3362, %v3359
        %v3528 = vpack.c.b16 %v3366, %v3363
        %v3529 = vpack.c.b16 %v3367, %v3364
        %v3530 = vpack.c.b16 %v3368, %v3365
        %v3531 = vpack.c.b16 %v3372, %v3369
        %v3532 = vpack.c.b16 %v3373, %v3370
        %v3533 = vpack.c.b16 %v3374, %v3371
        %v3534 = vpack.c.b16 %v3378, %v3375
        %v3535 = vpack.c.b16 %v3379, %v3376
        %v3536 = vpack.c.b16 %v3380, %v3377
        %v3537 = vpack.c.b16 %v3384, %v3381
        %v3538 = vpack.c.b16 %v3385, %v3382
        %v3539 = vpack.c.b16 %v3386, %v3383
        %v3540 = vpack.c.b16 %v3390, %v3387
        %v3541 = vpack.c.b16 %v3391, %v3388
        %v3542 = vpack.c.b16 %v3392, %v3389
        %v3543 = vpack.c.b16 %v3396, %v3393
        %v3544 = vpack.c.b16 %v3397, %v3394
        %v3545 = vpack.c.b16 %v3398, %v3395
        %v3546 = vpack.c.b16 %v3402, %v3399
        %v3547 = vpack.c.b16 %v3403, %v3400
        %v3548 = vpack.c.b16 %v3404, %v3401
        %v3549 = vpack.c.b16 %v3408, %v3405
        %v3550 = vpack.c.b16 %v3409, %v3406
        %v3551 = vpack.c.b16 %v3410, %v3407
        %v3552 = vpack.c.b16 %v3414, %v3411
        %v3553 = vpack.c.b16 %v3415, %v3412
        %v3554 = vpack.c.b16 %v3416, %v3413
        %v3555 = vpack.c.b16 %v3420, %v3417
        %v3556 = vpack.c.b16 %v3421, %v3418
        %v3557 = vpack.c.b16 %v3422, %v3419
        %v3558 = vpack.c.b16 %v3426, %v3423
        %v3559 = vpack.c.b16 %v3427, %v3424
        %v3560 = vpack.c.b16 %v3428, %v3425
        %v3561 = vpack.c.b16 %v3432, %v3429
        %v3562 = vpack.c.b16 %v3433, %v3430
        %v3563 = vpack.c.b16 %v3434, %v3431
        %v3564 = vpack.c.b16 %v3438, %v3435
        %v3565 = vpack.c.b16 %v3439, %v3436
        %v3566 = vpack.c.b16 %v3440, %v3437
        %v3567 = vpack.c.b16 %v3444, %v3441
        %v3568 = vpack.c.b16 %v3445, %v3442
        %v3569 = vpack.c.b16 %v3446, %v3443
        %v3570 = vpack.c.b16 %v3450, %v3447
        %v3571 = vpack.c.b16 %v3451, %v3448
        %v3572 = vpack.c.b16 %v3452, %v3449
        %v3573 = vpack.c.b16 %v3456, %v3453
        %v3574 = vpack.c.b16 %v3457, %v3454
        %v3575 = vpack.c.b16 %v3458, %v3455
        %v3576 = vpack.c.b16 %v3462, %v3459
        %v3577 = vpack.c.b16 %v3463, %v3460
        %v3578 = vpack.c.b16 %v3464, %v3461
        %v3579 = vpack.c.b16 %v3468, %v3465
        %v3580 = vpack.c.b16 %v3469, %v3466
        %v3581 = vpack.c.b16 %v3470, %v3467
        %v3582 = vpack.c.b16 %v3474, %v3471
        %v3583 = vpack.c.b16 %v3475, %v3472
        %v3584 = vpack.c.b16 %v3476, %v3473
        %v3585 = vpack.c.b16 %v3480, %v3477
        %v3586 = vpack.c.b16 %v3481, %v3478
        %v3587 = vpack.c.b16 %v3482, %v3479
        %v3588 = vpack.c.b16 %v3486, %v3483
        %v3589 = vpack.c.b16 %v3487, %v3484
        %v3590 = vpack.c.b16 %v3488, %v3485
        %v3591 = vpack.c.b16 %v3492, %v3489
        %v3592 = vpack.c.b16 %v3493, %v3490
        %v3593 = vpack.c.b16 %v3494, %v3491
        %v3594 = vpack.c.b16 %v3498, %v3495
        %v3595 = vpack.c.b16 %v3499, %v3496
        %v3596 = vpack.c.b16 %v3500, %v3497
        %3693 = vmatpush.bf16.msra.mxu0 %v3522
        %3694 = vmatpush.bf16.msra.mxu0 %v3519
        %3695 = vmatpush.bf16.msra.mxu0 %v3516
        %3696 = vmatpush.bf16.msra.mxu0 %v3513
        %3697 = vmatpush.bf16.msra.mxu0 %v3510
        %3698 = vmatpush.bf16.msra.mxu0 %v3507
        %3699 = vmatpush.bf16.msra.mxu0 %v3504
        %3700 = vmatpush.bf16.msra.mxu0 %v3501
        %3701 = vmatmul.bf16.gmra.mxu0 %v525
        %v3702 = vpop.f32.mrf.mxu0
        %v3703 = vadd.f32 %v3175, %v3702
        %v3704 = vpop.f32.mrf.mxu0
        %v3705 = vadd.f32 %v3178, %v3704
        %3706 = vdwg.mxu0
        %3707 = vmatpush.bf16.msra.mxu0 %v3546
        %3708 = vmatpush.bf16.msra.mxu0 %v3543
        %3709 = vmatpush.bf16.msra.mxu0 %v3540
        %3710 = vmatpush.bf16.msra.mxu0 %v3537
        %3711 = vmatpush.bf16.msra.mxu0 %v3534
        %3712 = vmatpush.bf16.msra.mxu0 %v3531
        %3713 = vmatpush.bf16.msra.mxu0 %v3528
        %3714 = vmatpush.bf16.msra.mxu0 %v3525
        %3715 = vmatmul.bf16.gmra.mxu0 %v526
        %v3716 = vpop.f32.mrf.mxu0
        %v3717 = vadd.f32 %v3703, %v3716
        %v3718 = vpop.f32.mrf.mxu0
        %v3719 = vadd.f32 %v3705, %v3718
        %3720 = vdwg.mxu0
        %3721 = vmatpush.bf16.msra.mxu0 %v3570
        %3722 = vmatpush.bf16.msra.mxu0 %v3567
        %3723 = vmatpush.bf16.msra.mxu0 %v3564
        %3724 = vmatpush.bf16.msra.mxu0 %v3561
        %3725 = vmatpush.bf16.msra.mxu0 %v3558
        %3726 = vmatpush.bf16.msra.mxu0 %v3555
        %3727 = vmatpush.bf16.msra.mxu0 %v3552
        %3728 = vmatpush.bf16.msra.mxu0 %v3549
        %3729 = vmatmul.bf16.gmra.mxu0 %v527
        %v3730 = vpop.f32.mrf.mxu0
        %v3731 = vadd.f32 %v3717, %v3730
        %v3732 = vpop.f32.mrf.mxu0
        %v3733 = vadd.f32 %v3719, %v3732
        %3734 = vdwg.mxu0
        %3735 = vmatpush.bf16.msra.mxu0 %v3594
        %3736 = vmatpush.bf16.msra.mxu0 %v3591
        %3737 = vmatpush.bf16.msra.mxu0 %v3588
        %3738 = vmatpush.bf16.msra.mxu0 %v3585
        %3739 = vmatpush.bf16.msra.mxu0 %v3582
        %3740 = vmatpush.bf16.msra.mxu0 %v3579
        %3741 = vmatpush.bf16.msra.mxu0 %v3576
        %3742 = vmatpush.bf16.msra.mxu0 %v3573
        %3743 = vmatmul.bf16.gmra.mxu0 %v528
        %v3744 = vpop.f32.mrf.mxu0
        %v3745 = vadd.f32 %v3731, %v3744
        %v3746 = vpop.f32.mrf.mxu0
        %v3747 = vadd.f32 %v3733, %v3746
        %3748 = vdwg.mxu0
        %3749 = vmatpush.bf16.msra.mxu0 %v3523
        %3750 = vmatpush.bf16.msra.mxu0 %v3520
        %3751 = vmatpush.bf16.msra.mxu0 %v3517
        %3752 = vmatpush.bf16.msra.mxu0 %v3514
        %3753 = vmatpush.bf16.msra.mxu0 %v3511
        %3754 = vmatpush.bf16.msra.mxu0 %v3508
        %3755 = vmatpush.bf16.msra.mxu0 %v3505
        %3756 = vmatpush.bf16.msra.mxu0 %v3502
        %3757 = vmatmul.bf16.gmra.mxu0 %v525
        %v3758 = vpop.f32.mrf.mxu0
        %v3759 = vadd.f32 %v3176, %v3758
        %v3760 = vpop.f32.mrf.mxu0
        %v3761 = vadd.f32 %v3179, %v3760
        %3762 = vdwg.mxu0
        %3763 = vmatpush.bf16.msra.mxu0 %v3547
        %3764 = vmatpush.bf16.msra.mxu0 %v3544
        %3765 = vmatpush.bf16.msra.mxu0 %v3541
        %3766 = vmatpush.bf16.msra.mxu0 %v3538
        %3767 = vmatpush.bf16.msra.mxu0 %v3535
        %3768 = vmatpush.bf16.msra.mxu0 %v3532
        %3769 = vmatpush.bf16.msra.mxu0 %v3529
        %3770 = vmatpush.bf16.msra.mxu0 %v3526
        %3771 = vmatmul.bf16.gmra.mxu0 %v526
        %v3772 = vpop.f32.mrf.mxu0
        %v3773 = vadd.f32 %v3759, %v3772
        %v3774 = vpop.f32.mrf.mxu0
        %v3775 = vadd.f32 %v3761, %v3774
        %3776 = vdwg.mxu0
        %3777 = vmatpush.bf16.msra.mxu0 %v3571
        %3778 = vmatpush.bf16.msra.mxu0 %v3568
        %3779 = vmatpush.bf16.msra.mxu0 %v3565
        %3780 = vmatpush.bf16.msra.mxu0 %v3562
        %3781 = vmatpush.bf16.msra.mxu0 %v3559
        %3782 = vmatpush.bf16.msra.mxu0 %v3556
        %3783 = vmatpush.bf16.msra.mxu0 %v3553
        %3784 = vmatpush.bf16.msra.mxu0 %v3550
        %3785 = vmatmul.bf16.gmra.mxu0 %v527
        %v3786 = vpop.f32.mrf.mxu0
        %v3787 = vadd.f32 %v3773, %v3786
        %v3788 = vpop.f32.mrf.mxu0
        %v3789 = vadd.f32 %v3775, %v3788
        %3790 = vdwg.mxu0
        %3791 = vmatpush.bf16.msra.mxu0 %v3595
        %3792 = vmatpush.bf16.msra.mxu0 %v3592
        %3793 = vmatpush.bf16.msra.mxu0 %v3589
        %3794 = vmatpush.bf16.msra.mxu0 %v3586
        %3795 = vmatpush.bf16.msra.mxu0 %v3583
        %3796 = vmatpush.bf16.msra.mxu0 %v3580
        %3797 = vmatpush.bf16.msra.mxu0 %v3577
        %3798 = vmatpush.bf16.msra.mxu0 %v3574
        %3799 = vmatmul.bf16.gmra.mxu0 %v528
        %v3800 = vpop.f32.mrf.mxu0
        %v3801 = vadd.f32 %v3787, %v3800
        %v3802 = vpop.f32.mrf.mxu0
        %v3803 = vadd.f32 %v3789, %v3802
        %3804 = vdwg.mxu0
        %3805 = vmatpush.bf16.msra.mxu0 %v3524
        %3806 = vmatpush.bf16.msra.mxu0 %v3521
        %3807 = vmatpush.bf16.msra.mxu0 %v3518
        %3808 = vmatpush.bf16.msra.mxu0 %v3515
        %3809 = vmatpush.bf16.msra.mxu0 %v3512
        %3810 = vmatpush.bf16.msra.mxu0 %v3509
        %3811 = vmatpush.bf16.msra.mxu0 %v3506
        %3812 = vmatpush.bf16.msra.mxu0 %v3503
        %3813 = vmatmul.bf16.gmra.mxu0 %v525
        %v3814 = vpop.f32.mrf.mxu0
        %v3815 = vadd.f32 %v3177, %v3814
        %v3816 = vpop.f32.mrf.mxu0
        %v3817 = vadd.f32 %v3180, %v3816
        %3818 = vdwg.mxu0
        %3819 = vmatpush.bf16.msra.mxu0 %v3548
        %3820 = vmatpush.bf16.msra.mxu0 %v3545
        %3821 = vmatpush.bf16.msra.mxu0 %v3542
        %3822 = vmatpush.bf16.msra.mxu0 %v3539
        %3823 = vmatpush.bf16.msra.mxu0 %v3536
        %3824 = vmatpush.bf16.msra.mxu0 %v3533
        %3825 = vmatpush.bf16.msra.mxu0 %v3530
        %3826 = vmatpush.bf16.msra.mxu0 %v3527
        %3827 = vmatmul.bf16.gmra.mxu0 %v526
        %v3828 = vpop.f32.mrf.mxu0
        %v3829 = vadd.f32 %v3815, %v3828
        %v3830 = vpop.f32.mrf.mxu0
        %v3831 = vadd.f32 %v3817, %v3830
        %3832 = vdwg.mxu0
        %3833 = vmatpush.bf16.msra.mxu0 %v3572
        %3834 = vmatpush.bf16.msra.mxu0 %v3569
        %3835 = vmatpush.bf16.msra.mxu0 %v3566
        %3836 = vmatpush.bf16.msra.mxu0 %v3563
        %3837 = vmatpush.bf16.msra.mxu0 %v3560
        %3838 = vmatpush.bf16.msra.mxu0 %v3557
        %3839 = vmatpush.bf16.msra.mxu0 %v3554
        %3840 = vmatpush.bf16.msra.mxu0 %v3551
        %3841 = vmatmul.bf16.gmra.mxu0 %v527
        %v3842 = vpop.f32.mrf.mxu0
        %v3843 = vadd.f32 %v3829, %v3842
        %v3844 = vpop.f32.mrf.mxu0
        %v3845 = vadd.f32 %v3831, %v3844
        %3846 = vdwg.mxu0
        %3847 = vmatpush.bf16.msra.mxu0 %v3596
        %3848 = vmatpush.bf16.msra.mxu0 %v3593
        %3849 = vmatpush.bf16.msra.mxu0 %v3590
        %3850 = vmatpush.bf16.msra.mxu0 %v3587
        %3851 = vmatpush.bf16.msra.mxu0 %v3584
        %3852 = vmatpush.bf16.msra.mxu0 %v3581
        %3853 = vmatpush.bf16.msra.mxu0 %v3578
        %3854 = vmatpush.bf16.msra.mxu0 %v3575
        %3855 = vmatmul.bf16.gmra.mxu0 %v528
        %v3856 = vpop.f32.mrf.mxu0
        %v3857 = vadd.f32 %v3843, %v3856
        %v3858 = vpop.f32.mrf.mxu0
        %v3859 = vadd.f32 %v3845, %v3858
        %3860 = vdwg.mxu0
        %v3861 = vadd.f32 %v3745, %v3150
        %v3862 = vadd.f32 %v3801, %v3151
        %v3863 = vadd.f32 %v3857, %v3152
        %v3864 = vadd.f32 %v3747, %v3150
        %v3865 = vadd.f32 %v3803, %v3151
        %v3866 = vadd.f32 %v3859, %v3152
        %v3873 = vrot.slane %v3157, 7
        %v3874 = vrot.slane %v3158, 6
        %v3875 = vrot.slane %v3160, 7
        %v3876 = vrot.slane %v3161, 6
        %vm3877 = vcmask 1040384
        %v3878 = vsel %vm3877, %v3156, %v3873
        %vm3879 = vcmask 1041408
        %v3880 = vsel %vm3879, %v3878, %v3874
        %vm3881 = vcmask 1041409
        %v3882 = vsel %vm3881, %v3156, %v3873
        %vm3883 = vcmask 1042433
        %v3884 = vsel %vm3883, %v3882, %v3874
        %v3885 = vrot.slane %v3884, 1
        %vm3886 = vcmask 1042434
        %v3887 = vsel %vm3886, %v3156, %v3873
        %vm3888 = vcmask 1043458
        %v3889 = vsel %vm3888, %v3887, %v3874
        %v3890 = vrot.slane %v3889, 2
        %vm3891 = vcmask 1043459
        %v3892 = vsel %vm3891, %v3156, %v3873
        %vm3893 = vcmask 1044483
        %v3894 = vsel %vm3893, %v3892, %v3874
        %v3895 = vrot.slane %v3894, 3
        %vm3896 = vcmask 1044484
        %v3897 = vsel %vm3896, %v3156, %v3873
        %vm3898 = vcmask 1045508
        %v3899 = vsel %vm3898, %v3897, %v3874
        %v3900 = vrot.slane %v3899, 4
        %vm3901 = vcmask 1045509
        %v3902 = vsel %vm3901, %v3156, %v3873
        %vm3903 = vcmask 1046533
        %v3904 = vsel %vm3903, %v3902, %v3874
        %v3905 = vrot.slane %v3904, 5
        %vm3906 = vcmask 1046534
        %v3907 = vsel %vm3906, %v3156, %v3873
        %vm3908 = vcmask 1045504
        %v3909 = vsel %vm3908, %v3874, %v3907
        %v3910 = vrot.slane %v3909, 6
        %vm3911 = vcmask 1046528
        %v3912 = vsel %vm3911, %v3873, %v3156
        %vm3913 = vcmask 1046529
        %v3914 = vsel %vm3913, %v3874, %v3912
        %v3915 = vrot.slane %v3914, 7
        %v3916 = vsel %vm3877, %v3159, %v3875
        %v3917 = vsel %vm3879, %v3916, %v3876
        %v3918 = vsel %vm3881, %v3159, %v3875
        %v3919 = vsel %vm3883, %v3918, %v3876
        %v3920 = vrot.slane %v3919, 1
        %v3921 = vsel %vm3886, %v3159, %v3875
        %v3922 = vsel %vm3888, %v3921, %v3876
        %v3923 = vrot.slane %v3922, 2
        %v3924 = vsel %vm3891, %v3159, %v3875
        %v3925 = vsel %vm3893, %v3924, %v3876
        %v3926 = vrot.slane %v3925, 3
        %v3927 = vsel %vm3896, %v3159, %v3875
        %v3928 = vsel %vm3898, %v3927, %v3876
        %v3929 = vrot.slane %v3928, 4
        %v3930 = vsel %vm3901, %v3159, %v3875
        %v3931 = vsel %vm3903, %v3930, %v3876
        %v3932 = vrot.slane %v3931, 5
        %v3933 = vsel %vm3906, %v3159, %v3875
        %v3934 = vsel %vm3908, %v3876, %v3933
        %v3935 = vrot.slane %v3934, 6
        %v3936 = vsel %vm3911, %v3875, %v3159
        %v3937 = vsel %vm3913, %v3876, %v3936
        %v3938 = vrot.slane %v3937, 7
        %v3945 = vrot.slane %v3862, 7
        %v3946 = vrot.slane %v3863, 6
        %v3947 = vrot.slane %v3865, 7
        %v3948 = vrot.slane %v3866, 6
        %v3949 = vsel %vm3877, %v3861, %v3945
        %v3950 = vsel %vm3879, %v3949, %v3946
        %v3951 = vsel %vm3881, %v3861, %v3945
        %v3952 = vsel %vm3883, %v3951, %v3946
        %v3953 = vrot.slane %v3952, 1
        %v3954 = vsel %vm3886, %v3861, %v3945
        %v3955 = vsel %vm3888, %v3954, %v3946
        %v3956 = vrot.slane %v3955, 2
        %v3957 = vsel %vm3891, %v3861, %v3945
        %v3958 = vsel %vm3893, %v3957, %v3946
        %v3959 = vrot.slane %v3958, 3
        %v3960 = vsel %vm3896, %v3861, %v3945
        %v3961 = vsel %vm3898, %v3960, %v3946
        %v3962 = vrot.slane %v3961, 4
        %v3963 = vsel %vm3901, %v3861, %v3945
        %v3964 = vsel %vm3903, %v3963, %v3946
        %v3965 = vrot.slane %v3964, 5
        %v3966 = vsel %vm3906, %v3861, %v3945
        %v3967 = vsel %vm3908, %v3946, %v3966
        %v3968 = vrot.slane %v3967, 6
        %v3969 = vsel %vm3911, %v3945, %v3861
        %v3970 = vsel %vm3913, %v3946, %v3969
        %v3971 = vrot.slane %v3970, 7
        %v3972 = vsel %vm3877, %v3864, %v3947
        %v3973 = vsel %vm3879, %v3972, %v3948
        %v3974 = vsel %vm3881, %v3864, %v3947
        %v3975 = vsel %vm3883, %v3974, %v3948
        %v3976 = vrot.slane %v3975, 1
        %v3977 = vsel %vm3886, %v3864, %v3947
        %v3978 = vsel %vm3888, %v3977, %v3948
        %v3979 = vrot.slane %v3978, 2
        %v3980 = vsel %vm3891, %v3864, %v3947
        %v3981 = vsel %vm3893, %v3980, %v3948
        %v3982 = vrot.slane %v3981, 3
        %v3983 = vsel %vm3896, %v3864, %v3947
        %v3984 = vsel %vm3898, %v3983, %v3948
        %v3985 = vrot.slane %v3984, 4
        %v3986 = vsel %vm3901, %v3864, %v3947
        %v3987 = vsel %vm3903, %v3986, %v3948
        %v3988 = vrot.slane %v3987, 5
        %v3989 = vsel %vm3906, %v3864, %v3947
        %v3990 = vsel %vm3908, %v3948, %v3989
        %v3991 = vrot.slane %v3990, 6
        %v3992 = vsel %vm3911, %v3947, %v3864
        %v3993 = vsel %vm3913, %v3948, %v3992
        %v3994 = vrot.slane %v3993, 7
        %v3995 = vperm.slane %v3880, 0
        %v3996 = vperm.slane %v3880, 1
        %v3997 = vperm.slane %v3880, 2
        %v3998 = vperm.slane %v3885, 0
        %v3999 = vperm.slane %v3885, 1
        %v4000 = vperm.slane %v3885, 2
        %v4001 = vperm.slane %v3890, 0
        %v4002 = vperm.slane %v3890, 1
        %v4003 = vperm.slane %v3890, 2
        %v4004 = vperm.slane %v3895, 0
        %v4005 = vperm.slane %v3895, 1
        %v4006 = vperm.slane %v3895, 2
        %v4007 = vperm.slane %v3900, 0
        %v4008 = vperm.slane %v3900, 1
        %v4009 = vperm.slane %v3900, 2
        %v4010 = vperm.slane %v3905, 0
        %v4011 = vperm.slane %v3905, 1
        %v4012 = vperm.slane %v3905, 2
        %v4013 = vperm.slane %v3910, 0
        %v4014 = vperm.slane %v3910, 1
        %v4015 = vperm.slane %v3910, 2
        %v4016 = vperm.slane %v3915, 0
        %v4017 = vperm.slane %v3915, 1
        %v4018 = vperm.slane %v3915, 2
        %v4019 = vperm.slane %v3917, 0
        %v4020 = vperm.slane %v3917, 1
        %v4021 = vperm.slane %v3917, 2
        %v4022 = vperm.slane %v3920, 0
        %v4023 = vperm.slane %v3920, 1
        %v4024 = vperm.slane %v3920, 2
        %v4025 = vperm.slane %v3923, 0
        %v4026 = vperm.slane %v3923, 1
        %v4027 = vperm.slane %v3923, 2
        %v4028 = vperm.slane %v3926, 0
        %v4029 = vperm.slane %v3926, 1
        %v4030 = vperm.slane %v3926, 2
        %v4031 = vperm.slane %v3929, 0
        %v4032 = vperm.slane %v3929, 1
        %v4033 = vperm.slane %v3929, 2
        %v4034 = vperm.slane %v3932, 0
        %v4035 = vperm.slane %v3932, 1
        %v4036 = vperm.slane %v3932, 2
        %v4037 = vperm.slane %v3935, 0
        %v4038 = vperm.slane %v3935, 1
        %v4039 = vperm.slane %v3935, 2
        %v4040 = vperm.slane %v3938, 0
        %v4041 = vperm.slane %v3938, 1
        %v4042 = vperm.slane %v3938, 2
        %v4091 = vperm.slane %v3950, 0
        %v4092 = vperm.slane %v3950, 1
        %v4093 = vperm.slane %v3950, 2
        %v4094 = vperm.slane %v3953, 0
        %v4095 = vperm.slane %v3953, 1
        %v4096 = vperm.slane %v3953, 2
        %v4097 = vperm.slane %v3956, 0
        %v4098 = vperm.slane %v3956, 1
        %v4099 = vperm.slane %v3956, 2
        %v4100 = vperm.slane %v3959, 0
        %v4101 = vperm.slane %v3959, 1
        %v4102 = vperm.slane %v3959, 2
        %v4103 = vperm.slane %v3962, 0
        %v4104 = vperm.slane %v3962, 1
        %v4105 = vperm.slane %v3962, 2
        %v4106 = vperm.slane %v3965, 0
        %v4107 = vperm.slane %v3965, 1
        %v4108 = vperm.slane %v3965, 2
        %v4109 = vperm.slane %v3968, 0
        %v4110 = vperm.slane %v3968, 1
        %v4111 = vperm.slane %v3968, 2
        %v4112 = vperm.slane %v3971, 0
        %v4113 = vperm.slane %v3971, 1
        %v4114 = vperm.slane %v3971, 2
        %v4115 = vperm.slane %v3973, 0
        %v4116 = vperm.slane %v3973, 1
        %v4117 = vperm.slane %v3973, 2
        %v4118 = vperm.slane %v3976, 0
        %v4119 = vperm.slane %v3976, 1
        %v4120 = vperm.slane %v3976, 2
        %v4121 = vperm.slane %v3979, 0
        %v4122 = vperm.slane %v3979, 1
        %v4123 = vperm.slane %v3979, 2
        %v4124 = vperm.slane %v3982, 0
        %v4125 = vperm.slane %v3982, 1
        %v4126 = vperm.slane %v3982, 2
        %v4127 = vperm.slane %v3985, 0
        %v4128 = vperm.slane %v3985, 1
        %v4129 = vperm.slane %v3985, 2
        %v4130 = vperm.slane %v3988, 0
        %v4131 = vperm.slane %v3988, 1
        %v4132 = vperm.slane %v3988, 2
        %v4133 = vperm.slane %v3991, 0
        %v4134 = vperm.slane %v3991, 1
        %v4135 = vperm.slane %v3991, 2
        %v4136 = vperm.slane %v3994, 0
        %v4137 = vperm.slane %v3994, 1
        %v4138 = vperm.slane %v3994, 2
        %v4187 = vsel %vm3877, %v3995, %v4091
        %v4188 = vsel %vm3877, %v3996, %v4092
        %v4189 = vsel %vm3877, %v3997, %v4093
        %v4190 = vsel %vm3877, %v3998, %v4094
        %v4191 = vsel %vm3877, %v3999, %v4095
        %v4192 = vsel %vm3877, %v4000, %v4096
        %v4193 = vsel %vm3877, %v4001, %v4097
        %v4194 = vsel %vm3877, %v4002, %v4098
        %v4195 = vsel %vm3877, %v4003, %v4099
        %v4196 = vsel %vm3877, %v4004, %v4100
        %v4197 = vsel %vm3877, %v4005, %v4101
        %v4198 = vsel %vm3877, %v4006, %v4102
        %v4199 = vsel %vm3877, %v4007, %v4103
        %v4200 = vsel %vm3877, %v4008, %v4104
        %v4201 = vsel %vm3877, %v4009, %v4105
        %v4202 = vsel %vm3877, %v4010, %v4106
        %v4203 = vsel %vm3877, %v4011, %v4107
        %v4204 = vsel %vm3877, %v4012, %v4108
        %v4205 = vsel %vm3877, %v4013, %v4109
        %v4206 = vsel %vm3877, %v4014, %v4110
        %v4207 = vsel %vm3877, %v4015, %v4111
        %v4208 = vsel %vm3877, %v4016, %v4112
        %v4209 = vsel %vm3877, %v4017, %v4113
        %v4210 = vsel %vm3877, %v4018, %v4114
        %v4211 = vsel %vm3877, %v4019, %v4115
        %v4212 = vsel %vm3877, %v4020, %v4116
        %v4213 = vsel %vm3877, %v4021, %v4117
        %v4214 = vsel %vm3877, %v4022, %v4118
        %v4215 = vsel %vm3877, %v4023, %v4119
        %v4216 = vsel %vm3877, %v4024, %v4120
        %v4217 = vsel %vm3877, %v4025, %v4121
        %v4218 = vsel %vm3877, %v4026, %v4122
        %v4219 = vsel %vm3877, %v4027, %v4123
        %v4220 = vsel %vm3877, %v4028, %v4124
        %v4221 = vsel %vm3877, %v4029, %v4125
        %v4222 = vsel %vm3877, %v4030, %v4126
        %v4223 = vsel %vm3877, %v4031, %v4127
        %v4224 = vsel %vm3877, %v4032, %v4128
        %v4225 = vsel %vm3877, %v4033, %v4129
        %v4226 = vsel %vm3877, %v4034, %v4130
        %v4227 = vsel %vm3877, %v4035, %v4131
        %v4228 = vsel %vm3877, %v4036, %v4132
        %v4229 = vsel %vm3877, %v4037, %v4133
        %v4230 = vsel %vm3877, %v4038, %v4134
        %v4231 = vsel %vm3877, %v4039, %v4135
        %v4232 = vsel %vm3877, %v4040, %v4136
        %v4233 = vsel %vm3877, %v4041, %v4137
        %v4234 = vsel %vm3877, %v4042, %v4138
        %v4283 = vrot.slane %v4188, 6
        %v4284 = vrot.slane %v4189, 4
        %v4285 = vrot.slane %v4191, 6
        %v4286 = vrot.slane %v4192, 4
        %v4287 = vrot.slane %v4194, 6
        %v4288 = vrot.slane %v4195, 4
        %v4289 = vrot.slane %v4197, 6
        %v4290 = vrot.slane %v4198, 4
        %v4291 = vrot.slane %v4200, 6
        %v4292 = vrot.slane %v4201, 4
        %v4293 = vrot.slane %v4203, 6
        %v4294 = vrot.slane %v4204, 4
        %v4295 = vrot.slane %v4206, 6
        %v4296 = vrot.slane %v4207, 4
        %v4297 = vrot.slane %v4209, 6
        %v4298 = vrot.slane %v4210, 4
        %v4299 = vrot.slane %v4212, 6
        %v4300 = vrot.slane %v4213, 4
        %v4301 = vrot.slane %v4215, 6
        %v4302 = vrot.slane %v4216, 4
        %v4303 = vrot.slane %v4218, 6
        %v4304 = vrot.slane %v4219, 4
        %v4305 = vrot.slane %v4221, 6
        %v4306 = vrot.slane %v4222, 4
        %v4307 = vrot.slane %v4224, 6
        %v4308 = vrot.slane %v4225, 4
        %v4309 = vrot.slane %v4227, 6
        %v4310 = vrot.slane %v4228, 4
        %v4311 = vrot.slane %v4230, 6
        %v4312 = vrot.slane %v4231, 4
        %v4313 = vrot.slane %v4233, 6
        %v4314 = vrot.slane %v4234, 4
        %v4315 = vsel %vm3879, %v4187, %v4283
        %vm4316 = vcmask 1043456
        %v4317 = vsel %vm4316, %v4315, %v4284
        %v4318 = vsel %vm3879, %v4190, %v4285
        %v4319 = vsel %vm4316, %v4318, %v4286
        %v4320 = vsel %vm3879, %v4193, %v4287
        %v4321 = vsel %vm4316, %v4320, %v4288
        %v4322 = vsel %vm3879, %v4196, %v4289
        %v4323 = vsel %vm4316, %v4322, %v4290
        %v4324 = vsel %vm3879, %v4199, %v4291
        %v4325 = vsel %vm4316, %v4324, %v4292
        %v4326 = vsel %vm3879, %v4202, %v4293
        %v4327 = vsel %vm4316, %v4326, %v4294
        %v4328 = vsel %vm3879, %v4205, %v4295
        %v4329 = vsel %vm4316, %v4328, %v4296
        %v4330 = vsel %vm3879, %v4208, %v4297
        %v4331 = vsel %vm4316, %v4330, %v4298
        %v4332 = vsel %vm3879, %v4211, %v4299
        %v4333 = vsel %vm4316, %v4332, %v4300
        %v4334 = vsel %vm3879, %v4214, %v4301
        %v4335 = vsel %vm4316, %v4334, %v4302
        %v4336 = vsel %vm3879, %v4217, %v4303
        %v4337 = vsel %vm4316, %v4336, %v4304
        %v4338 = vsel %vm3879, %v4220, %v4305
        %v4339 = vsel %vm4316, %v4338, %v4306
        %v4340 = vsel %vm3879, %v4223, %v4307
        %v4341 = vsel %vm4316, %v4340, %v4308
        %v4342 = vsel %vm3879, %v4226, %v4309
        %v4343 = vsel %vm4316, %v4342, %v4310
        %v4344 = vsel %vm3879, %v4229, %v4311
        %v4345 = vsel %vm4316, %v4344, %v4312
        %v4346 = vsel %vm3879, %v4232, %v4313
        %v4347 = vsel %vm4316, %v4346, %v4314
        %4364 = vst [vmem:[#allocation1] ss:$4 sm:$0xff] %v4317
        %s4365 = scalar_lea.vmem [#allocation1], 1
        %4366 = vst [vmem:[%s4365] ss:$4 sm:$0xff] %v4319
        %s4367 = scalar_lea.vmem [#allocation1], 2
        %4368 = vst [vmem:[%s4367] ss:$4 sm:$0xff] %v4321
        %s4369 = scalar_lea.vmem [#allocation1], 3
        %4370 = vst [vmem:[%s4369] ss:$4 sm:$0xff] %v4323
        %s4371 = scalar_lea.vmem [#allocation1], 32
        %4372 = vst [vmem:[%s4371] ss:$4 sm:$0xff] %v4325
        %s4373 = scalar_lea.vmem [#allocation1], 33
        %4374 = vst [vmem:[%s4373] ss:$4 sm:$0xff] %v4327
        %s4375 = scalar_lea.vmem [#allocation1], 34
        %4376 = vst [vmem:[%s4375] ss:$4 sm:$0xff] %v4329
        %s4377 = scalar_lea.vmem [#allocation1], 35
        %4378 = vst [vmem:[%s4377] ss:$4 sm:$0xff] %v4331
        %v4379 = vld.sshfl [vmem:[#allocation1] sm:$0xff pattern:$0x73625140]
        %v4380 = vld.sshfl [vmem:[#allocation1 + $0x8] sm:$0xff pattern:$0x73625140]
        %v4381 = vld.sshfl [vmem:[#allocation1 + $0x10] sm:$0xff pattern:$0x73625140]
        %v4382 = vld.sshfl [vmem:[#allocation1 + $0x20] sm:$0xff pattern:$0x73625140]
        %v4383 = vld.sshfl [vmem:[#allocation1 + $0x28] sm:$0xff pattern:$0x73625140]
        %v4384 = vld.sshfl [vmem:[#allocation1 + $0x30] sm:$0xff pattern:$0x73625140]
        %4385 = vst [vmem:[#allocation1] ss:$4 sm:$0xff] %v4333
        %4386 = vst [vmem:[%s4365] ss:$4 sm:$0xff] %v4335
        %4387 = vst [vmem:[%s4367] ss:$4 sm:$0xff] %v4337
        %4388 = vst [vmem:[%s4369] ss:$4 sm:$0xff] %v4339
        %4389 = vst [vmem:[%s4371] ss:$4 sm:$0xff] %v4341
        %4390 = vst [vmem:[%s4373] ss:$4 sm:$0xff] %v4343
        %4391 = vst [vmem:[%s4375] ss:$4 sm:$0xff] %v4345
        %4392 = vst [vmem:[%s4377] ss:$4 sm:$0xff] %v4347
        %v4393 = vld.sshfl [vmem:[#allocation1] sm:$0xff pattern:$0x73625140]
        %v4394 = vld.sshfl [vmem:[#allocation1 + $0x8] sm:$0xff pattern:$0x73625140]
        %v4395 = vld.sshfl [vmem:[#allocation1 + $0x10] sm:$0xff pattern:$0x73625140]
        %v4396 = vld.sshfl [vmem:[#allocation1 + $0x20] sm:$0xff pattern:$0x73625140]
        %v4397 = vld.sshfl [vmem:[#allocation1 + $0x28] sm:$0xff pattern:$0x73625140]
        %v4398 = vld.sshfl [vmem:[#allocation1 + $0x30] sm:$0xff pattern:$0x73625140]
        %v4411 = vadd.f32 %v4379, %v4382
        %v4412 = vrot.slane %v4411, 4
        %v4413 = vadd.f32 %v4411, %v4412
        %v4414 = vrot.slane %v4413, 2
        %v4415 = vadd.f32 %v4413, %v4414
        %v4416 = vrot.slane %v4415, 1
        %v4417 = vadd.f32 %v4415, %v4416
        %v4418 = vadd.f32 %v4380, %v4383
        %v4419 = vrot.slane %v4418, 4
        %v4420 = vadd.f32 %v4418, %v4419
        %v4421 = vrot.slane %v4420, 2
        %v4422 = vadd.f32 %v4420, %v4421
        %v4423 = vrot.slane %v4422, 1
        %v4424 = vadd.f32 %v4422, %v4423
        %v4425 = vadd.f32 %v4381, %v4384
        %v4426 = vrot.slane %v4425, 4
        %v4427 = vadd.f32 %v4425, %v4426
        %v4428 = vrot.slane %v4427, 2
        %v4429 = vadd.f32 %v4427, %v4428
        %v4430 = vrot.slane %v4429, 1
        %v4431 = vadd.f32 %v4429, %v4430
        %v4432 = vadd.f32 %v4393, %v4396
        %v4433 = vrot.slane %v4432, 4
        %v4434 = vadd.f32 %v4432, %v4433
        %v4435 = vrot.slane %v4434, 2
        %v4436 = vadd.f32 %v4434, %v4435
        %v4437 = vrot.slane %v4436, 1
        %v4438 = vadd.f32 %v4436, %v4437
        %v4439 = vadd.f32 %v4394, %v4397
        %v4440 = vrot.slane %v4439, 4
        %v4441 = vadd.f32 %v4439, %v4440
        %v4442 = vrot.slane %v4441, 2
        %v4443 = vadd.f32 %v4441, %v4442
        %v4444 = vrot.slane %v4443, 1
        %v4445 = vadd.f32 %v4443, %v4444
        %v4446 = vadd.f32 %v4395, %v4398
        %v4447 = vrot.slane %v4446, 4
        %v4448 = vadd.f32 %v4446, %v4447
        %v4449 = vrot.slane %v4448, 2
        %v4450 = vadd.f32 %v4448, %v4449
        %v4451 = vrot.slane %v4450, 1
        %v4452 = vadd.f32 %v4450, %v4451
        %v4453 = vrcp.pop 16.0
        %v4454 = vmul.f32 16.0, %v4453
        %v4455 = vsub.f32 1.0, %v4454
        %v4456 = vmul.f32 %v4453, %v4455
        %v4457 = vadd.f32 %v4453, %v4456
        %vm4458 = vweird.f32 %v4453
        %v4459 = vsel %vm4458, %v4453, %v4457
        %v4460 = vmul.f32 %v4417, %v4459
        %v4461 = vmul.f32 %v4424, %v4459
        %v4462 = vmul.f32 %v4431, %v4459
        %v4463 = vmul.f32 %v4438, %v4459
        %v4464 = vmul.f32 %v4445, %v4459
        %v4465 = vmul.f32 %v4452, %v4459
        %v4466 = vmul.f32 %v4317, %v4317
        %v4467 = vmul.f32 %v4319, %v4319
        %v4468 = vmul.f32 %v4321, %v4321
        %v4469 = vmul.f32 %v4323, %v4323
        %v4470 = vmul.f32 %v4325, %v4325
        %v4471 = vmul.f32 %v4327, %v4327
        %v4472 = vmul.f32 %v4329, %v4329
        %v4473 = vmul.f32 %v4331, %v4331
        %v4474 = vmul.f32 %v4333, %v4333
        %v4475 = vmul.f32 %v4335, %v4335
        %v4476 = vmul.f32 %v4337, %v4337
        %v4477 = vmul.f32 %v4339, %v4339
        %v4478 = vmul.f32 %v4341, %v4341
        %v4479 = vmul.f32 %v4343, %v4343
        %v4480 = vmul.f32 %v4345, %v4345
        %v4481 = vmul.f32 %v4347, %v4347
        %4498 = vst [vmem:[#allocation1] ss:$4 sm:$0xff] %v4466
        %s4499 = scalar_lea.vmem [#allocation1], 1
        %4500 = vst [vmem:[%s4499] ss:$4 sm:$0xff] %v4467
        %s4501 = scalar_lea.vmem [#allocation1], 2
        %4502 = vst [vmem:[%s4501] ss:$4 sm:$0xff] %v4468
        %s4503 = scalar_lea.vmem [#allocation1], 3
        %4504 = vst [vmem:[%s4503] ss:$4 sm:$0xff] %v4469
        %s4505 = scalar_lea.vmem [#allocation1], 32
        %4506 = vst [vmem:[%s4505] ss:$4 sm:$0xff] %v4470
        %s4507 = scalar_lea.vmem [#allocation1], 33
        %4508 = vst [vmem:[%s4507] ss:$4 sm:$0xff] %v4471
        %s4509 = scalar_lea.vmem [#allocation1], 34
        %4510 = vst [vmem:[%s4509] ss:$4 sm:$0xff] %v4472
        %s4511 = scalar_lea.vmem [#allocation1], 35
        %4512 = vst [vmem:[%s4511] ss:$4 sm:$0xff] %v4473
        %v4513 = vld.sshfl [vmem:[#allocation1] sm:$0xff pattern:$0x73625140]
        %v4514 = vld.sshfl [vmem:[#allocation1 + $0x8] sm:$0xff pattern:$0x73625140]
        %v4515 = vld.sshfl [vmem:[#allocation1 + $0x10] sm:$0xff pattern:$0x73625140]
        %v4516 = vld.sshfl [vmem:[#allocation1 + $0x20] sm:$0xff pattern:$0x73625140]
        %v4517 = vld.sshfl [vmem:[#allocation1 + $0x28] sm:$0xff pattern:$0x73625140]
        %v4518 = vld.sshfl [vmem:[#allocation1 + $0x30] sm:$0xff pattern:$0x73625140]
        %4519 = vst [vmem:[#allocation1] ss:$4 sm:$0xff] %v4474
        %4520 = vst [vmem:[%s4499] ss:$4 sm:$0xff] %v4475
        %4521 = vst [vmem:[%s4501] ss:$4 sm:$0xff] %v4476
        %4522 = vst [vmem:[%s4503] ss:$4 sm:$0xff] %v4477
        %4523 = vst [vmem:[%s4505] ss:$4 sm:$0xff] %v4478
        %4524 = vst [vmem:[%s4507] ss:$4 sm:$0xff] %v4479
        %4525 = vst [vmem:[%s4509] ss:$4 sm:$0xff] %v4480
        %4526 = vst [vmem:[%s4511] ss:$4 sm:$0xff] %v4481
        %v4527 = vld.sshfl [vmem:[#allocation1] sm:$0xff pattern:$0x73625140]
        %v4528 = vld.sshfl [vmem:[#allocation1 + $0x8] sm:$0xff pattern:$0x73625140]
        %v4529 = vld.sshfl [vmem:[#allocation1 + $0x10] sm:$0xff pattern:$0x73625140]
        %v4530 = vld.sshfl [vmem:[#allocation1 + $0x20] sm:$0xff pattern:$0x73625140]
        %v4531 = vld.sshfl [vmem:[#allocation1 + $0x28] sm:$0xff pattern:$0x73625140]
        %v4532 = vld.sshfl [vmem:[#allocation1 + $0x30] sm:$0xff pattern:$0x73625140]
        %v4545 = vadd.f32 %v4513, %v4516
        %v4546 = vrot.slane %v4545, 4
        %v4547 = vadd.f32 %v4545, %v4546
        %v4548 = vrot.slane %v4547, 2
        %v4549 = vadd.f32 %v4547, %v4548
        %v4550 = vrot.slane %v4549, 1
        %v4551 = vadd.f32 %v4549, %v4550
        %v4552 = vadd.f32 %v4514, %v4517
        %v4553 = vrot.slane %v4552, 4
        %v4554 = vadd.f32 %v4552, %v4553
        %v4555 = vrot.slane %v4554, 2
        %v4556 = vadd.f32 %v4554, %v4555
        %v4557 = vrot.slane %v4556, 1
        %v4558 = vadd.f32 %v4556, %v4557
        %v4559 = vadd.f32 %v4515, %v4518
        %v4560 = vrot.slane %v4559, 4
        %v4561 = vadd.f32 %v4559, %v4560
        %v4562 = vrot.slane %v4561, 2
        %v4563 = vadd.f32 %v4561, %v4562
        %v4564 = vrot.slane %v4563, 1
        %v4565 = vadd.f32 %v4563, %v4564
        %v4566 = vadd.f32 %v4527, %v4530
        %v4567 = vrot.slane %v4566, 4
        %v4568 = vadd.f32 %v4566, %v4567
        %v4569 = vrot.slane %v4568, 2
        %v4570 = vadd.f32 %v4568, %v4569
        %v4571 = vrot.slane %v4570, 1
        %v4572 = vadd.f32 %v4570, %v4571
        %v4573 = vadd.f32 %v4528, %v4531
        %v4574 = vrot.slane %v4573, 4
        %v4575 = vadd.f32 %v4573, %v4574
        %v4576 = vrot.slane %v4575, 2
        %v4577 = vadd.f32 %v4575, %v4576
        %v4578 = vrot.slane %v4577, 1
        %v4579 = vadd.f32 %v4577, %v4578
        %v4580 = vadd.f32 %v4529, %v4532
        %v4581 = vrot.slane %v4580, 4
        %v4582 = vadd.f32 %v4580, %v4581
        %v4583 = vrot.slane %v4582, 2
        %v4584 = vadd.f32 %v4582, %v4583
        %v4585 = vrot.slane %v4584, 1
        %v4586 = vadd.f32 %v4584, %v4585
        %v4587 = vmul.f32 %v4551, %v4459
        %v4588 = vmul.f32 %v4558, %v4459
        %v4589 = vmul.f32 %v4565, %v4459
        %v4590 = vmul.f32 %v4572, %v4459
        %v4591 = vmul.f32 %v4579, %v4459
        %v4592 = vmul.f32 %v4586, %v4459
        %v4593 = vmul.f32 %v4460, %v4460
        %v4594 = vmul.f32 %v4461, %v4461
        %v4595 = vmul.f32 %v4462, %v4462
        %v4596 = vmul.f32 %v4463, %v4463
        %v4597 = vmul.f32 %v4464, %v4464
        %v4598 = vmul.f32 %v4465, %v4465
        %v4599 = vsub.f32 %v4587, %v4593
        %v4600 = vsub.f32 %v4588, %v4594
        %v4601 = vsub.f32 %v4589, %v4595
        %v4602 = vsub.f32 %v4590, %v4596
        %v4603 = vsub.f32 %v4591, %v4597
        %v4604 = vsub.f32 %v4592, %v4598
        %v4605 = vmax.f32 %v4599, 0.0
        %v4606 = vmax.f32 %v4600, 0.0
        %v4607 = vmax.f32 %v4601, 0.0
        %v4608 = vmax.f32 %v4602, 0.0
        %v4609 = vmax.f32 %v4603, 0.0
        %v4610 = vmax.f32 %v4604, 0.0
        %v4617 = vrot.slane %v4461, 6
        %v4618 = vrot.slane %v4462, 4
        %v4619 = vrot.slane %v4464, 6
        %v4620 = vrot.slane %v4465, 4
        %v4621 = vsel %vm3879, %v4460, %v4617
        %v4622 = vsel %vm4316, %v4621, %v4618
        %v4623 = vsel %vm3888, %v4460, %v4617
        %vm4624 = vcmask 1045506
        %v4625 = vsel %vm4624, %v4623, %v4618
        %v4626 = vrot.slane %v4625, 2
        %v4627 = vsel %vm3898, %v4460, %v4617
        %v4628 = vsel %vm4316, %v4618, %v4627
        %v4629 = vrot.slane %v4628, 4
        %v4630 = vsel %vm3908, %v4617, %v4460
        %v4631 = vsel %vm4624, %v4618, %v4630
        %v4632 = vrot.slane %v4631, 6
        %v4633 = vsel %vm3879, %v4463, %v4619
        %v4634 = vsel %vm4316, %v4633, %v4620
        %v4635 = vsel %vm3888, %v4463, %v4619
        %v4636 = vsel %vm4624, %v4635, %v4620
        %v4637 = vrot.slane %v4636, 2
        %v4638 = vsel %vm3898, %v4463, %v4619
        %v4639 = vsel %vm4316, %v4620, %v4638
        %v4640 = vrot.slane %v4639, 4
        %v4641 = vsel %vm3908, %v4619, %v4463
        %v4642 = vsel %vm4624, %v4620, %v4641
        %v4643 = vrot.slane %v4642, 6
        %v4652 = vsub.f32 %v4317, %v4622
        %v4653 = vsub.f32 %v4319, %v4626
        %v4654 = vsub.f32 %v4321, %v4629
        %v4655 = vsub.f32 %v4323, %v4632
        %v4656 = vsub.f32 %v4325, %v4622
        %v4657 = vsub.f32 %v4327, %v4626
        %v4658 = vsub.f32 %v4329, %v4629
        %v4659 = vsub.f32 %v4331, %v4632
        %v4660 = vsub.f32 %v4333, %v4634
        %v4661 = vsub.f32 %v4335, %v4637
        %v4662 = vsub.f32 %v4337, %v4640
        %v4663 = vsub.f32 %v4339, %v4643
        %v4664 = vsub.f32 %v4341, %v4634
        %v4665 = vsub.f32 %v4343, %v4637
        %v4666 = vsub.f32 %v4345, %v4640
        %v4667 = vsub.f32 %v4347, %v4643
        %v4668 = vadd.f32 %v4605, 1e-05
        %v4669 = vadd.f32 %v4606, 1e-05
        %v4670 = vadd.f32 %v4607, 1e-05
        %v4671 = vadd.f32 %v4608, 1e-05
        %v4672 = vadd.f32 %v4609, 1e-05
        %v4673 = vadd.f32 %v4610, 1e-05
        %v4674 = vrsqrt.pop %v4668
        %v4675 = vmul.f32 %v4674, %v4668
        %v4676 = vmul.f32 %v4675, %v4674
        %v4677 = vmul.f32 0.5, %v4676
        %v4678 = vsub.f32 1.5, %v4677
        %v4679 = vmul.f32 %v4674, %v4678
        %vm4680 = vweird.f32 %v4668
        %vm4681 = vweird.f32 %v4674
        %vm4682 = vmor %vm4680, %vm4681
        %v4683 = vsel %vm4682, %v4674, %v4679
        %v4684 = vrsqrt.pop %v4669
        %v4685 = vmul.f32 %v4684, %v4669
        %v4686 = vmul.f32 %v4685, %v4684
        %v4687 = vmul.f32 0.5, %v4686
        %v4688 = vsub.f32 1.5, %v4687
        %v4689 = vmul.f32 %v4684, %v4688
        %vm4690 = vweird.f32 %v4669
        %vm4691 = vweird.f32 %v4684
        %vm4692 = vmor %vm4690, %vm4691
        %v4693 = vsel %vm4692, %v4684, %v4689
        %v4694 = vrsqrt.pop %v4670
        %v4695 = vmul.f32 %v4694, %v4670
        %v4696 = vmul.f32 %v4695, %v4694
        %v4697 = vmul.f32 0.5, %v4696
        %v4698 = vsub.f32 1.5, %v4697
        %v4699 = vmul.f32 %v4694, %v4698
        %vm4700 = vweird.f32 %v4670
        %vm4701 = vweird.f32 %v4694
        %vm4702 = vmor %vm4700, %vm4701
        %v4703 = vsel %vm4702, %v4694, %v4699
        %v4704 = vrsqrt.pop %v4671
        %v4705 = vmul.f32 %v4704, %v4671
        %v4706 = vmul.f32 %v4705, %v4704
        %v4707 = vmul.f32 0.5, %v4706
        %v4708 = vsub.f32 1.5, %v4707
        %v4709 = vmul.f32 %v4704, %v4708
        %vm4710 = vweird.f32 %v4671
        %vm4711 = vweird.f32 %v4704
        %vm4712 = vmor %vm4710, %vm4711
        %v4713 = vsel %vm4712, %v4704, %v4709
        %v4714 = vrsqrt.pop %v4672
        %v4715 = vmul.f32 %v4714, %v4672
        %v4716 = vmul.f32 %v4715, %v4714
        %v4717 = vmul.f32 0.5, %v4716
        %v4718 = vsub.f32 1.5, %v4717
        %v4719 = vmul.f32 %v4714, %v4718
        %vm4720 = vweird.f32 %v4672
        %vm4721 = vweird.f32 %v4714
        %vm4722 = vmor %vm4720, %vm4721
        %v4723 = vsel %vm4722, %v4714, %v4719
        %v4724 = vrsqrt.pop %v4673
        %v4725 = vmul.f32 %v4724, %v4673
        %v4726 = vmul.f32 %v4725, %v4724
        %v4727 = vmul.f32 0.5, %v4726
        %v4728 = vsub.f32 1.5, %v4727
        %v4729 = vmul.f32 %v4724, %v4728
        %vm4730 = vweird.f32 %v4673
        %vm4731 = vweird.f32 %v4724
        %vm4732 = vmor %vm4730, %vm4731
        %v4733 = vsel %vm4732, %v4724, %v4729
        %v4740 = vrot.slane %v4693, 6
        %v4741 = vrot.slane %v4703, 4
        %v4742 = vrot.slane %v4723, 6
        %v4743 = vrot.slane %v4733, 4
        %v4744 = vsel %vm3879, %v4683, %v4740
        %v4745 = vsel %vm4316, %v4744, %v4741
        %v4746 = vsel %vm3888, %v4683, %v4740
        %v4747 = vsel %vm4624, %v4746, %v4741
        %v4748 = vrot.slane %v4747, 2
        %v4749 = vsel %vm3898, %v4683, %v4740
        %v4750 = vsel %vm4316, %v4741, %v4749
        %v4751 = vrot.slane %v4750, 4
        %v4752 = vsel %vm3908, %v4740, %v4683
        %v4753 = vsel %vm4624, %v4741, %v4752
        %v4754 = vrot.slane %v4753, 6
        %v4755 = vsel %vm3879, %v4713, %v4742
        %v4756 = vsel %vm4316, %v4755, %v4743
        %v4757 = vsel %vm3888, %v4713, %v4742
        %v4758 = vsel %vm4624, %v4757, %v4743
        %v4759 = vrot.slane %v4758, 2
        %v4760 = vsel %vm3898, %v4713, %v4742
        %v4761 = vsel %vm4316, %v4743, %v4760
        %v4762 = vrot.slane %v4761, 4
        %v4763 = vsel %vm3908, %v4742, %v4713
        %v4764 = vsel %vm4624, %v4743, %v4763
        %v4765 = vrot.slane %v4764, 6
        %v4774 = vmul.f32 %v4652, %v4745
        %v4775 = vmul.f32 %v4653, %v4748
        %v4776 = vmul.f32 %v4654, %v4751
        %v4777 = vmul.f32 %v4655, %v4754
        %v4778 = vmul.f32 %v4656, %v4745
        %v4779 = vmul.f32 %v4657, %v4748
        %v4780 = vmul.f32 %v4658, %v4751
        %v4781 = vmul.f32 %v4659, %v4754
        %v4782 = vmul.f32 %v4660, %v4756
        %v4783 = vmul.f32 %v4661, %v4759
        %v4784 = vmul.f32 %v4662, %v4762
        %v4785 = vmul.f32 %v4663, %v4765
        %v4786 = vmul.f32 %v4664, %v4756
        %v4787 = vmul.f32 %v4665, %v4759
        %v4788 = vmul.f32 %v4666, %v4762
        %v4789 = vmul.f32 %v4667, %v4765
        %v4790 = vmax.f32 %v4774, 0.0
        %v4791 = vmax.f32 %v4775, 0.0
        %v4792 = vmax.f32 %v4776, 0.0
        %v4793 = vmax.f32 %v4777, 0.0
        %v4794 = vmax.f32 %v4778, 0.0
        %v4795 = vmax.f32 %v4779, 0.0
        %v4796 = vmax.f32 %v4780, 0.0
        %v4797 = vmax.f32 %v4781, 0.0
        %v4798 = vmax.f32 %v4782, 0.0
        %v4799 = vmax.f32 %v4783, 0.0
        %v4800 = vmax.f32 %v4784, 0.0
        %v4801 = vmax.f32 %v4785, 0.0
        %v4802 = vmax.f32 %v4786, 0.0
        %v4803 = vmax.f32 %v4787, 0.0
        %v4804 = vmax.f32 %v4788, 0.0
        %v4805 = vmax.f32 %v4789, 0.0
        %4822 = vst [vmem:[#allocation1] ss:$4 sm:$0xff] %v4790
        %s4823 = scalar_lea.vmem [#allocation1], 1
        %4824 = vst [vmem:[%s4823] ss:$4 sm:$0xff] %v4791
        %s4825 = scalar_lea.vmem [#allocation1], 2
        %4826 = vst [vmem:[%s4825] ss:$4 sm:$0xff] %v4792
        %s4827 = scalar_lea.vmem [#allocation1], 3
        %4828 = vst [vmem:[%s4827] ss:$4 sm:$0xff] %v4793
        %s4829 = scalar_lea.vmem [#allocation1], 32
        %4830 = vst [vmem:[%s4829] ss:$4 sm:$0xff] %v4794
        %s4831 = scalar_lea.vmem [#allocation1], 33
        %4832 = vst [vmem:[%s4831] ss:$4 sm:$0xff] %v4795
        %s4833 = scalar_lea.vmem [#allocation1], 34
        %4834 = vst [vmem:[%s4833] ss:$4 sm:$0xff] %v4796
        %s4835 = scalar_lea.vmem [#allocation1], 35
        %4836 = vst [vmem:[%s4835] ss:$4 sm:$0xff] %v4797
        %v4837 = vld.sshfl [vmem:[#allocation1] sm:$0xff pattern:$0x73625140]
        %v4838 = vld.sshfl [vmem:[#allocation1 + $0x8] sm:$0xff pattern:$0x73625140]
        %v4839 = vld.sshfl [vmem:[#allocation1 + $0x10] sm:$0xff pattern:$0x73625140]
        %v4840 = vld.sshfl [vmem:[#allocation1 + $0x20] sm:$0xff pattern:$0x73625140]
        %v4841 = vld.sshfl [vmem:[#allocation1 + $0x28] sm:$0xff pattern:$0x73625140]
        %v4842 = vld.sshfl [vmem:[#allocation1 + $0x30] sm:$0xff pattern:$0x73625140]
        %4843 = vst [vmem:[#allocation1] ss:$4 sm:$0xff] %v4798
        %4844 = vst [vmem:[%s4823] ss:$4 sm:$0xff] %v4799
        %4845 = vst [vmem:[%s4825] ss:$4 sm:$0xff] %v4800
        %4846 = vst [vmem:[%s4827] ss:$4 sm:$0xff] %v4801
        %4847 = vst [vmem:[%s4829] ss:$4 sm:$0xff] %v4802
        %4848 = vst [vmem:[%s4831] ss:$4 sm:$0xff] %v4803
        %4849 = vst [vmem:[%s4833] ss:$4 sm:$0xff] %v4804
        %4850 = vst [vmem:[%s4835] ss:$4 sm:$0xff] %v4805
        %v4851 = vld.sshfl [vmem:[#allocation1] sm:$0xff pattern:$0x73625140]
        %v4852 = vld.sshfl [vmem:[#allocation1 + $0x8] sm:$0xff pattern:$0x73625140]
        %v4853 = vld.sshfl [vmem:[#allocation1 + $0x10] sm:$0xff pattern:$0x73625140]
        %v4854 = vld.sshfl [vmem:[#allocation1 + $0x20] sm:$0xff pattern:$0x73625140]
        %v4855 = vld.sshfl [vmem:[#allocation1 + $0x28] sm:$0xff pattern:$0x73625140]
        %v4856 = vld.sshfl [vmem:[#allocation1 + $0x30] sm:$0xff pattern:$0x73625140]
        %v4869 = vpack.c.bf16 %v4840, %v4837
        %v4870 = vpack.c.bf16 %v4841, %v4838
        %v4871 = vpack.c.bf16 %v4842, %v4839
        %v4872 = vpack.c.bf16 %v4854, %v4851
        %v4873 = vpack.c.bf16 %v4855, %v4852
        %v4874 = vpack.c.bf16 %v4856, %v4853
        %v4875 = vadd.s32 %v530, 16
        %v4876 = vadd.s32 %v530, 24
        %vm4877 = vcmp.lt.s32.totalorder %v530, 0
        %v4878 = vsub.s32 0, %v530
        %v4879 = vsel %vm4877, %v4878, %v530
        %v4880 = vshrl.u32 %v4879, 4
        %v4881 = vand.u32 %v4879, 15
        %v4882 = vsub.s32 0, %v4881
        %v4883 = vsel %vm4877, %v4882, %v4881
        %vm4884 = vcmp.lt.s32.totalorder %v531, 0
        %v4885 = vsub.s32 0, %v531
        %v4886 = vsel %vm4884, %v4885, %v531
        %v4887 = vshrl.u32 %v4886, 4
        %v4888 = vand.u32 %v4886, 15
        %v4889 = vsub.s32 0, %v4888
        %v4890 = vsel %vm4884, %v4889, %v4888
        %vm4891 = vcmp.lt.s32.totalorder %v4875, 0
        %v4892 = vsub.s32 0, %v4875
        %v4893 = vsel %vm4891, %v4892, %v4875
        %v4894 = vshrl.u32 %v4893, 4
        %v4895 = vand.u32 %v4893, 15
        %v4896 = vsub.s32 0, %v4895
        %v4897 = vsel %vm4891, %v4896, %v4895
        %vm4898 = vcmp.lt.s32.totalorder %v4876, 0
        %v4899 = vsub.s32 0, %v4876
        %v4900 = vsel %vm4898, %v4899, %v4876
        %v4901 = vshrl.u32 %v4900, 4
        %v4902 = vand.u32 %v4900, 15
        %v4903 = vsub.s32 0, %v4902
        %v4904 = vsel %vm4898, %v4903, %v4902
        %vm4905 = vcmp.ne.s32.totalorder %v4883, 0
        %vm4906 = vcmp.ne.s32.totalorder %v4890, 0
        %vm4907 = vcmp.ne.s32.totalorder %v4897, 0
        %vm4908 = vcmp.ne.s32.totalorder %v4904, 0
        %vm4909 = vcmp.lt.s32.totalorder %v4883, 0
        %vm4910 = vcmp.lt.s32.totalorder %v4890, 0
        %vm4911 = vcmp.lt.s32.totalorder %v4897, 0
        %vm4912 = vcmp.lt.s32.totalorder %v4904, 0
        %vm4913 = vmand %vm4909, %vm4905
        %vm4914 = vmand %vm4910, %vm4906
        %vm4915 = vmand %vm4911, %vm4907
        %vm4916 = vmand %vm4912, %vm4908
        %v4917 = vadd.s32 %v4883, 16
        %v4918 = vadd.s32 %v4890, 16
        %v4919 = vadd.s32 %v4897, 16
        %v4920 = vadd.s32 %v4904, 16
        %v4921 = vsel %vm4913, %v4917, %v4883
        %v4922 = vsel %vm4914, %v4918, %v4890
        %v4923 = vsel %vm4915, %v4919, %v4897
        %v4924 = vsel %vm4916, %v4920, %v4904
        %vm4925 = vcmp.ne.s32.totalorder %v4921, 0
        %vm4926 = vcmp.ne.s32.totalorder %v4922, 0
        %vm4927 = vcmp.ne.s32.totalorder %v4923, 0
        %vm4928 = vcmp.ne.s32.totalorder %v4924, 0
        %v4929 = vsel %vm4925, 1, 0
        %v4930 = vsel %vm4926, 1, 0
        %v4931 = vsel %vm4927, 1, 0
        %v4932 = vsel %vm4928, 1, 0
        %v4933 = vcvt.s32.f32 %v4929
        %v4934 = vcvt.s32.f32 %v4930
        %v4935 = vcvt.s32.f32 %v4931
        %v4936 = vcvt.s32.f32 %v4932
        %vm4937 = vcmp.ne.s32.totalorder %v4921, 15
        %vm4938 = vcmp.ne.s32.totalorder %v4922, 15
        %vm4939 = vcmp.ne.s32.totalorder %v4923, 15
        %vm4940 = vcmp.ne.s32.totalorder %v4924, 15
        %v4941 = vsel %vm4937, 1, 0
        %v4942 = vsel %vm4938, 1, 0
        %v4943 = vsel %vm4939, 1, 0
        %v4944 = vsel %vm4940, 1, 0
        %v4945 = vcvt.s32.f32 %v4941
        %v4946 = vcvt.s32.f32 %v4942
        %v4947 = vcvt.s32.f32 %v4943
        %v4948 = vcvt.s32.f32 %v4944
        %v4949 = vld [vmem:[#allocation6] sm:$0xff]
        %v4950 = vld [vmem:[#allocation6 + $0x8] sm:$0xff]
        %v4951 = vld [vmem:[#allocation6 + $0x10] sm:$0xff]
        %v4952 = vld [vmem:[#allocation6 + $0x18] sm:$0xff]
        %v4953 = vld [vmem:[#allocation6 + $0x20] sm:$0xff]
        %v4954 = vld [vmem:[#allocation6 + $0x28] sm:$0xff]
        %v4955 = vld [vmem:[#allocation6 + $0x30] sm:$0xff]
        %v4956 = vld [vmem:[#allocation6 + $0x38] sm:$0xff]
        %v4957 = vld [vmem:[#allocation6 + $0x40] sm:$0xff]
        %v4958 = vld [vmem:[#allocation6 + $0x48] sm:$0xff]
        %v4959 = vld [vmem:[#allocation6 + $0x50] sm:$0xff]
        %v4960 = vld [vmem:[#allocation6 + $0x58] sm:$0xff]
        %v4961 = vld [vmem:[#allocation6 + $0x60] sm:$0xff]
        %v4962 = vld [vmem:[#allocation6 + $0x68] sm:$0xff]
        %v4963 = vld [vmem:[#allocation6 + $0x70] sm:$0xff]
        %v4964 = vld [vmem:[#allocation6 + $0x78] sm:$0xff]
        %v4965 = vld [vmem:[#allocation6 + $0x80] sm:$0xff]
        %v4966 = vld [vmem:[#allocation6 + $0x88] sm:$0xff]
        %v4967 = vld [vmem:[#allocation6 + $0x90] sm:$0xff]
        %v4968 = vld [vmem:[#allocation6 + $0x98] sm:$0xff]
        %v4969 = vld [vmem:[#allocation6 + $0xa0] sm:$0xff]
        %v4970 = vld [vmem:[#allocation6 + $0xa8] sm:$0xff]
        %v4971 = vld [vmem:[#allocation6 + $0xb0] sm:$0xff]
        %v4972 = vld [vmem:[#allocation6 + $0xb8] sm:$0xff]
        %v4973 = vld [vmem:[#allocation6 + $0xc0] sm:$0xff]
        %v4974 = vld [vmem:[#allocation6 + $0xc8] sm:$0xff]
        %v4975 = vld [vmem:[#allocation6 + $0xd0] sm:$0xff]
        %v4976 = vld [vmem:[#allocation6 + $0xd8] sm:$0xff]
        %v4977 = vld [vmem:[#allocation6 + $0xe0] sm:$0xff]
        %v4978 = vld [vmem:[#allocation6 + $0xe8] sm:$0xff]
        %v4979 = vld [vmem:[#allocation6 + $0xf0] sm:$0xff]
        %v4980 = vld [vmem:[#allocation6 + $0xf8] sm:$0xff]
        %v4981 = vld [vmem:[#allocation6 + $0x100] sm:$0xff]
        %v4982 = vld [vmem:[#allocation6 + $0x108] sm:$0xff]
        %v4983 = vld [vmem:[#allocation6 + $0x110] sm:$0xff]
        %v4984 = vld [vmem:[#allocation6 + $0x118] sm:$0xff]
        %v4985 = vld [vmem:[#allocation6 + $0x120] sm:$0xff]
        %v4986 = vld [vmem:[#allocation6 + $0x128] sm:$0xff]
        %v4987 = vld [vmem:[#allocation6 + $0x130] sm:$0xff]
        %v4988 = vld [vmem:[#allocation6 + $0x138] sm:$0xff]
        %v4989 = vld [vmem:[#allocation6 + $0x140] sm:$0xff]
        %v4990 = vld [vmem:[#allocation6 + $0x148] sm:$0xff]
        %v4991 = vld [vmem:[#allocation6 + $0x150] sm:$0xff]
        %v4992 = vld [vmem:[#allocation6 + $0x158] sm:$0xff]
        %v4993 = vld [vmem:[#allocation6 + $0x160] sm:$0xff]
        %v4994 = vld [vmem:[#allocation6 + $0x168] sm:$0xff]
        %v4995 = vld [vmem:[#allocation6 + $0x170] sm:$0xff]
        %v4996 = vld [vmem:[#allocation6 + $0x178] sm:$0xff]
        %v5045 = vunpack.c.l.b16 %v4949
        %v5046 = vunpack.c.h.b16 %v4949
        %v5047 = vunpack.c.l.b16 %v4950
        %v5048 = vunpack.c.h.b16 %v4950
        %v5049 = vunpack.c.l.b16 %v4951
        %v5050 = vunpack.c.h.b16 %v4951
        %v5051 = vunpack.c.l.b16 %v4952
        %v5052 = vunpack.c.h.b16 %v4952
        %v5053 = vunpack.c.l.b16 %v4953
        %v5054 = vunpack.c.h.b16 %v4953
        %v5055 = vunpack.c.l.b16 %v4954
        %v5056 = vunpack.c.h.b16 %v4954
        %v5057 = vunpack.c.l.b16 %v4955
        %v5058 = vunpack.c.h.b16 %v4955
        %v5059 = vunpack.c.l.b16 %v4956
        %v5060 = vunpack.c.h.b16 %v4956
        %v5061 = vunpack.c.l.b16 %v4957
        %v5062 = vunpack.c.h.b16 %v4957
        %v5063 = vunpack.c.l.b16 %v4958
        %v5064 = vunpack.c.h.b16 %v4958
        %v5065 = vunpack.c.l.b16 %v4959
        %v5066 = vunpack.c.h.b16 %v4959
        %v5067 = vunpack.c.l.b16 %v4960
        %v5068 = vunpack.c.h.b16 %v4960
        %v5069 = vunpack.c.l.b16 %v4961
        %v5070 = vunpack.c.h.b16 %v4961
        %v5071 = vunpack.c.l.b16 %v4962
        %v5072 = vunpack.c.h.b16 %v4962
        %v5073 = vunpack.c.l.b16 %v4963
        %v5074 = vunpack.c.h.b16 %v4963
        %v5075 = vunpack.c.l.b16 %v4964
        %v5076 = vunpack.c.h.b16 %v4964
        %v5077 = vunpack.c.l.b16 %v4965
        %v5078 = vunpack.c.h.b16 %v4965
        %v5079 = vunpack.c.l.b16 %v4966
        %v5080 = vunpack.c.h.b16 %v4966
        %v5081 = vunpack.c.l.b16 %v4967
        %v5082 = vunpack.c.h.b16 %v4967
        %v5083 = vunpack.c.l.b16 %v4968
        %v5084 = vunpack.c.h.b16 %v4968
        %v5085 = vunpack.c.l.b16 %v4969
        %v5086 = vunpack.c.h.b16 %v4969
        %v5087 = vunpack.c.l.b16 %v4970
        %v5088 = vunpack.c.h.b16 %v4970
        %v5089 = vunpack.c.l.b16 %v4971
        %v5090 = vunpack.c.h.b16 %v4971
        %v5091 = vunpack.c.l.b16 %v4972
        %v5092 = vunpack.c.h.b16 %v4972
        %v5093 = vunpack.c.l.b16 %v4973
        %v5094 = vunpack.c.h.b16 %v4973
        %v5095 = vunpack.c.l.b16 %v4974
        %v5096 = vunpack.c.h.b16 %v4974
        %v5097 = vunpack.c.l.b16 %v4975
        %v5098 = vunpack.c.h.b16 %v4975
        %v5099 = vunpack.c.l.b16 %v4976
        %v5100 = vunpack.c.h.b16 %v4976
        %v5101 = vunpack.c.l.b16 %v4977
        %v5102 = vunpack.c.h.b16 %v4977
        %v5103 = vunpack.c.l.b16 %v4978
        %v5104 = vunpack.c.h.b16 %v4978
        %v5105 = vunpack.c.l.b16 %v4979
        %v5106 = vunpack.c.h.b16 %v4979
        %v5107 = vunpack.c.l.b16 %v4980
        %v5108 = vunpack.c.h.b16 %v4980
        %v5109 = vunpack.c.l.b16 %v4981
        %v5110 = vunpack.c.h.b16 %v4981
        %v5111 = vunpack.c.l.b16 %v4982
        %v5112 = vunpack.c.h.b16 %v4982
        %v5113 = vunpack.c.l.b16 %v4983
        %v5114 = vunpack.c.h.b16 %v4983
        %v5115 = vunpack.c.l.b16 %v4984
        %v5116 = vunpack.c.h.b16 %v4984
        %v5117 = vunpack.c.l.b16 %v4985
        %v5118 = vunpack.c.h.b16 %v4985
        %v5119 = vunpack.c.l.b16 %v4986
        %v5120 = vunpack.c.h.b16 %v4986
        %v5121 = vunpack.c.l.b16 %v4987
        %v5122 = vunpack.c.h.b16 %v4987
        %v5123 = vunpack.c.l.b16 %v4988
        %v5124 = vunpack.c.h.b16 %v4988
        %v5125 = vunpack.c.l.b16 %v4989
        %v5126 = vunpack.c.h.b16 %v4989
        %v5127 = vunpack.c.l.b16 %v4990
        %v5128 = vunpack.c.h.b16 %v4990
        %v5129 = vunpack.c.l.b16 %v4991
        %v5130 = vunpack.c.h.b16 %v4991
        %v5131 = vunpack.c.l.b16 %v4992
        %v5132 = vunpack.c.h.b16 %v4992
        %v5133 = vunpack.c.l.b16 %v4993
        %v5134 = vunpack.c.h.b16 %v4993
        %v5135 = vunpack.c.l.b16 %v4994
        %v5136 = vunpack.c.h.b16 %v4994
        %v5137 = vunpack.c.l.b16 %v4995
        %v5138 = vunpack.c.h.b16 %v4995
        %v5139 = vunpack.c.l.b16 %v4996
        %v5140 = vunpack.c.h.b16 %v4996
        %v5141 = vpack.c.b16 %v5047, %v5045
        %v5142 = vpack.c.b16 %v5048, %v5046
        %v5143 = vpack.c.b16 %v5051, %v5049
        %v5144 = vpack.c.b16 %v5052, %v5050
        %v5145 = vpack.c.b16 %v5055, %v5053
        %v5146 = vpack.c.b16 %v5056, %v5054
        %v5147 = vpack.c.b16 %v5059, %v5057
        %v5148 = vpack.c.b16 %v5060, %v5058
        %v5149 = vpack.c.b16 %v5063, %v5061
        %v5150 = vpack.c.b16 %v5064, %v5062
        %v5151 = vpack.c.b16 %v5067, %v5065
        %v5152 = vpack.c.b16 %v5068, %v5066
        %v5153 = vpack.c.b16 %v5071, %v5069
        %v5154 = vpack.c.b16 %v5072, %v5070
        %v5155 = vpack.c.b16 %v5075, %v5073
        %v5156 = vpack.c.b16 %v5076, %v5074
        %v5157 = vpack.c.b16 %v5079, %v5077
        %v5158 = vpack.c.b16 %v5080, %v5078
        %v5159 = vpack.c.b16 %v5083, %v5081
        %v5160 = vpack.c.b16 %v5084, %v5082
        %v5161 = vpack.c.b16 %v5087, %v5085
        %v5162 = vpack.c.b16 %v5088, %v5086
        %v5163 = vpack.c.b16 %v5091, %v5089
        %v5164 = vpack.c.b16 %v5092, %v5090
        %v5165 = vpack.c.b16 %v5095, %v5093
        %v5166 = vpack.c.b16 %v5096, %v5094
        %v5167 = vpack.c.b16 %v5099, %v5097
        %v5168 = vpack.c.b16 %v5100, %v5098
        %v5169 = vpack.c.b16 %v5103, %v5101
        %v5170 = vpack.c.b16 %v5104, %v5102
        %v5171 = vpack.c.b16 %v5107, %v5105
        %v5172 = vpack.c.b16 %v5108, %v5106
        %v5173 = vpack.c.b16 %v5111, %v5109
        %v5174 = vpack.c.b16 %v5112, %v5110
        %v5175 = vpack.c.b16 %v5115, %v5113
        %v5176 = vpack.c.b16 %v5116, %v5114
        %v5177 = vpack.c.b16 %v5119, %v5117
        %v5178 = vpack.c.b16 %v5120, %v5118
        %v5179 = vpack.c.b16 %v5123, %v5121
        %v5180 = vpack.c.b16 %v5124, %v5122
        %v5181 = vpack.c.b16 %v5127, %v5125
        %v5182 = vpack.c.b16 %v5128, %v5126
        %v5183 = vpack.c.b16 %v5131, %v5129
        %v5184 = vpack.c.b16 %v5132, %v5130
        %v5185 = vpack.c.b16 %v5135, %v5133
        %v5186 = vpack.c.b16 %v5136, %v5134
        %v5187 = vpack.c.b16 %v5139, %v5137
        %v5188 = vpack.c.b16 %v5140, %v5138
        %5237 = vmatpush.bf16.msra.mxu0 %v5155
        %5238 = vmatpush.bf16.msra.mxu0 %v5153
        %5239 = vmatpush.bf16.msra.mxu0 %v5151
        %5240 = vmatpush.bf16.msra.mxu0 %v5149
        %5241 = vmatpush.bf16.msra.mxu0 %v5147
        %5242 = vmatpush.bf16.msra.mxu0 %v5145
        %5243 = vmatpush.bf16.msra.mxu0 %v5143
        %5244 = vmatpush.bf16.msra.mxu0 %v5141
        %5245 = vmatmul.bf16.gmra.mxu0 %v4869
        %v5246 = vpop.f32.mrf.mxu0
        %v5247 = vadd.f32 0.0, %v5246
        %v5248 = vpop.f32.mrf.mxu0
        %v5249 = vadd.f32 0.0, %v5248
        %5250 = vmatmul.bf16.gmra.mxu0 %v4872
        %v5251 = vpop.f32.mrf.mxu0
        %v5252 = vadd.f32 0.0, %v5251
        %v5253 = vpop.f32.mrf.mxu0
        %v5254 = vadd.f32 0.0, %v5253
        %5255 = vdwg.mxu0
        %5256 = vmatpush.bf16.msra.mxu0 %v5171
        %5257 = vmatpush.bf16.msra.mxu0 %v5169
        %5258 = vmatpush.bf16.msra.mxu0 %v5167
        %5259 = vmatpush.bf16.msra.mxu0 %v5165
        %5260 = vmatpush.bf16.msra.mxu0 %v5163
        %5261 = vmatpush.bf16.msra.mxu0 %v5161
        %5262 = vmatpush.bf16.msra.mxu0 %v5159
        %5263 = vmatpush.bf16.msra.mxu0 %v5157
        %5264 = vmatmul.bf16.gmra.mxu0 %v4870
        %v5265 = vpop.f32.mrf.mxu0
        %v5266 = vadd.f32 %v5247, %v5265
        %v5267 = vpop.f32.mrf.mxu0
        %v5268 = vadd.f32 %v5249, %v5267
        %5269 = vmatmul.bf16.gmra.mxu0 %v4873
        %v5270 = vpop.f32.mrf.mxu0
        %v5271 = vadd.f32 %v5252, %v5270
        %v5272 = vpop.f32.mrf.mxu0
        %v5273 = vadd.f32 %v5254, %v5272
        %5274 = vdwg.mxu0
        %5275 = vmatpush.bf16.msra.mxu0 %v5187
        %5276 = vmatpush.bf16.msra.mxu0 %v5185
        %5277 = vmatpush.bf16.msra.mxu0 %v5183
        %5278 = vmatpush.bf16.msra.mxu0 %v5181
        %5279 = vmatpush.bf16.msra.mxu0 %v5179
        %5280 = vmatpush.bf16.msra.mxu0 %v5177
        %5281 = vmatpush.bf16.msra.mxu0 %v5175
        %5282 = vmatpush.bf16.msra.mxu0 %v5173
        %5283 = vmatmul.bf16.gmra.mxu0 %v4871
        %v5284 = vpop.f32.mrf.mxu0
        %v5285 = vadd.f32 %v5266, %v5284
        %v5286 = vpop.f32.mrf.mxu0
        %v5287 = vadd.f32 %v5268, %v5286
        %5288 = vmatmul.bf16.gmra.mxu0 %v4874
        %v5289 = vpop.f32.mrf.mxu0
        %v5290 = vadd.f32 %v5271, %v5289
        %v5291 = vpop.f32.mrf.mxu0
        %v5292 = vadd.f32 %v5273, %v5291
        %5293 = vdwg.mxu0
        %5294 = vmatpush.bf16.msra.mxu0 %v5156
        %5295 = vmatpush.bf16.msra.mxu0 %v5154
        %5296 = vmatpush.bf16.msra.mxu0 %v5152
        %5297 = vmatpush.bf16.msra.mxu0 %v5150
        %5298 = vmatpush.bf16.msra.mxu0 %v5148
        %5299 = vmatpush.bf16.msra.mxu0 %v5146
        %5300 = vmatpush.bf16.msra.mxu0 %v5144
        %5301 = vmatpush.bf16.msra.mxu0 %v5142
        %5302 = vmatmul.bf16.gmra.mxu0 %v4869
        %v5303 = vpop.f32.mrf.mxu0
        %v5304 = vadd.f32 0.0, %v5303
        %v5305 = vpop.f32.mrf.mxu0
        %v5306 = vadd.f32 0.0, %v5305
        %5307 = vmatmul.bf16.gmra.mxu0 %v4872
        %v5308 = vpop.f32.mrf.mxu0
        %v5309 = vadd.f32 0.0, %v5308
        %v5310 = vpop.f32.mrf.mxu0
        %v5311 = vadd.f32 0.0, %v5310
        %5312 = vdwg.mxu0
        %5313 = vmatpush.bf16.msra.mxu0 %v5172
        %5314 = vmatpush.bf16.msra.mxu0 %v5170
        %5315 = vmatpush.bf16.msra.mxu0 %v5168
        %5316 = vmatpush.bf16.msra.mxu0 %v5166
        %5317 = vmatpush.bf16.msra.mxu0 %v5164
        %5318 = vmatpush.bf16.msra.mxu0 %v5162
        %5319 = vmatpush.bf16.msra.mxu0 %v5160
        %5320 = vmatpush.bf16.msra.mxu0 %v5158
        %5321 = vmatmul.bf16.gmra.mxu0 %v4870
        %v5322 = vpop.f32.mrf.mxu0
        %v5323 = vadd.f32 %v5304, %v5322
        %v5324 = vpop.f32.mrf.mxu0
        %v5325 = vadd.f32 %v5306, %v5324
        %5326 = vmatmul.bf16.gmra.mxu0 %v4873
        %v5327 = vpop.f32.mrf.mxu0
        %v5328 = vadd.f32 %v5309, %v5327
        %v5329 = vpop.f32.mrf.mxu0
        %v5330 = vadd.f32 %v5311, %v5329
        %5331 = vdwg.mxu0
        %5332 = vmatpush.bf16.msra.mxu0 %v5188
        %5333 = vmatpush.bf16.msra.mxu0 %v5186
        %5334 = vmatpush.bf16.msra.mxu0 %v5184
        %5335 = vmatpush.bf16.msra.mxu0 %v5182
        %5336 = vmatpush.bf16.msra.mxu0 %v5180
        %5337 = vmatpush.bf16.msra.mxu0 %v5178
        %5338 = vmatpush.bf16.msra.mxu0 %v5176
        %5339 = vmatpush.bf16.msra.mxu0 %v5174
        %5340 = vmatmul.bf16.gmra.mxu0 %v4871
        %v5341 = vpop.f32.mrf.mxu0
        %v5342 = vadd.f32 %v5323, %v5341
        %v5343 = vpop.f32.mrf.mxu0
        %v5344 = vadd.f32 %v5325, %v5343
        %5345 = vmatmul.bf16.gmra.mxu0 %v4874
        %v5346 = vpop.f32.mrf.mxu0
        %v5347 = vadd.f32 %v5328, %v5346
        %v5348 = vpop.f32.mrf.mxu0
        %v5349 = vadd.f32 %v5330, %v5348
        %5350 = vdwg.mxu0
        %s5351 = scalar_lea.vmem [#allocation6], 384
        %v5352 = vld [vmem:[%s5351] sm:$0xff]
        %v5353 = vld [vmem:[%s5351 + $0x8] sm:$0xff]
        %v5354 = vld [vmem:[%s5351 + $0x10] sm:$0xff]
        %v5355 = vld [vmem:[%s5351 + $0x18] sm:$0xff]
        %v5356 = vld [vmem:[%s5351 + $0x20] sm:$0xff]
        %v5357 = vld [vmem:[%s5351 + $0x28] sm:$0xff]
        %v5358 = vld [vmem:[%s5351 + $0x30] sm:$0xff]
        %v5359 = vld [vmem:[%s5351 + $0x38] sm:$0xff]
        %v5360 = vld [vmem:[%s5351 + $0x40] sm:$0xff]
        %v5361 = vld [vmem:[%s5351 + $0x48] sm:$0xff]
        %v5362 = vld [vmem:[%s5351 + $0x50] sm:$0xff]
        %v5363 = vld [vmem:[%s5351 + $0x58] sm:$0xff]
        %v5364 = vld [vmem:[%s5351 + $0x60] sm:$0xff]
        %v5365 = vld [vmem:[%s5351 + $0x68] sm:$0xff]
        %v5366 = vld [vmem:[%s5351 + $0x70] sm:$0xff]
        %v5367 = vld [vmem:[%s5351 + $0x78] sm:$0xff]
        %v5368 = vld [vmem:[%s5351 + $0x80] sm:$0xff]
        %v5369 = vld [vmem:[%s5351 + $0x88] sm:$0xff]
        %v5370 = vld [vmem:[%s5351 + $0x90] sm:$0xff]
        %v5371 = vld [vmem:[%s5351 + $0x98] sm:$0xff]
        %v5372 = vld [vmem:[%s5351 + $0xa0] sm:$0xff]
        %v5373 = vld [vmem:[%s5351 + $0xa8] sm:$0xff]
        %v5374 = vld [vmem:[%s5351 + $0xb0] sm:$0xff]
        %v5375 = vld [vmem:[%s5351 + $0xb8] sm:$0xff]
        %v5376 = vld [vmem:[%s5351 + $0xc0] sm:$0xff]
        %v5377 = vld [vmem:[%s5351 + $0xc8] sm:$0xff]
        %v5378 = vld [vmem:[%s5351 + $0xd0] sm:$0xff]
        %v5379 = vld [vmem:[%s5351 + $0xd8] sm:$0xff]
        %v5380 = vld [vmem:[%s5351 + $0xe0] sm:$0xff]
        %v5381 = vld [vmem:[%s5351 + $0xe8] sm:$0xff]
        %v5382 = vld [vmem:[%s5351 + $0xf0] sm:$0xff]
        %v5383 = vld [vmem:[%s5351 + $0xf8] sm:$0xff]
        %v5384 = vld [vmem:[%s5351 + $0x100] sm:$0xff]
        %v5385 = vld [vmem:[%s5351 + $0x108] sm:$0xff]
        %v5386 = vld [vmem:[%s5351 + $0x110] sm:$0xff]
        %v5387 = vld [vmem:[%s5351 + $0x118] sm:$0xff]
        %v5388 = vld [vmem:[%s5351 + $0x120] sm:$0xff]
        %v5389 = vld [vmem:[%s5351 + $0x128] sm:$0xff]
        %v5390 = vld [vmem:[%s5351 + $0x130] sm:$0xff]
        %v5391 = vld [vmem:[%s5351 + $0x138] sm:$0xff]
        %v5392 = vld [vmem:[%s5351 + $0x140] sm:$0xff]
        %v5393 = vld [vmem:[%s5351 + $0x148] sm:$0xff]
        %v5394 = vld [vmem:[%s5351 + $0x150] sm:$0xff]
        %v5395 = vld [vmem:[%s5351 + $0x158] sm:$0xff]
        %v5396 = vld [vmem:[%s5351 + $0x160] sm:$0xff]
        %v5397 = vld [vmem:[%s5351 + $0x168] sm:$0xff]
        %v5398 = vld [vmem:[%s5351 + $0x170] sm:$0xff]
        %v5399 = vld [vmem:[%s5351 + $0x178] sm:$0xff]
        %v5448 = vunpack.c.l.b16 %v5352
        %v5449 = vunpack.c.h.b16 %v5352
        %v5450 = vunpack.c.l.b16 %v5353
        %v5451 = vunpack.c.h.b16 %v5353
        %v5452 = vunpack.c.l.b16 %v5354
        %v5453 = vunpack.c.h.b16 %v5354
        %v5454 = vunpack.c.l.b16 %v5355
        %v5455 = vunpack.c.h.b16 %v5355
        %v5456 = vunpack.c.l.b16 %v5356
        %v5457 = vunpack.c.h.b16 %v5356
        %v5458 = vunpack.c.l.b16 %v5357
        %v5459 = vunpack.c.h.b16 %v5357
        %v5460 = vunpack.c.l.b16 %v5358
        %v5461 = vunpack.c.h.b16 %v5358
        %v5462 = vunpack.c.l.b16 %v5359
        %v5463 = vunpack.c.h.b16 %v5359
        %v5464 = vunpack.c.l.b16 %v5360
        %v5465 = vunpack.c.h.b16 %v5360
        %v5466 = vunpack.c.l.b16 %v5361
        %v5467 = vunpack.c.h.b16 %v5361
        %v5468 = vunpack.c.l.b16 %v5362
        %v5469 = vunpack.c.h.b16 %v5362
        %v5470 = vunpack.c.l.b16 %v5363
        %v5471 = vunpack.c.h.b16 %v5363
        %v5472 = vunpack.c.l.b16 %v5364
        %v5473 = vunpack.c.h.b16 %v5364
        %v5474 = vunpack.c.l.b16 %v5365
        %v5475 = vunpack.c.h.b16 %v5365
        %v5476 = vunpack.c.l.b16 %v5366
        %v5477 = vunpack.c.h.b16 %v5366
        %v5478 = vunpack.c.l.b16 %v5367
        %v5479 = vunpack.c.h.b16 %v5367
        %v5480 = vunpack.c.l.b16 %v5368
        %v5481 = vunpack.c.h.b16 %v5368
        %v5482 = vunpack.c.l.b16 %v5369
        %v5483 = vunpack.c.h.b16 %v5369
        %v5484 = vunpack.c.l.b16 %v5370
        %v5485 = vunpack.c.h.b16 %v5370
        %v5486 = vunpack.c.l.b16 %v5371
        %v5487 = vunpack.c.h.b16 %v5371
        %v5488 = vunpack.c.l.b16 %v5372
        %v5489 = vunpack.c.h.b16 %v5372
        %v5490 = vunpack.c.l.b16 %v5373
        %v5491 = vunpack.c.h.b16 %v5373
        %v5492 = vunpack.c.l.b16 %v5374
        %v5493 = vunpack.c.h.b16 %v5374
        %v5494 = vunpack.c.l.b16 %v5375
        %v5495 = vunpack.c.h.b16 %v5375
        %v5496 = vunpack.c.l.b16 %v5376
        %v5497 = vunpack.c.h.b16 %v5376
        %v5498 = vunpack.c.l.b16 %v5377
        %v5499 = vunpack.c.h.b16 %v5377
        %v5500 = vunpack.c.l.b16 %v5378
        %v5501 = vunpack.c.h.b16 %v5378
        %v5502 = vunpack.c.l.b16 %v5379
        %v5503 = vunpack.c.h.b16 %v5379
        %v5504 = vunpack.c.l.b16 %v5380
        %v5505 = vunpack.c.h.b16 %v5380
        %v5506 = vunpack.c.l.b16 %v5381
        %v5507 = vunpack.c.h.b16 %v5381
        %v5508 = vunpack.c.l.b16 %v5382
        %v5509 = vunpack.c.h.b16 %v5382
        %v5510 = vunpack.c.l.b16 %v5383
        %v5511 = vunpack.c.h.b16 %v5383
        %v5512 = vunpack.c.l.b16 %v5384
        %v5513 = vunpack.c.h.b16 %v5384
        %v5514 = vunpack.c.l.b16 %v5385
        %v5515 = vunpack.c.h.b16 %v5385
        %v5516 = vunpack.c.l.b16 %v5386
        %v5517 = vunpack.c.h.b16 %v5386
        %v5518 = vunpack.c.l.b16 %v5387
        %v5519 = vunpack.c.h.b16 %v5387
        %v5520 = vunpack.c.l.b16 %v5388
        %v5521 = vunpack.c.h.b16 %v5388
        %v5522 = vunpack.c.l.b16 %v5389
        %v5523 = vunpack.c.h.b16 %v5389
        %v5524 = vunpack.c.l.b16 %v5390
        %v5525 = vunpack.c.h.b16 %v5390
        %v5526 = vunpack.c.l.b16 %v5391
        %v5527 = vunpack.c.h.b16 %v5391
        %v5528 = vunpack.c.l.b16 %v5392
        %v5529 = vunpack.c.h.b16 %v5392
        %v5530 = vunpack.c.l.b16 %v5393
        %v5531 = vunpack.c.h.b16 %v5393
        %v5532 = vunpack.c.l.b16 %v5394
        %v5533 = vunpack.c.h.b16 %v5394
        %v5534 = vunpack.c.l.b16 %v5395
        %v5535 = vunpack.c.h.b16 %v5395
        %v5536 = vunpack.c.l.b16 %v5396
        %v5537 = vunpack.c.h.b16 %v5396
        %v5538 = vunpack.c.l.b16 %v5397
        %v5539 = vunpack.c.h.b16 %v5397
        %v5540 = vunpack.c.l.b16 %v5398
        %v5541 = vunpack.c.h.b16 %v5398
        %v5542 = vunpack.c.l.b16 %v5399
        %v5543 = vunpack.c.h.b16 %v5399
        %v5544 = vpack.c.b16 %v5450, %v5448
        %v5545 = vpack.c.b16 %v5451, %v5449
        %v5546 = vpack.c.b16 %v5454, %v5452
        %v5547 = vpack.c.b16 %v5455, %v5453
        %v5548 = vpack.c.b16 %v5458, %v5456
        %v5549 = vpack.c.b16 %v5459, %v5457
        %v5550 = vpack.c.b16 %v5462, %v5460
        %v5551 = vpack.c.b16 %v5463, %v5461
        %v5552 = vpack.c.b16 %v5466, %v5464
        %v5553 = vpack.c.b16 %v5467, %v5465
        %v5554 = vpack.c.b16 %v5470, %v5468
        %v5555 = vpack.c.b16 %v5471, %v5469
        %v5556 = vpack.c.b16 %v5474, %v5472
        %v5557 = vpack.c.b16 %v5475, %v5473
        %v5558 = vpack.c.b16 %v5478, %v5476
        %v5559 = vpack.c.b16 %v5479, %v5477
        %v5560 = vpack.c.b16 %v5482, %v5480
        %v5561 = vpack.c.b16 %v5483, %v5481
        %v5562 = vpack.c.b16 %v5486, %v5484
        %v5563 = vpack.c.b16 %v5487, %v5485
        %v5564 = vpack.c.b16 %v5490, %v5488
        %v5565 = vpack.c.b16 %v5491, %v5489
        %v5566 = vpack.c.b16 %v5494, %v5492
        %v5567 = vpack.c.b16 %v5495, %v5493
        %v5568 = vpack.c.b16 %v5498, %v5496
        %v5569 = vpack.c.b16 %v5499, %v5497
        %v5570 = vpack.c.b16 %v5502, %v5500
        %v5571 = vpack.c.b16 %v5503, %v5501
        %v5572 = vpack.c.b16 %v5506, %v5504
        %v5573 = vpack.c.b16 %v5507, %v5505
        %v5574 = vpack.c.b16 %v5510, %v5508
        %v5575 = vpack.c.b16 %v5511, %v5509
        %v5576 = vpack.c.b16 %v5514, %v5512
        %v5577 = vpack.c.b16 %v5515, %v5513
        %v5578 = vpack.c.b16 %v5518, %v5516
        %v5579 = vpack.c.b16 %v5519, %v5517
        %v5580 = vpack.c.b16 %v5522, %v5520
        %v5581 = vpack.c.b16 %v5523, %v5521
        %v5582 = vpack.c.b16 %v5526, %v5524
        %v5583 = vpack.c.b16 %v5527, %v5525
        %v5584 = vpack.c.b16 %v5530, %v5528
        %v5585 = vpack.c.b16 %v5531, %v5529
        %v5586 = vpack.c.b16 %v5534, %v5532
        %v5587 = vpack.c.b16 %v5535, %v5533
        %v5588 = vpack.c.b16 %v5538, %v5536
        %v5589 = vpack.c.b16 %v5539, %v5537
        %v5590 = vpack.c.b16 %v5542, %v5540
        %v5591 = vpack.c.b16 %v5543, %v5541
        %5640 = vmatpush.bf16.msra.mxu0 %v5558
        %5641 = vmatpush.bf16.msra.mxu0 %v5556
        %5642 = vmatpush.bf16.msra.mxu0 %v5554
        %5643 = vmatpush.bf16.msra.mxu0 %v5552
        %5644 = vmatpush.bf16.msra.mxu0 %v5550
        %5645 = vmatpush.bf16.msra.mxu0 %v5548
        %5646 = vmatpush.bf16.msra.mxu0 %v5546
        %5647 = vmatpush.bf16.msra.mxu0 %v5544
        %5648 = vmatmul.bf16.gmra.mxu0 %v4869
        %v5649 = vpop.f32.mrf.mxu0
        %v5650 = vadd.f32 0.0, %v5649
        %v5651 = vpop.f32.mrf.mxu0
        %v5652 = vadd.f32 0.0, %v5651
        %5653 = vmatmul.bf16.gmra.mxu0 %v4872
        %v5654 = vpop.f32.mrf.mxu0
        %v5655 = vadd.f32 0.0, %v5654
        %v5656 = vpop.f32.mrf.mxu0
        %v5657 = vadd.f32 0.0, %v5656
        %5658 = vdwg.mxu0
        %5659 = vmatpush.bf16.msra.mxu0 %v5574
        %5660 = vmatpush.bf16.msra.mxu0 %v5572
        %5661 = vmatpush.bf16.msra.mxu0 %v5570
        %5662 = vmatpush.bf16.msra.mxu0 %v5568
        %5663 = vmatpush.bf16.msra.mxu0 %v5566
        %5664 = vmatpush.bf16.msra.mxu0 %v5564
        %5665 = vmatpush.bf16.msra.mxu0 %v5562
        %5666 = vmatpush.bf16.msra.mxu0 %v5560
        %5667 = vmatmul.bf16.gmra.mxu0 %v4870
        %v5668 = vpop.f32.mrf.mxu0
        %v5669 = vadd.f32 %v5650, %v5668
        %v5670 = vpop.f32.mrf.mxu0
        %v5671 = vadd.f32 %v5652, %v5670
        %5672 = vmatmul.bf16.gmra.mxu0 %v4873
        %v5673 = vpop.f32.mrf.mxu0
        %v5674 = vadd.f32 %v5655, %v5673
        %v5675 = vpop.f32.mrf.mxu0
        %v5676 = vadd.f32 %v5657, %v5675
        %5677 = vdwg.mxu0
        %5678 = vmatpush.bf16.msra.mxu0 %v5590
        %5679 = vmatpush.bf16.msra.mxu0 %v5588
        %5680 = vmatpush.bf16.msra.mxu0 %v5586
        %5681 = vmatpush.bf16.msra.mxu0 %v5584
        %5682 = vmatpush.bf16.msra.mxu0 %v5582
        %5683 = vmatpush.bf16.msra.mxu0 %v5580
        %5684 = vmatpush.bf16.msra.mxu0 %v5578
        %5685 = vmatpush.bf16.msra.mxu0 %v5576
        %5686 = vmatmul.bf16.gmra.mxu0 %v4871
        %v5687 = vpop.f32.mrf.mxu0
        %v5688 = vadd.f32 %v5669, %v5687
        %v5689 = vpop.f32.mrf.mxu0
        %v5690 = vadd.f32 %v5671, %v5689
        %5691 = vmatmul.bf16.gmra.mxu0 %v4874
        %v5692 = vpop.f32.mrf.mxu0
        %v5693 = vadd.f32 %v5674, %v5692
        %v5694 = vpop.f32.mrf.mxu0
        %v5695 = vadd.f32 %v5676, %v5694
        %5696 = vdwg.mxu0
        %5697 = vmatpush.bf16.msra.mxu0 %v5559
        %5698 = vmatpush.bf16.msra.mxu0 %v5557
        %5699 = vmatpush.bf16.msra.mxu0 %v5555
        %5700 = vmatpush.bf16.msra.mxu0 %v5553
        %5701 = vmatpush.bf16.msra.mxu0 %v5551
        %5702 = vmatpush.bf16.msra.mxu0 %v5549
        %5703 = vmatpush.bf16.msra.mxu0 %v5547
        %5704 = vmatpush.bf16.msra.mxu0 %v5545
        %5705 = vmatmul.bf16.gmra.mxu0 %v4869
        %v5706 = vpop.f32.mrf.mxu0
        %v5707 = vadd.f32 0.0, %v5706
        %v5708 = vpop.f32.mrf.mxu0
        %v5709 = vadd.f32 0.0, %v5708
        %5710 = vmatmul.bf16.gmra.mxu0 %v4872
        %v5711 = vpop.f32.mrf.mxu0
        %v5712 = vadd.f32 0.0, %v5711
        %v5713 = vpop.f32.mrf.mxu0
        %v5714 = vadd.f32 0.0, %v5713
        %5715 = vdwg.mxu0
        %5716 = vmatpush.bf16.msra.mxu0 %v5575
        %5717 = vmatpush.bf16.msra.mxu0 %v5573
        %5718 = vmatpush.bf16.msra.mxu0 %v5571
        %5719 = vmatpush.bf16.msra.mxu0 %v5569
        %5720 = vmatpush.bf16.msra.mxu0 %v5567
        %5721 = vmatpush.bf16.msra.mxu0 %v5565
        %5722 = vmatpush.bf16.msra.mxu0 %v5563
        %5723 = vmatpush.bf16.msra.mxu0 %v5561
        %5724 = vmatmul.bf16.gmra.mxu0 %v4870
        %v5725 = vpop.f32.mrf.mxu0
        %v5726 = vadd.f32 %v5707, %v5725
        %v5727 = vpop.f32.mrf.mxu0
        %v5728 = vadd.f32 %v5709, %v5727
        %5729 = vmatmul.bf16.gmra.mxu0 %v4873
        %v5730 = vpop.f32.mrf.mxu0
        %v5731 = vadd.f32 %v5712, %v5730
        %v5732 = vpop.f32.mrf.mxu0
        %v5733 = vadd.f32 %v5714, %v5732
        %5734 = vdwg.mxu0
        %5735 = vmatpush.bf16.msra.mxu0 %v5591
        %5736 = vmatpush.bf16.msra.mxu0 %v5589
        %5737 = vmatpush.bf16.msra.mxu0 %v5587
        %5738 = vmatpush.bf16.msra.mxu0 %v5585
        %5739 = vmatpush.bf16.msra.mxu0 %v5583
        %5740 = vmatpush.bf16.msra.mxu0 %v5581
        %5741 = vmatpush.bf16.msra.mxu0 %v5579
        %5742 = vmatpush.bf16.msra.mxu0 %v5577
        %5743 = vmatmul.bf16.gmra.mxu0 %v4871
        %v5744 = vpop.f32.mrf.mxu0
        %v5745 = vadd.f32 %v5726, %v5744
        %v5746 = vpop.f32.mrf.mxu0
        %v5747 = vadd.f32 %v5728, %v5746
        %5748 = vmatmul.bf16.gmra.mxu0 %v4874
        %v5749 = vpop.f32.mrf.mxu0
        %v5750 = vadd.f32 %v5731, %v5749
        %v5751 = vpop.f32.mrf.mxu0
        %v5752 = vadd.f32 %v5733, %v5751
        %5753 = vdwg.mxu0
        %s5754 = scalar_lea.vmem [#allocation6], 768
        %v5755 = vld [vmem:[%s5754] sm:$0xff]
        %v5756 = vld [vmem:[%s5754 + $0x8] sm:$0xff]
        %v5757 = vld [vmem:[%s5754 + $0x10] sm:$0xff]
        %v5758 = vld [vmem:[%s5754 + $0x18] sm:$0xff]
        %v5759 = vld [vmem:[%s5754 + $0x20] sm:$0xff]
        %v5760 = vld [vmem:[%s5754 + $0x28] sm:$0xff]
        %v5761 = vld [vmem:[%s5754 + $0x30] sm:$0xff]
        %v5762 = vld [vmem:[%s5754 + $0x38] sm:$0xff]
        %v5763 = vld [vmem:[%s5754 + $0x40] sm:$0xff]
        %v5764 = vld [vmem:[%s5754 + $0x48] sm:$0xff]
        %v5765 = vld [vmem:[%s5754 + $0x50] sm:$0xff]
        %v5766 = vld [vmem:[%s5754 + $0x58] sm:$0xff]
        %v5767 = vld [vmem:[%s5754 + $0x60] sm:$0xff]
        %v5768 = vld [vmem:[%s5754 + $0x68] sm:$0xff]
        %v5769 = vld [vmem:[%s5754 + $0x70] sm:$0xff]
        %v5770 = vld [vmem:[%s5754 + $0x78] sm:$0xff]
        %v5771 = vld [vmem:[%s5754 + $0x80] sm:$0xff]
        %v5772 = vld [vmem:[%s5754 + $0x88] sm:$0xff]
        %v5773 = vld [vmem:[%s5754 + $0x90] sm:$0xff]
        %v5774 = vld [vmem:[%s5754 + $0x98] sm:$0xff]
        %v5775 = vld [vmem:[%s5754 + $0xa0] sm:$0xff]
        %v5776 = vld [vmem:[%s5754 + $0xa8] sm:$0xff]
        %v5777 = vld [vmem:[%s5754 + $0xb0] sm:$0xff]
        %v5778 = vld [vmem:[%s5754 + $0xb8] sm:$0xff]
        %v5779 = vld [vmem:[%s5754 + $0xc0] sm:$0xff]
        %v5780 = vld [vmem:[%s5754 + $0xc8] sm:$0xff]
        %v5781 = vld [vmem:[%s5754 + $0xd0] sm:$0xff]
        %v5782 = vld [vmem:[%s5754 + $0xd8] sm:$0xff]
        %v5783 = vld [vmem:[%s5754 + $0xe0] sm:$0xff]
        %v5784 = vld [vmem:[%s5754 + $0xe8] sm:$0xff]
        %v5785 = vld [vmem:[%s5754 + $0xf0] sm:$0xff]
        %v5786 = vld [vmem:[%s5754 + $0xf8] sm:$0xff]
        %v5787 = vld [vmem:[%s5754 + $0x100] sm:$0xff]
        %v5788 = vld [vmem:[%s5754 + $0x108] sm:$0xff]
        %v5789 = vld [vmem:[%s5754 + $0x110] sm:$0xff]
        %v5790 = vld [vmem:[%s5754 + $0x118] sm:$0xff]
        %v5791 = vld [vmem:[%s5754 + $0x120] sm:$0xff]
        %v5792 = vld [vmem:[%s5754 + $0x128] sm:$0xff]
        %v5793 = vld [vmem:[%s5754 + $0x130] sm:$0xff]
        %v5794 = vld [vmem:[%s5754 + $0x138] sm:$0xff]
        %v5795 = vld [vmem:[%s5754 + $0x140] sm:$0xff]
        %v5796 = vld [vmem:[%s5754 + $0x148] sm:$0xff]
        %v5797 = vld [vmem:[%s5754 + $0x150] sm:$0xff]
        %v5798 = vld [vmem:[%s5754 + $0x158] sm:$0xff]
        %v5799 = vld [vmem:[%s5754 + $0x160] sm:$0xff]
        %v5800 = vld [vmem:[%s5754 + $0x168] sm:$0xff]
        %v5801 = vld [vmem:[%s5754 + $0x170] sm:$0xff]
        %v5802 = vld [vmem:[%s5754 + $0x178] sm:$0xff]
        %s5803 = scalar_lea.vmem [#allocation6], 1152
        %v5804 = vld [vmem:[%s5803] sm:$0xff]
        %v5805 = vld [vmem:[%s5803 + $0x8] sm:$0xff]
        %v5806 = vld [vmem:[%s5803 + $0x10] sm:$0xff]
        %v5807 = vld [vmem:[%s5803 + $0x18] sm:$0xff]
        %v5808 = vld [vmem:[%s5803 + $0x20] sm:$0xff]
        %v5809 = vld [vmem:[%s5803 + $0x28] sm:$0xff]
        %v5810 = vld [vmem:[%s5803 + $0x30] sm:$0xff]
        %v5811 = vld [vmem:[%s5803 + $0x38] sm:$0xff]
        %v5812 = vld [vmem:[%s5803 + $0x40] sm:$0xff]
        %v5813 = vld [vmem:[%s5803 + $0x48] sm:$0xff]
        %v5814 = vld [vmem:[%s5803 + $0x50] sm:$0xff]
        %v5815 = vld [vmem:[%s5803 + $0x58] sm:$0xff]
        %v5816 = vld [vmem:[%s5803 + $0x60] sm:$0xff]
        %v5817 = vld [vmem:[%s5803 + $0x68] sm:$0xff]
        %v5818 = vld [vmem:[%s5803 + $0x70] sm:$0xff]
        %v5819 = vld [vmem:[%s5803 + $0x78] sm:$0xff]
        %v5820 = vld [vmem:[%s5803 + $0x80] sm:$0xff]
        %v5821 = vld [vmem:[%s5803 + $0x88] sm:$0xff]
        %v5822 = vld [vmem:[%s5803 + $0x90] sm:$0xff]
        %v5823 = vld [vmem:[%s5803 + $0x98] sm:$0xff]
        %v5824 = vld [vmem:[%s5803 + $0xa0] sm:$0xff]
        %v5825 = vld [vmem:[%s5803 + $0xa8] sm:$0xff]
        %v5826 = vld [vmem:[%s5803 + $0xb0] sm:$0xff]
        %v5827 = vld [vmem:[%s5803 + $0xb8] sm:$0xff]
        %v5828 = vld [vmem:[%s5803 + $0xc0] sm:$0xff]
        %v5829 = vld [vmem:[%s5803 + $0xc8] sm:$0xff]
        %v5830 = vld [vmem:[%s5803 + $0xd0] sm:$0xff]
        %v5831 = vld [vmem:[%s5803 + $0xd8] sm:$0xff]
        %v5832 = vld [vmem:[%s5803 + $0xe0] sm:$0xff]
        %v5833 = vld [vmem:[%s5803 + $0xe8] sm:$0xff]
        %v5834 = vld [vmem:[%s5803 + $0xf0] sm:$0xff]
        %v5835 = vld [vmem:[%s5803 + $0xf8] sm:$0xff]
        %v5836 = vld [vmem:[%s5803 + $0x100] sm:$0xff]
        %v5837 = vld [vmem:[%s5803 + $0x108] sm:$0xff]
        %v5838 = vld [vmem:[%s5803 + $0x110] sm:$0xff]
        %v5839 = vld [vmem:[%s5803 + $0x118] sm:$0xff]
        %v5840 = vld [vmem:[%s5803 + $0x120] sm:$0xff]
        %v5841 = vld [vmem:[%s5803 + $0x128] sm:$0xff]
        %v5842 = vld [vmem:[%s5803 + $0x130] sm:$0xff]
        %v5843 = vld [vmem:[%s5803 + $0x138] sm:$0xff]
        %v5844 = vld [vmem:[%s5803 + $0x140] sm:$0xff]
        %v5845 = vld [vmem:[%s5803 + $0x148] sm:$0xff]
        %v5846 = vld [vmem:[%s5803 + $0x150] sm:$0xff]
        %v5847 = vld [vmem:[%s5803 + $0x158] sm:$0xff]
        %v5848 = vld [vmem:[%s5803 + $0x160] sm:$0xff]
        %v5849 = vld [vmem:[%s5803 + $0x168] sm:$0xff]
        %v5850 = vld [vmem:[%s5803 + $0x170] sm:$0xff]
        %v5851 = vld [vmem:[%s5803 + $0x178] sm:$0xff]
        %v5900 = vunpack.c.l.b16 %v5804
        %v5901 = vunpack.c.h.b16 %v5804
        %v5902 = vunpack.c.l.b16 %v5805
        %v5903 = vunpack.c.h.b16 %v5805
        %v5904 = vunpack.c.l.b16 %v5806
        %v5905 = vunpack.c.h.b16 %v5806
        %v5906 = vunpack.c.l.b16 %v5807
        %v5907 = vunpack.c.h.b16 %v5807
        %v5908 = vunpack.c.l.b16 %v5808
        %v5909 = vunpack.c.h.b16 %v5808
        %v5910 = vunpack.c.l.b16 %v5809
        %v5911 = vunpack.c.h.b16 %v5809
        %v5912 = vunpack.c.l.b16 %v5810
        %v5913 = vunpack.c.h.b16 %v5810
        %v5914 = vunpack.c.l.b16 %v5811
        %v5915 = vunpack.c.h.b16 %v5811
        %v5916 = vunpack.c.l.b16 %v5812
        %v5917 = vunpack.c.h.b16 %v5812
        %v5918 = vunpack.c.l.b16 %v5813
        %v5919 = vunpack.c.h.b16 %v5813
        %v5920 = vunpack.c.l.b16 %v5814
        %v5921 = vunpack.c.h.b16 %v5814
        %v5922 = vunpack.c.l.b16 %v5815
        %v5923 = vunpack.c.h.b16 %v5815
        %v5924 = vunpack.c.l.b16 %v5816
        %v5925 = vunpack.c.h.b16 %v5816
        %v5926 = vunpack.c.l.b16 %v5817
        %v5927 = vunpack.c.h.b16 %v5817
        %v5928 = vunpack.c.l.b16 %v5818
        %v5929 = vunpack.c.h.b16 %v5818
        %v5930 = vunpack.c.l.b16 %v5819
        %v5931 = vunpack.c.h.b16 %v5819
        %v5932 = vunpack.c.l.b16 %v5820
        %v5933 = vunpack.c.h.b16 %v5820
        %v5934 = vunpack.c.l.b16 %v5821
        %v5935 = vunpack.c.h.b16 %v5821
        %v5936 = vunpack.c.l.b16 %v5822
        %v5937 = vunpack.c.h.b16 %v5822
        %v5938 = vunpack.c.l.b16 %v5823
        %v5939 = vunpack.c.h.b16 %v5823
        %v5940 = vunpack.c.l.b16 %v5824
        %v5941 = vunpack.c.h.b16 %v5824
        %v5942 = vunpack.c.l.b16 %v5825
        %v5943 = vunpack.c.h.b16 %v5825
        %v5944 = vunpack.c.l.b16 %v5826
        %v5945 = vunpack.c.h.b16 %v5826
        %v5946 = vunpack.c.l.b16 %v5827
        %v5947 = vunpack.c.h.b16 %v5827
        %v5948 = vunpack.c.l.b16 %v5828
        %v5949 = vunpack.c.h.b16 %v5828
        %v5950 = vunpack.c.l.b16 %v5829
        %v5951 = vunpack.c.h.b16 %v5829
        %v5952 = vunpack.c.l.b16 %v5830
        %v5953 = vunpack.c.h.b16 %v5830
        %v5954 = vunpack.c.l.b16 %v5831
        %v5955 = vunpack.c.h.b16 %v5831
        %v5956 = vunpack.c.l.b16 %v5832
        %v5957 = vunpack.c.h.b16 %v5832
        %v5958 = vunpack.c.l.b16 %v5833
        %v5959 = vunpack.c.h.b16 %v5833
        %v5960 = vunpack.c.l.b16 %v5834
        %v5961 = vunpack.c.h.b16 %v5834
        %v5962 = vunpack.c.l.b16 %v5835
        %v5963 = vunpack.c.h.b16 %v5835
        %v5964 = vunpack.c.l.b16 %v5836
        %v5965 = vunpack.c.h.b16 %v5836
        %v5966 = vunpack.c.l.b16 %v5837
        %v5967 = vunpack.c.h.b16 %v5837
        %v5968 = vunpack.c.l.b16 %v5838
        %v5969 = vunpack.c.h.b16 %v5838
        %v5970 = vunpack.c.l.b16 %v5839
        %v5971 = vunpack.c.h.b16 %v5839
        %v5972 = vunpack.c.l.b16 %v5840
        %v5973 = vunpack.c.h.b16 %v5840
        %v5974 = vunpack.c.l.b16 %v5841
        %v5975 = vunpack.c.h.b16 %v5841
        %v5976 = vunpack.c.l.b16 %v5842
        %v5977 = vunpack.c.h.b16 %v5842
        %v5978 = vunpack.c.l.b16 %v5843
        %v5979 = vunpack.c.h.b16 %v5843
        %v5980 = vunpack.c.l.b16 %v5844
        %v5981 = vunpack.c.h.b16 %v5844
        %v5982 = vunpack.c.l.b16 %v5845
        %v5983 = vunpack.c.h.b16 %v5845
        %v5984 = vunpack.c.l.b16 %v5846
        %v5985 = vunpack.c.h.b16 %v5846
        %v5986 = vunpack.c.l.b16 %v5847
        %v5987 = vunpack.c.h.b16 %v5847
        %v5988 = vunpack.c.l.b16 %v5848
        %v5989 = vunpack.c.h.b16 %v5848
        %v5990 = vunpack.c.l.b16 %v5849
        %v5991 = vunpack.c.h.b16 %v5849
        %v5992 = vunpack.c.l.b16 %v5850
        %v5993 = vunpack.c.h.b16 %v5850
        %v5994 = vunpack.c.l.b16 %v5851
        %v5995 = vunpack.c.h.b16 %v5851
        %v5996 = vpack.c.b16 %v5902, %v5900
        %v5997 = vpack.c.b16 %v5903, %v5901
        %v5998 = vpack.c.b16 %v5906, %v5904
        %v5999 = vpack.c.b16 %v5907, %v5905
        %v6000 = vpack.c.b16 %v5910, %v5908
        %v6001 = vpack.c.b16 %v5911, %v5909
        %v6002 = vpack.c.b16 %v5914, %v5912
        %v6003 = vpack.c.b16 %v5915, %v5913
        %v6004 = vpack.c.b16 %v5918, %v5916
        %v6005 = vpack.c.b16 %v5919, %v5917
        %v6006 = vpack.c.b16 %v5922, %v5920
        %v6007 = vpack.c.b16 %v5923, %v5921
        %v6008 = vpack.c.b16 %v5926, %v5924
        %v6009 = vpack.c.b16 %v5927, %v5925
        %v6010 = vpack.c.b16 %v5930, %v5928
        %v6011 = vpack.c.b16 %v5931, %v5929
        %v6012 = vpack.c.b16 %v5934, %v5932
        %v6013 = vpack.c.b16 %v5935, %v5933
        %v6014 = vpack.c.b16 %v5938, %v5936
        %v6015 = vpack.c.b16 %v5939, %v5937
        %v6016 = vpack.c.b16 %v5942, %v5940
        %v6017 = vpack.c.b16 %v5943, %v5941
        %v6018 = vpack.c.b16 %v5946, %v5944
        %v6019 = vpack.c.b16 %v5947, %v5945
        %v6020 = vpack.c.b16 %v5950, %v5948
        %v6021 = vpack.c.b16 %v5951, %v5949
        %v6022 = vpack.c.b16 %v5954, %v5952
        %v6023 = vpack.c.b16 %v5955, %v5953
        %v6024 = vpack.c.b16 %v5958, %v5956
        %v6025 = vpack.c.b16 %v5959, %v5957
        %v6026 = vpack.c.b16 %v5962, %v5960
        %v6027 = vpack.c.b16 %v5963, %v5961
        %v6028 = vpack.c.b16 %v5966, %v5964
        %v6029 = vpack.c.b16 %v5967, %v5965
        %v6030 = vpack.c.b16 %v5970, %v5968
        %v6031 = vpack.c.b16 %v5971, %v5969
        %v6032 = vpack.c.b16 %v5974, %v5972
        %v6033 = vpack.c.b16 %v5975, %v5973
        %v6034 = vpack.c.b16 %v5978, %v5976
        %v6035 = vpack.c.b16 %v5979, %v5977
        %v6036 = vpack.c.b16 %v5982, %v5980
        %v6037 = vpack.c.b16 %v5983, %v5981
        %v6038 = vpack.c.b16 %v5986, %v5984
        %v6039 = vpack.c.b16 %v5987, %v5985
        %v6040 = vpack.c.b16 %v5990, %v5988
        %v6041 = vpack.c.b16 %v5991, %v5989
        %v6042 = vpack.c.b16 %v5994, %v5992
        %v6043 = vpack.c.b16 %v5995, %v5993
        %6092 = vmatpush.bf16.msra.mxu0 %v6010
        %6093 = vmatpush.bf16.msra.mxu0 %v6008
        %6094 = vmatpush.bf16.msra.mxu0 %v6006
        %6095 = vmatpush.bf16.msra.mxu0 %v6004
        %6096 = vmatpush.bf16.msra.mxu0 %v6002
        %6097 = vmatpush.bf16.msra.mxu0 %v6000
        %6098 = vmatpush.bf16.msra.mxu0 %v5998
        %6099 = vmatpush.bf16.msra.mxu0 %v5996
        %6100 = vmatmul.bf16.gmra.mxu0 %v4869
        %v6101 = vpop.f32.mrf.mxu0
        %v6102 = vadd.f32 0.0, %v6101
        %v6103 = vpop.f32.mrf.mxu0
        %v6104 = vadd.f32 0.0, %v6103
        %6105 = vmatmul.bf16.gmra.mxu0 %v4872
        %v6106 = vpop.f32.mrf.mxu0
        %v6107 = vadd.f32 0.0, %v6106
        %v6108 = vpop.f32.mrf.mxu0
        %v6109 = vadd.f32 0.0, %v6108
        %6110 = vdwg.mxu0
        %6111 = vmatpush.bf16.msra.mxu0 %v6026
        %6112 = vmatpush.bf16.msra.mxu0 %v6024
        %6113 = vmatpush.bf16.msra.mxu0 %v6022
        %6114 = vmatpush.bf16.msra.mxu0 %v6020
        %6115 = vmatpush.bf16.msra.mxu0 %v6018
        %6116 = vmatpush.bf16.msra.mxu0 %v6016
        %6117 = vmatpush.bf16.msra.mxu0 %v6014
        %6118 = vmatpush.bf16.msra.mxu0 %v6012
        %6119 = vmatmul.bf16.gmra.mxu0 %v4870
        %v6120 = vpop.f32.mrf.mxu0
        %v6121 = vadd.f32 %v6102, %v6120
        %v6122 = vpop.f32.mrf.mxu0
        %v6123 = vadd.f32 %v6104, %v6122
        %6124 = vmatmul.bf16.gmra.mxu0 %v4873
        %v6125 = vpop.f32.mrf.mxu0
        %v6126 = vadd.f32 %v6107, %v6125
        %v6127 = vpop.f32.mrf.mxu0
        %v6128 = vadd.f32 %v6109, %v6127
        %6129 = vdwg.mxu0
        %6130 = vmatpush.bf16.msra.mxu0 %v6042
        %6131 = vmatpush.bf16.msra.mxu0 %v6040
        %6132 = vmatpush.bf16.msra.mxu0 %v6038
        %6133 = vmatpush.bf16.msra.mxu0 %v6036
        %6134 = vmatpush.bf16.msra.mxu0 %v6034
        %6135 = vmatpush.bf16.msra.mxu0 %v6032
        %6136 = vmatpush.bf16.msra.mxu0 %v6030
        %6137 = vmatpush.bf16.msra.mxu0 %v6028
        %6138 = vmatmul.bf16.gmra.mxu0 %v4871
        %v6139 = vpop.f32.mrf.mxu0
        %v6140 = vadd.f32 %v6121, %v6139
        %v6141 = vpop.f32.mrf.mxu0
        %v6142 = vadd.f32 %v6123, %v6141
        %6143 = vmatmul.bf16.gmra.mxu0 %v4874
        %v6144 = vpop.f32.mrf.mxu0
        %v6145 = vadd.f32 %v6126, %v6144
        %v6146 = vpop.f32.mrf.mxu0
        %v6147 = vadd.f32 %v6128, %v6146
        %6148 = vdwg.mxu0
        %6149 = vmatpush.bf16.msra.mxu0 %v6011
        %6150 = vmatpush.bf16.msra.mxu0 %v6009
        %6151 = vmatpush.bf16.msra.mxu0 %v6007
        %6152 = vmatpush.bf16.msra.mxu0 %v6005
        %6153 = vmatpush.bf16.msra.mxu0 %v6003
        %6154 = vmatpush.bf16.msra.mxu0 %v6001
        %6155 = vmatpush.bf16.msra.mxu0 %v5999
        %6156 = vmatpush.bf16.msra.mxu0 %v5997
        %6157 = vmatmul.bf16.gmra.mxu0 %v4869
        %v6158 = vpop.f32.mrf.mxu0
        %v6159 = vadd.f32 0.0, %v6158
        %v6160 = vpop.f32.mrf.mxu0
        %v6161 = vadd.f32 0.0, %v6160
        %6162 = vmatmul.bf16.gmra.mxu0 %v4872
        %v6163 = vpop.f32.mrf.mxu0
        %v6164 = vadd.f32 0.0, %v6163
        %v6165 = vpop.f32.mrf.mxu0
        %v6166 = vadd.f32 0.0, %v6165
        %6167 = vdwg.mxu0
        %6168 = vmatpush.bf16.msra.mxu0 %v6027
        %6169 = vmatpush.bf16.msra.mxu0 %v6025
        %6170 = vmatpush.bf16.msra.mxu0 %v6023
        %6171 = vmatpush.bf16.msra.mxu0 %v6021
        %6172 = vmatpush.bf16.msra.mxu0 %v6019
        %6173 = vmatpush.bf16.msra.mxu0 %v6017
        %6174 = vmatpush.bf16.msra.mxu0 %v6015
        %6175 = vmatpush.bf16.msra.mxu0 %v6013
        %6176 = vmatmul.bf16.gmra.mxu0 %v4870
        %v6177 = vpop.f32.mrf.mxu0
        %v6178 = vadd.f32 %v6159, %v6177
        %v6179 = vpop.f32.mrf.mxu0
        %v6180 = vadd.f32 %v6161, %v6179
        %6181 = vmatmul.bf16.gmra.mxu0 %v4873
        %v6182 = vpop.f32.mrf.mxu0
        %v6183 = vadd.f32 %v6164, %v6182
        %v6184 = vpop.f32.mrf.mxu0
        %v6185 = vadd.f32 %v6166, %v6184
        %6186 = vdwg.mxu0
        %6187 = vmatpush.bf16.msra.mxu0 %v6043
        %6188 = vmatpush.bf16.msra.mxu0 %v6041
        %6189 = vmatpush.bf16.msra.mxu0 %v6039
        %6190 = vmatpush.bf16.msra.mxu0 %v6037
        %6191 = vmatpush.bf16.msra.mxu0 %v6035
        %6192 = vmatpush.bf16.msra.mxu0 %v6033
        %6193 = vmatpush.bf16.msra.mxu0 %v6031
        %6194 = vmatpush.bf16.msra.mxu0 %v6029
        %6195 = vmatmul.bf16.gmra.mxu0 %v4871
        %v6196 = vpop.f32.mrf.mxu0
        %v6197 = vadd.f32 %v6178, %v6196
        %v6198 = vpop.f32.mrf.mxu0
        %v6199 = vadd.f32 %v6180, %v6198
        %6200 = vmatmul.bf16.gmra.mxu0 %v4874
        %v6201 = vpop.f32.mrf.mxu0
        %v6202 = vadd.f32 %v6183, %v6201
        %v6203 = vpop.f32.mrf.mxu0
        %v6204 = vadd.f32 %v6185, %v6203
        %6205 = vdwg.mxu0
        %v6206 = vld [vmem:[#allocation7] sm:$0x3]
        %v6207 = vrot.slane %v6140, 7
        %v6208 = vrot.slane %v6197, 7
        %v6209 = vrot.slane %v6142, 7
        %v6210 = vrot.slane %v6199, 7
        %v6211 = vrot.slane %v6145, 7
        %v6212 = vrot.slane %v6202, 7
        %v6213 = vrot.slane %v6147, 7
        %v6214 = vrot.slane %v6204, 7
        %v6215 = vsel %vm3130, %v6211, %v6213
        %v6216 = vsel %vm3130, %v6212, %v6214
        %v6217 = vsel %vm3130, %v6209, %v6211
        %v6218 = vsel %vm3130, %v6210, %v6212
        %v6219 = vsel %vm3130, %v6207, %v6209
        %v6220 = vsel %vm3130, %v6208, %v6210
        %v6221 = vsel %vm3130, %v6213, %v6207
        %v6222 = vsel %vm3130, %v6214, %v6208
        %v6223 = vmul.f32 %v6221, %v4933
        %v6224 = vmul.f32 %v6222, %v4933
        %v6225 = vmul.f32 %v6219, %v4934
        %v6226 = vmul.f32 %v6220, %v4934
        %v6227 = vmul.f32 %v6217, %v4935
        %v6228 = vmul.f32 %v6218, %v4935
        %v6229 = vmul.f32 %v6215, %v4936
        %v6230 = vmul.f32 %v6216, %v4936
        %v6231 = vadd.f32 %v6223, %v5688
        %v6232 = vadd.f32 %v6224, %v5745
        %v6233 = vadd.f32 %v6225, %v5690
        %v6234 = vadd.f32 %v6226, %v5747
        %v6235 = vadd.f32 %v6227, %v5693
        %v6236 = vadd.f32 %v6228, %v5750
        %v6237 = vadd.f32 %v6229, %v5695
        %v6238 = vadd.f32 %v6230, %v5752
        %v6240 = vperm.slane %v6206, 0
        %v6241 = vperm.slane %v6206, 1
        %v6244 = vadd.f32 %v6231, %v6240
        %v6245 = vadd.f32 %v6232, %v6241
        %v6246 = vadd.f32 %v6233, %v6240
        %v6247 = vadd.f32 %v6234, %v6241
        %v6248 = vadd.f32 %v6235, %v6240
        %v6249 = vadd.f32 %v6236, %v6241
        %v6250 = vadd.f32 %v6237, %v6240
        %v6251 = vadd.f32 %v6238, %v6241
        %v6252 = vrot.slane %v5285, 1
        %v6253 = vrot.slane %v5342, 1
        %v6254 = vrot.slane %v5287, 1
        %v6255 = vrot.slane %v5344, 1
        %v6256 = vrot.slane %v5290, 1
        %v6257 = vrot.slane %v5347, 1
        %v6258 = vrot.slane %v5292, 1
        %v6259 = vrot.slane %v5349, 1
        %v6260 = vsel %vm3168, %v6256, %v6258
        %v6261 = vsel %vm3168, %v6257, %v6259
        %v6262 = vsel %vm3168, %v6254, %v6256
        %v6263 = vsel %vm3168, %v6255, %v6257
        %v6264 = vsel %vm3168, %v6252, %v6254
        %v6265 = vsel %vm3168, %v6253, %v6255
        %v6266 = vsel %vm3168, %v6258, %v6252
        %v6267 = vsel %vm3168, %v6259, %v6253
        %v6268 = vmul.f32 %v6264, %v4945
        %v6269 = vmul.f32 %v6265, %v4945
        %v6270 = vmul.f32 %v6262, %v4946
        %v6271 = vmul.f32 %v6263, %v4946
        %v6272 = vmul.f32 %v6260, %v4947
        %v6273 = vmul.f32 %v6261, %v4947
        %v6274 = vmul.f32 %v6266, %v4948
        %v6275 = vmul.f32 %v6267, %v4948
        %v6324 = vunpack.c.l.b16 %v5755
        %v6325 = vunpack.c.h.b16 %v5755
        %v6326 = vunpack.c.l.b16 %v5756
        %v6327 = vunpack.c.h.b16 %v5756
        %v6328 = vunpack.c.l.b16 %v5757
        %v6329 = vunpack.c.h.b16 %v5757
        %v6330 = vunpack.c.l.b16 %v5758
        %v6331 = vunpack.c.h.b16 %v5758
        %v6332 = vunpack.c.l.b16 %v5759
        %v6333 = vunpack.c.h.b16 %v5759
        %v6334 = vunpack.c.l.b16 %v5760
        %v6335 = vunpack.c.h.b16 %v5760
        %v6336 = vunpack.c.l.b16 %v5761
        %v6337 = vunpack.c.h.b16 %v5761
        %v6338 = vunpack.c.l.b16 %v5762
        %v6339 = vunpack.c.h.b16 %v5762
        %v6340 = vunpack.c.l.b16 %v5763
        %v6341 = vunpack.c.h.b16 %v5763
        %v6342 = vunpack.c.l.b16 %v5764
        %v6343 = vunpack.c.h.b16 %v5764
        %v6344 = vunpack.c.l.b16 %v5765
        %v6345 = vunpack.c.h.b16 %v5765
        %v6346 = vunpack.c.l.b16 %v5766
        %v6347 = vunpack.c.h.b16 %v5766
        %v6348 = vunpack.c.l.b16 %v5767
        %v6349 = vunpack.c.h.b16 %v5767
        %v6350 = vunpack.c.l.b16 %v5768
        %v6351 = vunpack.c.h.b16 %v5768
        %v6352 = vunpack.c.l.b16 %v5769
        %v6353 = vunpack.c.h.b16 %v5769
        %v6354 = vunpack.c.l.b16 %v5770
        %v6355 = vunpack.c.h.b16 %v5770
        %v6356 = vunpack.c.l.b16 %v5771
        %v6357 = vunpack.c.h.b16 %v5771
        %v6358 = vunpack.c.l.b16 %v5772
        %v6359 = vunpack.c.h.b16 %v5772
        %v6360 = vunpack.c.l.b16 %v5773
        %v6361 = vunpack.c.h.b16 %v5773
        %v6362 = vunpack.c.l.b16 %v5774
        %v6363 = vunpack.c.h.b16 %v5774
        %v6364 = vunpack.c.l.b16 %v5775
        %v6365 = vunpack.c.h.b16 %v5775
        %v6366 = vunpack.c.l.b16 %v5776
        %v6367 = vunpack.c.h.b16 %v5776
        %v6368 = vunpack.c.l.b16 %v5777
        %v6369 = vunpack.c.h.b16 %v5777
        %v6370 = vunpack.c.l.b16 %v5778
        %v6371 = vunpack.c.h.b16 %v5778
        %v6372 = vunpack.c.l.b16 %v5779
        %v6373 = vunpack.c.h.b16 %v5779
        %v6374 = vunpack.c.l.b16 %v5780
        %v6375 = vunpack.c.h.b16 %v5780
        %v6376 = vunpack.c.l.b16 %v5781
        %v6377 = vunpack.c.h.b16 %v5781
        %v6378 = vunpack.c.l.b16 %v5782
        %v6379 = vunpack.c.h.b16 %v5782
        %v6380 = vunpack.c.l.b16 %v5783
        %v6381 = vunpack.c.h.b16 %v5783
        %v6382 = vunpack.c.l.b16 %v5784
        %v6383 = vunpack.c.h.b16 %v5784
        %v6384 = vunpack.c.l.b16 %v5785
        %v6385 = vunpack.c.h.b16 %v5785
        %v6386 = vunpack.c.l.b16 %v5786
        %v6387 = vunpack.c.h.b16 %v5786
        %v6388 = vunpack.c.l.b16 %v5787
        %v6389 = vunpack.c.h.b16 %v5787
        %v6390 = vunpack.c.l.b16 %v5788
        %v6391 = vunpack.c.h.b16 %v5788
        %v6392 = vunpack.c.l.b16 %v5789
        %v6393 = vunpack.c.h.b16 %v5789
        %v6394 = vunpack.c.l.b16 %v5790
        %v6395 = vunpack.c.h.b16 %v5790
        %v6396 = vunpack.c.l.b16 %v5791
        %v6397 = vunpack.c.h.b16 %v5791
        %v6398 = vunpack.c.l.b16 %v5792
        %v6399 = vunpack.c.h.b16 %v5792
        %v6400 = vunpack.c.l.b16 %v5793
        %v6401 = vunpack.c.h.b16 %v5793
        %v6402 = vunpack.c.l.b16 %v5794
        %v6403 = vunpack.c.h.b16 %v5794
        %v6404 = vunpack.c.l.b16 %v5795
        %v6405 = vunpack.c.h.b16 %v5795
        %v6406 = vunpack.c.l.b16 %v5796
        %v6407 = vunpack.c.h.b16 %v5796
        %v6408 = vunpack.c.l.b16 %v5797
        %v6409 = vunpack.c.h.b16 %v5797
        %v6410 = vunpack.c.l.b16 %v5798
        %v6411 = vunpack.c.h.b16 %v5798
        %v6412 = vunpack.c.l.b16 %v5799
        %v6413 = vunpack.c.h.b16 %v5799
        %v6414 = vunpack.c.l.b16 %v5800
        %v6415 = vunpack.c.h.b16 %v5800
        %v6416 = vunpack.c.l.b16 %v5801
        %v6417 = vunpack.c.h.b16 %v5801
        %v6418 = vunpack.c.l.b16 %v5802
        %v6419 = vunpack.c.h.b16 %v5802
        %v6420 = vpack.c.b16 %v6326, %v6324
        %v6421 = vpack.c.b16 %v6327, %v6325
        %v6422 = vpack.c.b16 %v6330, %v6328
        %v6423 = vpack.c.b16 %v6331, %v6329
        %v6424 = vpack.c.b16 %v6334, %v6332
        %v6425 = vpack.c.b16 %v6335, %v6333
        %v6426 = vpack.c.b16 %v6338, %v6336
        %v6427 = vpack.c.b16 %v6339, %v6337
        %v6428 = vpack.c.b16 %v6342, %v6340
        %v6429 = vpack.c.b16 %v6343, %v6341
        %v6430 = vpack.c.b16 %v6346, %v6344
        %v6431 = vpack.c.b16 %v6347, %v6345
        %v6432 = vpack.c.b16 %v6350, %v6348
        %v6433 = vpack.c.b16 %v6351, %v6349
        %v6434 = vpack.c.b16 %v6354, %v6352
        %v6435 = vpack.c.b16 %v6355, %v6353
        %v6436 = vpack.c.b16 %v6358, %v6356
        %v6437 = vpack.c.b16 %v6359, %v6357
        %v6438 = vpack.c.b16 %v6362, %v6360
        %v6439 = vpack.c.b16 %v6363, %v6361
        %v6440 = vpack.c.b16 %v6366, %v6364
        %v6441 = vpack.c.b16 %v6367, %v6365
        %v6442 = vpack.c.b16 %v6370, %v6368
        %v6443 = vpack.c.b16 %v6371, %v6369
        %v6444 = vpack.c.b16 %v6374, %v6372
        %v6445 = vpack.c.b16 %v6375, %v6373
        %v6446 = vpack.c.b16 %v6378, %v6376
        %v6447 = vpack.c.b16 %v6379, %v6377
        %v6448 = vpack.c.b16 %v6382, %v6380
        %v6449 = vpack.c.b16 %v6383, %v6381
        %v6450 = vpack.c.b16 %v6386, %v6384
        %v6451 = vpack.c.b16 %v6387, %v6385
        %v6452 = vpack.c.b16 %v6390, %v6388
        %v6453 = vpack.c.b16 %v6391, %v6389
        %v6454 = vpack.c.b16 %v6394, %v6392
        %v6455 = vpack.c.b16 %v6395, %v6393
        %v6456 = vpack.c.b16 %v6398, %v6396
        %v6457 = vpack.c.b16 %v6399, %v6397
        %v6458 = vpack.c.b16 %v6402, %v6400
        %v6459 = vpack.c.b16 %v6403, %v6401
        %v6460 = vpack.c.b16 %v6406, %v6404
        %v6461 = vpack.c.b16 %v6407, %v6405
        %v6462 = vpack.c.b16 %v6410, %v6408
        %v6463 = vpack.c.b16 %v6411, %v6409
        %v6464 = vpack.c.b16 %v6414, %v6412
        %v6465 = vpack.c.b16 %v6415, %v6413
        %v6466 = vpack.c.b16 %v6418, %v6416
        %v6467 = vpack.c.b16 %v6419, %v6417
        %6516 = vmatpush.bf16.msra.mxu0 %v6434
        %6517 = vmatpush.bf16.msra.mxu0 %v6432
        %6518 = vmatpush.bf16.msra.mxu0 %v6430
        %6519 = vmatpush.bf16.msra.mxu0 %v6428
        %6520 = vmatpush.bf16.msra.mxu0 %v6426
        %6521 = vmatpush.bf16.msra.mxu0 %v6424
        %6522 = vmatpush.bf16.msra.mxu0 %v6422
        %6523 = vmatpush.bf16.msra.mxu0 %v6420
        %6524 = vmatmul.bf16.gmra.mxu0 %v4869
        %v6525 = vpop.f32.mrf.mxu0
        %v6526 = vadd.f32 %v6268, %v6525
        %v6527 = vpop.f32.mrf.mxu0
        %v6528 = vadd.f32 %v6270, %v6527
        %6529 = vmatmul.bf16.gmra.mxu0 %v4872
        %v6530 = vpop.f32.mrf.mxu0
        %v6531 = vadd.f32 %v6272, %v6530
        %v6532 = vpop.f32.mrf.mxu0
        %v6533 = vadd.f32 %v6274, %v6532
        %6534 = vdwg.mxu0
        %6535 = vmatpush.bf16.msra.mxu0 %v6450
        %6536 = vmatpush.bf16.msra.mxu0 %v6448
        %6537 = vmatpush.bf16.msra.mxu0 %v6446
        %6538 = vmatpush.bf16.msra.mxu0 %v6444
        %6539 = vmatpush.bf16.msra.mxu0 %v6442
        %6540 = vmatpush.bf16.msra.mxu0 %v6440
        %6541 = vmatpush.bf16.msra.mxu0 %v6438
        %6542 = vmatpush.bf16.msra.mxu0 %v6436
        %6543 = vmatmul.bf16.gmra.mxu0 %v4870
        %v6544 = vpop.f32.mrf.mxu0
        %v6545 = vadd.f32 %v6526, %v6544
        %v6546 = vpop.f32.mrf.mxu0
        %v6547 = vadd.f32 %v6528, %v6546
        %6548 = vmatmul.bf16.gmra.mxu0 %v4873
        %v6549 = vpop.f32.mrf.mxu0
        %v6550 = vadd.f32 %v6531, %v6549
        %v6551 = vpop.f32.mrf.mxu0
        %v6552 = vadd.f32 %v6533, %v6551
        %6553 = vdwg.mxu0
        %6554 = vmatpush.bf16.msra.mxu0 %v6466
        %6555 = vmatpush.bf16.msra.mxu0 %v6464
        %6556 = vmatpush.bf16.msra.mxu0 %v6462
        %6557 = vmatpush.bf16.msra.mxu0 %v6460
        %6558 = vmatpush.bf16.msra.mxu0 %v6458
        %6559 = vmatpush.bf16.msra.mxu0 %v6456
        %6560 = vmatpush.bf16.msra.mxu0 %v6454
        %6561 = vmatpush.bf16.msra.mxu0 %v6452
        %6562 = vmatmul.bf16.gmra.mxu0 %v4871
        %v6563 = vpop.f32.mrf.mxu0
        %v6564 = vadd.f32 %v6545, %v6563
        %v6565 = vpop.f32.mrf.mxu0
        %v6566 = vadd.f32 %v6547, %v6565
        %6567 = vmatmul.bf16.gmra.mxu0 %v4874
        %v6568 = vpop.f32.mrf.mxu0
        %v6569 = vadd.f32 %v6550, %v6568
        %v6570 = vpop.f32.mrf.mxu0
        %v6571 = vadd.f32 %v6552, %v6570
        %6572 = vdwg.mxu0
        %6573 = vmatpush.bf16.msra.mxu0 %v6435
        %6574 = vmatpush.bf16.msra.mxu0 %v6433
        %6575 = vmatpush.bf16.msra.mxu0 %v6431
        %6576 = vmatpush.bf16.msra.mxu0 %v6429
        %6577 = vmatpush.bf16.msra.mxu0 %v6427
        %6578 = vmatpush.bf16.msra.mxu0 %v6425
        %6579 = vmatpush.bf16.msra.mxu0 %v6423
        %6580 = vmatpush.bf16.msra.mxu0 %v6421
        %6581 = vmatmul.bf16.gmra.mxu0 %v4869
        %v6582 = vpop.f32.mrf.mxu0
        %v6583 = vadd.f32 %v6269, %v6582
        %v6584 = vpop.f32.mrf.mxu0
        %v6585 = vadd.f32 %v6271, %v6584
        %6586 = vmatmul.bf16.gmra.mxu0 %v4872
        %v6587 = vpop.f32.mrf.mxu0
        %v6588 = vadd.f32 %v6273, %v6587
        %v6589 = vpop.f32.mrf.mxu0
        %v6590 = vadd.f32 %v6275, %v6589
        %6591 = vdwg.mxu0
        %6592 = vmatpush.bf16.msra.mxu0 %v6451
        %6593 = vmatpush.bf16.msra.mxu0 %v6449
        %6594 = vmatpush.bf16.msra.mxu0 %v6447
        %6595 = vmatpush.bf16.msra.mxu0 %v6445
        %6596 = vmatpush.bf16.msra.mxu0 %v6443
        %6597 = vmatpush.bf16.msra.mxu0 %v6441
        %6598 = vmatpush.bf16.msra.mxu0 %v6439
        %6599 = vmatpush.bf16.msra.mxu0 %v6437
        %6600 = vmatmul.bf16.gmra.mxu0 %v4870
        %v6601 = vpop.f32.mrf.mxu0
        %v6602 = vadd.f32 %v6583, %v6601
        %v6603 = vpop.f32.mrf.mxu0
        %v6604 = vadd.f32 %v6585, %v6603
        %6605 = vmatmul.bf16.gmra.mxu0 %v4873
        %v6606 = vpop.f32.mrf.mxu0
        %v6607 = vadd.f32 %v6588, %v6606
        %v6608 = vpop.f32.mrf.mxu0
        %v6609 = vadd.f32 %v6590, %v6608
        %6610 = vdwg.mxu0
        %6611 = vmatpush.bf16.msra.mxu0 %v6467
        %6612 = vmatpush.bf16.msra.mxu0 %v6465
        %6613 = vmatpush.bf16.msra.mxu0 %v6463
        %6614 = vmatpush.bf16.msra.mxu0 %v6461
        %6615 = vmatpush.bf16.msra.mxu0 %v6459
        %6616 = vmatpush.bf16.msra.mxu0 %v6457
        %6617 = vmatpush.bf16.msra.mxu0 %v6455
        %6618 = vmatpush.bf16.msra.mxu0 %v6453
        %6619 = vmatmul.bf16.gmra.mxu0 %v4871
        %v6620 = vpop.f32.mrf.mxu0
        %v6621 = vadd.f32 %v6602, %v6620
        %v6622 = vpop.f32.mrf.mxu0
        %v6623 = vadd.f32 %v6604, %v6622
        %6624 = vmatmul.bf16.gmra.mxu0 %v4874
        %v6625 = vpop.f32.mrf.mxu0
        %v6626 = vadd.f32 %v6607, %v6625
        %v6627 = vpop.f32.mrf.mxu0
        %v6628 = vadd.f32 %v6609, %v6627
        %6629 = vdwg.mxu0
        %v6630 = vadd.f32 %v6564, %v6240
        %v6631 = vadd.f32 %v6621, %v6241
        %v6632 = vadd.f32 %v6566, %v6240
        %v6633 = vadd.f32 %v6623, %v6241
        %v6634 = vadd.f32 %v6569, %v6240
        %v6635 = vadd.f32 %v6626, %v6241
        %v6636 = vadd.f32 %v6571, %v6240
        %v6637 = vadd.f32 %v6628, %v6241
        %v6646 = vrot.slane %v6245, 7
        %v6647 = vrot.slane %v6247, 7
        %v6648 = vrot.slane %v6249, 7
        %v6649 = vrot.slane %v6251, 7
        %v6650 = vsel %vm3877, %v6244, %v6646
        %v6651 = vsel %vm3881, %v6244, %v6646
        %v6652 = vrot.slane %v6651, 1
        %v6653 = vsel %vm3886, %v6244, %v6646
        %v6654 = vrot.slane %v6653, 2
        %v6655 = vsel %vm3891, %v6244, %v6646
        %v6656 = vrot.slane %v6655, 3
        %v6657 = vsel %vm3896, %v6244, %v6646
        %v6658 = vrot.slane %v6657, 4
        %v6659 = vsel %vm3901, %v6244, %v6646
        %v6660 = vrot.slane %v6659, 5
        %v6661 = vsel %vm3906, %v6244, %v6646
        %v6662 = vrot.slane %v6661, 6
        %v6663 = vsel %vm3911, %v6646, %v6244
        %v6664 = vrot.slane %v6663, 7
        %v6665 = vsel %vm3877, %v6246, %v6647
        %v6666 = vsel %vm3881, %v6246, %v6647
        %v6667 = vrot.slane %v6666, 1
        %v6668 = vsel %vm3886, %v6246, %v6647
        %v6669 = vrot.slane %v6668, 2
        %v6670 = vsel %vm3891, %v6246, %v6647
        %v6671 = vrot.slane %v6670, 3
        %v6672 = vsel %vm3896, %v6246, %v6647
        %v6673 = vrot.slane %v6672, 4
        %v6674 = vsel %vm3901, %v6246, %v6647
        %v6675 = vrot.slane %v6674, 5
        %v6676 = vsel %vm3906, %v6246, %v6647
        %v6677 = vrot.slane %v6676, 6
        %v6678 = vsel %vm3911, %v6647, %v6246
        %v6679 = vrot.slane %v6678, 7
        %v6680 = vsel %vm3877, %v6248, %v6648
        %v6681 = vsel %vm3881, %v6248, %v6648
        %v6682 = vrot.slane %v6681, 1
        %v6683 = vsel %vm3886, %v6248, %v6648
        %v6684 = vrot.slane %v6683, 2
        %v6685 = vsel %vm3891, %v6248, %v6648
        %v6686 = vrot.slane %v6685, 3
        %v6687 = vsel %vm3896, %v6248, %v6648
        %v6688 = vrot.slane %v6687, 4
        %v6689 = vsel %vm3901, %v6248, %v6648
        %v6690 = vrot.slane %v6689, 5
        %v6691 = vsel %vm3906, %v6248, %v6648
        %v6692 = vrot.slane %v6691, 6
        %v6693 = vsel %vm3911, %v6648, %v6248
        %v6694 = vrot.slane %v6693, 7
        %v6695 = vsel %vm3877, %v6250, %v6649
        %v6696 = vsel %vm3881, %v6250, %v6649
        %v6697 = vrot.slane %v6696, 1
        %v6698 = vsel %vm3886, %v6250, %v6649
        %v6699 = vrot.slane %v6698, 2
        %v6700 = vsel %vm3891, %v6250, %v6649
        %v6701 = vrot.slane %v6700, 3
        %v6702 = vsel %vm3896, %v6250, %v6649
        %v6703 = vrot.slane %v6702, 4
        %v6704 = vsel %vm3901, %v6250, %v6649
        %v6705 = vrot.slane %v6704, 5
        %v6706 = vsel %vm3906, %v6250, %v6649
        %v6707 = vrot.slane %v6706, 6
        %v6708 = vsel %vm3911, %v6649, %v6250
        %v6709 = vrot.slane %v6708, 7
        %v6718 = vrot.slane %v6631, 7
        %v6719 = vrot.slane %v6633, 7
        %v6720 = vrot.slane %v6635, 7
        %v6721 = vrot.slane %v6637, 7
        %v6722 = vsel %vm3877, %v6630, %v6718
        %v6723 = vsel %vm3881, %v6630, %v6718
        %v6724 = vrot.slane %v6723, 1
        %v6725 = vsel %vm3886, %v6630, %v6718
        %v6726 = vrot.slane %v6725, 2
        %v6727 = vsel %vm3891, %v6630, %v6718
        %v6728 = vrot.slane %v6727, 3
        %v6729 = vsel %vm3896, %v6630, %v6718
        %v6730 = vrot.slane %v6729, 4
        %v6731 = vsel %vm3901, %v6630, %v6718
        %v6732 = vrot.slane %v6731, 5
        %v6733 = vsel %vm3906, %v6630, %v6718
        %v6734 = vrot.slane %v6733, 6
        %v6735 = vsel %vm3911, %v6718, %v6630
        %v6736 = vrot.slane %v6735, 7
        %v6737 = vsel %vm3877, %v6632, %v6719
        %v6738 = vsel %vm3881, %v6632, %v6719
        %v6739 = vrot.slane %v6738, 1
        %v6740 = vsel %vm3886, %v6632, %v6719
        %v6741 = vrot.slane %v6740, 2
        %v6742 = vsel %vm3891, %v6632, %v6719
        %v6743 = vrot.slane %v6742, 3
        %v6744 = vsel %vm3896, %v6632, %v6719
        %v6745 = vrot.slane %v6744, 4
        %v6746 = vsel %vm3901, %v6632, %v6719
        %v6747 = vrot.slane %v6746, 5
        %v6748 = vsel %vm3906, %v6632, %v6719
        %v6749 = vrot.slane %v6748, 6
        %v6750 = vsel %vm3911, %v6719, %v6632
        %v6751 = vrot.slane %v6750, 7
        %v6752 = vsel %vm3877, %v6634, %v6720
        %v6753 = vsel %vm3881, %v6634, %v6720
        %v6754 = vrot.slane %v6753, 1
        %v6755 = vsel %vm3886, %v6634, %v6720
        %v6756 = vrot.slane %v6755, 2
        %v6757 = vsel %vm3891, %v6634, %v6720
        %v6758 = vrot.slane %v6757, 3
        %v6759 = vsel %vm3896, %v6634, %v6720
        %v6760 = vrot.slane %v6759, 4
        %v6761 = vsel %vm3901, %v6634, %v6720
        %v6762 = vrot.slane %v6761, 5
        %v6763 = vsel %vm3906, %v6634, %v6720
        %v6764 = vrot.slane %v6763, 6
        %v6765 = vsel %vm3911, %v6720, %v6634
        %v6766 = vrot.slane %v6765, 7
        %v6767 = vsel %vm3877, %v6636, %v6721
        %v6768 = vsel %vm3881, %v6636, %v6721
        %v6769 = vrot.slane %v6768, 1
        %v6770 = vsel %vm3886, %v6636, %v6721
        %v6771 = vrot.slane %v6770, 2
        %v6772 = vsel %vm3891, %v6636, %v6721
        %v6773 = vrot.slane %v6772, 3
        %v6774 = vsel %vm3896, %v6636, %v6721
        %v6775 = vrot.slane %v6774, 4
        %v6776 = vsel %vm3901, %v6636, %v6721
        %v6777 = vrot.slane %v6776, 5
        %v6778 = vsel %vm3906, %v6636, %v6721
        %v6779 = vrot.slane %v6778, 6
        %v6780 = vsel %vm3911, %v6721, %v6636
        %v6781 = vrot.slane %v6780, 7
        %v6782 = vperm.slane %v6650, 0
        %v6783 = vperm.slane %v6650, 1
        %v6784 = vperm.slane %v6652, 0
        %v6785 = vperm.slane %v6652, 1
        %v6786 = vperm.slane %v6654, 0
        %v6787 = vperm.slane %v6654, 1
        %v6788 = vperm.slane %v6656, 0
        %v6789 = vperm.slane %v6656, 1
        %v6790 = vperm.slane %v6658, 0
        %v6791 = vperm.slane %v6658, 1
        %v6792 = vperm.slane %v6660, 0
        %v6793 = vperm.slane %v6660, 1
        %v6794 = vperm.slane %v6662, 0
        %v6795 = vperm.slane %v6662, 1
        %v6796 = vperm.slane %v6664, 0
        %v6797 = vperm.slane %v6664, 1
        %v6798 = vperm.slane %v6665, 0
        %v6799 = vperm.slane %v6665, 1
        %v6800 = vperm.slane %v6667, 0
        %v6801 = vperm.slane %v6667, 1
        %v6802 = vperm.slane %v6669, 0
        %v6803 = vperm.slane %v6669, 1
        %v6804 = vperm.slane %v6671, 0
        %v6805 = vperm.slane %v6671, 1
        %v6806 = vperm.slane %v6673, 0
        %v6807 = vperm.slane %v6673, 1
        %v6808 = vperm.slane %v6675, 0
        %v6809 = vperm.slane %v6675, 1
        %v6810 = vperm.slane %v6677, 0
        %v6811 = vperm.slane %v6677, 1
        %v6812 = vperm.slane %v6679, 0
        %v6813 = vperm.slane %v6679, 1
        %v6814 = vperm.slane %v6680, 0
        %v6815 = vperm.slane %v6680, 1
        %v6816 = vperm.slane %v6682, 0
        %v6817 = vperm.slane %v6682, 1
        %v6818 = vperm.slane %v6684, 0
        %v6819 = vperm.slane %v6684, 1
        %v6820 = vperm.slane %v6686, 0
        %v6821 = vperm.slane %v6686, 1
        %v6822 = vperm.slane %v6688, 0
        %v6823 = vperm.slane %v6688, 1
        %v6824 = vperm.slane %v6690, 0
        %v6825 = vperm.slane %v6690, 1
        %v6826 = vperm.slane %v6692, 0
        %v6827 = vperm.slane %v6692, 1
        %v6828 = vperm.slane %v6694, 0
        %v6829 = vperm.slane %v6694, 1
        %v6830 = vperm.slane %v6695, 0
        %v6831 = vperm.slane %v6695, 1
        %v6832 = vperm.slane %v6697, 0
        %v6833 = vperm.slane %v6697, 1
        %v6834 = vperm.slane %v6699, 0
        %v6835 = vperm.slane %v6699, 1
        %v6836 = vperm.slane %v6701, 0
        %v6837 = vperm.slane %v6701, 1
        %v6838 = vperm.slane %v6703, 0
        %v6839 = vperm.slane %v6703, 1
        %v6840 = vperm.slane %v6705, 0
        %v6841 = vperm.slane %v6705, 1
        %v6842 = vperm.slane %v6707, 0
        %v6843 = vperm.slane %v6707, 1
        %v6844 = vperm.slane %v6709, 0
        %v6845 = vperm.slane %v6709, 1
        %v6910 = vperm.slane %v6722, 0
        %v6911 = vperm.slane %v6722, 1
        %v6912 = vperm.slane %v6724, 0
        %v6913 = vperm.slane %v6724, 1
        %v6914 = vperm.slane %v6726, 0
        %v6915 = vperm.slane %v6726, 1
        %v6916 = vperm.slane %v6728, 0
        %v6917 = vperm.slane %v6728, 1
        %v6918 = vperm.slane %v6730, 0
        %v6919 = vperm.slane %v6730, 1
        %v6920 = vperm.slane %v6732, 0
        %v6921 = vperm.slane %v6732, 1
        %v6922 = vperm.slane %v6734, 0
        %v6923 = vperm.slane %v6734, 1
        %v6924 = vperm.slane %v6736, 0
        %v6925 = vperm.slane %v6736, 1
        %v6926 = vperm.slane %v6737, 0
        %v6927 = vperm.slane %v6737, 1
        %v6928 = vperm.slane %v6739, 0
        %v6929 = vperm.slane %v6739, 1
        %v6930 = vperm.slane %v6741, 0
        %v6931 = vperm.slane %v6741, 1
        %v6932 = vperm.slane %v6743, 0
        %v6933 = vperm.slane %v6743, 1
        %v6934 = vperm.slane %v6745, 0
        %v6935 = vperm.slane %v6745, 1
        %v6936 = vperm.slane %v6747, 0
        %v6937 = vperm.slane %v6747, 1
        %v6938 = vperm.slane %v6749, 0
        %v6939 = vperm.slane %v6749, 1
        %v6940 = vperm.slane %v6751, 0
        %v6941 = vperm.slane %v6751, 1
        %v6942 = vperm.slane %v6752, 0
        %v6943 = vperm.slane %v6752, 1
        %v6944 = vperm.slane %v6754, 0
        %v6945 = vperm.slane %v6754, 1
        %v6946 = vperm.slane %v6756, 0
        %v6947 = vperm.slane %v6756, 1
        %v6948 = vperm.slane %v6758, 0
        %v6949 = vperm.slane %v6758, 1
        %v6950 = vperm.slane %v6760, 0
        %v6951 = vperm.slane %v6760, 1
        %v6952 = vperm.slane %v6762, 0
        %v6953 = vperm.slane %v6762, 1
        %v6954 = vperm.slane %v6764, 0
        %v6955 = vperm.slane %v6764, 1
        %v6956 = vperm.slane %v6766, 0
        %v6957 = vperm.slane %v6766, 1
        %v6958 = vperm.slane %v6767, 0
        %v6959 = vperm.slane %v6767, 1
        %v6960 = vperm.slane %v6769, 0
        %v6961 = vperm.slane %v6769, 1
        %v6962 = vperm.slane %v6771, 0
        %v6963 = vperm.slane %v6771, 1
        %v6964 = vperm.slane %v6773, 0
        %v6965 = vperm.slane %v6773, 1
        %v6966 = vperm.slane %v6775, 0
        %v6967 = vperm.slane %v6775, 1
        %v6968 = vperm.slane %v6777, 0
        %v6969 = vperm.slane %v6777, 1
        %v6970 = vperm.slane %v6779, 0
        %v6971 = vperm.slane %v6779, 1
        %v6972 = vperm.slane %v6781, 0
        %v6973 = vperm.slane %v6781, 1
        %v7038 = vsel %vm3877, %v6782, %v6910
        %v7039 = vsel %vm3877, %v6783, %v6911
        %v7040 = vsel %vm3877, %v6784, %v6912
        %v7041 = vsel %vm3877, %v6785, %v6913
        %v7042 = vsel %vm3877, %v6786, %v6914
        %v7043 = vsel %vm3877, %v6787, %v6915
        %v7044 = vsel %vm3877, %v6788, %v6916
        %v7045 = vsel %vm3877, %v6789, %v6917
        %v7046 = vsel %vm3877, %v6790, %v6918
        %v7047 = vsel %vm3877, %v6791, %v6919
        %v7048 = vsel %vm3877, %v6792, %v6920
        %v7049 = vsel %vm3877, %v6793, %v6921
        %v7050 = vsel %vm3877, %v6794, %v6922
        %v7051 = vsel %vm3877, %v6795, %v6923
        %v7052 = vsel %vm3877, %v6796, %v6924
        %v7053 = vsel %vm3877, %v6797, %v6925
        %v7054 = vsel %vm3877, %v6798, %v6926
        %v7055 = vsel %vm3877, %v6799, %v6927
        %v7056 = vsel %vm3877, %v6800, %v6928
        %v7057 = vsel %vm3877, %v6801, %v6929
        %v7058 = vsel %vm3877, %v6802, %v6930
        %v7059 = vsel %vm3877, %v6803, %v6931
        %v7060 = vsel %vm3877, %v6804, %v6932
        %v7061 = vsel %vm3877, %v6805, %v6933
        %v7062 = vsel %vm3877, %v6806, %v6934
        %v7063 = vsel %vm3877, %v6807, %v6935
        %v7064 = vsel %vm3877, %v6808, %v6936
        %v7065 = vsel %vm3877, %v6809, %v6937
        %v7066 = vsel %vm3877, %v6810, %v6938
        %v7067 = vsel %vm3877, %v6811, %v6939
        %v7068 = vsel %vm3877, %v6812, %v6940
        %v7069 = vsel %vm3877, %v6813, %v6941
        %v7070 = vsel %vm3877, %v6814, %v6942
        %v7071 = vsel %vm3877, %v6815, %v6943
        %v7072 = vsel %vm3877, %v6816, %v6944
        %v7073 = vsel %vm3877, %v6817, %v6945
        %v7074 = vsel %vm3877, %v6818, %v6946
        %v7075 = vsel %vm3877, %v6819, %v6947
        %v7076 = vsel %vm3877, %v6820, %v6948
        %v7077 = vsel %vm3877, %v6821, %v6949
        %v7078 = vsel %vm3877, %v6822, %v6950
        %v7079 = vsel %vm3877, %v6823, %v6951
        %v7080 = vsel %vm3877, %v6824, %v6952
        %v7081 = vsel %vm3877, %v6825, %v6953
        %v7082 = vsel %vm3877, %v6826, %v6954
        %v7083 = vsel %vm3877, %v6827, %v6955
        %v7084 = vsel %vm3877, %v6828, %v6956
        %v7085 = vsel %vm3877, %v6829, %v6957
        %v7086 = vsel %vm3877, %v6830, %v6958
        %v7087 = vsel %vm3877, %v6831, %v6959
        %v7088 = vsel %vm3877, %v6832, %v6960
        %v7089 = vsel %vm3877, %v6833, %v6961
        %v7090 = vsel %vm3877, %v6834, %v6962
        %v7091 = vsel %vm3877, %v6835, %v6963
        %v7092 = vsel %vm3877, %v6836, %v6964
        %v7093 = vsel %vm3877, %v6837, %v6965
        %v7094 = vsel %vm3877, %v6838, %v6966
        %v7095 = vsel %vm3877, %v6839, %v6967
        %v7096 = vsel %vm3877, %v6840, %v6968
        %v7097 = vsel %vm3877, %v6841, %v6969
        %v7098 = vsel %vm3877, %v6842, %v6970
        %v7099 = vsel %vm3877, %v6843, %v6971
        %v7100 = vsel %vm3877, %v6844, %v6972
        %v7101 = vsel %vm3877, %v6845, %v6973
        %v7166 = vrot.slane %v7039, 6
        %v7167 = vrot.slane %v7041, 6
        %v7168 = vrot.slane %v7043, 6
        %v7169 = vrot.slane %v7045, 6
        %v7170 = vrot.slane %v7047, 6
        %v7171 = vrot.slane %v7049, 6
        %v7172 = vrot.slane %v7051, 6
        %v7173 = vrot.slane %v7053, 6
        %v7174 = vrot.slane %v7055, 6
        %v7175 = vrot.slane %v7057, 6
        %v7176 = vrot.slane %v7059, 6
        %v7177 = vrot.slane %v7061, 6
        %v7178 = vrot.slane %v7063, 6
        %v7179 = vrot.slane %v7065, 6
        %v7180 = vrot.slane %v7067, 6
        %v7181 = vrot.slane %v7069, 6
        %v7182 = vrot.slane %v7071, 6
        %v7183 = vrot.slane %v7073, 6
        %v7184 = vrot.slane %v7075, 6
        %v7185 = vrot.slane %v7077, 6
        %v7186 = vrot.slane %v7079, 6
        %v7187 = vrot.slane %v7081, 6
        %v7188 = vrot.slane %v7083, 6
        %v7189 = vrot.slane %v7085, 6
        %v7190 = vrot.slane %v7087, 6
        %v7191 = vrot.slane %v7089, 6
        %v7192 = vrot.slane %v7091, 6
        %v7193 = vrot.slane %v7093, 6
        %v7194 = vrot.slane %v7095, 6
        %v7195 = vrot.slane %v7097, 6
        %v7196 = vrot.slane %v7099, 6
        %v7197 = vrot.slane %v7101, 6
        %v7198 = vsel %vm3879, %v7038, %v7166
        %v7199 = vsel %vm3879, %v7040, %v7167
        %v7200 = vsel %vm3879, %v7042, %v7168
        %v7201 = vsel %vm3879, %v7044, %v7169
        %v7202 = vsel %vm3879, %v7046, %v7170
        %v7203 = vsel %vm3879, %v7048, %v7171
        %v7204 = vsel %vm3879, %v7050, %v7172
        %v7205 = vsel %vm3879, %v7052, %v7173
        %v7206 = vsel %vm3879, %v7054, %v7174
        %v7207 = vsel %vm3879, %v7056, %v7175
        %v7208 = vsel %vm3879, %v7058, %v7176
        %v7209 = vsel %vm3879, %v7060, %v7177
        %v7210 = vsel %vm3879, %v7062, %v7178
        %v7211 = vsel %vm3879, %v7064, %v7179
        %v7212 = vsel %vm3879, %v7066, %v7180
        %v7213 = vsel %vm3879, %v7068, %v7181
        %v7214 = vsel %vm3879, %v7070, %v7182
        %v7215 = vsel %vm3879, %v7072, %v7183
        %v7216 = vsel %vm3879, %v7074, %v7184
        %v7217 = vsel %vm3879, %v7076, %v7185
        %v7218 = vsel %vm3879, %v7078, %v7186
        %v7219 = vsel %vm3879, %v7080, %v7187
        %v7220 = vsel %vm3879, %v7082, %v7188
        %v7221 = vsel %vm3879, %v7084, %v7189
        %v7222 = vsel %vm3879, %v7086, %v7190
        %v7223 = vsel %vm3879, %v7088, %v7191
        %v7224 = vsel %vm3879, %v7090, %v7192
        %v7225 = vsel %vm3879, %v7092, %v7193
        %v7226 = vsel %vm3879, %v7094, %v7194
        %v7227 = vsel %vm3879, %v7096, %v7195
        %v7228 = vsel %vm3879, %v7098, %v7196
        %v7229 = vsel %vm3879, %v7100, %v7197
        %7262 = vst [vmem:[#allocation1] ss:$4 sm:$0xff] %v7198
        %s7263 = scalar_lea.vmem [#allocation1], 1
        %7264 = vst [vmem:[%s7263] ss:$4 sm:$0xff] %v7199
        %s7265 = scalar_lea.vmem [#allocation1], 2
        %7266 = vst [vmem:[%s7265] ss:$4 sm:$0xff] %v7200
        %s7267 = scalar_lea.vmem [#allocation1], 3
        %7268 = vst [vmem:[%s7267] ss:$4 sm:$0xff] %v7201
        %s7269 = scalar_lea.vmem [#allocation1], 32
        %7270 = vst [vmem:[%s7269] ss:$4 sm:$0xff] %v7202
        %s7271 = scalar_lea.vmem [#allocation1], 33
        %7272 = vst [vmem:[%s7271] ss:$4 sm:$0xff] %v7203
        %s7273 = scalar_lea.vmem [#allocation1], 34
        %7274 = vst [vmem:[%s7273] ss:$4 sm:$0xff] %v7204
        %s7275 = scalar_lea.vmem [#allocation1], 35
        %7276 = vst [vmem:[%s7275] ss:$4 sm:$0xff] %v7205
        %v7277 = vld.sshfl [vmem:[#allocation1] sm:$0xff pattern:$0x73625140]
        %v7278 = vld.sshfl [vmem:[#allocation1 + $0x8] sm:$0xff pattern:$0x73625140]
        %v7279 = vld.sshfl [vmem:[#allocation1 + $0x20] sm:$0xff pattern:$0x73625140]
        %v7280 = vld.sshfl [vmem:[#allocation1 + $0x28] sm:$0xff pattern:$0x73625140]
        %7281 = vst [vmem:[#allocation1] ss:$4 sm:$0xff] %v7206
        %7282 = vst [vmem:[%s7263] ss:$4 sm:$0xff] %v7207
        %7283 = vst [vmem:[%s7265] ss:$4 sm:$0xff] %v7208
        %7284 = vst [vmem:[%s7267] ss:$4 sm:$0xff] %v7209
        %7285 = vst [vmem:[%s7269] ss:$4 sm:$0xff] %v7210
        %7286 = vst [vmem:[%s7271] ss:$4 sm:$0xff] %v7211
        %7287 = vst [vmem:[%s7273] ss:$4 sm:$0xff] %v7212
        %7288 = vst [vmem:[%s7275] ss:$4 sm:$0xff] %v7213
        %v7289 = vld.sshfl [vmem:[#allocation1] sm:$0xff pattern:$0x73625140]
        %v7290 = vld.sshfl [vmem:[#allocation1 + $0x8] sm:$0xff pattern:$0x73625140]
        %v7291 = vld.sshfl [vmem:[#allocation1 + $0x20] sm:$0xff pattern:$0x73625140]
        %v7292 = vld.sshfl [vmem:[#allocation1 + $0x28] sm:$0xff pattern:$0x73625140]
        %7293 = vst [vmem:[#allocation1] ss:$4 sm:$0xff] %v7214
        %7294 = vst [vmem:[%s7263] ss:$4 sm:$0xff] %v7215
        %7295 = vst [vmem:[%s7265] ss:$4 sm:$0xff] %v7216
        %7296 = vst [vmem:[%s7267] ss:$4 sm:$0xff] %v7217
        %7297 = vst [vmem:[%s7269] ss:$4 sm:$0xff] %v7218
        %7298 = vst [vmem:[%s7271] ss:$4 sm:$0xff] %v7219
        %7299 = vst [vmem:[%s7273] ss:$4 sm:$0xff] %v7220
        %7300 = vst [vmem:[%s7275] ss:$4 sm:$0xff] %v7221
        %v7301 = vld.sshfl [vmem:[#allocation1] sm:$0xff pattern:$0x73625140]
        %v7302 = vld.sshfl [vmem:[#allocation1 + $0x8] sm:$0xff pattern:$0x73625140]
        %v7303 = vld.sshfl [vmem:[#allocation1 + $0x20] sm:$0xff pattern:$0x73625140]
        %v7304 = vld.sshfl [vmem:[#allocation1 + $0x28] sm:$0xff pattern:$0x73625140]
        %7305 = vst [vmem:[#allocation1] ss:$4 sm:$0xff] %v7222
        %7306 = vst [vmem:[%s7263] ss:$4 sm:$0xff] %v7223
        %7307 = vst [vmem:[%s7265] ss:$4 sm:$0xff] %v7224
        %7308 = vst [vmem:[%s7267] ss:$4 sm:$0xff] %v7225
        %7309 = vst [vmem:[%s7269] ss:$4 sm:$0xff] %v7226
        %7310 = vst [vmem:[%s7271] ss:$4 sm:$0xff] %v7227
        %7311 = vst [vmem:[%s7273] ss:$4 sm:$0xff] %v7228
        %7312 = vst [vmem:[%s7275] ss:$4 sm:$0xff] %v7229
        %v7313 = vld.sshfl [vmem:[#allocation1] sm:$0xff pattern:$0x73625140]
        %v7314 = vld.sshfl [vmem:[#allocation1 + $0x8] sm:$0xff pattern:$0x73625140]
        %v7315 = vld.sshfl [vmem:[#allocation1 + $0x20] sm:$0xff pattern:$0x73625140]
        %v7316 = vld.sshfl [vmem:[#allocation1 + $0x28] sm:$0xff pattern:$0x73625140]
        %v7333 = vadd.f32 %v7277, %v7279
        %v7334 = vadd.f32 %v7333, %v7289
        %v7335 = vadd.f32 %v7334, %v7291
        %v7336 = vrot.slane %v7335, 4
        %v7337 = vadd.f32 %v7335, %v7336
        %v7338 = vrot.slane %v7337, 2
        %v7339 = vadd.f32 %v7337, %v7338
        %v7340 = vrot.slane %v7339, 1
        %v7341 = vadd.f32 %v7339, %v7340
        %v7342 = vadd.f32 %v7278, %v7280
        %v7343 = vadd.f32 %v7342, %v7290
        %v7344 = vadd.f32 %v7343, %v7292
        %v7345 = vrot.slane %v7344, 4
        %v7346 = vadd.f32 %v7344, %v7345
        %v7347 = vrot.slane %v7346, 2
        %v7348 = vadd.f32 %v7346, %v7347
        %v7349 = vrot.slane %v7348, 1
        %v7350 = vadd.f32 %v7348, %v7349
        %v7351 = vadd.f32 %v7301, %v7303
        %v7352 = vadd.f32 %v7351, %v7313
        %v7353 = vadd.f32 %v7352, %v7315
        %v7354 = vrot.slane %v7353, 4
        %v7355 = vadd.f32 %v7353, %v7354
        %v7356 = vrot.slane %v7355, 2
        %v7357 = vadd.f32 %v7355, %v7356
        %v7358 = vrot.slane %v7357, 1
        %v7359 = vadd.f32 %v7357, %v7358
        %v7360 = vadd.f32 %v7302, %v7304
        %v7361 = vadd.f32 %v7360, %v7314
        %v7362 = vadd.f32 %v7361, %v7316
        %v7363 = vrot.slane %v7362, 4
        %v7364 = vadd.f32 %v7362, %v7363
        %v7365 = vrot.slane %v7364, 2
        %v7366 = vadd.f32 %v7364, %v7365
        %v7367 = vrot.slane %v7366, 1
        %v7368 = vadd.f32 %v7366, %v7367
        %v7369 = vrcp.pop 32.0
        %v7370 = vmul.f32 32.0, %v7369
        %v7371 = vsub.f32 1.0, %v7370
        %v7372 = vmul.f32 %v7369, %v7371
        %v7373 = vadd.f32 %v7369, %v7372
        %vm7374 = vweird.f32 %v7369
        %v7375 = vsel %vm7374, %v7369, %v7373
        %v7376 = vmul.f32 %v7341, %v7375
        %v7377 = vmul.f32 %v7350, %v7375
        %v7378 = vmul.f32 %v7359, %v7375
        %v7379 = vmul.f32 %v7368, %v7375
        %v7380 = vmul.f32 %v7198, %v7198
        %v7381 = vmul.f32 %v7199, %v7199
        %v7382 = vmul.f32 %v7200, %v7200
        %v7383 = vmul.f32 %v7201, %v7201
        %v7384 = vmul.f32 %v7202, %v7202
        %v7385 = vmul.f32 %v7203, %v7203
        %v7386 = vmul.f32 %v7204, %v7204
        %v7387 = vmul.f32 %v7205, %v7205
        %v7388 = vmul.f32 %v7206, %v7206
        %v7389 = vmul.f32 %v7207, %v7207
        %v7390 = vmul.f32 %v7208, %v7208
        %v7391 = vmul.f32 %v7209, %v7209
        %v7392 = vmul.f32 %v7210, %v7210
        %v7393 = vmul.f32 %v7211, %v7211
        %v7394 = vmul.f32 %v7212, %v7212
        %v7395 = vmul.f32 %v7213, %v7213
        %v7396 = vmul.f32 %v7214, %v7214
        %v7397 = vmul.f32 %v7215, %v7215
        %v7398 = vmul.f32 %v7216, %v7216
        %v7399 = vmul.f32 %v7217, %v7217
        %v7400 = vmul.f32 %v7218, %v7218
        %v7401 = vmul.f32 %v7219, %v7219
        %v7402 = vmul.f32 %v7220, %v7220
        %v7403 = vmul.f32 %v7221, %v7221
        %v7404 = vmul.f32 %v7222, %v7222
        %v7405 = vmul.f32 %v7223, %v7223
        %v7406 = vmul.f32 %v7224, %v7224
        %v7407 = vmul.f32 %v7225, %v7225
        %v7408 = vmul.f32 %v7226, %v7226
        %v7409 = vmul.f32 %v7227, %v7227
        %v7410 = vmul.f32 %v7228, %v7228
        %v7411 = vmul.f32 %v7229, %v7229
        %7444 = vst [vmem:[#allocation1] ss:$4 sm:$0xff] %v7380
        %s7445 = scalar_lea.vmem [#allocation1], 1
        %7446 = vst [vmem:[%s7445] ss:$4 sm:$0xff] %v7381
        %s7447 = scalar_lea.vmem [#allocation1], 2
        %7448 = vst [vmem:[%s7447] ss:$4 sm:$0xff] %v7382
        %s7449 = scalar_lea.vmem [#allocation1], 3
        %7450 = vst [vmem:[%s7449] ss:$4 sm:$0xff] %v7383
        %s7451 = scalar_lea.vmem [#allocation1], 32
        %7452 = vst [vmem:[%s7451] ss:$4 sm:$0xff] %v7384
        %s7453 = scalar_lea.vmem [#allocation1], 33
        %7454 = vst [vmem:[%s7453] ss:$4 sm:$0xff] %v7385
        %s7455 = scalar_lea.vmem [#allocation1], 34
        %7456 = vst [vmem:[%s7455] ss:$4 sm:$0xff] %v7386
        %s7457 = scalar_lea.vmem [#allocation1], 35
        %7458 = vst [vmem:[%s7457] ss:$4 sm:$0xff] %v7387
        %v7459 = vld.sshfl [vmem:[#allocation1] sm:$0xff pattern:$0x73625140]
        %v7460 = vld.sshfl [vmem:[#allocation1 + $0x8] sm:$0xff pattern:$0x73625140]
        %v7461 = vld.sshfl [vmem:[#allocation1 + $0x20] sm:$0xff pattern:$0x73625140]
        %v7462 = vld.sshfl [vmem:[#allocation1 + $0x28] sm:$0xff pattern:$0x73625140]
        %7463 = vst [vmem:[#allocation1] ss:$4 sm:$0xff] %v7388
        %7464 = vst [vmem:[%s7445] ss:$4 sm:$0xff] %v7389
        %7465 = vst [vmem:[%s7447] ss:$4 sm:$0xff] %v7390
        %7466 = vst [vmem:[%s7449] ss:$4 sm:$0xff] %v7391
        %7467 = vst [vmem:[%s7451] ss:$4 sm:$0xff] %v7392
        %7468 = vst [vmem:[%s7453] ss:$4 sm:$0xff] %v7393
        %7469 = vst [vmem:[%s7455] ss:$4 sm:$0xff] %v7394
        %7470 = vst [vmem:[%s7457] ss:$4 sm:$0xff] %v7395
        %v7471 = vld.sshfl [vmem:[#allocation1] sm:$0xff pattern:$0x73625140]
        %v7472 = vld.sshfl [vmem:[#allocation1 + $0x8] sm:$0xff pattern:$0x73625140]
        %v7473 = vld.sshfl [vmem:[#allocation1 + $0x20] sm:$0xff pattern:$0x73625140]
        %v7474 = vld.sshfl [vmem:[#allocation1 + $0x28] sm:$0xff pattern:$0x73625140]
        %7475 = vst [vmem:[#allocation1] ss:$4 sm:$0xff] %v7396
        %7476 = vst [vmem:[%s7445] ss:$4 sm:$0xff] %v7397
        %7477 = vst [vmem:[%s7447] ss:$4 sm:$0xff] %v7398
        %7478 = vst [vmem:[%s7449] ss:$4 sm:$0xff] %v7399
        %7479 = vst [vmem:[%s7451] ss:$4 sm:$0xff] %v7400
        %7480 = vst [vmem:[%s7453] ss:$4 sm:$0xff] %v7401
        %7481 = vst [vmem:[%s7455] ss:$4 sm:$0xff] %v7402
        %7482 = vst [vmem:[%s7457] ss:$4 sm:$0xff] %v7403
        %v7483 = vld.sshfl [vmem:[#allocation1] sm:$0xff pattern:$0x73625140]
        %v7484 = vld.sshfl [vmem:[#allocation1 + $0x8] sm:$0xff pattern:$0x73625140]
        %v7485 = vld.sshfl [vmem:[#allocation1 + $0x20] sm:$0xff pattern:$0x73625140]
        %v7486 = vld.sshfl [vmem:[#allocation1 + $0x28] sm:$0xff pattern:$0x73625140]
        %7487 = vst [vmem:[#allocation1] ss:$4 sm:$0xff] %v7404
        %7488 = vst [vmem:[%s7445] ss:$4 sm:$0xff] %v7405
        %7489 = vst [vmem:[%s7447] ss:$4 sm:$0xff] %v7406
        %7490 = vst [vmem:[%s7449] ss:$4 sm:$0xff] %v7407
        %7491 = vst [vmem:[%s7451] ss:$4 sm:$0xff] %v7408
        %7492 = vst [vmem:[%s7453] ss:$4 sm:$0xff] %v7409
        %7493 = vst [vmem:[%s7455] ss:$4 sm:$0xff] %v7410
        %7494 = vst [vmem:[%s7457] ss:$4 sm:$0xff] %v7411
        %v7495 = vld.sshfl [vmem:[#allocation1] sm:$0xff pattern:$0x73625140]
        %v7496 = vld.sshfl [vmem:[#allocation1 + $0x8] sm:$0xff pattern:$0x73625140]
        %v7497 = vld.sshfl [vmem:[#allocation1 + $0x20] sm:$0xff pattern:$0x73625140]
        %v7498 = vld.sshfl [vmem:[#allocation1 + $0x28] sm:$0xff pattern:$0x73625140]
        %v7515 = vadd.f32 %v7459, %v7461
        %v7516 = vadd.f32 %v7515, %v7471
        %v7517 = vadd.f32 %v7516, %v7473
        %v7518 = vrot.slane %v7517, 4
        %v7519 = vadd.f32 %v7517, %v7518
        %v7520 = vrot.slane %v7519, 2
        %v7521 = vadd.f32 %v7519, %v7520
        %v7522 = vrot.slane %v7521, 1
        %v7523 = vadd.f32 %v7521, %v7522
        %v7524 = vadd.f32 %v7460, %v7462
        %v7525 = vadd.f32 %v7524, %v7472
        %v7526 = vadd.f32 %v7525, %v7474
        %v7527 = vrot.slane %v7526, 4
        %v7528 = vadd.f32 %v7526, %v7527
        %v7529 = vrot.slane %v7528, 2
        %v7530 = vadd.f32 %v7528, %v7529
        %v7531 = vrot.slane %v7530, 1
        %v7532 = vadd.f32 %v7530, %v7531
        %v7533 = vadd.f32 %v7483, %v7485
        %v7534 = vadd.f32 %v7533, %v7495
        %v7535 = vadd.f32 %v7534, %v7497
        %v7536 = vrot.slane %v7535, 4
        %v7537 = vadd.f32 %v7535, %v7536
        %v7538 = vrot.slane %v7537, 2
        %v7539 = vadd.f32 %v7537, %v7538
        %v7540 = vrot.slane %v7539, 1
        %v7541 = vadd.f32 %v7539, %v7540
        %v7542 = vadd.f32 %v7484, %v7486
        %v7543 = vadd.f32 %v7542, %v7496
        %v7544 = vadd.f32 %v7543, %v7498
        %v7545 = vrot.slane %v7544, 4
        %v7546 = vadd.f32 %v7544, %v7545
        %v7547 = vrot.slane %v7546, 2
        %v7548 = vadd.f32 %v7546, %v7547
        %v7549 = vrot.slane %v7548, 1
        %v7550 = vadd.f32 %v7548, %v7549
        %v7551 = vmul.f32 %v7523, %v7375
        %v7552 = vmul.f32 %v7532, %v7375
        %v7553 = vmul.f32 %v7541, %v7375
        %v7554 = vmul.f32 %v7550, %v7375
        %v7555 = vmul.f32 %v7376, %v7376
        %v7556 = vmul.f32 %v7377, %v7377
        %v7557 = vmul.f32 %v7378, %v7378
        %v7558 = vmul.f32 %v7379, %v7379
        %v7559 = vsub.f32 %v7551, %v7555
        %v7560 = vsub.f32 %v7552, %v7556
        %v7561 = vsub.f32 %v7553, %v7557
        %v7562 = vsub.f32 %v7554, %v7558
        %v7563 = vmax.f32 %v7559, 0.0
        %v7564 = vmax.f32 %v7560, 0.0
        %v7565 = vmax.f32 %v7561, 0.0
        %v7566 = vmax.f32 %v7562, 0.0
        %v7571 = vrot.slane %v7377, 6
        %v7572 = vrot.slane %v7379, 6
        %v7573 = vsel %vm3879, %v7376, %v7571
        %v7574 = vsel %vm3888, %v7376, %v7571
        %v7575 = vrot.slane %v7574, 2
        %v7576 = vsel %vm3898, %v7376, %v7571
        %v7577 = vrot.slane %v7576, 4
        %v7578 = vsel %vm3908, %v7571, %v7376
        %v7579 = vrot.slane %v7578, 6
        %v7580 = vsel %vm3879, %v7378, %v7572
        %v7581 = vsel %vm3888, %v7378, %v7572
        %v7582 = vrot.slane %v7581, 2
        %v7583 = vsel %vm3898, %v7378, %v7572
        %v7584 = vrot.slane %v7583, 4
        %v7585 = vsel %vm3908, %v7572, %v7378
        %v7586 = vrot.slane %v7585, 6
        %v7595 = vsub.f32 %v7198, %v7573
        %v7596 = vsub.f32 %v7199, %v7575
        %v7597 = vsub.f32 %v7200, %v7577
        %v7598 = vsub.f32 %v7201, %v7579
        %v7599 = vsub.f32 %v7202, %v7573
        %v7600 = vsub.f32 %v7203, %v7575
        %v7601 = vsub.f32 %v7204, %v7577
        %v7602 = vsub.f32 %v7205, %v7579
        %v7603 = vsub.f32 %v7206, %v7573
        %v7604 = vsub.f32 %v7207, %v7575
        %v7605 = vsub.f32 %v7208, %v7577
        %v7606 = vsub.f32 %v7209, %v7579
        %v7607 = vsub.f32 %v7210, %v7573
        %v7608 = vsub.f32 %v7211, %v7575
        %v7609 = vsub.f32 %v7212, %v7577
        %v7610 = vsub.f32 %v7213, %v7579
        %v7611 = vsub.f32 %v7214, %v7580
        %v7612 = vsub.f32 %v7215, %v7582
        %v7613 = vsub.f32 %v7216, %v7584
        %v7614 = vsub.f32 %v7217, %v7586
        %v7615 = vsub.f32 %v7218, %v7580
        %v7616 = vsub.f32 %v7219, %v7582
        %v7617 = vsub.f32 %v7220, %v7584
        %v7618 = vsub.f32 %v7221, %v7586
        %v7619 = vsub.f32 %v7222, %v7580
        %v7620 = vsub.f32 %v7223, %v7582
        %v7621 = vsub.f32 %v7224, %v7584
        %v7622 = vsub.f32 %v7225, %v7586
        %v7623 = vsub.f32 %v7226, %v7580
        %v7624 = vsub.f32 %v7227, %v7582
        %v7625 = vsub.f32 %v7228, %v7584
        %v7626 = vsub.f32 %v7229, %v7586
        %v7627 = vadd.f32 %v7563, 1e-05
        %v7628 = vadd.f32 %v7564, 1e-05
        %v7629 = vadd.f32 %v7565, 1e-05
        %v7630 = vadd.f32 %v7566, 1e-05
        %v7631 = vrsqrt.pop %v7627
        %v7632 = vmul.f32 %v7631, %v7627
        %v7633 = vmul.f32 %v7632, %v7631
        %v7634 = vmul.f32 0.5, %v7633
        %v7635 = vsub.f32 1.5, %v7634
        %v7636 = vmul.f32 %v7631, %v7635
        %vm7637 = vweird.f32 %v7627
        %vm7638 = vweird.f32 %v7631
        %vm7639 = vmor %vm7637, %vm7638
        %v7640 = vsel %vm7639, %v7631, %v7636
        %v7641 = vrsqrt.pop %v7628
        %v7642 = vmul.f32 %v7641, %v7628
        %v7643 = vmul.f32 %v7642, %v7641
        %v7644 = vmul.f32 0.5, %v7643
        %v7645 = vsub.f32 1.5, %v7644
        %v7646 = vmul.f32 %v7641, %v7645
        %vm7647 = vweird.f32 %v7628
        %vm7648 = vweird.f32 %v7641
        %vm7649 = vmor %vm7647, %vm7648
        %v7650 = vsel %vm7649, %v7641, %v7646
        %v7651 = vrsqrt.pop %v7629
        %v7652 = vmul.f32 %v7651, %v7629
        %v7653 = vmul.f32 %v7652, %v7651
        %v7654 = vmul.f32 0.5, %v7653
        %v7655 = vsub.f32 1.5, %v7654
        %v7656 = vmul.f32 %v7651, %v7655
        %vm7657 = vweird.f32 %v7629
        %vm7658 = vweird.f32 %v7651
        %vm7659 = vmor %vm7657, %vm7658
        %v7660 = vsel %vm7659, %v7651, %v7656
        %v7661 = vrsqrt.pop %v7630
        %v7662 = vmul.f32 %v7661, %v7630
        %v7663 = vmul.f32 %v7662, %v7661
        %v7664 = vmul.f32 0.5, %v7663
        %v7665 = vsub.f32 1.5, %v7664
        %v7666 = vmul.f32 %v7661, %v7665
        %vm7667 = vweird.f32 %v7630
        %vm7668 = vweird.f32 %v7661
        %vm7669 = vmor %vm7667, %vm7668
        %v7670 = vsel %vm7669, %v7661, %v7666
        %v7675 = vrot.slane %v7650, 6
        %v7676 = vrot.slane %v7670, 6
        %v7677 = vsel %vm3879, %v7640, %v7675
        %v7678 = vsel %vm3888, %v7640, %v7675
        %v7679 = vrot.slane %v7678, 2
        %v7680 = vsel %vm3898, %v7640, %v7675
        %v7681 = vrot.slane %v7680, 4
        %v7682 = vsel %vm3908, %v7675, %v7640
        %v7683 = vrot.slane %v7682, 6
        %v7684 = vsel %vm3879, %v7660, %v7676
        %v7685 = vsel %vm3888, %v7660, %v7676
        %v7686 = vrot.slane %v7685, 2
        %v7687 = vsel %vm3898, %v7660, %v7676
        %v7688 = vrot.slane %v7687, 4
        %v7689 = vsel %vm3908, %v7676, %v7660
        %v7690 = vrot.slane %v7689, 6
        %v7699 = vmul.f32 %v7595, %v7677
        %v7700 = vmul.f32 %v7596, %v7679
        %v7701 = vmul.f32 %v7597, %v7681
        %v7702 = vmul.f32 %v7598, %v7683
        %v7703 = vmul.f32 %v7599, %v7677
        %v7704 = vmul.f32 %v7600, %v7679
        %v7705 = vmul.f32 %v7601, %v7681
        %v7706 = vmul.f32 %v7602, %v7683
        %v7707 = vmul.f32 %v7603, %v7677
        %v7708 = vmul.f32 %v7604, %v7679
        %v7709 = vmul.f32 %v7605, %v7681
        %v7710 = vmul.f32 %v7606, %v7683
        %v7711 = vmul.f32 %v7607, %v7677
        %v7712 = vmul.f32 %v7608, %v7679
        %v7713 = vmul.f32 %v7609, %v7681
        %v7714 = vmul.f32 %v7610, %v7683
        %v7715 = vmul.f32 %v7611, %v7684
        %v7716 = vmul.f32 %v7612, %v7686
        %v7717 = vmul.f32 %v7613, %v7688
        %v7718 = vmul.f32 %v7614, %v7690
        %v7719 = vmul.f32 %v7615, %v7684
        %v7720 = vmul.f32 %v7616, %v7686
        %v7721 = vmul.f32 %v7617, %v7688
        %v7722 = vmul.f32 %v7618, %v7690
        %v7723 = vmul.f32 %v7619, %v7684
        %v7724 = vmul.f32 %v7620, %v7686
        %v7725 = vmul.f32 %v7621, %v7688
        %v7726 = vmul.f32 %v7622, %v7690
        %v7727 = vmul.f32 %v7623, %v7684
        %v7728 = vmul.f32 %v7624, %v7686
        %v7729 = vmul.f32 %v7625, %v7688
        %v7730 = vmul.f32 %v7626, %v7690
        %v7731 = vmax.f32 %v7699, 0.0
        %v7732 = vmax.f32 %v7700, 0.0
        %v7733 = vmax.f32 %v7701, 0.0
        %v7734 = vmax.f32 %v7702, 0.0
        %v7735 = vmax.f32 %v7703, 0.0
        %v7736 = vmax.f32 %v7704, 0.0
        %v7737 = vmax.f32 %v7705, 0.0
        %v7738 = vmax.f32 %v7706, 0.0
        %v7739 = vmax.f32 %v7707, 0.0
        %v7740 = vmax.f32 %v7708, 0.0
        %v7741 = vmax.f32 %v7709, 0.0
        %v7742 = vmax.f32 %v7710, 0.0
        %v7743 = vmax.f32 %v7711, 0.0
        %v7744 = vmax.f32 %v7712, 0.0
        %v7745 = vmax.f32 %v7713, 0.0
        %v7746 = vmax.f32 %v7714, 0.0
        %v7747 = vmax.f32 %v7715, 0.0
        %v7748 = vmax.f32 %v7716, 0.0
        %v7749 = vmax.f32 %v7717, 0.0
        %v7750 = vmax.f32 %v7718, 0.0
        %v7751 = vmax.f32 %v7719, 0.0
        %v7752 = vmax.f32 %v7720, 0.0
        %v7753 = vmax.f32 %v7721, 0.0
        %v7754 = vmax.f32 %v7722, 0.0
        %v7755 = vmax.f32 %v7723, 0.0
        %v7756 = vmax.f32 %v7724, 0.0
        %v7757 = vmax.f32 %v7725, 0.0
        %v7758 = vmax.f32 %v7726, 0.0
        %v7759 = vmax.f32 %v7727, 0.0
        %v7760 = vmax.f32 %v7728, 0.0
        %v7761 = vmax.f32 %v7729, 0.0
        %v7762 = vmax.f32 %v7730, 0.0
        %7795 = vst [vmem:[#allocation1] ss:$4 sm:$0xff] %v7731
        %s7796 = scalar_lea.vmem [#allocation1], 1
        %7797 = vst [vmem:[%s7796] ss:$4 sm:$0xff] %v7732
        %s7798 = scalar_lea.vmem [#allocation1], 2
        %7799 = vst [vmem:[%s7798] ss:$4 sm:$0xff] %v7733
        %s7800 = scalar_lea.vmem [#allocation1], 3
        %7801 = vst [vmem:[%s7800] ss:$4 sm:$0xff] %v7734
        %s7802 = scalar_lea.vmem [#allocation1], 32
        %7803 = vst [vmem:[%s7802] ss:$4 sm:$0xff] %v7735
        %s7804 = scalar_lea.vmem [#allocation1], 33
        %7805 = vst [vmem:[%s7804] ss:$4 sm:$0xff] %v7736
        %s7806 = scalar_lea.vmem [#allocation1], 34
        %7807 = vst [vmem:[%s7806] ss:$4 sm:$0xff] %v7737
        %s7808 = scalar_lea.vmem [#allocation1], 35
        %7809 = vst [vmem:[%s7808] ss:$4 sm:$0xff] %v7738
        %v7810 = vld.sshfl [vmem:[#allocation1] sm:$0xff pattern:$0x73625140]
        %v7811 = vld.sshfl [vmem:[#allocation1 + $0x8] sm:$0xff pattern:$0x73625140]
        %v7812 = vld.sshfl [vmem:[#allocation1 + $0x20] sm:$0xff pattern:$0x73625140]
        %v7813 = vld.sshfl [vmem:[#allocation1 + $0x28] sm:$0xff pattern:$0x73625140]
        %7814 = vst [vmem:[#allocation1] ss:$4 sm:$0xff] %v7739
        %7815 = vst [vmem:[%s7796] ss:$4 sm:$0xff] %v7740
        %7816 = vst [vmem:[%s7798] ss:$4 sm:$0xff] %v7741
        %7817 = vst [vmem:[%s7800] ss:$4 sm:$0xff] %v7742
        %7818 = vst [vmem:[%s7802] ss:$4 sm:$0xff] %v7743
        %7819 = vst [vmem:[%s7804] ss:$4 sm:$0xff] %v7744
        %7820 = vst [vmem:[%s7806] ss:$4 sm:$0xff] %v7745
        %7821 = vst [vmem:[%s7808] ss:$4 sm:$0xff] %v7746
        %v7822 = vld.sshfl [vmem:[#allocation1] sm:$0xff pattern:$0x73625140]
        %v7823 = vld.sshfl [vmem:[#allocation1 + $0x8] sm:$0xff pattern:$0x73625140]
        %v7824 = vld.sshfl [vmem:[#allocation1 + $0x20] sm:$0xff pattern:$0x73625140]
        %v7825 = vld.sshfl [vmem:[#allocation1 + $0x28] sm:$0xff pattern:$0x73625140]
        %7826 = vst [vmem:[#allocation1] ss:$4 sm:$0xff] %v7747
        %7827 = vst [vmem:[%s7796] ss:$4 sm:$0xff] %v7748
        %7828 = vst [vmem:[%s7798] ss:$4 sm:$0xff] %v7749
        %7829 = vst [vmem:[%s7800] ss:$4 sm:$0xff] %v7750
        %7830 = vst [vmem:[%s7802] ss:$4 sm:$0xff] %v7751
        %7831 = vst [vmem:[%s7804] ss:$4 sm:$0xff] %v7752
        %7832 = vst [vmem:[%s7806] ss:$4 sm:$0xff] %v7753
        %7833 = vst [vmem:[%s7808] ss:$4 sm:$0xff] %v7754
        %v7834 = vld.sshfl [vmem:[#allocation1] sm:$0xff pattern:$0x73625140]
        %v7835 = vld.sshfl [vmem:[#allocation1 + $0x8] sm:$0xff pattern:$0x73625140]
        %v7836 = vld.sshfl [vmem:[#allocation1 + $0x20] sm:$0xff pattern:$0x73625140]
        %v7837 = vld.sshfl [vmem:[#allocation1 + $0x28] sm:$0xff pattern:$0x73625140]
        %7838 = vst [vmem:[#allocation1] ss:$4 sm:$0xff] %v7755
        %7839 = vst [vmem:[%s7796] ss:$4 sm:$0xff] %v7756
        %7840 = vst [vmem:[%s7798] ss:$4 sm:$0xff] %v7757
        %7841 = vst [vmem:[%s7800] ss:$4 sm:$0xff] %v7758
        %7842 = vst [vmem:[%s7802] ss:$4 sm:$0xff] %v7759
        %7843 = vst [vmem:[%s7804] ss:$4 sm:$0xff] %v7760
        %7844 = vst [vmem:[%s7806] ss:$4 sm:$0xff] %v7761
        %7845 = vst [vmem:[%s7808] ss:$4 sm:$0xff] %v7762
        %v7846 = vld.sshfl [vmem:[#allocation1] sm:$0xff pattern:$0x73625140]
        %v7847 = vld.sshfl [vmem:[#allocation1 + $0x8] sm:$0xff pattern:$0x73625140]
        %v7848 = vld.sshfl [vmem:[#allocation1 + $0x20] sm:$0xff pattern:$0x73625140]
        %v7849 = vld.sshfl [vmem:[#allocation1 + $0x28] sm:$0xff pattern:$0x73625140]
        %v7866 = vpack.c.bf16 %v7812, %v7810
        %v7867 = vpack.c.bf16 %v7813, %v7811
        %v7868 = vpack.c.bf16 %v7824, %v7822
        %v7869 = vpack.c.bf16 %v7825, %v7823
        %v7870 = vpack.c.bf16 %v7836, %v7834
        %v7871 = vpack.c.bf16 %v7837, %v7835
        %v7872 = vpack.c.bf16 %v7848, %v7846
        %v7873 = vpack.c.bf16 %v7849, %v7847
        %v7874 = vadd.s32 %v530, 32
        %v7875 = vadd.s32 %v530, 40
        %v7876 = vadd.s32 %v530, 48
        %v7877 = vadd.s32 %v530, 56
        %vm7878 = vcmp.lt.s32.totalorder %v530, 0
        %v7879 = vsub.s32 0, %v530
        %v7880 = vsel %vm7878, %v7879, %v530
        %v7881 = vshrl.u32 %v7880, 5
        %v7882 = vand.u32 %v7880, 31
        %v7883 = vsub.s32 0, %v7882
        %v7884 = vsel %vm7878, %v7883, %v7882
        %vm7885 = vcmp.lt.s32.totalorder %v531, 0
        %v7886 = vsub.s32 0, %v531
        %v7887 = vsel %vm7885, %v7886, %v531
        %v7888 = vshrl.u32 %v7887, 5
        %v7889 = vand.u32 %v7887, 31
        %v7890 = vsub.s32 0, %v7889
        %v7891 = vsel %vm7885, %v7890, %v7889
        %vm7892 = vcmp.lt.s32.totalorder %v4875, 0
        %v7893 = vsub.s32 0, %v4875
        %v7894 = vsel %vm7892, %v7893, %v4875
        %v7895 = vshrl.u32 %v7894, 5
        %v7896 = vand.u32 %v7894, 31
        %v7897 = vsub.s32 0, %v7896
        %v7898 = vsel %vm7892, %v7897, %v7896
        %vm7899 = vcmp.lt.s32.totalorder %v4876, 0
        %v7900 = vsub.s32 0, %v4876
        %v7901 = vsel %vm7899, %v7900, %v4876
        %v7902 = vshrl.u32 %v7901, 5
        %v7903 = vand.u32 %v7901, 31
        %v7904 = vsub.s32 0, %v7903
        %v7905 = vsel %vm7899, %v7904, %v7903
        %vm7906 = vcmp.lt.s32.totalorder %v7874, 0
        %v7907 = vsub.s32 0, %v7874
        %v7908 = vsel %vm7906, %v7907, %v7874
        %v7909 = vshrl.u32 %v7908, 5
        %v7910 = vand.u32 %v7908, 31
        %v7911 = vsub.s32 0, %v7910
        %v7912 = vsel %vm7906, %v7911, %v7910
        %vm7913 = vcmp.lt.s32.totalorder %v7875, 0
        %v7914 = vsub.s32 0, %v7875
        %v7915 = vsel %vm7913, %v7914, %v7875
        %v7916 = vshrl.u32 %v7915, 5
        %v7917 = vand.u32 %v7915, 31
        %v7918 = vsub.s32 0, %v7917
        %v7919 = vsel %vm7913, %v7918, %v7917
        %vm7920 = vcmp.lt.s32.totalorder %v7876, 0
        %v7921 = vsub.s32 0, %v7876
        %v7922 = vsel %vm7920, %v7921, %v7876
        %v7923 = vshrl.u32 %v7922, 5
        %v7924 = vand.u32 %v7922, 31
        %v7925 = vsub.s32 0, %v7924
        %v7926 = vsel %vm7920, %v7925, %v7924
        %vm7927 = vcmp.lt.s32.totalorder %v7877, 0
        %v7928 = vsub.s32 0, %v7877
        %v7929 = vsel %vm7927, %v7928, %v7877
        %v7930 = vshrl.u32 %v7929, 5
        %v7931 = vand.u32 %v7929, 31
        %v7932 = vsub.s32 0, %v7931
        %v7933 = vsel %vm7927, %v7932, %v7931
        %vm7934 = vcmp.ne.s32.totalorder %v7884, 0
        %vm7935 = vcmp.ne.s32.totalorder %v7891, 0
        %vm7936 = vcmp.ne.s32.totalorder %v7898, 0
        %vm7937 = vcmp.ne.s32.totalorder %v7905, 0
        %vm7938 = vcmp.ne.s32.totalorder %v7912, 0
        %vm7939 = vcmp.ne.s32.totalorder %v7919, 0
        %vm7940 = vcmp.ne.s32.totalorder %v7926, 0
        %vm7941 = vcmp.ne.s32.totalorder %v7933, 0
        %vm7942 = vcmp.lt.s32.totalorder %v7884, 0
        %vm7943 = vcmp.lt.s32.totalorder %v7891, 0
        %vm7944 = vcmp.lt.s32.totalorder %v7898, 0
        %vm7945 = vcmp.lt.s32.totalorder %v7905, 0
        %vm7946 = vcmp.lt.s32.totalorder %v7912, 0
        %vm7947 = vcmp.lt.s32.totalorder %v7919, 0
        %vm7948 = vcmp.lt.s32.totalorder %v7926, 0
        %vm7949 = vcmp.lt.s32.totalorder %v7933, 0
        %vm7950 = vmand %vm7942, %vm7934
        %vm7951 = vmand %vm7943, %vm7935
        %vm7952 = vmand %vm7944, %vm7936
        %vm7953 = vmand %vm7945, %vm7937
        %vm7954 = vmand %vm7946, %vm7938
        %vm7955 = vmand %vm7947, %vm7939
        %vm7956 = vmand %vm7948, %vm7940
        %vm7957 = vmand %vm7949, %vm7941
        %v7958 = vadd.s32 %v7884, 32
        %v7959 = vadd.s32 %v7891, 32
        %v7960 = vadd.s32 %v7898, 32
        %v7961 = vadd.s32 %v7905, 32
        %v7962 = vadd.s32 %v7912, 32
        %v7963 = vadd.s32 %v7919, 32
        %v7964 = vadd.s32 %v7926, 32
        %v7965 = vadd.s32 %v7933, 32
        %v7966 = vsel %vm7950, %v7958, %v7884
        %v7967 = vsel %vm7951, %v7959, %v7891
        %v7968 = vsel %vm7952, %v7960, %v7898
        %v7969 = vsel %vm7953, %v7961, %v7905
        %v7970 = vsel %vm7954, %v7962, %v7912
        %v7971 = vsel %vm7955, %v7963, %v7919
        %v7972 = vsel %vm7956, %v7964, %v7926
        %v7973 = vsel %vm7957, %v7965, %v7933
        %vm7974 = vcmp.ne.s32.totalorder %v7966, 0
        %vm7975 = vcmp.ne.s32.totalorder %v7967, 0
        %vm7976 = vcmp.ne.s32.totalorder %v7968, 0
        %vm7977 = vcmp.ne.s32.totalorder %v7969, 0
        %vm7978 = vcmp.ne.s32.totalorder %v7970, 0
        %vm7979 = vcmp.ne.s32.totalorder %v7971, 0
        %vm7980 = vcmp.ne.s32.totalorder %v7972, 0
        %vm7981 = vcmp.ne.s32.totalorder %v7973, 0
        %v7982 = vsel %vm7974, 1, 0
        %v7983 = vsel %vm7975, 1, 0
        %v7984 = vsel %vm7976, 1, 0
        %v7985 = vsel %vm7977, 1, 0
        %v7986 = vsel %vm7978, 1, 0
        %v7987 = vsel %vm7979, 1, 0
        %v7988 = vsel %vm7980, 1, 0
        %v7989 = vsel %vm7981, 1, 0
        %v7990 = vcvt.s32.f32 %v7982
        %v7991 = vcvt.s32.f32 %v7983
        %v7992 = vcvt.s32.f32 %v7984
        %v7993 = vcvt.s32.f32 %v7985
        %v7994 = vcvt.s32.f32 %v7986
        %v7995 = vcvt.s32.f32 %v7987
        %v7996 = vcvt.s32.f32 %v7988
        %v7997 = vcvt.s32.f32 %v7989
        %vm7998 = vcmp.ne.s32.totalorder %v7966, 31
        %vm7999 = vcmp.ne.s32.totalorder %v7967, 31
        %vm8000 = vcmp.ne.s32.totalorder %v7968, 31
        %vm8001 = vcmp.ne.s32.totalorder %v7969, 31
        %vm8002 = vcmp.ne.s32.totalorder %v7970, 31
        %vm8003 = vcmp.ne.s32.totalorder %v7971, 31
        %vm8004 = vcmp.ne.s32.totalorder %v7972, 31
        %vm8005 = vcmp.ne.s32.totalorder %v7973, 31
        %v8006 = vsel %vm7998, 1, 0
        %v8007 = vsel %vm7999, 1, 0
        %v8008 = vsel %vm8000, 1, 0
        %v8009 = vsel %vm8001, 1, 0
        %v8010 = vsel %vm8002, 1, 0
        %v8011 = vsel %vm8003, 1, 0
        %v8012 = vsel %vm8004, 1, 0
        %v8013 = vsel %vm8005, 1, 0
        %v8014 = vcvt.s32.f32 %v8006
        %v8015 = vcvt.s32.f32 %v8007
        %v8016 = vcvt.s32.f32 %v8008
        %v8017 = vcvt.s32.f32 %v8009
        %v8018 = vcvt.s32.f32 %v8010
        %v8019 = vcvt.s32.f32 %v8011
        %v8020 = vcvt.s32.f32 %v8012
        %v8021 = vcvt.s32.f32 %v8013
        %v8022 = vld [vmem:[#allocation9] sm:$0xf]
        %v8023 = vld [vmem:[#allocation9 + $0x4] sm:$0xf]
        %v8024 = vld [vmem:[#allocation9 + $0x8] sm:$0xf]
        %v8025 = vld [vmem:[#allocation9 + $0xc] sm:$0xf]
        %v8026 = vld [vmem:[#allocation9 + $0x10] sm:$0xf]
        %v8027 = vld [vmem:[#allocation9 + $0x14] sm:$0xf]
        %v8028 = vld [vmem:[#allocation9 + $0x18] sm:$0xf]
        %v8029 = vld [vmem:[#allocation9 + $0x1c] sm:$0xf]
        %v8030 = vld [vmem:[#allocation9 + $0x20] sm:$0xf]
        %v8031 = vld [vmem:[#allocation9 + $0x24] sm:$0xf]
        %v8032 = vld [vmem:[#allocation9 + $0x28] sm:$0xf]
        %v8033 = vld [vmem:[#allocation9 + $0x2c] sm:$0xf]
        %v8034 = vld [vmem:[#allocation9 + $0x30] sm:$0xf]
        %v8035 = vld [vmem:[#allocation9 + $0x34] sm:$0xf]
        %v8036 = vld [vmem:[#allocation9 + $0x38] sm:$0xf]
        %v8037 = vld [vmem:[#allocation9 + $0x3c] sm:$0xf]
        %v8038 = vld [vmem:[#allocation9 + $0x40] sm:$0xf]
        %v8039 = vld [vmem:[#allocation9 + $0x44] sm:$0xf]
        %v8040 = vld [vmem:[#allocation9 + $0x48] sm:$0xf]
        %v8041 = vld [vmem:[#allocation9 + $0x4c] sm:$0xf]
        %v8042 = vld [vmem:[#allocation9 + $0x50] sm:$0xf]
        %v8043 = vld [vmem:[#allocation9 + $0x54] sm:$0xf]
        %v8044 = vld [vmem:[#allocation9 + $0x58] sm:$0xf]
        %v8045 = vld [vmem:[#allocation9 + $0x5c] sm:$0xf]
        %v8046 = vld [vmem:[#allocation9 + $0x60] sm:$0xf]
        %v8047 = vld [vmem:[#allocation9 + $0x64] sm:$0xf]
        %v8048 = vld [vmem:[#allocation9 + $0x68] sm:$0xf]
        %v8049 = vld [vmem:[#allocation9 + $0x6c] sm:$0xf]
        %v8050 = vld [vmem:[#allocation9 + $0x70] sm:$0xf]
        %v8051 = vld [vmem:[#allocation9 + $0x74] sm:$0xf]
        %v8052 = vld [vmem:[#allocation9 + $0x78] sm:$0xf]
        %v8053 = vld [vmem:[#allocation9 + $0x7c] sm:$0xf]
        %v8086 = vunpack.c.l.b16 %v8022
        %v8087 = vunpack.c.l.b16 %v8023
        %v8088 = vunpack.c.l.b16 %v8024
        %v8089 = vunpack.c.l.b16 %v8025
        %v8090 = vunpack.c.l.b16 %v8026
        %v8091 = vunpack.c.l.b16 %v8027
        %v8092 = vunpack.c.l.b16 %v8028
        %v8093 = vunpack.c.l.b16 %v8029
        %v8094 = vunpack.c.l.b16 %v8030
        %v8095 = vunpack.c.l.b16 %v8031
        %v8096 = vunpack.c.l.b16 %v8032
        %v8097 = vunpack.c.l.b16 %v8033
        %v8098 = vunpack.c.l.b16 %v8034
        %v8099 = vunpack.c.l.b16 %v8035
        %v8100 = vunpack.c.l.b16 %v8036
        %v8101 = vunpack.c.l.b16 %v8037
        %v8102 = vunpack.c.l.b16 %v8038
        %v8103 = vunpack.c.l.b16 %v8039
        %v8104 = vunpack.c.l.b16 %v8040
        %v8105 = vunpack.c.l.b16 %v8041
        %v8106 = vunpack.c.l.b16 %v8042
        %v8107 = vunpack.c.l.b16 %v8043
        %v8108 = vunpack.c.l.b16 %v8044
        %v8109 = vunpack.c.l.b16 %v8045
        %v8110 = vunpack.c.l.b16 %v8046
        %v8111 = vunpack.c.l.b16 %v8047
        %v8112 = vunpack.c.l.b16 %v8048
        %v8113 = vunpack.c.l.b16 %v8049
        %v8114 = vunpack.c.l.b16 %v8050
        %v8115 = vunpack.c.l.b16 %v8051
        %v8116 = vunpack.c.l.b16 %v8052
        %v8117 = vunpack.c.l.b16 %v8053
        %v8118 = vpack.c.b16 %v8087, %v8086
        %v8119 = vpack.c.b16 %v8089, %v8088
        %v8120 = vpack.c.b16 %v8091, %v8090
        %v8121 = vpack.c.b16 %v8093, %v8092
        %v8122 = vpack.c.b16 %v8095, %v8094
        %v8123 = vpack.c.b16 %v8097, %v8096
        %v8124 = vpack.c.b16 %v8099, %v8098
        %v8125 = vpack.c.b16 %v8101, %v8100
        %v8126 = vpack.c.b16 %v8103, %v8102
        %v8127 = vpack.c.b16 %v8105, %v8104
        %v8128 = vpack.c.b16 %v8107, %v8106
        %v8129 = vpack.c.b16 %v8109, %v8108
        %v8130 = vpack.c.b16 %v8111, %v8110
        %v8131 = vpack.c.b16 %v8113, %v8112
        %v8132 = vpack.c.b16 %v8115, %v8114
        %v8133 = vpack.c.b16 %v8117, %v8116
        %8150 = vmatpush.bf16.msra.mxu0 %v8125
        %8151 = vmatpush.bf16.msra.mxu0 %v8124
        %8152 = vmatpush.bf16.msra.mxu0 %v8123
        %8153 = vmatpush.bf16.msra.mxu0 %v8122
        %8154 = vmatpush.bf16.msra.mxu0 %v8121
        %8155 = vmatpush.bf16.msra.mxu0 %v8120
        %8156 = vmatpush.bf16.msra.mxu0 %v8119
        %8157 = vmatpush.bf16.msra.mxu0 %v8118
        %8158 = vmatmul.bf16.gmra.mxu0 %v7866
        %v8159 = vpop.f32.mrf.mxu0
        %v8160 = vadd.f32 0.0, %v8159
        %v8161 = vpop.f32.mrf.mxu0
        %v8162 = vadd.f32 0.0, %v8161
        %8163 = vmatmul.bf16.gmra.mxu0 %v7868
        %v8164 = vpop.f32.mrf.mxu0
        %v8165 = vadd.f32 0.0, %v8164
        %v8166 = vpop.f32.mrf.mxu0
        %v8167 = vadd.f32 0.0, %v8166
        %8168 = vmatmul.bf16.gmra.mxu0 %v7870
        %v8169 = vpop.f32.mrf.mxu0
        %v8170 = vadd.f32 0.0, %v8169
        %v8171 = vpop.f32.mrf.mxu0
        %v8172 = vadd.f32 0.0, %v8171
        %8173 = vmatmul.bf16.gmra.mxu0 %v7872
        %v8174 = vpop.f32.mrf.mxu0
        %v8175 = vadd.f32 0.0, %v8174
        %v8176 = vpop.f32.mrf.mxu0
        %v8177 = vadd.f32 0.0, %v8176
        %8178 = vdwg.mxu0
        %8179 = vmatpush.bf16.msra.mxu0 %v8133
        %8180 = vmatpush.bf16.msra.mxu0 %v8132
        %8181 = vmatpush.bf16.msra.mxu0 %v8131
        %8182 = vmatpush.bf16.msra.mxu0 %v8130
        %8183 = vmatpush.bf16.msra.mxu0 %v8129
        %8184 = vmatpush.bf16.msra.mxu0 %v8128
        %8185 = vmatpush.bf16.msra.mxu0 %v8127
        %8186 = vmatpush.bf16.msra.mxu0 %v8126
        %8187 = vmatmul.bf16.gmra.mxu0 %v7867
        %v8188 = vpop.f32.mrf.mxu0
        %v8189 = vadd.f32 %v8160, %v8188
        %v8190 = vpop.f32.mrf.mxu0
        %v8191 = vadd.f32 %v8162, %v8190
        %8192 = vmatmul.bf16.gmra.mxu0 %v7869
        %v8193 = vpop.f32.mrf.mxu0
        %v8194 = vadd.f32 %v8165, %v8193
        %v8195 = vpop.f32.mrf.mxu0
        %v8196 = vadd.f32 %v8167, %v8195
        %8197 = vmatmul.bf16.gmra.mxu0 %v7871
        %v8198 = vpop.f32.mrf.mxu0
        %v8199 = vadd.f32 %v8170, %v8198
        %v8200 = vpop.f32.mrf.mxu0
        %v8201 = vadd.f32 %v8172, %v8200
        %8202 = vmatmul.bf16.gmra.mxu0 %v7873
        %v8203 = vpop.f32.mrf.mxu0
        %v8204 = vadd.f32 %v8175, %v8203
        %v8205 = vpop.f32.mrf.mxu0
        %v8206 = vadd.f32 %v8177, %v8205
        %8207 = vdwg.mxu0
        %s8208 = scalar_lea.vmem [#allocation9], 128
        %v8209 = vld [vmem:[%s8208] sm:$0xf]
        %v8210 = vld [vmem:[%s8208 + $0x4] sm:$0xf]
        %v8211 = vld [vmem:[%s8208 + $0x8] sm:$0xf]
        %v8212 = vld [vmem:[%s8208 + $0xc] sm:$0xf]
        %v8213 = vld [vmem:[%s8208 + $0x10] sm:$0xf]
        %v8214 = vld [vmem:[%s8208 + $0x14] sm:$0xf]
        %v8215 = vld [vmem:[%s8208 + $0x18] sm:$0xf]
        %v8216 = vld [vmem:[%s8208 + $0x1c] sm:$0xf]
        %v8217 = vld [vmem:[%s8208 + $0x20] sm:$0xf]
        %v8218 = vld [vmem:[%s8208 + $0x24] sm:$0xf]
        %v8219 = vld [vmem:[%s8208 + $0x28] sm:$0xf]
        %v8220 = vld [vmem:[%s8208 + $0x2c] sm:$0xf]
        %v8221 = vld [vmem:[%s8208 + $0x30] sm:$0xf]
        %v8222 = vld [vmem:[%s8208 + $0x34] sm:$0xf]
        %v8223 = vld [vmem:[%s8208 + $0x38] sm:$0xf]
        %v8224 = vld [vmem:[%s8208 + $0x3c] sm:$0xf]
        %v8225 = vld [vmem:[%s8208 + $0x40] sm:$0xf]
        %v8226 = vld [vmem:[%s8208 + $0x44] sm:$0xf]
        %v8227 = vld [vmem:[%s8208 + $0x48] sm:$0xf]
        %v8228 = vld [vmem:[%s8208 + $0x4c] sm:$0xf]
        %v8229 = vld [vmem:[%s8208 + $0x50] sm:$0xf]
        %v8230 = vld [vmem:[%s8208 + $0x54] sm:$0xf]
        %v8231 = vld [vmem:[%s8208 + $0x58] sm:$0xf]
        %v8232 = vld [vmem:[%s8208 + $0x5c] sm:$0xf]
        %v8233 = vld [vmem:[%s8208 + $0x60] sm:$0xf]
        %v8234 = vld [vmem:[%s8208 + $0x64] sm:$0xf]
        %v8235 = vld [vmem:[%s8208 + $0x68] sm:$0xf]
        %v8236 = vld [vmem:[%s8208 + $0x6c] sm:$0xf]
        %v8237 = vld [vmem:[%s8208 + $0x70] sm:$0xf]
        %v8238 = vld [vmem:[%s8208 + $0x74] sm:$0xf]
        %v8239 = vld [vmem:[%s8208 + $0x78] sm:$0xf]
        %v8240 = vld [vmem:[%s8208 + $0x7c] sm:$0xf]
        %v8273 = vunpack.c.l.b16 %v8209
        %v8274 = vunpack.c.l.b16 %v8210
        %v8275 = vunpack.c.l.b16 %v8211
        %v8276 = vunpack.c.l.b16 %v8212
        %v8277 = vunpack.c.l.b16 %v8213
        %v8278 = vunpack.c.l.b16 %v8214
        %v8279 = vunpack.c.l.b16 %v8215
        %v8280 = vunpack.c.l.b16 %v8216
        %v8281 = vunpack.c.l.b16 %v8217
        %v8282 = vunpack.c.l.b16 %v8218
        %v8283 = vunpack.c.l.b16 %v8219
        %v8284 = vunpack.c.l.b16 %v8220
        %v8285 = vunpack.c.l.b16 %v8221
        %v8286 = vunpack.c.l.b16 %v8222
        %v8287 = vunpack.c.l.b16 %v8223
        %v8288 = vunpack.c.l.b16 %v8224
        %v8289 = vunpack.c.l.b16 %v8225
        %v8290 = vunpack.c.l.b16 %v8226
        %v8291 = vunpack.c.l.b16 %v8227
        %v8292 = vunpack.c.l.b16 %v8228
        %v8293 = vunpack.c.l.b16 %v8229
        %v8294 = vunpack.c.l.b16 %v8230
        %v8295 = vunpack.c.l.b16 %v8231
        %v8296 = vunpack.c.l.b16 %v8232
        %v8297 = vunpack.c.l.b16 %v8233
        %v8298 = vunpack.c.l.b16 %v8234
        %v8299 = vunpack.c.l.b16 %v8235
        %v8300 = vunpack.c.l.b16 %v8236
        %v8301 = vunpack.c.l.b16 %v8237
        %v8302 = vunpack.c.l.b16 %v8238
        %v8303 = vunpack.c.l.b16 %v8239
        %v8304 = vunpack.c.l.b16 %v8240
        %v8305 = vpack.c.b16 %v8274, %v8273
        %v8306 = vpack.c.b16 %v8276, %v8275
        %v8307 = vpack.c.b16 %v8278, %v8277
        %v8308 = vpack.c.b16 %v8280, %v8279
        %v8309 = vpack.c.b16 %v8282, %v8281
        %v8310 = vpack.c.b16 %v8284, %v8283
        %v8311 = vpack.c.b16 %v8286, %v8285
        %v8312 = vpack.c.b16 %v8288, %v8287
        %v8313 = vpack.c.b16 %v8290, %v8289
        %v8314 = vpack.c.b16 %v8292, %v8291
        %v8315 = vpack.c.b16 %v8294, %v8293
        %v8316 = vpack.c.b16 %v8296, %v8295
        %v8317 = vpack.c.b16 %v8298, %v8297
        %v8318 = vpack.c.b16 %v8300, %v8299
        %v8319 = vpack.c.b16 %v8302, %v8301
        %v8320 = vpack.c.b16 %v8304, %v8303
        %8337 = vmatpush.bf16.msra.mxu0 %v8312
        %8338 = vmatpush.bf16.msra.mxu0 %v8311
        %8339 = vmatpush.bf16.msra.mxu0 %v8310
        %8340 = vmatpush.bf16.msra.mxu0 %v8309
        %8341 = vmatpush.bf16.msra.mxu0 %v8308
        %8342 = vmatpush.bf16.msra.mxu0 %v8307
        %8343 = vmatpush.bf16.msra.mxu0 %v8306
        %8344 = vmatpush.bf16.msra.mxu0 %v8305
        %8345 = vmatmul.bf16.gmra.mxu0 %v7866
        %v8346 = vpop.f32.mrf.mxu0
        %v8347 = vadd.f32 0.0, %v8346
        %v8348 = vpop.f32.mrf.mxu0
        %v8349 = vadd.f32 0.0, %v8348
        %8350 = vmatmul.bf16.gmra.mxu0 %v7868
        %v8351 = vpop.f32.mrf.mxu0
        %v8352 = vadd.f32 0.0, %v8351
        %v8353 = vpop.f32.mrf.mxu0
        %v8354 = vadd.f32 0.0, %v8353
        %8355 = vmatmul.bf16.gmra.mxu0 %v7870
        %v8356 = vpop.f32.mrf.mxu0
        %v8357 = vadd.f32 0.0, %v8356
        %v8358 = vpop.f32.mrf.mxu0
        %v8359 = vadd.f32 0.0, %v8358
        %8360 = vmatmul.bf16.gmra.mxu0 %v7872
        %v8361 = vpop.f32.mrf.mxu0
        %v8362 = vadd.f32 0.0, %v8361
        %v8363 = vpop.f32.mrf.mxu0
        %v8364 = vadd.f32 0.0, %v8363
        %8365 = vdwg.mxu0
        %8366 = vmatpush.bf16.msra.mxu0 %v8320
        %8367 = vmatpush.bf16.msra.mxu0 %v8319
        %8368 = vmatpush.bf16.msra.mxu0 %v8318
        %8369 = vmatpush.bf16.msra.mxu0 %v8317
        %8370 = vmatpush.bf16.msra.mxu0 %v8316
        %8371 = vmatpush.bf16.msra.mxu0 %v8315
        %8372 = vmatpush.bf16.msra.mxu0 %v8314
        %8373 = vmatpush.bf16.msra.mxu0 %v8313
        %8374 = vmatmul.bf16.gmra.mxu0 %v7867
        %v8375 = vpop.f32.mrf.mxu0
        %v8376 = vadd.f32 %v8347, %v8375
        %v8377 = vpop.f32.mrf.mxu0
        %v8378 = vadd.f32 %v8349, %v8377
        %8379 = vmatmul.bf16.gmra.mxu0 %v7869
        %v8380 = vpop.f32.mrf.mxu0
        %v8381 = vadd.f32 %v8352, %v8380
        %v8382 = vpop.f32.mrf.mxu0
        %v8383 = vadd.f32 %v8354, %v8382
        %8384 = vmatmul.bf16.gmra.mxu0 %v7871
        %v8385 = vpop.f32.mrf.mxu0
        %v8386 = vadd.f32 %v8357, %v8385
        %v8387 = vpop.f32.mrf.mxu0
        %v8388 = vadd.f32 %v8359, %v8387
        %8389 = vmatmul.bf16.gmra.mxu0 %v7873
        %v8390 = vpop.f32.mrf.mxu0
        %v8391 = vadd.f32 %v8362, %v8390
        %v8392 = vpop.f32.mrf.mxu0
        %v8393 = vadd.f32 %v8364, %v8392
        %8394 = vdwg.mxu0
        %s8395 = scalar_lea.vmem [#allocation9], 256
        %v8396 = vld [vmem:[%s8395] sm:$0xf]
        %v8397 = vld [vmem:[%s8395 + $0x4] sm:$0xf]
        %v8398 = vld [vmem:[%s8395 + $0x8] sm:$0xf]
        %v8399 = vld [vmem:[%s8395 + $0xc] sm:$0xf]
        %v8400 = vld [vmem:[%s8395 + $0x10] sm:$0xf]
        %v8401 = vld [vmem:[%s8395 + $0x14] sm:$0xf]
        %v8402 = vld [vmem:[%s8395 + $0x18] sm:$0xf]
        %v8403 = vld [vmem:[%s8395 + $0x1c] sm:$0xf]
        %v8404 = vld [vmem:[%s8395 + $0x20] sm:$0xf]
        %v8405 = vld [vmem:[%s8395 + $0x24] sm:$0xf]
        %v8406 = vld [vmem:[%s8395 + $0x28] sm:$0xf]
        %v8407 = vld [vmem:[%s8395 + $0x2c] sm:$0xf]
        %v8408 = vld [vmem:[%s8395 + $0x30] sm:$0xf]
        %v8409 = vld [vmem:[%s8395 + $0x34] sm:$0xf]
        %v8410 = vld [vmem:[%s8395 + $0x38] sm:$0xf]
        %v8411 = vld [vmem:[%s8395 + $0x3c] sm:$0xf]
        %v8412 = vld [vmem:[%s8395 + $0x40] sm:$0xf]
        %v8413 = vld [vmem:[%s8395 + $0x44] sm:$0xf]
        %v8414 = vld [vmem:[%s8395 + $0x48] sm:$0xf]
        %v8415 = vld [vmem:[%s8395 + $0x4c] sm:$0xf]
        %v8416 = vld [vmem:[%s8395 + $0x50] sm:$0xf]
        %v8417 = vld [vmem:[%s8395 + $0x54] sm:$0xf]
        %v8418 = vld [vmem:[%s8395 + $0x58] sm:$0xf]
        %v8419 = vld [vmem:[%s8395 + $0x5c] sm:$0xf]
        %v8420 = vld [vmem:[%s8395 + $0x60] sm:$0xf]
        %v8421 = vld [vmem:[%s8395 + $0x64] sm:$0xf]
        %v8422 = vld [vmem:[%s8395 + $0x68] sm:$0xf]
        %v8423 = vld [vmem:[%s8395 + $0x6c] sm:$0xf]
        %v8424 = vld [vmem:[%s8395 + $0x70] sm:$0xf]
        %v8425 = vld [vmem:[%s8395 + $0x74] sm:$0xf]
        %v8426 = vld [vmem:[%s8395 + $0x78] sm:$0xf]
        %v8427 = vld [vmem:[%s8395 + $0x7c] sm:$0xf]
        %s8428 = scalar_lea.vmem [#allocation9], 384
        %v8429 = vld [vmem:[%s8428] sm:$0xf]
        %v8430 = vld [vmem:[%s8428 + $0x4] sm:$0xf]
        %v8431 = vld [vmem:[%s8428 + $0x8] sm:$0xf]
        %v8432 = vld [vmem:[%s8428 + $0xc] sm:$0xf]
        %v8433 = vld [vmem:[%s8428 + $0x10] sm:$0xf]
        %v8434 = vld [vmem:[%s8428 + $0x14] sm:$0xf]
        %v8435 = vld [vmem:[%s8428 + $0x18] sm:$0xf]
        %v8436 = vld [vmem:[%s8428 + $0x1c] sm:$0xf]
        %v8437 = vld [vmem:[%s8428 + $0x20] sm:$0xf]
        %v8438 = vld [vmem:[%s8428 + $0x24] sm:$0xf]
        %v8439 = vld [vmem:[%s8428 + $0x28] sm:$0xf]
        %v8440 = vld [vmem:[%s8428 + $0x2c] sm:$0xf]
        %v8441 = vld [vmem:[%s8428 + $0x30] sm:$0xf]
        %v8442 = vld [vmem:[%s8428 + $0x34] sm:$0xf]
        %v8443 = vld [vmem:[%s8428 + $0x38] sm:$0xf]
        %v8444 = vld [vmem:[%s8428 + $0x3c] sm:$0xf]
        %v8445 = vld [vmem:[%s8428 + $0x40] sm:$0xf]
        %v8446 = vld [vmem:[%s8428 + $0x44] sm:$0xf]
        %v8447 = vld [vmem:[%s8428 + $0x48] sm:$0xf]
        %v8448 = vld [vmem:[%s8428 + $0x4c] sm:$0xf]
        %v8449 = vld [vmem:[%s8428 + $0x50] sm:$0xf]
        %v8450 = vld [vmem:[%s8428 + $0x54] sm:$0xf]
        %v8451 = vld [vmem:[%s8428 + $0x58] sm:$0xf]
        %v8452 = vld [vmem:[%s8428 + $0x5c] sm:$0xf]
        %v8453 = vld [vmem:[%s8428 + $0x60] sm:$0xf]
        %v8454 = vld [vmem:[%s8428 + $0x64] sm:$0xf]
        %v8455 = vld [vmem:[%s8428 + $0x68] sm:$0xf]
        %v8456 = vld [vmem:[%s8428 + $0x6c] sm:$0xf]
        %v8457 = vld [vmem:[%s8428 + $0x70] sm:$0xf]
        %v8458 = vld [vmem:[%s8428 + $0x74] sm:$0xf]
        %v8459 = vld [vmem:[%s8428 + $0x78] sm:$0xf]
        %v8460 = vld [vmem:[%s8428 + $0x7c] sm:$0xf]
        %v8493 = vunpack.c.l.b16 %v8429
        %v8494 = vunpack.c.l.b16 %v8430
        %v8495 = vunpack.c.l.b16 %v8431
        %v8496 = vunpack.c.l.b16 %v8432
        %v8497 = vunpack.c.l.b16 %v8433
        %v8498 = vunpack.c.l.b16 %v8434
        %v8499 = vunpack.c.l.b16 %v8435
        %v8500 = vunpack.c.l.b16 %v8436
        %v8501 = vunpack.c.l.b16 %v8437
        %v8502 = vunpack.c.l.b16 %v8438
        %v8503 = vunpack.c.l.b16 %v8439
        %v8504 = vunpack.c.l.b16 %v8440
        %v8505 = vunpack.c.l.b16 %v8441
        %v8506 = vunpack.c.l.b16 %v8442
        %v8507 = vunpack.c.l.b16 %v8443
        %v8508 = vunpack.c.l.b16 %v8444
        %v8509 = vunpack.c.l.b16 %v8445
        %v8510 = vunpack.c.l.b16 %v8446
        %v8511 = vunpack.c.l.b16 %v8447
        %v8512 = vunpack.c.l.b16 %v8448
        %v8513 = vunpack.c.l.b16 %v8449
        %v8514 = vunpack.c.l.b16 %v8450
        %v8515 = vunpack.c.l.b16 %v8451
        %v8516 = vunpack.c.l.b16 %v8452
        %v8517 = vunpack.c.l.b16 %v8453
        %v8518 = vunpack.c.l.b16 %v8454
        %v8519 = vunpack.c.l.b16 %v8455
        %v8520 = vunpack.c.l.b16 %v8456
        %v8521 = vunpack.c.l.b16 %v8457
        %v8522 = vunpack.c.l.b16 %v8458
        %v8523 = vunpack.c.l.b16 %v8459
        %v8524 = vunpack.c.l.b16 %v8460
        %v8525 = vpack.c.b16 %v8494, %v8493
        %v8526 = vpack.c.b16 %v8496, %v8495
        %v8527 = vpack.c.b16 %v8498, %v8497
        %v8528 = vpack.c.b16 %v8500, %v8499
        %v8529 = vpack.c.b16 %v8502, %v8501
        %v8530 = vpack.c.b16 %v8504, %v8503
        %v8531 = vpack.c.b16 %v8506, %v8505
        %v8532 = vpack.c.b16 %v8508, %v8507
        %v8533 = vpack.c.b16 %v8510, %v8509
        %v8534 = vpack.c.b16 %v8512, %v8511
        %v8535 = vpack.c.b16 %v8514, %v8513
        %v8536 = vpack.c.b16 %v8516, %v8515
        %v8537 = vpack.c.b16 %v8518, %v8517
        %v8538 = vpack.c.b16 %v8520, %v8519
        %v8539 = vpack.c.b16 %v8522, %v8521
        %v8540 = vpack.c.b16 %v8524, %v8523
        %8557 = vmatpush.bf16.msra.mxu0 %v8532
        %8558 = vmatpush.bf16.msra.mxu0 %v8531
        %8559 = vmatpush.bf16.msra.mxu0 %v8530
        %8560 = vmatpush.bf16.msra.mxu0 %v8529
        %8561 = vmatpush.bf16.msra.mxu0 %v8528
        %8562 = vmatpush.bf16.msra.mxu0 %v8527
        %8563 = vmatpush.bf16.msra.mxu0 %v8526
        %8564 = vmatpush.bf16.msra.mxu0 %v8525
        %8565 = vmatmul.bf16.gmra.mxu0 %v7866
        %v8566 = vpop.f32.mrf.mxu0
        %v8567 = vadd.f32 0.0, %v8566
        %v8568 = vpop.f32.mrf.mxu0
        %v8569 = vadd.f32 0.0, %v8568
        %8570 = vmatmul.bf16.gmra.mxu0 %v7868
        %v8571 = vpop.f32.mrf.mxu0
        %v8572 = vadd.f32 0.0, %v8571
        %v8573 = vpop.f32.mrf.mxu0
        %v8574 = vadd.f32 0.0, %v8573
        %8575 = vmatmul.bf16.gmra.mxu0 %v7870
        %v8576 = vpop.f32.mrf.mxu0
        %v8577 = vadd.f32 0.0, %v8576
        %v8578 = vpop.f32.mrf.mxu0
        %v8579 = vadd.f32 0.0, %v8578
        %8580 = vmatmul.bf16.gmra.mxu0 %v7872
        %v8581 = vpop.f32.mrf.mxu0
        %v8582 = vadd.f32 0.0, %v8581
        %v8583 = vpop.f32.mrf.mxu0
        %v8584 = vadd.f32 0.0, %v8583
        %8585 = vdwg.mxu0
        %8586 = vmatpush.bf16.msra.mxu0 %v8540
        %8587 = vmatpush.bf16.msra.mxu0 %v8539
        %8588 = vmatpush.bf16.msra.mxu0 %v8538
        %8589 = vmatpush.bf16.msra.mxu0 %v8537
        %8590 = vmatpush.bf16.msra.mxu0 %v8536
        %8591 = vmatpush.bf16.msra.mxu0 %v8535
        %8592 = vmatpush.bf16.msra.mxu0 %v8534
        %8593 = vmatpush.bf16.msra.mxu0 %v8533
        %8594 = vmatmul.bf16.gmra.mxu0 %v7867
        %v8595 = vpop.f32.mrf.mxu0
        %v8596 = vadd.f32 %v8567, %v8595
        %v8597 = vpop.f32.mrf.mxu0
        %v8598 = vadd.f32 %v8569, %v8597
        %8599 = vmatmul.bf16.gmra.mxu0 %v7869
        %v8600 = vpop.f32.mrf.mxu0
        %v8601 = vadd.f32 %v8572, %v8600
        %v8602 = vpop.f32.mrf.mxu0
        %v8603 = vadd.f32 %v8574, %v8602
        %8604 = vmatmul.bf16.gmra.mxu0 %v7871
        %v8605 = vpop.f32.mrf.mxu0
        %v8606 = vadd.f32 %v8577, %v8605
        %v8607 = vpop.f32.mrf.mxu0
        %v8608 = vadd.f32 %v8579, %v8607
        %8609 = vmatmul.bf16.gmra.mxu0 %v7873
        %v8610 = vpop.f32.mrf.mxu0
        %v8611 = vadd.f32 %v8582, %v8610
        %v8612 = vpop.f32.mrf.mxu0
        %v8613 = vadd.f32 %v8584, %v8612
        %8614 = vdwg.mxu0
        %v8615 = vld [vmem:[#allocation10] sm:$0x1]
        %v8616 = vrot.slane %v8596, 7
        %v8617 = vrot.slane %v8598, 7
        %v8618 = vrot.slane %v8601, 7
        %v8619 = vrot.slane %v8603, 7
        %v8620 = vrot.slane %v8606, 7
        %v8621 = vrot.slane %v8608, 7
        %v8622 = vrot.slane %v8611, 7
        %v8623 = vrot.slane %v8613, 7
        %v8624 = vsel %vm3130, %v8622, %v8623
        %v8625 = vsel %vm3130, %v8621, %v8622
        %v8626 = vsel %vm3130, %v8620, %v8621
        %v8627 = vsel %vm3130, %v8619, %v8620
        %v8628 = vsel %vm3130, %v8618, %v8619
        %v8629 = vsel %vm3130, %v8617, %v8618
        %v8630 = vsel %vm3130, %v8616, %v8617
        %v8631 = vsel %vm3130, %v8623, %v8616
        %v8632 = vmul.f32 %v8631, %v7990
        %v8633 = vmul.f32 %v8630, %v7991
        %v8634 = vmul.f32 %v8629, %v7992
        %v8635 = vmul.f32 %v8628, %v7993
        %v8636 = vmul.f32 %v8627, %v7994
        %v8637 = vmul.f32 %v8626, %v7995
        %v8638 = vmul.f32 %v8625, %v7996
        %v8639 = vmul.f32 %v8624, %v7997
        %v8640 = vadd.f32 %v8632, %v8376
        %v8641 = vadd.f32 %v8633, %v8378
        %v8642 = vadd.f32 %v8634, %v8381
        %v8643 = vadd.f32 %v8635, %v8383
        %v8644 = vadd.f32 %v8636, %v8386
        %v8645 = vadd.f32 %v8637, %v8388
        %v8646 = vadd.f32 %v8638, %v8391
        %v8647 = vadd.f32 %v8639, %v8393
        %v8649 = vperm.slane %v8615, 0
        %v8651 = vadd.f32 %v8640, %v8649
        %v8652 = vadd.f32 %v8641, %v8649
        %v8653 = vadd.f32 %v8642, %v8649
        %v8654 = vadd.f32 %v8643, %v8649
        %v8655 = vadd.f32 %v8644, %v8649
        %v8656 = vadd.f32 %v8645, %v8649
        %v8657 = vadd.f32 %v8646, %v8649
        %v8658 = vadd.f32 %v8647, %v8649
        %v8659 = vrot.slane %v8189, 1
        %v8660 = vrot.slane %v8191, 1
        %v8661 = vrot.slane %v8194, 1
        %v8662 = vrot.slane %v8196, 1
        %v8663 = vrot.slane %v8199, 1
        %v8664 = vrot.slane %v8201, 1
        %v8665 = vrot.slane %v8204, 1
        %v8666 = vrot.slane %v8206, 1
        %v8667 = vsel %vm3168, %v8665, %v8666
        %v8668 = vsel %vm3168, %v8664, %v8665
        %v8669 = vsel %vm3168, %v8663, %v8664
        %v8670 = vsel %vm3168, %v8662, %v8663
        %v8671 = vsel %vm3168, %v8661, %v8662
        %v8672 = vsel %vm3168, %v8660, %v8661
        %v8673 = vsel %vm3168, %v8659, %v8660
        %v8674 = vsel %vm3168, %v8666, %v8659
        %v8675 = vmul.f32 %v8673, %v8014
        %v8676 = vmul.f32 %v8672, %v8015
        %v8677 = vmul.f32 %v8671, %v8016
        %v8678 = vmul.f32 %v8670, %v8017
        %v8679 = vmul.f32 %v8669, %v8018
        %v8680 = vmul.f32 %v8668, %v8019
        %v8681 = vmul.f32 %v8667, %v8020
        %v8682 = vmul.f32 %v8674, %v8021
        %v8715 = vunpack.c.l.b16 %v8396
        %v8716 = vunpack.c.l.b16 %v8397
        %v8717 = vunpack.c.l.b16 %v8398
        %v8718 = vunpack.c.l.b16 %v8399
        %v8719 = vunpack.c.l.b16 %v8400
        %v8720 = vunpack.c.l.b16 %v8401
        %v8721 = vunpack.c.l.b16 %v8402
        %v8722 = vunpack.c.l.b16 %v8403
        %v8723 = vunpack.c.l.b16 %v8404
        %v8724 = vunpack.c.l.b16 %v8405
        %v8725 = vunpack.c.l.b16 %v8406
        %v8726 = vunpack.c.l.b16 %v8407
        %v8727 = vunpack.c.l.b16 %v8408
        %v8728 = vunpack.c.l.b16 %v8409
        %v8729 = vunpack.c.l.b16 %v8410
        %v8730 = vunpack.c.l.b16 %v8411
        %v8731 = vunpack.c.l.b16 %v8412
        %v8732 = vunpack.c.l.b16 %v8413
        %v8733 = vunpack.c.l.b16 %v8414
        %v8734 = vunpack.c.l.b16 %v8415
        %v8735 = vunpack.c.l.b16 %v8416
        %v8736 = vunpack.c.l.b16 %v8417
        %v8737 = vunpack.c.l.b16 %v8418
        %v8738 = vunpack.c.l.b16 %v8419
        %v8739 = vunpack.c.l.b16 %v8420
        %v8740 = vunpack.c.l.b16 %v8421
        %v8741 = vunpack.c.l.b16 %v8422
        %v8742 = vunpack.c.l.b16 %v8423
        %v8743 = vunpack.c.l.b16 %v8424
        %v8744 = vunpack.c.l.b16 %v8425
        %v8745 = vunpack.c.l.b16 %v8426
        %v8746 = vunpack.c.l.b16 %v8427
        %v8747 = vpack.c.b16 %v8716, %v8715
        %v8748 = vpack.c.b16 %v8718, %v8717
        %v8749 = vpack.c.b16 %v8720, %v8719
        %v8750 = vpack.c.b16 %v8722, %v8721
        %v8751 = vpack.c.b16 %v8724, %v8723
        %v8752 = vpack.c.b16 %v8726, %v8725
        %v8753 = vpack.c.b16 %v8728, %v8727
        %v8754 = vpack.c.b16 %v8730, %v8729
        %v8755 = vpack.c.b16 %v8732, %v8731
        %v8756 = vpack.c.b16 %v8734, %v8733
        %v8757 = vpack.c.b16 %v8736, %v8735
        %v8758 = vpack.c.b16 %v8738, %v8737
        %v8759 = vpack.c.b16 %v8740, %v8739
        %v8760 = vpack.c.b16 %v8742, %v8741
        %v8761 = vpack.c.b16 %v8744, %v8743
        %v8762 = vpack.c.b16 %v8746, %v8745
        %8779 = vmatpush.bf16.msra.mxu0 %v8754
        %8780 = vmatpush.bf16.msra.mxu0 %v8753
        %8781 = vmatpush.bf16.msra.mxu0 %v8752
        %8782 = vmatpush.bf16.msra.mxu0 %v8751
        %8783 = vmatpush.bf16.msra.mxu0 %v8750
        %8784 = vmatpush.bf16.msra.mxu0 %v8749
        %8785 = vmatpush.bf16.msra.mxu0 %v8748
        %8786 = vmatpush.bf16.msra.mxu0 %v8747
        %8787 = vmatmul.bf16.gmra.mxu0 %v7866
        %v8788 = vpop.f32.mrf.mxu0
        %v8789 = vadd.f32 %v8675, %v8788
        %v8790 = vpop.f32.mrf.mxu0
        %v8791 = vadd.f32 %v8676, %v8790
        %8792 = vmatmul.bf16.gmra.mxu0 %v7868
        %v8793 = vpop.f32.mrf.mxu0
        %v8794 = vadd.f32 %v8677, %v8793
        %v8795 = vpop.f32.mrf.mxu0
        %v8796 = vadd.f32 %v8678, %v8795
        %8797 = vmatmul.bf16.gmra.mxu0 %v7870
        %v8798 = vpop.f32.mrf.mxu0
        %v8799 = vadd.f32 %v8679, %v8798
        %v8800 = vpop.f32.mrf.mxu0
        %v8801 = vadd.f32 %v8680, %v8800
        %8802 = vmatmul.bf16.gmra.mxu0 %v7872
        %v8803 = vpop.f32.mrf.mxu0
        %v8804 = vadd.f32 %v8681, %v8803
        %v8805 = vpop.f32.mrf.mxu0
        %v8806 = vadd.f32 %v8682, %v8805
        %8807 = vdwg.mxu0
        %8808 = vmatpush.bf16.msra.mxu0 %v8762
        %8809 = vmatpush.bf16.msra.mxu0 %v8761
        %8810 = vmatpush.bf16.msra.mxu0 %v8760
        %8811 = vmatpush.bf16.msra.mxu0 %v8759
        %8812 = vmatpush.bf16.msra.mxu0 %v8758
        %8813 = vmatpush.bf16.msra.mxu0 %v8757
        %8814 = vmatpush.bf16.msra.mxu0 %v8756
        %8815 = vmatpush.bf16.msra.mxu0 %v8755
        %8816 = vmatmul.bf16.gmra.mxu0 %v7867
        %v8817 = vpop.f32.mrf.mxu0
        %v8818 = vadd.f32 %v8789, %v8817
        %v8819 = vpop.f32.mrf.mxu0
        %v8820 = vadd.f32 %v8791, %v8819
        %8821 = vmatmul.bf16.gmra.mxu0 %v7869
        %v8822 = vpop.f32.mrf.mxu0
        %v8823 = vadd.f32 %v8794, %v8822
        %v8824 = vpop.f32.mrf.mxu0
        %v8825 = vadd.f32 %v8796, %v8824
        %8826 = vmatmul.bf16.gmra.mxu0 %v7871
        %v8827 = vpop.f32.mrf.mxu0
        %v8828 = vadd.f32 %v8799, %v8827
        %v8829 = vpop.f32.mrf.mxu0
        %v8830 = vadd.f32 %v8801, %v8829
        %8831 = vmatmul.bf16.gmra.mxu0 %v7873
        %v8832 = vpop.f32.mrf.mxu0
        %v8833 = vadd.f32 %v8804, %v8832
        %v8834 = vpop.f32.mrf.mxu0
        %v8835 = vadd.f32 %v8806, %v8834
        %8836 = vdwg.mxu0
        %v8837 = vadd.f32 %v8818, %v8649
        %v8838 = vadd.f32 %v8820, %v8649
        %v8839 = vadd.f32 %v8823, %v8649
        %v8840 = vadd.f32 %v8825, %v8649
        %v8841 = vadd.f32 %v8828, %v8649
        %v8842 = vadd.f32 %v8830, %v8649
        %v8843 = vadd.f32 %v8833, %v8649
        %v8844 = vadd.f32 %v8835, %v8649
        %v8845 = vmax.f32 %v8651, 0.0
        %v8846 = vmax.f32 %v8652, 0.0
        %v8847 = vmax.f32 %v8653, 0.0
        %v8848 = vmax.f32 %v8654, 0.0
        %v8849 = vmax.f32 %v8655, 0.0
        %v8850 = vmax.f32 %v8656, 0.0
        %v8851 = vmax.f32 %v8657, 0.0
        %v8852 = vmax.f32 %v8658, 0.0
        %v8853 = vpack.c.bf16 %v8846, %v8845
        %v8854 = vpack.c.bf16 %v8848, %v8847
        %v8855 = vpack.c.bf16 %v8850, %v8849
        %v8856 = vpack.c.bf16 %v8852, %v8851
        %v8857 = vmax.f32 %v8837, 0.0
        %v8858 = vmax.f32 %v8838, 0.0
        %v8859 = vmax.f32 %v8839, 0.0
        %v8860 = vmax.f32 %v8840, 0.0
        %v8861 = vmax.f32 %v8841, 0.0
        %v8862 = vmax.f32 %v8842, 0.0
        %v8863 = vmax.f32 %v8843, 0.0
        %v8864 = vmax.f32 %v8844, 0.0
        %v8865 = vpack.c.bf16 %v8858, %v8857
        %v8866 = vpack.c.bf16 %v8860, %v8859
        %v8867 = vpack.c.bf16 %v8862, %v8861
        %v8868 = vpack.c.bf16 %v8864, %v8863
        %v8869 = vld [vmem:[#allocation12] sm:$0xf]
        %v8870 = vld [vmem:[#allocation12 + $0x4] sm:$0xf]
        %v8871 = vld [vmem:[#allocation12 + $0x8] sm:$0xf]
        %v8872 = vld [vmem:[#allocation12 + $0xc] sm:$0xf]
        %v8873 = vld [vmem:[#allocation12 + $0x10] sm:$0xf]
        %v8874 = vld [vmem:[#allocation12 + $0x14] sm:$0xf]
        %v8875 = vld [vmem:[#allocation12 + $0x18] sm:$0xf]
        %v8876 = vld [vmem:[#allocation12 + $0x1c] sm:$0xf]
        %v8877 = vld [vmem:[#allocation12 + $0x20] sm:$0xf]
        %v8878 = vld [vmem:[#allocation12 + $0x24] sm:$0xf]
        %v8879 = vld [vmem:[#allocation12 + $0x28] sm:$0xf]
        %v8880 = vld [vmem:[#allocation12 + $0x2c] sm:$0xf]
        %v8881 = vld [vmem:[#allocation12 + $0x30] sm:$0xf]
        %v8882 = vld [vmem:[#allocation12 + $0x34] sm:$0xf]
        %v8883 = vld [vmem:[#allocation12 + $0x38] sm:$0xf]
        %v8884 = vld [vmem:[#allocation12 + $0x3c] sm:$0xf]
        %v8885 = vld [vmem:[#allocation13] sm:$0x1]
        %v8887 = vperm.slane %v8885, 0
        %v8905 = vunpack.c.l.b16 %v8869
        %v8906 = vunpack.c.l.b16 %v8870
        %v8907 = vunpack.c.l.b16 %v8871
        %v8908 = vunpack.c.l.b16 %v8872
        %v8909 = vunpack.c.l.b16 %v8873
        %v8910 = vunpack.c.l.b16 %v8874
        %v8911 = vunpack.c.l.b16 %v8875
        %v8912 = vunpack.c.l.b16 %v8876
        %v8913 = vunpack.c.l.b16 %v8877
        %v8914 = vunpack.c.l.b16 %v8878
        %v8915 = vunpack.c.l.b16 %v8879
        %v8916 = vunpack.c.l.b16 %v8880
        %v8917 = vunpack.c.l.b16 %v8881
        %v8918 = vunpack.c.l.b16 %v8882
        %v8919 = vunpack.c.l.b16 %v8883
        %v8920 = vunpack.c.l.b16 %v8884
        %v8921 = vpack.c.b16 %v8906, %v8905
        %v8922 = vpack.c.b16 %v8908, %v8907
        %v8923 = vpack.c.b16 %v8910, %v8909
        %v8924 = vpack.c.b16 %v8912, %v8911
        %v8925 = vpack.c.b16 %v8914, %v8913
        %v8926 = vpack.c.b16 %v8916, %v8915
        %v8927 = vpack.c.b16 %v8918, %v8917
        %v8928 = vpack.c.b16 %v8920, %v8919
        %8937 = vmatpush.bf16.msra.mxu0 %v8928
        %8938 = vmatpush.bf16.msra.mxu0 %v8927
        %8939 = vmatpush.bf16.msra.mxu0 %v8926
        %8940 = vmatpush.bf16.msra.mxu0 %v8925
        %8941 = vmatpush.bf16.msra.mxu0 %v8924
        %8942 = vmatpush.bf16.msra.mxu0 %v8923
        %8943 = vmatpush.bf16.msra.mxu0 %v8922
        %8944 = vmatpush.bf16.msra.mxu0 %v8921
        %8945 = vmatmul.bf16.gmra.mxu0 %v8853
        %v8946 = vpop.f32.mrf.mxu0
        %v8947 = vadd.f32 %v8887, %v8946
        %v8948 = vpop.f32.mrf.mxu0
        %v8949 = vadd.f32 %v8887, %v8948
        %8950 = vmatmul.bf16.gmra.mxu0 %v8854
        %v8951 = vpop.f32.mrf.mxu0
        %v8952 = vadd.f32 %v8887, %v8951
        %v8953 = vpop.f32.mrf.mxu0
        %v8954 = vadd.f32 %v8887, %v8953
        %8955 = vmatmul.bf16.gmra.mxu0 %v8855
        %v8956 = vpop.f32.mrf.mxu0
        %v8957 = vadd.f32 %v8887, %v8956
        %v8958 = vpop.f32.mrf.mxu0
        %v8959 = vadd.f32 %v8887, %v8958
        %8960 = vmatmul.bf16.gmra.mxu0 %v8856
        %v8961 = vpop.f32.mrf.mxu0
        %v8962 = vadd.f32 %v8887, %v8961
        %v8963 = vpop.f32.mrf.mxu0
        %v8964 = vadd.f32 %v8887, %v8963
        %8965 = vdwg.mxu0
        %v8966 = vtanh.pop %v8947
        %v8967 = vtanh.pop %v8949
        %v8968 = vtanh.pop %v8952
        %v8969 = vtanh.pop %v8954
        %v8970 = vtanh.pop %v8957
        %v8971 = vtanh.pop %v8959
        %v8972 = vtanh.pop %v8962
        %v8973 = vtanh.pop %v8964
        %v8974 = vpack.c.bf16 %v8966, %v8966
        %v8975 = vpack.c.bf16 %v8967, %v8967
        %v8976 = vpack.c.bf16 %v8968, %v8968
        %v8977 = vpack.c.bf16 %v8969, %v8969
        %v8978 = vpack.c.bf16 %v8970, %v8970
        %v8979 = vpack.c.bf16 %v8971, %v8971
        %v8980 = vpack.c.bf16 %v8972, %v8972
        %v8981 = vpack.c.bf16 %v8973, %v8973
        %8982 = vst [vmem:[%s497] sm:$0xf] %v8974
        %8983 = vst [vmem:[%s497 + $0x4] sm:$0xf] %v8975
        %8984 = vst [vmem:[%s497 + $0x8] sm:$0xf] %v8976
        %8985 = vst [vmem:[%s497 + $0xc] sm:$0xf] %v8977
        %8986 = vst [vmem:[%s497 + $0x10] sm:$0xf] %v8978
        %8987 = vst [vmem:[%s497 + $0x14] sm:$0xf] %v8979
        %8988 = vst [vmem:[%s497 + $0x18] sm:$0xf] %v8980
        %8989 = vst [vmem:[%s497 + $0x1c] sm:$0xf] %v8981
        %8990 = vmatpush.bf16.msra.mxu0 %v8928
        %8991 = vmatpush.bf16.msra.mxu0 %v8927
        %8992 = vmatpush.bf16.msra.mxu0 %v8926
        %8993 = vmatpush.bf16.msra.mxu0 %v8925
        %8994 = vmatpush.bf16.msra.mxu0 %v8924
        %8995 = vmatpush.bf16.msra.mxu0 %v8923
        %8996 = vmatpush.bf16.msra.mxu0 %v8922
        %8997 = vmatpush.bf16.msra.mxu0 %v8921
        %8998 = vmatmul.bf16.gmra.mxu0 %v8865
        %v8999 = vpop.f32.mrf.mxu0
        %v9000 = vadd.f32 %v8887, %v8999
        %v9001 = vpop.f32.mrf.mxu0
        %v9002 = vadd.f32 %v8887, %v9001
        %9003 = vmatmul.bf16.gmra.mxu0 %v8866
        %v9004 = vpop.f32.mrf.mxu0
        %v9005 = vadd.f32 %v8887, %v9004
        %v9006 = vpop.f32.mrf.mxu0
        %v9007 = vadd.f32 %v8887, %v9006
        %9008 = vmatmul.bf16.gmra.mxu0 %v8867
        %v9009 = vpop.f32.mrf.mxu0
        %v9010 = vadd.f32 %v8887, %v9009
        %v9011 = vpop.f32.mrf.mxu0
        %v9012 = vadd.f32 %v8887, %v9011
        %9013 = vmatmul.bf16.gmra.mxu0 %v8868
        %v9014 = vpop.f32.mrf.mxu0
        %v9015 = vadd.f32 %v8887, %v9014
        %v9016 = vpop.f32.mrf.mxu0
        %v9017 = vadd.f32 %v8887, %v9016
        %9018 = vdwg.mxu0
        %v9019 = vtanh.pop %v9000
        %v9020 = vtanh.pop %v9002
        %v9021 = vtanh.pop %v9005
        %v9022 = vtanh.pop %v9007
        %v9023 = vtanh.pop %v9010
        %v9024 = vtanh.pop %v9012
        %v9025 = vtanh.pop %v9015
        %v9026 = vtanh.pop %v9017
        %v9027 = vpack.c.bf16 %v9019, %v9019
        %v9028 = vpack.c.bf16 %v9020, %v9020
        %v9029 = vpack.c.bf16 %v9021, %v9021
        %v9030 = vpack.c.bf16 %v9022, %v9022
        %v9031 = vpack.c.bf16 %v9023, %v9023
        %v9032 = vpack.c.bf16 %v9024, %v9024
        %v9033 = vpack.c.bf16 %v9025, %v9025
        %v9034 = vpack.c.bf16 %v9026, %v9026
        %9035 = vst [vmem:[%s503] sm:$0xf] %v9027
        %9036 = vst [vmem:[%s503 + $0x4] sm:$0xf] %v9028
        %9037 = vst [vmem:[%s503 + $0x8] sm:$0xf] %v9029
        %9038 = vst [vmem:[%s503 + $0xc] sm:$0xf] %v9030
        %9039 = vst [vmem:[%s503 + $0x10] sm:$0xf] %v9031
        %9040 = vst [vmem:[%s503 + $0x14] sm:$0xf] %v9032
        %9041 = vst [vmem:[%s503 + $0x18] sm:$0xf] %v9033
        %9042 = vst [vmem:[%s503 + $0x1c] sm:$0xf] %v9034
        %s9043 = smul.u32 8, %s27
        %p9044 = scmp.lt.s32.totalorder %s9043, 15
        %s9045 = scalar_select %p9044, %s9043, 15
        %s9046 = smul.addr %s9045, 4
        %s9047 = scalar_lea.vmem %s9, %s9046
        %s9048 = smul.u32 8, %s27
        %p9049 = scmp.lt.s32.totalorder %s9048, 15
        %s9050 = scalar_select %p9049, %s9048, 15
        %s9051 = smul.addr %s9050, 4
        %s9052 = scalar_lea.vmem %s10, %s9051
        // Predicated region
        $region89: #{gen_forward.1} parent=55 // pred_check
          %p9053 = pneg %p239
        $region90: #{gen_forward.1} parent=55 // pred_check_branch
          %9055 = sbr.rel (%p9053) target = $region92
        $region91: #{gen_forward.1} parent=55 // pred_region
          %s9056 = smul.u32 8, %s27
        $region92: #{gen_forward.1} parent=55 // pred_fallthru
          _
        // Predicated region
        $region93: #{gen_forward.1} parent=55 // pred_check
          %p9057 = pneg %p265
        $region94: #{gen_forward.1} parent=55 // pred_check_branch
          %9059 = sbr.rel (%p9057) target = $region96
        $region95: #{gen_forward.1} parent=55 // pred_region
          %s9060 = smul.u32 8, %s27
        $region96: #{gen_forward.1} parent=55 // pred_fallthru
          _
      $region56: #{gen_forward.1} parent=5 // pred_fallthru
        _
      %p9061 = scmp.le.s32.totalorder 2, %s22
      // Predicated region
      $region97: #{gen_forward.1} parent=5 // pred_check
        %p9062 = pneg %p9061
      $region98: #{gen_forward.1} parent=5 // pred_check_branch
        %9064 = sbr.rel (%p9062) target = $region100
      $region99: #{gen_forward.1} parent=5 // pred_region
        %s9065 = ssub.s32 %s22, 2
        // Predicated region
        $region101: #{gen_forward.1} parent=99 // pred_check
          %p9066 = pneg %p245
        $region102: #{gen_forward.1} parent=99 // pred_check_branch
          %9068 = sbr.rel (%p9066) target = $region104
        $region103: #{gen_forward.1} parent=99 // pred_region
          %s9069 = smul.u32 8, %s28
          %p9070 = scmp.lt.s32.totalorder %s9069, 15
          %s9071 = scalar_select %p9070, %s9069, 15
          %s9072 = smul.addr %s9071, 4
          %s9073 = scalar_lea.vmem %s9, %s9072
        $region104: #{gen_forward.1} parent=99 // pred_fallthru
          _
        // Predicated region
        $region105: #{gen_forward.1} parent=99 // pred_check
          %p9074 = pneg %p271
        $region106: #{gen_forward.1} parent=99 // pred_check_branch
          %9076 = sbr.rel (%p9074) target = $region108
        $region107: #{gen_forward.1} parent=99 // pred_region
          %s9077 = smul.u32 8, %s28
          %p9078 = scmp.lt.s32.totalorder %s9077, 15
          %s9079 = scalar_select %p9078, %s9077, 15
          %s9080 = smul.addr %s9079, 4
          %s9081 = scalar_lea.vmem %s10, %s9080
        $region108: #{gen_forward.1} parent=99 // pred_fallthru
          _
      $region100: #{gen_forward.1} parent=5 // pred_fallthru
        _
    $region6: #{gen_forward.1} parent=1 // loop_footer
      %s26 = sadd.s32 1, %s22
    $region7: #{gen_forward.1} parent=1 // loop_footer_branch
      %21 = sbr.rel target = $region3
    $region8: #{gen_forward.1} parent=1 // loop_exit
      _
    %9082 = vsyncpa [#allocation3], 1
    %s9083 = scalar_lea.sflag [#allocation3], 1
    %9084 = vsyncpa %s9083, 1
    %9085 = vsyncpa [#allocation5], 1
    %9086 = vsyncpa [#allocation8], 1
    %9087 = vsyncpa [#allocation11], 1
    %9088 = vsyncpa [#allocation14], 1

</llo_original>
